<compile_context>
chip_gen: v7x
topology: tpu7x:2x2x1
jax: 0.10.0
libtpu: 0.0.40
codegen_flags: <defaults>
</compile_context>

<pallas_src>
import functools
import math

import jax
import jax.numpy as jnp
from jax.experimental import pallas as pl
from jax.experimental.pallas import tpu as pltpu

N_SHARED_LAYERS = 6        # 6 x (Linear -> BatchNorm1d -> ReLU)
BN_EPS = 1e-5
NORM_EPS = 1e-12           # F.normalize default eps

HEAD_DIMS = (4, 3, 45, 1, 3)       # quaternion, dc, rest, opacity, scales
HEAD_TOTAL = sum(HEAD_DIMS)        # 56
HEAD_PAD = 64                      # fused head width (zero padded, per row)
PACK = 4                           # original rows packed per lane row


def _round_up(x, m):
    return ((x + m - 1) // m) * m


# ---------------------------------------------------------------------------
# Trunk stats pass l: stream x, recompute layers 1..l-1 (finalized BN stats),
# run Linear(l), emit per-tile partial [sum; sumsq] of its pre-activation.
# ---------------------------------------------------------------------------
def _trunk_pass_kernel(n_recompute, tile_rows, n_ref, x_ref, *refs):
    *layer_refs, w_ref, b_ref, grp_ref, out_ref = refs

    a = x_ref[...]
    for k in range(n_recompute):
        w, b, sc, sh = layer_refs[4 * k:4 * k + 4]
        z = jnp.dot(a, w[...], preferred_element_type=jnp.float32) + b[...]
        a = jnp.maximum(z * sc[...] + sh[...], 0.0)          # BN + ReLU

    z = jnp.dot(a, w_ref[...], preferred_element_type=jnp.float32) + b_ref[...]

    # Unmasked partial sums on interior tiles (padding only exists on the last).
    s = jnp.sum(z, axis=0, keepdims=True)
    ss = jnp.sum(z * z, axis=0, keepdims=True)
    out_ref[0] = jnp.concatenate([s, ss], axis=0)

    t = pl.program_id(0)

    @pl.when(t == pl.num_programs(0) - 1)
    def _():
        # Mask out padded rows: original row = (t*TR + packed_row)*PACK + group.
        row = jax.lax.broadcasted_iota(jnp.int32, z.shape, 0)
        orig = (t * tile_rows + row) * PACK + grp_ref[...]
        zm = jnp.where(orig < n_ref[0], z, 0.0)
        sm = jnp.sum(zm, axis=0, keepdims=True)
        ssm = jnp.sum(zm * zm, axis=0, keepdims=True)
        out_ref[0] = jnp.concatenate([sm, ssm], axis=0)


# ---------------------------------------------------------------------------
# Head pass: stream x, recompute all 6 trunk layers, fused head matmul, apply
# quaternion normalization / sigmoid via column-code masks, write packed slab.
# ---------------------------------------------------------------------------
def _head_pass_kernel(n_layers, x_ref, *refs):
    *layer_refs, wh_ref, bh_ref, qmat_ref, code_ref, out_ref = refs

    a = x_ref[...]
    for k in range(n_layers):
        w, b, sc, sh = layer_refs[4 * k:4 * k + 4]
        z = jnp.dot(a, w[...], preferred_element_type=jnp.float32) + b[...]
        a = jnp.maximum(z * sc[...] + sh[...], 0.0)

    y = jnp.dot(a, wh_ref[...], preferred_element_type=jnp.float32) + bh_ref[...]

    # Segmented (per original row) sum of squared quaternion outputs, broadcast
    # back onto the quaternion columns via a constant [256, 256] matmul.
    qsq = jnp.dot(y * y, qmat_ref[...], preferred_element_type=jnp.float32)
    inv_qn = jax.lax.rsqrt(jnp.maximum(qsq, NORM_EPS * NORM_EPS))

    code = code_ref[...]                 # 1.0 = quaternion col, 2.0 = sigmoid col
    is_q = code == 1.0
    is_sig = code == 2.0
    # TODO(synk): sigmoid is evaluated on all packed columns (only 4/64 need it);
    # restrict to a lane-aligned sub-slab only if the EUP slot ever binds here.
    out_ref[...] = jnp.where(is_q, y * inv_qn,
                             jnp.where(is_sig, jax.nn.sigmoid(y), y))


# ---------------------------------------------------------------------------
# Wrapper
# ---------------------------------------------------------------------------
def specialized_mlp_sh(x, shared_params, head_params, *, tile_n=8192):
    """x: [N, input_dim] f32.
    shared_params: 6 tuples (W[in,out], b[1,out], gamma[1,out], beta[1,out]).
    head_params:   5 tuples (W[hidden,out], b[1,out]) in order
                   (quaternion, features_dc, features_rest, opacity, scales).
    Returns (quaternions [N,4], features_dc [N,3], features_rest [N,15,3],
             opacities [N,1], scales [N,3]).
    """
    n, d_in = x.shape
    x = x.astype(jnp.float32)

    # Packed-row tiling: PACK original rows per lane row.
    rows = -(-n // PACK)                                   # packed rows needed
    tile_rows = min(max(tile_n // PACK, 8), _round_up(rows, 8))
    tile_rows = _round_up(tile_rows, 8)
    rows_pad = _round_up(rows, tile_rows)
    nt = rows_pad // tile_rows
    n_pad = rows_pad * PACK

    if n_pad != n:
        x = jnp.pad(x, ((0, n_pad - n), (0, 0)))
    xp = x.reshape(rows_pad, PACK * d_in)                  # free lane packing
    n_arr = jnp.array([n], jnp.int32)

    smem = pl.BlockSpec(memory_space=pltpu.MemorySpace.SMEM)

    def res(arr):                                          # resident (constant idx)
        nd = arr.ndim
        return pl.BlockSpec(arr.shape, lambda t: (0,) * nd)

    x_spec = pl.BlockSpec((tile_rows, PACK * d_in), lambda t: (t, 0))

    cparams = pltpu.CompilerParams(
        dimension_semantics=("parallel",),                 # megacore-shardable
        vmem_limit_bytes=48 * 1024 * 1024)                 # headroom < v7x 64 MiB

    # ---- pack trunk parameters once (block-diagonal weights, lane-tiled rest) ----
    eye = jnp.eye(PACK, dtype=jnp.float32)
    packed_layers = []
    for (w, b, gamma, beta) in shared_params:
        h = w.shape[1]
        wp = jnp.kron(eye, w.astype(jnp.float32))                    # [P*in, P*h]
        bp = jnp.tile(b.astype(jnp.float32).reshape(1, -1), (1, PACK))
        grp = jnp.repeat(jnp.arange(PACK, dtype=jnp.int32), h).reshape(1, -1)
        packed_layers.append((wp, bp,
                              gamma.astype(jnp.float32).reshape(1, -1),
                              beta.astype(jnp.float32).reshape(1, -1),
                              h, grp))

    # ---- trunk: 6 stats passes (recompute-from-x, per-tile partial sums) ----
    scales_p, shifts_p = [], []
    for l, (wp, bp, gamma, beta, h, grp) in enumerate(packed_layers):
        inputs = [n_arr, xp]
        in_specs = [smem, x_spec]
        for k in range(l):
            wpk, bpk = packed_layers[k][0], packed_layers[k][1]
            inputs += [wpk, bpk, scales_p[k], shifts_p[k]]
            in_specs += [res(wpk), res(bpk), res(scales_p[k]), res(shifts_p[k])]
        inputs += [wp, bp, grp]
        in_specs += [res(wp), res(bp), res(grp)]

        kernel = functools.partial(_trunk_pass_kernel, l, tile_rows)
        part = pl.pallas_call(
            kernel,
            grid=(nt,),
            in_specs=in_specs,
            out_specs=pl.BlockSpec((1, 2, PACK * h), lambda t: (t, 0, 0)),
            out_shape=jax.ShapeDtypeStruct((nt, 2, PACK * h), jnp.float32),
            compiler_params=cparams,
        )(*inputs)

        # Hierarchical reduce of per-tile partials, then fold PACK lane replicas.
        sums = part.sum(axis=0).reshape(2, PACK, h).sum(axis=1)       # [2, h]
        mean = sums[0] / n
        var = sums[1] / n - mean * mean                    # biased variance (train BN)
        scale = gamma[0] * jax.lax.rsqrt(var + BN_EPS)
        shift = beta[0] - mean * scale
        scales_p.append(jnp.tile(scale.reshape(1, -1), (1, PACK)))
        shifts_p.append(jnp.tile(shift.reshape(1, -1), (1, PACK)))

    # ---- fused, lane-packed heads ----
    hidden = packed_layers[-1][4]
    wh = jnp.zeros((hidden, HEAD_PAD), jnp.float32)
    bh = jnp.zeros((1, HEAD_PAD), jnp.float32)
    off = 0
    for (w, b), d in zip(head_params, HEAD_DIMS):
        wh = wh.at[:, off:off + d].set(w.astype(jnp.float32))
        bh = bh.at[:, off:off + d].set(b.astype(jnp.float32).reshape(1, -1))
        off += d
    whp = jnp.kron(eye, wh)                                # [P*hidden, P*64]
    bhp = jnp.tile(bh, (1, PACK))
    code = jnp.zeros((HEAD_PAD,), jnp.float32).at[0:4].set(1.0).at[52:56].set(2.0)
    codep = jnp.tile(code.reshape(1, -1), (1, PACK))       # [1, P*64]
    qblock = jnp.zeros((HEAD_PAD, HEAD_PAD), jnp.float32).at[:4, :4].set(1.0)
    qmat = jnp.kron(eye, qblock)                           # segmented reduce-bcast

    inputs = [xp]
    in_specs = [x_spec]
    for k in range(N_SHARED_LAYERS):
        wpk, bpk = packed_layers[k][0], packed_layers[k][1]
        inputs += [wpk, bpk, scales_p[k], shifts_p[k]]
        in_specs += [res(wpk), res(bpk), res(scales_p[k]), res(shifts_p[k])]
    inputs += [whp, bhp, qmat, codep]
    in_specs += [res(whp), res(bhp), res(qmat), res(codep)]

    kernel = functools.partial(_head_pass_kernel, N_SHARED_LAYERS)
    out_p = pl.pallas_call(
        kernel,
        grid=(nt,),
        in_specs=in_specs,
        out_specs=pl.BlockSpec((tile_rows, PACK * HEAD_PAD), lambda t: (t, 0)),
        out_shape=jax.ShapeDtypeStruct((rows_pad, PACK * HEAD_PAD), jnp.float32),
        compiler_params=cparams,
    )(*inputs)

    # NOTE(perf): downstream consumers that can take the fused [N, 64] slab should
    # use `out` directly; the 5-way split below re-streams ~224 B/row under jit.
    out = out_p.reshape(n_pad, HEAD_PAD)[:n]
    quaternions = out[:, 0:4]
    features_dc = out[:, 4:7]
    features_rest = out[:, 7:52].reshape(n, 15, 3)
    opacities = out[:, 52:53]
    scales = out[:, 53:56]
    return quaternions, features_dc, features_rest, opacities, scales


# ---------------------------------------------------------------------------
# Parameter init (mirrors PyTorch defaults; weights stored [in, out])
# ---------------------------------------------------------------------------
def init_linear(key, fan_in, fan_out):
    kw, kb = jax.random.split(key)
    bound = 1.0 / math.sqrt(fan_in)
    w = jax.random.uniform(kw, (fan_in, fan_out), jnp.float32, -bound, bound)
    b = jax.random.uniform(kb, (1, fan_out), jnp.float32, -bound, bound)
    return w, b


def init_params(key, input_dim, shared_hidden_dim, hidden_dim):
    dims = [input_dim] + [shared_hidden_dim] * 5 + [hidden_dim]
    shared = []
    for i in range(N_SHARED_LAYERS):
        key, sub = jax.random.split(key)
        w, b = init_linear(sub, dims[i], dims[i + 1])
        gamma = jnp.ones((1, dims[i + 1]), jnp.float32)
        beta = jnp.zeros((1, dims[i + 1]), jnp.float32)
        shared.append((w, b, gamma, beta))

    heads = []
    for d in HEAD_DIMS:
        key, sub = jax.random.split(key)
        heads.append(init_linear(sub, hidden_dim, d))
    return shared, heads


# ---------------------------------------------------------------------------
# Pure-JAX reference (train-mode BN), used only for correctness checking.
# ---------------------------------------------------------------------------
def reference_forward(x, shared_params, head_params):
    h = x.astype(jnp.float32)
    for (w, b, gamma, beta) in shared_params:
        z = h @ w + b
        mean = jnp.mean(z, axis=0)
        var = jnp.mean((z - mean) ** 2, axis=0)
        h = jnp.maximum((z - mean) * jax.lax.rsqrt(var + BN_EPS) * gamma[0]
                        + beta[0], 0.0)
    (wq, bq), (wd, bd), (wr, br), (wo, bo), (ws, bs) = head_params
    q = h @ wq + bq
    q = q / jnp.maximum(jnp.linalg.norm(q, axis=1, keepdims=True), NORM_EPS)
    dc = h @ wd + bd
    rest = (h @ wr + br).reshape(-1, 15, 3)
    op = jax.nn.sigmoid(h @ wo + bo)
    sc = jax.nn.sigmoid(h @ ws + bs)
    return q, dc, rest, op, sc


if __name__ == "__main__":
    config = dict(L=4, input_dim=3, include_input=True,
                  use_positional_encoding=False,
                  shared_hidden_dim=32, hidden_dim=32)

    key = jax.random.PRNGKey(0)
    k_x, k_p, k_x2 = jax.random.split(key, 3)
    shared_params, head_params = init_params(
        k_p, config["input_dim"], config["shared_hidden_dim"],
        config["hidden_dim"])

    names = ("quaternions", "features_dc", "features_rest", "opacities", "scales")

    def check(outs, refs):
        for a, b, nm in zip(outs, refs, names):
            err = float(jnp.max(jnp.abs(a - b)))
            assert err < 2e-3, f"{nm} mismatch: max abs err = {err}"

    # --- small single-tile case ---
    batch = 16
    x = jax.random.normal(k_x, (batch, config["input_dim"]), jnp.float32)
    fwd = jax.jit(specialized_mlp_sh)
    outs = fwd(x, shared_params, head_params)
    jax.block_until_ready(outs)
    quats, feats_dc, feats_rest, opacities, scales = outs
    assert quats.shape == (batch, 4)
    assert feats_dc.shape == (batch, 3)
    assert feats_rest.shape == (batch, 15, 3)
    assert opacities.shape == (batch, 1)
    assert scales.shape == (batch, 3)
    check(outs, reference_forward(x, shared_params, head_params))

    # --- multi-tile case (grid > 1, batch not a multiple of PACK, padded rows) ---
    batch2 = 530
    x2 = jax.random.normal(k_x2, (batch2, config["input_dim"]), jnp.float32)
    fwd2 = jax.jit(functools.partial(specialized_mlp_sh, tile_n=256))
    outs2 = fwd2(x2, shared_params, head_params)
    jax.block_until_ready(outs2)
    check(outs2, reference_forward(x2, shared_params, head_params))

    print("KERNEL_OK")
</pallas_src>

<mosaic_0001>
module attributes {stable_mosaic.version = 11 : i64} {
  func.func @_trunk_pass_kernel(%arg0: i32, %arg1: memref<1xi32, #tpu.memory_space<smem>>, %arg2: memref<8x12xf32, #tpu.memory_space<vmem>>, %arg3: memref<12x128xf32, #tpu.memory_space<vmem>>, %arg4: memref<1x128xf32, #tpu.memory_space<vmem>>, %arg5: memref<1x128xf32, #tpu.memory_space<vmem>>, %arg6: memref<1x128xf32, #tpu.memory_space<vmem>>, %arg7: memref<128x128xf32, #tpu.memory_space<vmem>>, %arg8: memref<1x128xf32, #tpu.memory_space<vmem>>, %arg9: memref<1x128xi32, #tpu.memory_space<vmem>>, %arg10: memref<1x2x128xf32, #tpu.memory_space<vmem>>) attributes {dimension_semantics = [#tpu.dimension_semantics<parallel>], iteration_bounds = array<i64: 1>, scalar_prefetch = 0 : i64, scratch_operands = 0 : i64, tpu.core_type = #tpu.core_type<tc>, window_params = [{transform_indices = @transform_0, window_bounds = array<i64: 1>}, {transform_indices = @transform_1, window_bounds = array<i64: 8, 12>}, {pipeline_mode = #tpu.pipeline_mode<synchronous>, transform_indices = @transform_2, window_bounds = array<i64: 12, 128>}, {pipeline_mode = #tpu.pipeline_mode<synchronous>, transform_indices = @transform_3, window_bounds = array<i64: 1, 128>}, {pipeline_mode = #tpu.pipeline_mode<synchronous>, transform_indices = @transform_4, window_bounds = array<i64: 1, 128>}, {pipeline_mode = #tpu.pipeline_mode<synchronous>, transform_indices = @transform_5, window_bounds = array<i64: 1, 128>}, {pipeline_mode = #tpu.pipeline_mode<synchronous>, transform_indices = @transform_6, window_bounds = array<i64: 128, 128>}, {pipeline_mode = #tpu.pipeline_mode<synchronous>, transform_indices = @transform_7, window_bounds = array<i64: 1, 128>}, {pipeline_mode = #tpu.pipeline_mode<synchronous>, transform_indices = @transform_8, window_bounds = array<i64: 1, 128>}, {transform_indices = @transform_9, window_bounds = array<i64: 1, 2, 128>}]} {
    %c0 = arith.constant 0 : index
    %c0_0 = arith.constant 0 : index
    %0 = vector.load %arg2[%c0, %c0_0] : memref<8x12xf32, #tpu.memory_space<vmem>>, vector<8x12xf32>
    %c0_1 = arith.constant 0 : index
    %c0_2 = arith.constant 0 : index
    %1 = vector.load %arg3[%c0_1, %c0_2] : memref<12x128xf32, #tpu.memory_space<vmem>>, vector<12x128xf32>
    %cst = arith.constant dense<0.000000e+00> : vector<8x128xf32>
    %2 = tpu.matmul %0, %1, %cst {dimension_numbers = #tpu.dot_dimension_numbers<[1], [0], [0], [1], [0, 0, 1, 1], [], []>} : vector<8x12xf32>, vector<12x128xf32>, vector<8x128xf32> -> vector<8x128xf32>
    %c0_3 = arith.constant 0 : index
    %c0_4 = arith.constant 0 : index
    %3 = vector.load %arg4[%c0_3, %c0_4] : memref<1x128xf32, #tpu.memory_space<vmem>>, vector<1x128xf32>
    %4 = vector.broadcast %3 : vector<1x128xf32> to vector<8x128xf32>
    %5 = arith.addf %2, %4 : vector<8x128xf32>
    %c0_5 = arith.constant 0 : index
    %c0_6 = arith.constant 0 : index
    %6 = vector.load %arg5[%c0_5, %c0_6] : memref<1x128xf32, #tpu.memory_space<vmem>>, vector<1x128xf32>
    %7 = vector.broadcast %6 : vector<1x128xf32> to vector<8x128xf32>
    %8 = arith.mulf %5, %7 : vector<8x128xf32>
    %c0_7 = arith.constant 0 : index
    %c0_8 = arith.constant 0 : index
    %9 = vector.load %arg6[%c0_7, %c0_8] : memref<1x128xf32, #tpu.memory_space<vmem>>, vector<1x128xf32>
    %10 = vector.broadcast %9 : vector<1x128xf32> to vector<8x128xf32>
    %11 = arith.addf %8, %10 : vector<8x128xf32>
    %cst_9 = arith.constant 0.000000e+00 : f32
    %12 = vector.broadcast %cst_9 : f32 to vector<8x128xf32>
    %13 = arith.maximumf %11, %12 : vector<8x128xf32>
    %c0_10 = arith.constant 0 : index
    %c0_11 = arith.constant 0 : index
    %14 = vector.load %arg7[%c0_10, %c0_11] : memref<128x128xf32, #tpu.memory_space<vmem>>, vector<128x128xf32>
    %cst_12 = arith.constant dense<0.000000e+00> : vector<8x128xf32>
    %15 = tpu.matmul %13, %14, %cst_12 {dimension_numbers = #tpu.dot_dimension_numbers<[1], [0], [0], [1], [0, 0, 1, 1], [], []>} : vector<8x128xf32>, vector<128x128xf32>, vector<8x128xf32> -> vector<8x128xf32>
    %c0_13 = arith.constant 0 : index
    %c0_14 = arith.constant 0 : index
    %16 = vector.load %arg8[%c0_13, %c0_14] : memref<1x128xf32, #tpu.memory_space<vmem>>, vector<1x128xf32>
    %17 = vector.broadcast %16 : vector<1x128xf32> to vector<8x128xf32>
    %18 = arith.addf %15, %17 : vector<8x128xf32>
    %cst_15 = arith.constant dense<0.000000e+00> : vector<128xf32>
    %19 = vector.multi_reduction <add>, %18, %cst_15 [0] : vector<8x128xf32> to vector<128xf32>
    %20 = vector.shape_cast %19 : vector<128xf32> to vector<1x128xf32>
    %21 = arith.mulf %18, %18 : vector<8x128xf32>
    %cst_16 = arith.constant dense<0.000000e+00> : vector<128xf32>
    %22 = vector.multi_reduction <add>, %21, %cst_16 [0] : vector<8x128xf32> to vector<128xf32>
    %23 = vector.shape_cast %22 : vector<128xf32> to vector<1x128xf32>
    %24 = tpu.concatenate %20, %23 in 0 : vector<1x128xf32>, vector<1x128xf32> -> vector<2x128xf32>
    %c0_17 = arith.constant 0 : index
    %c0_18 = arith.constant 0 : index
    %c0_19 = arith.constant 0 : index
    %25 = vector.load %arg10[%c0_17, %c0_18, %c0_19] : memref<1x2x128xf32, #tpu.memory_space<vmem>>, vector<1x2x128xf32>
    %26 = vector.shape_cast %25 : vector<1x2x128xf32> to vector<2x128xf32>
    %27 = vector.shape_cast %24 : vector<2x128xf32> to vector<1x2x128xf32>
    tpu.vector_store %arg10[%c0_17, %c0_18, %c0_19], %27 {strides = array<i32>} : memref<1x2x128xf32, #tpu.memory_space<vmem>>, vector<1x2x128xf32>,
    %c0_i32 = arith.constant 0 : i32
    %28 = arith.cmpi eq, %arg0, %c0_i32 : i32
    %29 = arith.extui %28 : i1 to i32
    %c0_i32_20 = arith.constant 0 : i32
    %30 = arith.cmpi ne, %29, %c0_i32_20 : i32
    scf.if %30 {
      %31 = tpu.iota {dimensions = array<i32: 0>} : vector<8x128xi32>
      %c8_i32 = arith.constant 8 : i32
      %32 = arith.muli %arg0, %c8_i32 : i32
      %33 = vector.broadcast %32 : i32 to vector<8x128xi32>
      %34 = arith.addi %33, %31 : vector<8x128xi32>
      %c4_i32 = arith.constant 4 : i32
      %35 = vector.broadcast %c4_i32 : i32 to vector<8x128xi32>
      %36 = arith.muli %34, %35 : vector<8x128xi32>
      %c0_21 = arith.constant 0 : index
      %c0_22 = arith.constant 0 : index
      %37 = vector.load %arg9[%c0_21, %c0_22] : memref<1x128xi32, #tpu.memory_space<vmem>>, vector<1x128xi32>
      %38 = vector.broadcast %37 : vector<1x128xi32> to vector<8x128xi32>
      %39 = arith.addi %36, %38 : vector<8x128xi32>
      %c0_23 = arith.constant 0 : index
      %40 = memref.load %arg1[%c0_23] : memref<1xi32, #tpu.memory_space<smem>>
      %41 = vector.broadcast %40 : i32 to vector<8x128xi32>
      %42 = arith.cmpi slt, %39, %41 : vector<8x128xi32>
      %cst_24 = arith.constant 0.000000e+00 : f32
      %43 = vector.broadcast %cst_24 : f32 to vector<8x128xf32>
      %44 = arith.select %42, %18, %43 : vector<8x128xi1>, vector<8x128xf32>
      %cst_25 = arith.constant dense<0.000000e+00> : vector<128xf32>
      %45 = vector.multi_reduction <add>, %44, %cst_25 [0] : vector<8x128xf32> to vector<128xf32>
      %46 = vector.shape_cast %45 : vector<128xf32> to vector<1x128xf32>
      %47 = arith.mulf %44, %44 : vector<8x128xf32>
      %cst_26 = arith.constant dense<0.000000e+00> : vector<128xf32>
      %48 = vector.multi_reduction <add>, %47, %cst_26 [0] : vector<8x128xf32> to vector<128xf32>
      %49 = vector.shape_cast %48 : vector<128xf32> to vector<1x128xf32>
      %50 = tpu.concatenate %46, %49 in 0 : vector<1x128xf32>, vector<1x128xf32> -> vector<2x128xf32>
      %c0_27 = arith.constant 0 : index
      %c0_28 = arith.constant 0 : index
      %c0_29 = arith.constant 0 : index
      %51 = vector.load %arg10[%c0_27, %c0_28, %c0_29] : memref<1x2x128xf32, #tpu.memory_space<vmem>>, vector<1x2x128xf32>
      %52 = vector.shape_cast %51 : vector<1x2x128xf32> to vector<2x128xf32>
      %53 = vector.shape_cast %50 : vector<2x128xf32> to vector<1x2x128xf32>
      tpu.vector_store %arg10[%c0_27, %c0_28, %c0_29], %53 {strides = array<i32>} : memref<1x2x128xf32, #tpu.memory_space<vmem>>, vector<1x2x128xf32>,
    } else {
    }
    return
  }
  func.func @transform_0(%arg0: i32) -> i32 {
    %c0_i32 = arith.constant 0 : i32
    %c0_i32_0 = arith.constant 0 : i32
    return %c0_i32 : i32
  }
  func.func @transform_1(%arg0: i32) -> (i32, i32) {
    %c0_i32 = arith.constant 0 : i32
    %c0_i32_0 = arith.constant 0 : i32
    return %arg0, %c0_i32 : i32, i32
  }
  func.func @transform_2(%arg0: i32) -> (i32, i32) {
    %c0_i32 = arith.constant 0 : i32
    %c0_i32_0 = arith.constant 0 : i32
    %c0_i32_1 = arith.constant 0 : i32
    return %c0_i32, %c0_i32_0 : i32, i32
  }
  func.func @transform_3(%arg0: i32) -> (i32, i32) {
    %c0_i32 = arith.constant 0 : i32
    %c0_i32_0 = arith.constant 0 : i32
    %c0_i32_1 = arith.constant 0 : i32
    return %c0_i32, %c0_i32_0 : i32, i32
  }
  func.func @transform_4(%arg0: i32) -> (i32, i32) {
    %c0_i32 = arith.constant 0 : i32
    %c0_i32_0 = arith.constant 0 : i32
    %c0_i32_1 = arith.constant 0 : i32
    return %c0_i32, %c0_i32_0 : i32, i32
  }
  func.func @transform_5(%arg0: i32) -> (i32, i32) {
    %c0_i32 = arith.constant 0 : i32
    %c0_i32_0 = arith.constant 0 : i32
    %c0_i32_1 = arith.constant 0 : i32
    return %c0_i32, %c0_i32_0 : i32, i32
  }
  func.func @transform_6(%arg0: i32) -> (i32, i32) {
    %c0_i32 = arith.constant 0 : i32
    %c0_i32_0 = arith.constant 0 : i32
    %c0_i32_1 = arith.constant 0 : i32
    return %c0_i32, %c0_i32_0 : i32, i32
  }
  func.func @transform_7(%arg0: i32) -> (i32, i32) {
    %c0_i32 = arith.constant 0 : i32
    %c0_i32_0 = arith.constant 0 : i32
    %c0_i32_1 = arith.constant 0 : i32
    return %c0_i32, %c0_i32_0 : i32, i32
  }
  func.func @transform_8(%arg0: i32) -> (i32, i32) {
    %c0_i32 = arith.constant 0 : i32
    %c0_i32_0 = arith.constant 0 : i32
    %c0_i32_1 = arith.constant 0 : i32
    return %c0_i32, %c0_i32_0 : i32, i32
  }
  func.func @transform_9(%arg0: i32) -> (i32, i32, i32) {
    %c0_i32 = arith.constant 0 : i32
    %c0_i32_0 = arith.constant 0 : i32
    %c0_i32_1 = arith.constant 0 : i32
    return %arg0, %c0_i32, %c0_i32_0 : i32, i32, i32
  }
}

module attributes {stable_mosaic.version = 11 : i64} {
  func.func @_trunk_pass_kernel(%arg0: i32, %arg1: memref<1xi32, #tpu.memory_space<smem>>, %arg2: memref<8x12xf32, #tpu.memory_space<vmem>>, %arg3: memref<12x128xf32, #tpu.memory_space<vmem>>, %arg4: memref<1x128xf32, #tpu.memory_space<vmem>>, %arg5: memref<1x128xi32, #tpu.memory_space<vmem>>, %arg6: memref<1x2x128xf32, #tpu.memory_space<vmem>>) attributes {dimension_semantics = [#tpu.dimension_semantics<parallel>], iteration_bounds = array<i64: 1>, scalar_prefetch = 0 : i64, scratch_operands = 0 : i64, tpu.core_type = #tpu.core_type<tc>, window_params = [{transform_indices = @transform_0, window_bounds = array<i64: 1>}, {transform_indices = @transform_1, window_bounds = array<i64: 8, 12>}, {pipeline_mode = #tpu.pipeline_mode<synchronous>, transform_indices = @transform_2, window_bounds = array<i64: 12, 128>}, {pipeline_mode = #tpu.pipeline_mode<synchronous>, transform_indices = @transform_3, window_bounds = array<i64: 1, 128>}, {pipeline_mode = #tpu.pipeline_mode<synchronous>, transform_indices = @transform_4, window_bounds = array<i64: 1, 128>}, {transform_indices = @transform_5, window_bounds = array<i64: 1, 2, 128>}]} {
    %c0 = arith.constant 0 : index
    %c0_0 = arith.constant 0 : index
    %0 = vector.load %arg2[%c0, %c0_0] : memref<8x12xf32, #tpu.memory_space<vmem>>, vector<8x12xf32>
    %c0_1 = arith.constant 0 : index
    %c0_2 = arith.constant 0 : index
    %1 = vector.load %arg3[%c0_1, %c0_2] : memref<12x128xf32, #tpu.memory_space<vmem>>, vector<12x128xf32>
    %cst = arith.constant dense<0.000000e+00> : vector<8x128xf32>
    %2 = tpu.matmul %0, %1, %cst {dimension_numbers = #tpu.dot_dimension_numbers<[1], [0], [0], [1], [0, 0, 1, 1], [], []>} : vector<8x12xf32>, vector<12x128xf32>, vector<8x128xf32> -> vector<8x128xf32>
    %c0_3 = arith.constant 0 : index
    %c0_4 = arith.constant 0 : index
    %3 = vector.load %arg4[%c0_3, %c0_4] : memref<1x128xf32, #tpu.memory_space<vmem>>, vector<1x128xf32>
    %4 = vector.broadcast %3 : vector<1x128xf32> to vector<8x128xf32>
    %5 = arith.addf %2, %4 : vector<8x128xf32>
    %cst_5 = arith.constant dense<0.000000e+00> : vector<128xf32>
    %6 = vector.multi_reduction <add>, %5, %cst_5 [0] : vector<8x128xf32> to vector<128xf32>
    %7 = vector.shape_cast %6 : vector<128xf32> to vector<1x128xf32>
    %8 = arith.mulf %5, %5 : vector<8x128xf32>
    %cst_6 = arith.constant dense<0.000000e+00> : vector<128xf32>
    %9 = vector.multi_reduction <add>, %8, %cst_6 [0] : vector<8x128xf32> to vector<128xf32>
    %10 = vector.shape_cast %9 : vector<128xf32> to vector<1x128xf32>
    %11 = tpu.concatenate %7, %10 in 0 : vector<1x128xf32>, vector<1x128xf32> -> vector<2x128xf32>
    %c0_7 = arith.constant 0 : index
    %c0_8 = arith.constant 0 : index
    %c0_9 = arith.constant 0 : index
    %12 = vector.load %arg6[%c0_7, %c0_8, %c0_9] : memref<1x2x128xf32, #tpu.memory_space<vmem>>, vector<1x2x128xf32>
    %13 = vector.shape_cast %12 : vector<1x2x128xf32> to vector<2x128xf32>
    %14 = vector.shape_cast %11 : vector<2x128xf32> to vector<1x2x128xf32>
    tpu.vector_store %arg6[%c0_7, %c0_8, %c0_9], %14 {strides = array<i32>} : memref<1x2x128xf32, #tpu.memory_space<vmem>>, vector<1x2x128xf32>,
    %c0_i32 = arith.constant 0 : i32
    %15 = arith.cmpi eq, %arg0, %c0_i32 : i32
    %16 = arith.extui %15 : i1 to i32
    %c0_i32_10 = arith.constant 0 : i32
    %17 = arith.cmpi ne, %16, %c0_i32_10 : i32
    scf.if %17 {
      %18 = tpu.iota {dimensions = array<i32: 0>} : vector<8x128xi32>
      %c8_i32 = arith.constant 8 : i32
      %19 = arith.muli %arg0, %c8_i32 : i32
      %20 = vector.broadcast %19 : i32 to vector<8x128xi32>
      %21 = arith.addi %20, %18 : vector<8x128xi32>
      %c4_i32 = arith.constant 4 : i32
      %22 = vector.broadcast %c4_i32 : i32 to vector<8x128xi32>
      %23 = arith.muli %21, %22 : vector<8x128xi32>
      %c0_11 = arith.constant 0 : index
      %c0_12 = arith.constant 0 : index
      %24 = vector.load %arg5[%c0_11, %c0_12] : memref<1x128xi32, #tpu.memory_space<vmem>>, vector<1x128xi32>
      %25 = vector.broadcast %24 : vector<1x128xi32> to vector<8x128xi32>
      %26 = arith.addi %23, %25 : vector<8x128xi32>
      %c0_13 = arith.constant 0 : index
      %27 = memref.load %arg1[%c0_13] : memref<1xi32, #tpu.memory_space<smem>>
      %28 = vector.broadcast %27 : i32 to vector<8x128xi32>
      %29 = arith.cmpi slt, %26, %28 : vector<8x128xi32>
      %cst_14 = arith.constant 0.000000e+00 : f32
      %30 = vector.broadcast %cst_14 : f32 to vector<8x128xf32>
      %31 = arith.select %29, %5, %30 : vector<8x128xi1>, vector<8x128xf32>
      %cst_15 = arith.constant dense<0.000000e+00> : vector<128xf32>
      %32 = vector.multi_reduction <add>, %31, %cst_15 [0] : vector<8x128xf32> to vector<128xf32>
      %33 = vector.shape_cast %32 : vector<128xf32> to vector<1x128xf32>
      %34 = arith.mulf %31, %31 : vector<8x128xf32>
      %cst_16 = arith.constant dense<0.000000e+00> : vector<128xf32>
      %35 = vector.multi_reduction <add>, %34, %cst_16 [0] : vector<8x128xf32> to vector<128xf32>
      %36 = vector.shape_cast %35 : vector<128xf32> to vector<1x128xf32>
      %37 = tpu.concatenate %33, %36 in 0 : vector<1x128xf32>, vector<1x128xf32> -> vector<2x128xf32>
      %c0_17 = arith.constant 0 : index
      %c0_18 = arith.constant 0 : index
      %c0_19 = arith.constant 0 : index
      %38 = vector.load %arg6[%c0_17, %c0_18, %c0_19] : memref<1x2x128xf32, #tpu.memory_space<vmem>>, vector<1x2x128xf32>
      %39 = vector.shape_cast %38 : vector<1x2x128xf32> to vector<2x128xf32>
      %40 = vector.shape_cast %37 : vector<2x128xf32> to vector<1x2x128xf32>
      tpu.vector_store %arg6[%c0_17, %c0_18, %c0_19], %40 {strides = array<i32>} : memref<1x2x128xf32, #tpu.memory_space<vmem>>, vector<1x2x128xf32>,
    } else {
    }
    return
  }
  func.func @transform_0(%arg0: i32) -> i32 {
    %c0_i32 = arith.constant 0 : i32
    %c0_i32_0 = arith.constant 0 : i32
    return %c0_i32 : i32
  }
  func.func @transform_1(%arg0: i32) -> (i32, i32) {
    %c0_i32 = arith.constant 0 : i32
    %c0_i32_0 = arith.constant 0 : i32
    return %arg0, %c0_i32 : i32, i32
  }
  func.func @transform_2(%arg0: i32) -> (i32, i32) {
    %c0_i32 = arith.constant 0 : i32
    %c0_i32_0 = arith.constant 0 : i32
    %c0_i32_1 = arith.constant 0 : i32
    return %c0_i32, %c0_i32_0 : i32, i32
  }
  func.func @transform_3(%arg0: i32) -> (i32, i32) {
    %c0_i32 = arith.constant 0 : i32
    %c0_i32_0 = arith.constant 0 : i32
    %c0_i32_1 = arith.constant 0 : i32
    return %c0_i32, %c0_i32_0 : i32, i32
  }
  func.func @transform_4(%arg0: i32) -> (i32, i32) {
    %c0_i32 = arith.constant 0 : i32
    %c0_i32_0 = arith.constant 0 : i32
    %c0_i32_1 = arith.constant 0 : i32
    return %c0_i32, %c0_i32_0 : i32, i32
  }
  func.func @transform_5(%arg0: i32) -> (i32, i32, i32) {
    %c0_i32 = arith.constant 0 : i32
    %c0_i32_0 = arith.constant 0 : i32
    %c0_i32_1 = arith.constant 0 : i32
    return %arg0, %c0_i32, %c0_i32_0 : i32, i32, i32
  }
}

module attributes {stable_mosaic.version = 11 : i64} {
  func.func @_trunk_pass_kernel(%arg0: i32, %arg1: memref<1xi32, #tpu.memory_space<smem>>, %arg2: memref<8x12xf32, #tpu.memory_space<vmem>>, %arg3: memref<12x128xf32, #tpu.memory_space<vmem>>, %arg4: memref<1x128xf32, #tpu.memory_space<vmem>>, %arg5: memref<1x128xf32, #tpu.memory_space<vmem>>, %arg6: memref<1x128xf32, #tpu.memory_space<vmem>>, %arg7: memref<128x128xf32, #tpu.memory_space<vmem>>, %arg8: memref<1x128xf32, #tpu.memory_space<vmem>>, %arg9: memref<1x128xf32, #tpu.memory_space<vmem>>, %arg10: memref<1x128xf32, #tpu.memory_space<vmem>>, %arg11: memref<128x128xf32, #tpu.memory_space<vmem>>, %arg12: memref<1x128xf32, #tpu.memory_space<vmem>>, %arg13: memref<1x128xi32, #tpu.memory_space<vmem>>, %arg14: memref<1x2x128xf32, #tpu.memory_space<vmem>>) attributes {dimension_semantics = [#tpu.dimension_semantics<parallel>], iteration_bounds = array<i64: 1>, scalar_prefetch = 0 : i64, scratch_operands = 0 : i64, tpu.core_type = #tpu.core_type<tc>, window_params = [{transform_indices = @transform_0, window_bounds = array<i64: 1>}, {transform_indices = @transform_1, window_bounds = array<i64: 8, 12>}, {pipeline_mode = #tpu.pipeline_mode<synchronous>, transform_indices = @transform_2, window_bounds = array<i64: 12, 128>}, {pipeline_mode = #tpu.pipeline_mode<synchronous>, transform_indices = @transform_3, window_bounds = array<i64: 1, 128>}, {pipeline_mode = #tpu.pipeline_mode<synchronous>, transform_indices = @transform_4, window_bounds = array<i64: 1, 128>}, {pipeline_mode = #tpu.pipeline_mode<synchronous>, transform_indices = @transform_5, window_bounds = array<i64: 1, 128>}, {pipeline_mode = #tpu.pipeline_mode<synchronous>, transform_indices = @transform_6, window_bounds = array<i64: 128, 128>}, {pipeline_mode = #tpu.pipeline_mode<synchronous>, transform_indices = @transform_7, window_bounds = array<i64: 1, 128>}, {pipeline_mode = #tpu.pipeline_mode<synchronous>, transform_indices = @transform_8, window_bounds = array<i64: 1, 128>}, {pipeline_mode = #tpu.pipeline_mode<synchronous>, transform_indices = @transform_9, window_bounds = array<i64: 1, 128>}, {pipeline_mode = #tpu.pipeline_mode<synchronous>, transform_indices = @transform_10, window_bounds = array<i64: 128, 128>}, {pipeline_mode = #tpu.pipeline_mode<synchronous>, transform_indices = @transform_11, window_bounds = array<i64: 1, 128>}, {pipeline_mode = #tpu.pipeline_mode<synchronous>, transform_indices = @transform_12, window_bounds = array<i64: 1, 128>}, {transform_indices = @transform_13, window_bounds = array<i64: 1, 2, 128>}]} {
    %c0 = arith.constant 0 : index
    %c0_0 = arith.constant 0 : index
    %0 = vector.load %arg2[%c0, %c0_0] : memref<8x12xf32, #tpu.memory_space<vmem>>, vector<8x12xf32>
    %c0_1 = arith.constant 0 : index
    %c0_2 = arith.constant 0 : index
    %1 = vector.load %arg3[%c0_1, %c0_2] : memref<12x128xf32, #tpu.memory_space<vmem>>, vector<12x128xf32>
    %cst = arith.constant dense<0.000000e+00> : vector<8x128xf32>
    %2 = tpu.matmul %0, %1, %cst {dimension_numbers = #tpu.dot_dimension_numbers<[1], [0], [0], [1], [0, 0, 1, 1], [], []>} : vector<8x12xf32>, vector<12x128xf32>, vector<8x128xf32> -> vector<8x128xf32>
    %c0_3 = arith.constant 0 : index
    %c0_4 = arith.constant 0 : index
    %3 = vector.load %arg4[%c0_3, %c0_4] : memref<1x128xf32, #tpu.memory_space<vmem>>, vector<1x128xf32>
    %4 = vector.broadcast %3 : vector<1x128xf32> to vector<8x128xf32>
    %5 = arith.addf %2, %4 : vector<8x128xf32>
    %c0_5 = arith.constant 0 : index
    %c0_6 = arith.constant 0 : index
    %6 = vector.load %arg5[%c0_5, %c0_6] : memref<1x128xf32, #tpu.memory_space<vmem>>, vector<1x128xf32>
    %7 = vector.broadcast %6 : vector<1x128xf32> to vector<8x128xf32>
    %8 = arith.mulf %5, %7 : vector<8x128xf32>
    %c0_7 = arith.constant 0 : index
    %c0_8 = arith.constant 0 : index
    %9 = vector.load %arg6[%c0_7, %c0_8] : memref<1x128xf32, #tpu.memory_space<vmem>>, vector<1x128xf32>
    %10 = vector.broadcast %9 : vector<1x128xf32> to vector<8x128xf32>
    %11 = arith.addf %8, %10 : vector<8x128xf32>
    %cst_9 = arith.constant 0.000000e+00 : f32
    %12 = vector.broadcast %cst_9 : f32 to vector<8x128xf32>
    %13 = arith.maximumf %11, %12 : vector<8x128xf32>
    %c0_10 = arith.constant 0 : index
    %c0_11 = arith.constant 0 : index
    %14 = vector.load %arg7[%c0_10, %c0_11] : memref<128x128xf32, #tpu.memory_space<vmem>>, vector<128x128xf32>
    %cst_12 = arith.constant dense<0.000000e+00> : vector<8x128xf32>
    %15 = tpu.matmul %13, %14, %cst_12 {dimension_numbers = #tpu.dot_dimension_numbers<[1], [0], [0], [1], [0, 0, 1, 1], [], []>} : vector<8x128xf32>, vector<128x128xf32>, vector<8x128xf32> -> vector<8x128xf32>
    %c0_13 = arith.constant 0 : index
    %c0_14 = arith.constant 0 : index
    %16 = vector.load %arg8[%c0_13, %c0_14] : memref<1x128xf32, #tpu.memory_space<vmem>>, vector<1x128xf32>
    %17 = vector.broadcast %16 : vector<1x128xf32> to vector<8x128xf32>
    %18 = arith.addf %15, %17 : vector<8x128xf32>
    %c0_15 = arith.constant 0 : index
    %c0_16 = arith.constant 0 : index
    %19 = vector.load %arg9[%c0_15, %c0_16] : memref<1x128xf32, #tpu.memory_space<vmem>>, vector<1x128xf32>
    %20 = vector.broadcast %19 : vector<1x128xf32> to vector<8x128xf32>
    %21 = arith.mulf %18, %20 : vector<8x128xf32>
    %c0_17 = arith.constant 0 : index
    %c0_18 = arith.constant 0 : index
    %22 = vector.load %arg10[%c0_17, %c0_18] : memref<1x128xf32, #tpu.memory_space<vmem>>, vector<1x128xf32>
    %23 = vector.broadcast %22 : vector<1x128xf32> to vector<8x128xf32>
    %24 = arith.addf %21, %23 : vector<8x128xf32>
    %cst_19 = arith.constant 0.000000e+00 : f32
    %25 = vector.broadcast %cst_19 : f32 to vector<8x128xf32>
    %26 = arith.maximumf %24, %25 : vector<8x128xf32>
    %c0_20 = arith.constant 0 : index
    %c0_21 = arith.constant 0 : index
    %27 = vector.load %arg11[%c0_20, %c0_21] : memref<128x128xf32, #tpu.memory_space<vmem>>, vector<128x128xf32>
    %cst_22 = arith.constant dense<0.000000e+00> : vector<8x128xf32>
    %28 = tpu.matmul %26, %27, %cst_22 {dimension_numbers = #tpu.dot_dimension_numbers<[1], [0], [0], [1], [0, 0, 1, 1], [], []>} : vector<8x128xf32>, vector<128x128xf32>, vector<8x128xf32> -> vector<8x128xf32>
    %c0_23 = arith.constant 0 : index
    %c0_24 = arith.constant 0 : index
    %29 = vector.load %arg12[%c0_23, %c0_24] : memref<1x128xf32, #tpu.memory_space<vmem>>, vector<1x128xf32>
    %30 = vector.broadcast %29 : vector<1x128xf32> to vector<8x128xf32>
    %31 = arith.addf %28, %30 : vector<8x128xf32>
    %cst_25 = arith.constant dense<0.000000e+00> : vector<128xf32>
    %32 = vector.multi_reduction <add>, %31, %cst_25 [0] : vector<8x128xf32> to vector<128xf32>
    %33 = vector.shape_cast %32 : vector<128xf32> to vector<1x128xf32>
    %34 = arith.mulf %31, %31 : vector<8x128xf32>
    %cst_26 = arith.constant dense<0.000000e+00> : vector<128xf32>
    %35 = vector.multi_reduction <add>, %34, %cst_26 [0] : vector<8x128xf32> to vector<128xf32>
    %36 = vector.shape_cast %35 : vector<128xf32> to vector<1x128xf32>
    %37 = tpu.concatenate %33, %36 in 0 : vector<1x128xf32>, vector<1x128xf32> -> vector<2x128xf32>
    %c0_27 = arith.constant 0 : index
    %c0_28 = arith.constant 0 : index
    %c0_29 = arith.constant 0 : index
    %38 = vector.load %arg14[%c0_27, %c0_28, %c0_29] : memref<1x2x128xf32, #tpu.memory_space<vmem>>, vector<1x2x128xf32>
    %39 = vector.shape_cast %38 : vector<1x2x128xf32> to vector<2x128xf32>
    %40 = vector.shape_cast %37 : vector<2x128xf32> to vector<1x2x128xf32>
    tpu.vector_store %arg14[%c0_27, %c0_28, %c0_29], %40 {strides = array<i32>} : memref<1x2x128xf32, #tpu.memory_space<vmem>>, vector<1x2x128xf32>,
    %c0_i32 = arith.constant 0 : i32
    %41 = arith.cmpi eq, %arg0, %c0_i32 : i32
    %42 = arith.extui %41 : i1 to i32
    %c0_i32_30 = arith.constant 0 : i32
    %43 = arith.cmpi ne, %42, %c0_i32_30 : i32
    scf.if %43 {
      %44 = tpu.iota {dimensions = array<i32: 0>} : vector<8x128xi32>
      %c8_i32 = arith.constant 8 : i32
      %45 = arith.muli %arg0, %c8_i32 : i32
      %46 = vector.broadcast %45 : i32 to vector<8x128xi32>
      %47 = arith.addi %46, %44 : vector<8x128xi32>
      %c4_i32 = arith.constant 4 : i32
      %48 = vector.broadcast %c4_i32 : i32 to vector<8x128xi32>
      %49 = arith.muli %47, %48 : vector<8x128xi32>
      %c0_31 = arith.constant 0 : index
      %c0_32 = arith.constant 0 : index
      %50 = vector.load %arg13[%c0_31, %c0_32] : memref<1x128xi32, #tpu.memory_space<vmem>>, vector<1x128xi32>
      %51 = vector.broadcast %50 : vector<1x128xi32> to vector<8x128xi32>
      %52 = arith.addi %49, %51 : vector<8x128xi32>
      %c0_33 = arith.constant 0 : index
      %53 = memref.load %arg1[%c0_33] : memref<1xi32, #tpu.memory_space<smem>>
      %54 = vector.broadcast %53 : i32 to vector<8x128xi32>
      %55 = arith.cmpi slt, %52, %54 : vector<8x128xi32>
      %cst_34 = arith.constant 0.000000e+00 : f32
      %56 = vector.broadcast %cst_34 : f32 to vector<8x128xf32>
      %57 = arith.select %55, %31, %56 : vector<8x128xi1>, vector<8x128xf32>
      %cst_35 = arith.constant dense<0.000000e+00> : vector<128xf32>
      %58 = vector.multi_reduction <add>, %57, %cst_35 [0] : vector<8x128xf32> to vector<128xf32>
      %59 = vector.shape_cast %58 : vector<128xf32> to vector<1x128xf32>
      %60 = arith.mulf %57, %57 : vector<8x128xf32>
      %cst_36 = arith.constant dense<0.000000e+00> : vector<128xf32>
      %61 = vector.multi_reduction <add>, %60, %cst_36 [0] : vector<8x128xf32> to vector<128xf32>
      %62 = vector.shape_cast %61 : vector<128xf32> to vector<1x128xf32>
      %63 = tpu.concatenate %59, %62 in 0 : vector<1x128xf32>, vector<1x128xf32> -> vector<2x128xf32>
      %c0_37 = arith.constant 0 : index
      %c0_38 = arith.constant 0 : index
      %c0_39 = arith.constant 0 : index
      %64 = vector.load %arg14[%c0_37, %c0_38, %c0_39] : memref<1x2x128xf32, #tpu.memory_space<vmem>>, vector<1x2x128xf32>
      %65 = vector.shape_cast %64 : vector<1x2x128xf32> to vector<2x128xf32>
      %66 = vector.shape_cast %63 : vector<2x128xf32> to vector<1x2x128xf32>
      tpu.vector_store %arg14[%c0_37, %c0_38, %c0_39], %66 {strides = array<i32>} : memref<1x2x128xf32, #tpu.memory_space<vmem>>, vector<1x2x128xf32>,
    } else {
    }
    return
  }
  func.func @transform_0(%arg0: i32) -> i32 {
    %c0_i32 = arith.constant 0 : i32
    %c0_i32_0 = arith.constant 0 : i32
    return %c0_i32 : i32
  }
  func.func @transform_1(%arg0: i32) -> (i32, i32) {
    %c0_i32 = arith.constant 0 : i32
    %c0_i32_0 = arith.constant 0 : i32
    return %arg0, %c0_i32 : i32, i32
  }
  func.func @transform_2(%arg0: i32) -> (i32, i32) {
    %c0_i32 = arith.constant 0 : i32
    %c0_i32_0 = arith.constant 0 : i32
    %c0_i32_1 = arith.constant 0 : i32
    return %c0_i32, %c0_i32_0 : i32, i32
  }
  func.func @transform_3(%arg0: i32) -> (i32, i32) {
    %c0_i32 = arith.constant 0 : i32
    %c0_i32_0 = arith.constant 0 : i32
    %c0_i32_1 = arith.constant 0 : i32
    return %c0_i32, %c0_i32_0 : i32, i32
  }
  func.func @transform_4(%arg0: i32) -> (i32, i32) {
    %c0_i32 = arith.constant 0 : i32
    %c0_i32_0 = arith.constant 0 : i32
    %c0_i32_1 = arith.constant 0 : i32
    return %c0_i32, %c0_i32_0 : i32, i32
  }
  func.func @transform_5(%arg0: i32) -> (i32, i32) {
    %c0_i32 = arith.constant 0 : i32
    %c0_i32_0 = arith.constant 0 : i32
    %c0_i32_1 = arith.constant 0 : i32
    return %c0_i32, %c0_i32_0 : i32, i32
  }
  func.func @transform_6(%arg0: i32) -> (i32, i32) {
    %c0_i32 = arith.constant 0 : i32
    %c0_i32_0 = arith.constant 0 : i32
    %c0_i32_1 = arith.constant 0 : i32
    return %c0_i32, %c0_i32_0 : i32, i32
  }
  func.func @transform_7(%arg0: i32) -> (i32, i32) {
    %c0_i32 = arith.constant 0 : i32
    %c0_i32_0 = arith.constant 0 : i32
    %c0_i32_1 = arith.constant 0 : i32
    return %c0_i32, %c0_i32_0 : i32, i32
  }
  func.func @transform_8(%arg0: i32) -> (i32, i32) {
    %c0_i32 = arith.constant 0 : i32
    %c0_i32_0 = arith.constant 0 : i32
    %c0_i32_1 = arith.constant 0 : i32
    return %c0_i32, %c0_i32_0 : i32, i32
  }
  func.func @transform_9(%arg0: i32) -> (i32, i32) {
    %c0_i32 = arith.constant 0 : i32
    %c0_i32_0 = arith.constant 0 : i32
    %c0_i32_1 = arith.constant 0 : i32
    return %c0_i32, %c0_i32_0 : i32, i32
  }
  func.func @transform_10(%arg0: i32) -> (i32, i32) {
    %c0_i32 = arith.constant 0 : i32
    %c0_i32_0 = arith.constant 0 : i32
    %c0_i32_1 = arith.constant 0 : i32
    return %c0_i32, %c0_i32_0 : i32, i32
  }
  func.func @transform_11(%arg0: i32) -> (i32, i32) {
    %c0_i32 = arith.constant 0 : i32
    %c0_i32_0 = arith.constant 0 : i32
    %c0_i32_1 = arith.constant 0 : i32
    return %c0_i32, %c0_i32_0 : i32, i32
  }
  func.func @transform_12(%arg0: i32) -> (i32, i32) {
    %c0_i32 = arith.constant 0 : i32
    %c0_i32_0 = arith.constant 0 : i32
    %c0_i32_1 = arith.constant 0 : i32
    return %c0_i32, %c0_i32_0 : i32, i32
  }
  func.func @transform_13(%arg0: i32) -> (i32, i32, i32) {
    %c0_i32 = arith.constant 0 : i32
    %c0_i32_0 = arith.constant 0 : i32
    %c0_i32_1 = arith.constant 0 : i32
    return %arg0, %c0_i32, %c0_i32_0 : i32, i32, i32
  }
}

module attributes {stable_mosaic.version = 11 : i64} {
  func.func @_trunk_pass_kernel(%arg0: i32, %arg1: memref<1xi32, #tpu.memory_space<smem>>, %arg2: memref<8x12xf32, #tpu.memory_space<vmem>>, %arg3: memref<12x128xf32, #tpu.memory_space<vmem>>, %arg4: memref<1x128xf32, #tpu.memory_space<vmem>>, %arg5: memref<1x128xf32, #tpu.memory_space<vmem>>, %arg6: memref<1x128xf32, #tpu.memory_space<vmem>>, %arg7: memref<128x128xf32, #tpu.memory_space<vmem>>, %arg8: memref<1x128xf32, #tpu.memory_space<vmem>>, %arg9: memref<1x128xf32, #tpu.memory_space<vmem>>, %arg10: memref<1x128xf32, #tpu.memory_space<vmem>>, %arg11: memref<128x128xf32, #tpu.memory_space<vmem>>, %arg12: memref<1x128xf32, #tpu.memory_space<vmem>>, %arg13: memref<1x128xf32, #tpu.memory_space<vmem>>, %arg14: memref<1x128xf32, #tpu.memory_space<vmem>>, %arg15: memref<128x128xf32, #tpu.memory_space<vmem>>, %arg16: memref<1x128xf32, #tpu.memory_space<vmem>>, %arg17: memref<1x128xf32, #tpu.memory_space<vmem>>, %arg18: memref<1x128xf32, #tpu.memory_space<vmem>>, %arg19: memref<128x128xf32, #tpu.memory_space<vmem>>, %arg20: memref<1x128xf32, #tpu.memory_space<vmem>>, %arg21: memref<1x128xi32, #tpu.memory_space<vmem>>, %arg22: memref<1x2x128xf32, #tpu.memory_space<vmem>>) attributes {dimension_semantics = [#tpu.dimension_semantics<parallel>], iteration_bounds = array<i64: 1>, scalar_prefetch = 0 : i64, scratch_operands = 0 : i64, tpu.core_type = #tpu.core_type<tc>, window_params = [{transform_indices = @transform_0, window_bounds = array<i64: 1>}, {transform_indices = @transform_1, window_bounds = array<i64: 8, 12>}, {pipeline_mode = #tpu.pipeline_mode<synchronous>, transform_indices = @transform_2, window_bounds = array<i64: 12, 128>}, {pipeline_mode = #tpu.pipeline_mode<synchronous>, transform_indices = @transform_3, window_bounds = array<i64: 1, 128>}, {pipeline_mode = #tpu.pipeline_mode<synchronous>, transform_indices = @transform_4, window_bounds = array<i64: 1, 128>}, {pipeline_mode = #tpu.pipeline_mode<synchronous>, transform_indices = @transform_5, window_bounds = array<i64: 1, 128>}, {pipeline_mode = #tpu.pipeline_mode<synchronous>, transform_indices = @transform_6, window_bounds = array<i64: 128, 128>}, {pipeline_mode = #tpu.pipeline_mode<synchronous>, transform_indices = @transform_7, window_bounds = array<i64: 1, 128>}, {pipeline_mode = #tpu.pipeline_mode<synchronous>, transform_indices = @transform_8, window_bounds = array<i64: 1, 128>}, {pipeline_mode = #tpu.pipeline_mode<synchronous>, transform_indices = @transform_9, window_bounds = array<i64: 1, 128>}, {pipeline_mode = #tpu.pipeline_mode<synchronous>, transform_indices = @transform_10, window_bounds = array<i64: 128, 128>}, {pipeline_mode = #tpu.pipeline_mode<synchronous>, transform_indices = @transform_11, window_bounds = array<i64: 1, 128>}, {pipeline_mode = #tpu.pipeline_mode<synchronous>, transform_indices = @transform_12, window_bounds = array<i64: 1, 128>}, {pipeline_mode = #tpu.pipeline_mode<synchronous>, transform_indices = @transform_13, window_bounds = array<i64: 1, 128>}, {pipeline_mode = #tpu.pipeline_mode<synchronous>, transform_indices = @transform_14, window_bounds = array<i64: 128, 128>}, {pipeline_mode = #tpu.pipeline_mode<synchronous>, transform_indices = @transform_15, window_bounds = array<i64: 1, 128>}, {pipeline_mode = #tpu.pipeline_mode<synchronous>, transform_indices = @transform_16, window_bounds = array<i64: 1, 128>}, {pipeline_mode = #tpu.pipeline_mode<synchronous>, transform_indices = @transform_17, window_bounds = array<i64: 1, 128>}, {pipeline_mode = #tpu.pipeline_mode<synchronous>, transform_indices = @transform_18, window_bounds = array<i64: 128, 128>}, {pipeline_mode = #tpu.pipeline_mode<synchronous>, transform_indices = @transform_19, window_bounds = array<i64: 1, 128>}, {pipeline_mode = #tpu.pipeline_mode<synchronous>, transform_indices = @transform_20, window_bounds = array<i64: 1, 128>}, {transform_indices = @transform_21, window_bounds = array<i64: 1, 2, 128>}]} {
    %c0 = arith.constant 0 : index
    %c0_0 = arith.constant 0 : index
    %0 = vector.load %arg2[%c0, %c0_0] : memref<8x12xf32, #tpu.memory_space<vmem>>, vector<8x12xf32>
    %c0_1 = arith.constant 0 : index
    %c0_2 = arith.constant 0 : index
    %1 = vector.load %arg3[%c0_1, %c0_2] : memref<12x128xf32, #tpu.memory_space<vmem>>, vector<12x128xf32>
    %cst = arith.constant dense<0.000000e+00> : vector<8x128xf32>
    %2 = tpu.matmul %0, %1, %cst {dimension_numbers = #tpu.dot_dimension_numbers<[1], [0], [0], [1], [0, 0, 1, 1], [], []>} : vector<8x12xf32>, vector<12x128xf32>, vector<8x128xf32> -> vector<8x128xf32>
    %c0_3 = arith.constant 0 : index
    %c0_4 = arith.constant 0 : index
    %3 = vector.load %arg4[%c0_3, %c0_4] : memref<1x128xf32, #tpu.memory_space<vmem>>, vector<1x128xf32>
    %4 = vector.broadcast %3 : vector<1x128xf32> to vector<8x128xf32>
    %5 = arith.addf %2, %4 : vector<8x128xf32>
    %c0_5 = arith.constant 0 : index
    %c0_6 = arith.constant 0 : index
    %6 = vector.load %arg5[%c0_5, %c0_6] : memref<1x128xf32, #tpu.memory_space<vmem>>, vector<1x128xf32>
    %7 = vector.broadcast %6 : vector<1x128xf32> to vector<8x128xf32>
    %8 = arith.mulf %5, %7 : vector<8x128xf32>
    %c0_7 = arith.constant 0 : index
    %c0_8 = arith.constant 0 : index
    %9 = vector.load %arg6[%c0_7, %c0_8] : memref<1x128xf32, #tpu.memory_space<vmem>>, vector<1x128xf32>
    %10 = vector.broadcast %9 : vector<1x128xf32> to vector<8x128xf32>
    %11 = arith.addf %8, %10 : vector<8x128xf32>
    %cst_9 = arith.constant 0.000000e+00 : f32
    %12 = vector.broadcast %cst_9 : f32 to vector<8x128xf32>
    %13 = arith.maximumf %11, %12 : vector<8x128xf32>
    %c0_10 = arith.constant 0 : index
    %c0_11 = arith.constant 0 : index
    %14 = vector.load %arg7[%c0_10, %c0_11] : memref<128x128xf32, #tpu.memory_space<vmem>>, vector<128x128xf32>
    %cst_12 = arith.constant dense<0.000000e+00> : vector<8x128xf32>
    %15 = tpu.matmul %13, %14, %cst_12 {dimension_numbers = #tpu.dot_dimension_numbers<[1], [0], [0], [1], [0, 0, 1, 1], [], []>} : vector<8x128xf32>, vector<128x128xf32>, vector<8x128xf32> -> vector<8x128xf32>
    %c0_13 = arith.constant 0 : index
    %c0_14 = arith.constant 0 : index
    %16 = vector.load %arg8[%c0_13, %c0_14] : memref<1x128xf32, #tpu.memory_space<vmem>>, vector<1x128xf32>
    %17 = vector.broadcast %16 : vector<1x128xf32> to vector<8x128xf32>
    %18 = arith.addf %15, %17 : vector<8x128xf32>
    %c0_15 = arith.constant 0 : index
    %c0_16 = arith.constant 0 : index
    %19 = vector.load %arg9[%c0_15, %c0_16] : memref<1x128xf32, #tpu.memory_space<vmem>>, vector<1x128xf32>
    %20 = vector.broadcast %19 : vector<1x128xf32> to vector<8x128xf32>
    %21 = arith.mulf %18, %20 : vector<8x128xf32>
    %c0_17 = arith.constant 0 : index
    %c0_18 = arith.constant 0 : index
    %22 = vector.load %arg10[%c0_17, %c0_18] : memref<1x128xf32, #tpu.memory_space<vmem>>, vector<1x128xf32>
    %23 = vector.broadcast %22 : vector<1x128xf32> to vector<8x128xf32>
    %24 = arith.addf %21, %23 : vector<8x128xf32>
    %cst_19 = arith.constant 0.000000e+00 : f32
    %25 = vector.broadcast %cst_19 : f32 to vector<8x128xf32>
    %26 = arith.maximumf %24, %25 : vector<8x128xf32>
    %c0_20 = arith.constant 0 : index
    %c0_21 = arith.constant 0 : index
    %27 = vector.load %arg11[%c0_20, %c0_21] : memref<128x128xf32, #tpu.memory_space<vmem>>, vector<128x128xf32>
    %cst_22 = arith.constant dense<0.000000e+00> : vector<8x128xf32>
    %28 = tpu.matmul %26, %27, %cst_22 {dimension_numbers = #tpu.dot_dimension_numbers<[1], [0], [0], [1], [0, 0, 1, 1], [], []>} : vector<8x128xf32>, vector<128x128xf32>, vector<8x128xf32> -> vector<8x128xf32>
    %c0_23 = arith.constant 0 : index
    %c0_24 = arith.constant 0 : index
    %29 = vector.load %arg12[%c0_23, %c0_24] : memref<1x128xf32, #tpu.memory_space<vmem>>, vector<1x128xf32>
    %30 = vector.broadcast %29 : vector<1x128xf32> to vector<8x128xf32>
    %31 = arith.addf %28, %30 : vector<8x128xf32>
    %c0_25 = arith.constant 0 : index
    %c0_26 = arith.constant 0 : index
    %32 = vector.load %arg13[%c0_25, %c0_26] : memref<1x128xf32, #tpu.memory_space<vmem>>, vector<1x128xf32>
    %33 = vector.broadcast %32 : vector<1x128xf32> to vector<8x128xf32>
    %34 = arith.mulf %31, %33 : vector<8x128xf32>
    %c0_27 = arith.constant 0 : index
    %c0_28 = arith.constant 0 : index
    %35 = vector.load %arg14[%c0_27, %c0_28] : memref<1x128xf32, #tpu.memory_space<vmem>>, vector<1x128xf32>
    %36 = vector.broadcast %35 : vector<1x128xf32> to vector<8x128xf32>
    %37 = arith.addf %34, %36 : vector<8x128xf32>
    %cst_29 = arith.constant 0.000000e+00 : f32
    %38 = vector.broadcast %cst_29 : f32 to vector<8x128xf32>
    %39 = arith.maximumf %37, %38 : vector<8x128xf32>
    %c0_30 = arith.constant 0 : index
    %c0_31 = arith.constant 0 : index
    %40 = vector.load %arg15[%c0_30, %c0_31] : memref<128x128xf32, #tpu.memory_space<vmem>>, vector<128x128xf32>
    %cst_32 = arith.constant dense<0.000000e+00> : vector<8x128xf32>
    %41 = tpu.matmul %39, %40, %cst_32 {dimension_numbers = #tpu.dot_dimension_numbers<[1], [0], [0], [1], [0, 0, 1, 1], [], []>} : vector<8x128xf32>, vector<128x128xf32>, vector<8x128xf32> -> vector<8x128xf32>
    %c0_33 = arith.constant 0 : index
    %c0_34 = arith.constant 0 : index
    %42 = vector.load %arg16[%c0_33, %c0_34] : memref<1x128xf32, #tpu.memory_space<vmem>>, vector<1x128xf32>
    %43 = vector.broadcast %42 : vector<1x128xf32> to vector<8x128xf32>
    %44 = arith.addf %41, %43 : vector<8x128xf32>
    %c0_35 = arith.constant 0 : index
    %c0_36 = arith.constant 0 : index
    %45 = vector.load %arg17[%c0_35, %c0_36] : memref<1x128xf32, #tpu.memory_space<vmem>>, vector<1x128xf32>
    %46 = vector.broadcast %45 : vector<1x128xf32> to vector<8x128xf32>
    %47 = arith.mulf %44, %46 : vector<8x128xf32>
    %c0_37 = arith.constant 0 : index
    %c0_38 = arith.constant 0 : index
    %48 = vector.load %arg18[%c0_37, %c0_38] : memref<1x128xf32, #tpu.memory_space<vmem>>, vector<1x128xf32>
    %49 = vector.broadcast %48 : vector<1x128xf32> to vector<8x128xf32>
    %50 = arith.addf %47, %49 : vector<8x128xf32>
    %cst_39 = arith.constant 0.000000e+00 : f32
    %51 = vector.broadcast %cst_39 : f32 to vector<8x128xf32>
    %52 = arith.maximumf %50, %51 : vector<8x128xf32>
    %c0_40 = arith.constant 0 : index
    %c0_41 = arith.constant 0 : index
    %53 = vector.load %arg19[%c0_40, %c0_41] : memref<128x128xf32, #tpu.memory_space<vmem>>, vector<128x128xf32>
    %cst_42 = arith.constant dense<0.000000e+00> : vector<8x128xf32>
    %54 = tpu.matmul %52, %53, %cst_42 {dimension_numbers = #tpu.dot_dimension_numbers<[1], [0], [0], [1], [0, 0, 1, 1], [], []>} : vector<8x128xf32>, vector<128x128xf32>, vector<8x128xf32> -> vector<8x128xf32>
    %c0_43 = arith.constant 0 : index
    %c0_44 = arith.constant 0 : index
    %55 = vector.load %arg20[%c0_43, %c0_44] : memref<1x128xf32, #tpu.memory_space<vmem>>, vector<1x128xf32>
    %56 = vector.broadcast %55 : vector<1x128xf32> to vector<8x128xf32>
    %57 = arith.addf %54, %56 : vector<8x128xf32>
    %cst_45 = arith.constant dense<0.000000e+00> : vector<128xf32>
    %58 = vector.multi_reduction <add>, %57, %cst_45 [0] : vector<8x128xf32> to vector<128xf32>
    %59 = vector.shape_cast %58 : vector<128xf32> to vector<1x128xf32>
    %60 = arith.mulf %57, %57 : vector<8x128xf32>
    %cst_46 = arith.constant dense<0.000000e+00> : vector<128xf32>
    %61 = vector.multi_reduction <add>, %60, %cst_46 [0] : vector<8x128xf32> to vector<128xf32>
    %62 = vector.shape_cast %61 : vector<128xf32> to vector<1x128xf32>
    %63 = tpu.concatenate %59, %62 in 0 : vector<1x128xf32>, vector<1x128xf32> -> vector<2x128xf32>
    %c0_47 = arith.constant 0 : index
    %c0_48 = arith.constant 0 : index
    %c0_49 = arith.constant 0 : index
    %64 = vector.load %arg22[%c0_47, %c0_48, %c0_49] : memref<1x2x128xf32, #tpu.memory_space<vmem>>, vector<1x2x128xf32>
    %65 = vector.shape_cast %64 : vector<1x2x128xf32> to vector<2x128xf32>
    %66 = vector.shape_cast %63 : vector<2x128xf32> to vector<1x2x128xf32>
    tpu.vector_store %arg22[%c0_47, %c0_48, %c0_49], %66 {strides = array<i32>} : memref<1x2x128xf32, #tpu.memory_space<vmem>>, vector<1x2x128xf32>,
    %c0_i32 = arith.constant 0 : i32
    %67 = arith.cmpi eq, %arg0, %c0_i32 : i32
    %68 = arith.extui %67 : i1 to i32
    %c0_i32_50 = arith.constant 0 : i32
    %69 = arith.cmpi ne, %68, %c0_i32_50 : i32
    scf.if %69 {
      %70 = tpu.iota {dimensions = array<i32: 0>} : vector<8x128xi32>
      %c8_i32 = arith.constant 8 : i32
      %71 = arith.muli %arg0, %c8_i32 : i32
      %72 = vector.broadcast %71 : i32 to vector<8x128xi32>
      %73 = arith.addi %72, %70 : vector<8x128xi32>
      %c4_i32 = arith.constant 4 : i32
      %74 = vector.broadcast %c4_i32 : i32 to vector<8x128xi32>
      %75 = arith.muli %73, %74 : vector<8x128xi32>
      %c0_51 = arith.constant 0 : index
      %c0_52 = arith.constant 0 : index
      %76 = vector.load %arg21[%c0_51, %c0_52] : memref<1x128xi32, #tpu.memory_space<vmem>>, vector<1x128xi32>
      %77 = vector.broadcast %76 : vector<1x128xi32> to vector<8x128xi32>
      %78 = arith.addi %75, %77 : vector<8x128xi32>
      %c0_53 = arith.constant 0 : index
      %79 = memref.load %arg1[%c0_53] : memref<1xi32, #tpu.memory_space<smem>>
      %80 = vector.broadcast %79 : i32 to vector<8x128xi32>
      %81 = arith.cmpi slt, %78, %80 : vector<8x128xi32>
      %cst_54 = arith.constant 0.000000e+00 : f32
      %82 = vector.broadcast %cst_54 : f32 to vector<8x128xf32>
      %83 = arith.select %81, %57, %82 : vector<8x128xi1>, vector<8x128xf32>
      %cst_55 = arith.constant dense<0.000000e+00> : vector<128xf32>
      %84 = vector.multi_reduction <add>, %83, %cst_55 [0] : vector<8x128xf32> to vector<128xf32>
      %85 = vector.shape_cast %84 : vector<128xf32> to vector<1x128xf32>
      %86 = arith.mulf %83, %83 : vector<8x128xf32>
      %cst_56 = arith.constant dense<0.000000e+00> : vector<128xf32>
      %87 = vector.multi_reduction <add>, %86, %cst_56 [0] : vector<8x128xf32> to vector<128xf32>
      %88 = vector.shape_cast %87 : vector<128xf32> to vector<1x128xf32>
      %89 = tpu.concatenate %85, %88 in 0 : vector<1x128xf32>, vector<1x128xf32> -> vector<2x128xf32>
      %c0_57 = arith.constant 0 : index
      %c0_58 = arith.constant 0 : index
      %c0_59 = arith.constant 0 : index
      %90 = vector.load %arg22[%c0_57, %c0_58, %c0_59] : memref<1x2x128xf32, #tpu.memory_space<vmem>>, vector<1x2x128xf32>
      %91 = vector.shape_cast %90 : vector<1x2x128xf32> to vector<2x128xf32>
      %92 = vector.shape_cast %89 : vector<2x128xf32> to vector<1x2x128xf32>
      tpu.vector_store %arg22[%c0_57, %c0_58, %c0_59], %92 {strides = array<i32>} : memref<1x2x128xf32, #tpu.memory_space<vmem>>, vector<1x2x128xf32>,
    } else {
    }
    return
  }
  func.func @transform_0(%arg0: i32) -> i32 {
    %c0_i32 = arith.constant 0 : i32
    %c0_i32_0 = arith.constant 0 : i32
    return %c0_i32 : i32
  }
  func.func @transform_1(%arg0: i32) -> (i32, i32) {
    %c0_i32 = arith.constant 0 : i32
    %c0_i32_0 = arith.constant 0 : i32
    return %arg0, %c0_i32 : i32, i32
  }
  func.func @transform_2(%arg0: i32) -> (i32, i32) {
    %c0_i32 = arith.constant 0 : i32
    %c0_i32_0 = arith.constant 0 : i32
    %c0_i32_1 = arith.constant 0 : i32
    return %c0_i32, %c0_i32_0 : i32, i32
  }
  func.func @transform_3(%arg0: i32) -> (i32, i32) {
    %c0_i32 = arith.constant 0 : i32
    %c0_i32_0 = arith.constant 0 : i32
    %c0_i32_1 = arith.constant 0 : i32
    return %c0_i32, %c0_i32_0 : i32, i32
  }
  func.func @transform_4(%arg0: i32) -> (i32, i32) {
    %c0_i32 = arith.constant 0 : i32
    %c0_i32_0 = arith.constant 0 : i32
    %c0_i32_1 = arith.constant 0 : i32
    return %c0_i32, %c0_i32_0 : i32, i32
  }
  func.func @transform_5(%arg0: i32) -> (i32, i32) {
    %c0_i32 = arith.constant 0 : i32
    %c0_i32_0 = arith.constant 0 : i32
    %c0_i32_1 = arith.constant 0 : i32
    return %c0_i32, %c0_i32_0 : i32, i32
  }
  func.func @transform_6(%arg0: i32) -> (i32, i32) {
    %c0_i32 = arith.constant 0 : i32
    %c0_i32_0 = arith.constant 0 : i32
    %c0_i32_1 = arith.constant 0 : i32
    return %c0_i32, %c0_i32_0 : i32, i32
  }
  func.func @transform_7(%arg0: i32) -> (i32, i32) {
    %c0_i32 = arith.constant 0 : i32
    %c0_i32_0 = arith.constant 0 : i32
    %c0_i32_1 = arith.constant 0 : i32
    return %c0_i32, %c0_i32_0 : i32, i32
  }
  func.func @transform_8(%arg0: i32) -> (i32, i32) {
    %c0_i32 = arith.constant 0 : i32
    %c0_i32_0 = arith.constant 0 : i32
    %c0_i32_1 = arith.constant 0 : i32
    return %c0_i32, %c0_i32_0 : i32, i32
  }
  func.func @transform_9(%arg0: i32) -> (i32, i32) {
    %c0_i32 = arith.constant 0 : i32
    %c0_i32_0 = arith.constant 0 : i32
    %c0_i32_1 = arith.constant 0 : i32
    return %c0_i32, %c0_i32_0 : i32, i32
  }
  func.func @transform_10(%arg0: i32) -> (i32, i32) {
    %c0_i32 = arith.constant 0 : i32
    %c0_i32_0 = arith.constant 0 : i32
    %c0_i32_1 = arith.constant 0 : i32
    return %c0_i32, %c0_i32_0 : i32, i32
  }
  func.func @transform_11(%arg0: i32) -> (i32, i32) {
    %c0_i32 = arith.constant 0 : i32
    %c0_i32_0 = arith.constant 0 : i32
    %c0_i32_1 = arith.constant 0 : i32
    return %c0_i32, %c0_i32_0 : i32, i32
  }
  func.func @transform_12(%arg0: i32) -> (i32, i32) {
    %c0_i32 = arith.constant 0 : i32
    %c0_i32_0 = arith.constant 0 : i32
    %c0_i32_1 = arith.constant 0 : i32
    return %c0_i32, %c0_i32_0 : i32, i32
  }
  func.func @transform_13(%arg0: i32) -> (i32, i32) {
    %c0_i32 = arith.constant 0 : i32
    %c0_i32_0 = arith.constant 0 : i32
    %c0_i32_1 = arith.constant 0 : i32
    return %c0_i32, %c0_i32_0 : i32, i32
  }
  func.func @transform_14(%arg0: i32) -> (i32, i32) {
    %c0_i32 = arith.constant 0 : i32
    %c0_i32_0 = arith.constant 0 : i32
    %c0_i32_1 = arith.constant 0 : i32
    return %c0_i32, %c0_i32_0 : i32, i32
  }
  func.func @transform_15(%arg0: i32) -> (i32, i32) {
    %c0_i32 = arith.constant 0 : i32
    %c0_i32_0 = arith.constant 0 : i32
    %c0_i32_1 = arith.constant 0 : i32
    return %c0_i32, %c0_i32_0 : i32, i32
  }
  func.func @transform_16(%arg0: i32) -> (i32, i32) {
    %c0_i32 = arith.constant 0 : i32
    %c0_i32_0 = arith.constant 0 : i32
    %c0_i32_1 = arith.constant 0 : i32
    return %c0_i32, %c0_i32_0 : i32, i32
  }
  func.func @transform_17(%arg0: i32) -> (i32, i32) {
    %c0_i32 = arith.constant 0 : i32
    %c0_i32_0 = arith.constant 0 : i32
    %c0_i32_1 = arith.constant 0 : i32
    return %c0_i32, %c0_i32_0 : i32, i32
  }
  func.func @transform_18(%arg0: i32) -> (i32, i32) {
    %c0_i32 = arith.constant 0 : i32
    %c0_i32_0 = arith.constant 0 : i32
    %c0_i32_1 = arith.constant 0 : i32
    return %c0_i32, %c0_i32_0 : i32, i32
  }
  func.func @transform_19(%arg0: i32) -> (i32, i32) {
    %c0_i32 = arith.constant 0 : i32
    %c0_i32_0 = arith.constant 0 : i32
    %c0_i32_1 = arith.constant 0 : i32
    return %c0_i32, %c0_i32_0 : i32, i32
  }
  func.func @transform_20(%arg0: i32) -> (i32, i32) {
    %c0_i32 = arith.constant 0 : i32
    %c0_i32_0 = arith.constant 0 : i32
    %c0_i32_1 = arith.constant 0 : i32
    return %c0_i32, %c0_i32_0 : i32, i32
  }
  func.func @transform_21(%arg0: i32) -> (i32, i32, i32) {
    %c0_i32 = arith.constant 0 : i32
    %c0_i32_0 = arith.constant 0 : i32
    %c0_i32_1 = arith.constant 0 : i32
    return %arg0, %c0_i32, %c0_i32_0 : i32, i32, i32
  }
}

module attributes {stable_mosaic.version = 11 : i64} {
  func.func @_trunk_pass_kernel(%arg0: i32, %arg1: memref<1xi32, #tpu.memory_space<smem>>, %arg2: memref<8x12xf32, #tpu.memory_space<vmem>>, %arg3: memref<12x128xf32, #tpu.memory_space<vmem>>, %arg4: memref<1x128xf32, #tpu.memory_space<vmem>>, %arg5: memref<1x128xf32, #tpu.memory_space<vmem>>, %arg6: memref<1x128xf32, #tpu.memory_space<vmem>>, %arg7: memref<128x128xf32, #tpu.memory_space<vmem>>, %arg8: memref<1x128xf32, #tpu.memory_space<vmem>>, %arg9: memref<1x128xf32, #tpu.memory_space<vmem>>, %arg10: memref<1x128xf32, #tpu.memory_space<vmem>>, %arg11: memref<128x128xf32, #tpu.memory_space<vmem>>, %arg12: memref<1x128xf32, #tpu.memory_space<vmem>>, %arg13: memref<1x128xf32, #tpu.memory_space<vmem>>, %arg14: memref<1x128xf32, #tpu.memory_space<vmem>>, %arg15: memref<128x128xf32, #tpu.memory_space<vmem>>, %arg16: memref<1x128xf32, #tpu.memory_space<vmem>>, %arg17: memref<1x128xi32, #tpu.memory_space<vmem>>, %arg18: memref<1x2x128xf32, #tpu.memory_space<vmem>>) attributes {dimension_semantics = [#tpu.dimension_semantics<parallel>], iteration_bounds = array<i64: 1>, scalar_prefetch = 0 : i64, scratch_operands = 0 : i64, tpu.core_type = #tpu.core_type<tc>, window_params = [{transform_indices = @transform_0, window_bounds = array<i64: 1>}, {transform_indices = @transform_1, window_bounds = array<i64: 8, 12>}, {pipeline_mode = #tpu.pipeline_mode<synchronous>, transform_indices = @transform_2, window_bounds = array<i64: 12, 128>}, {pipeline_mode = #tpu.pipeline_mode<synchronous>, transform_indices = @transform_3, window_bounds = array<i64: 1, 128>}, {pipeline_mode = #tpu.pipeline_mode<synchronous>, transform_indices = @transform_4, window_bounds = array<i64: 1, 128>}, {pipeline_mode = #tpu.pipeline_mode<synchronous>, transform_indices = @transform_5, window_bounds = array<i64: 1, 128>}, {pipeline_mode = #tpu.pipeline_mode<synchronous>, transform_indices = @transform_6, window_bounds = array<i64: 128, 128>}, {pipeline_mode = #tpu.pipeline_mode<synchronous>, transform_indices = @transform_7, window_bounds = array<i64: 1, 128>}, {pipeline_mode = #tpu.pipeline_mode<synchronous>, transform_indices = @transform_8, window_bounds = array<i64: 1, 128>}, {pipeline_mode = #tpu.pipeline_mode<synchronous>, transform_indices = @transform_9, window_bounds = array<i64: 1, 128>}, {pipeline_mode = #tpu.pipeline_mode<synchronous>, transform_indices = @transform_10, window_bounds = array<i64: 128, 128>}, {pipeline_mode = #tpu.pipeline_mode<synchronous>, transform_indices = @transform_11, window_bounds = array<i64: 1, 128>}, {pipeline_mode = #tpu.pipeline_mode<synchronous>, transform_indices = @transform_12, window_bounds = array<i64: 1, 128>}, {pipeline_mode = #tpu.pipeline_mode<synchronous>, transform_indices = @transform_13, window_bounds = array<i64: 1, 128>}, {pipeline_mode = #tpu.pipeline_mode<synchronous>, transform_indices = @transform_14, window_bounds = array<i64: 128, 128>}, {pipeline_mode = #tpu.pipeline_mode<synchronous>, transform_indices = @transform_15, window_bounds = array<i64: 1, 128>}, {pipeline_mode = #tpu.pipeline_mode<synchronous>, transform_indices = @transform_16, window_bounds = array<i64: 1, 128>}, {transform_indices = @transform_17, window_bounds = array<i64: 1, 2, 128>}]} {
    %c0 = arith.constant 0 : index
    %c0_0 = arith.constant 0 : index
    %0 = vector.load %arg2[%c0, %c0_0] : memref<8x12xf32, #tpu.memory_space<vmem>>, vector<8x12xf32>
    %c0_1 = arith.constant 0 : index
    %c0_2 = arith.constant 0 : index
    %1 = vector.load %arg3[%c0_1, %c0_2] : memref<12x128xf32, #tpu.memory_space<vmem>>, vector<12x128xf32>
    %cst = arith.constant dense<0.000000e+00> : vector<8x128xf32>
    %2 = tpu.matmul %0, %1, %cst {dimension_numbers = #tpu.dot_dimension_numbers<[1], [0], [0], [1], [0, 0, 1, 1], [], []>} : vector<8x12xf32>, vector<12x128xf32>, vector<8x128xf32> -> vector<8x128xf32>
    %c0_3 = arith.constant 0 : index
    %c0_4 = arith.constant 0 : index
    %3 = vector.load %arg4[%c0_3, %c0_4] : memref<1x128xf32, #tpu.memory_space<vmem>>, vector<1x128xf32>
    %4 = vector.broadcast %3 : vector<1x128xf32> to vector<8x128xf32>
    %5 = arith.addf %2, %4 : vector<8x128xf32>
    %c0_5 = arith.constant 0 : index
    %c0_6 = arith.constant 0 : index
    %6 = vector.load %arg5[%c0_5, %c0_6] : memref<1x128xf32, #tpu.memory_space<vmem>>, vector<1x128xf32>
    %7 = vector.broadcast %6 : vector<1x128xf32> to vector<8x128xf32>
    %8 = arith.mulf %5, %7 : vector<8x128xf32>
    %c0_7 = arith.constant 0 : index
    %c0_8 = arith.constant 0 : index
    %9 = vector.load %arg6[%c0_7, %c0_8] : memref<1x128xf32, #tpu.memory_space<vmem>>, vector<1x128xf32>
    %10 = vector.broadcast %9 : vector<1x128xf32> to vector<8x128xf32>
    %11 = arith.addf %8, %10 : vector<8x128xf32>
    %cst_9 = arith.constant 0.000000e+00 : f32
    %12 = vector.broadcast %cst_9 : f32 to vector<8x128xf32>
    %13 = arith.maximumf %11, %12 : vector<8x128xf32>
    %c0_10 = arith.constant 0 : index
    %c0_11 = arith.constant 0 : index
    %14 = vector.load %arg7[%c0_10, %c0_11] : memref<128x128xf32, #tpu.memory_space<vmem>>, vector<128x128xf32>
    %cst_12 = arith.constant dense<0.000000e+00> : vector<8x128xf32>
    %15 = tpu.matmul %13, %14, %cst_12 {dimension_numbers = #tpu.dot_dimension_numbers<[1], [0], [0], [1], [0, 0, 1, 1], [], []>} : vector<8x128xf32>, vector<128x128xf32>, vector<8x128xf32> -> vector<8x128xf32>
    %c0_13 = arith.constant 0 : index
    %c0_14 = arith.constant 0 : index
    %16 = vector.load %arg8[%c0_13, %c0_14] : memref<1x128xf32, #tpu.memory_space<vmem>>, vector<1x128xf32>
    %17 = vector.broadcast %16 : vector<1x128xf32> to vector<8x128xf32>
    %18 = arith.addf %15, %17 : vector<8x128xf32>
    %c0_15 = arith.constant 0 : index
    %c0_16 = arith.constant 0 : index
    %19 = vector.load %arg9[%c0_15, %c0_16] : memref<1x128xf32, #tpu.memory_space<vmem>>, vector<1x128xf32>
    %20 = vector.broadcast %19 : vector<1x128xf32> to vector<8x128xf32>
    %21 = arith.mulf %18, %20 : vector<8x128xf32>
    %c0_17 = arith.constant 0 : index
    %c0_18 = arith.constant 0 : index
    %22 = vector.load %arg10[%c0_17, %c0_18] : memref<1x128xf32, #tpu.memory_space<vmem>>, vector<1x128xf32>
    %23 = vector.broadcast %22 : vector<1x128xf32> to vector<8x128xf32>
    %24 = arith.addf %21, %23 : vector<8x128xf32>
    %cst_19 = arith.constant 0.000000e+00 : f32
    %25 = vector.broadcast %cst_19 : f32 to vector<8x128xf32>
    %26 = arith.maximumf %24, %25 : vector<8x128xf32>
    %c0_20 = arith.constant 0 : index
    %c0_21 = arith.constant 0 : index
    %27 = vector.load %arg11[%c0_20, %c0_21] : memref<128x128xf32, #tpu.memory_space<vmem>>, vector<128x128xf32>
    %cst_22 = arith.constant dense<0.000000e+00> : vector<8x128xf32>
    %28 = tpu.matmul %26, %27, %cst_22 {dimension_numbers = #tpu.dot_dimension_numbers<[1], [0], [0], [1], [0, 0, 1, 1], [], []>} : vector<8x128xf32>, vector<128x128xf32>, vector<8x128xf32> -> vector<8x128xf32>
    %c0_23 = arith.constant 0 : index
    %c0_24 = arith.constant 0 : index
    %29 = vector.load %arg12[%c0_23, %c0_24] : memref<1x128xf32, #tpu.memory_space<vmem>>, vector<1x128xf32>
    %30 = vector.broadcast %29 : vector<1x128xf32> to vector<8x128xf32>
    %31 = arith.addf %28, %30 : vector<8x128xf32>
    %c0_25 = arith.constant 0 : index
    %c0_26 = arith.constant 0 : index
    %32 = vector.load %arg13[%c0_25, %c0_26] : memref<1x128xf32, #tpu.memory_space<vmem>>, vector<1x128xf32>
    %33 = vector.broadcast %32 : vector<1x128xf32> to vector<8x128xf32>
    %34 = arith.mulf %31, %33 : vector<8x128xf32>
    %c0_27 = arith.constant 0 : index
    %c0_28 = arith.constant 0 : index
    %35 = vector.load %arg14[%c0_27, %c0_28] : memref<1x128xf32, #tpu.memory_space<vmem>>, vector<1x128xf32>
    %36 = vector.broadcast %35 : vector<1x128xf32> to vector<8x128xf32>
    %37 = arith.addf %34, %36 : vector<8x128xf32>
    %cst_29 = arith.constant 0.000000e+00 : f32
    %38 = vector.broadcast %cst_29 : f32 to vector<8x128xf32>
    %39 = arith.maximumf %37, %38 : vector<8x128xf32>
    %c0_30 = arith.constant 0 : index
    %c0_31 = arith.constant 0 : index
    %40 = vector.load %arg15[%c0_30, %c0_31] : memref<128x128xf32, #tpu.memory_space<vmem>>, vector<128x128xf32>
    %cst_32 = arith.constant dense<0.000000e+00> : vector<8x128xf32>
    %41 = tpu.matmul %39, %40, %cst_32 {dimension_numbers = #tpu.dot_dimension_numbers<[1], [0], [0], [1], [0, 0, 1, 1], [], []>} : vector<8x128xf32>, vector<128x128xf32>, vector<8x128xf32> -> vector<8x128xf32>
    %c0_33 = arith.constant 0 : index
    %c0_34 = arith.constant 0 : index
    %42 = vector.load %arg16[%c0_33, %c0_34] : memref<1x128xf32, #tpu.memory_space<vmem>>, vector<1x128xf32>
    %43 = vector.broadcast %42 : vector<1x128xf32> to vector<8x128xf32>
    %44 = arith.addf %41, %43 : vector<8x128xf32>
    %cst_35 = arith.constant dense<0.000000e+00> : vector<128xf32>
    %45 = vector.multi_reduction <add>, %44, %cst_35 [0] : vector<8x128xf32> to vector<128xf32>
    %46 = vector.shape_cast %45 : vector<128xf32> to vector<1x128xf32>
    %47 = arith.mulf %44, %44 : vector<8x128xf32>
    %cst_36 = arith.constant dense<0.000000e+00> : vector<128xf32>
    %48 = vector.multi_reduction <add>, %47, %cst_36 [0] : vector<8x128xf32> to vector<128xf32>
    %49 = vector.shape_cast %48 : vector<128xf32> to vector<1x128xf32>
    %50 = tpu.concatenate %46, %49 in 0 : vector<1x128xf32>, vector<1x128xf32> -> vector<2x128xf32>
    %c0_37 = arith.constant 0 : index
    %c0_38 = arith.constant 0 : index
    %c0_39 = arith.constant 0 : index
    %51 = vector.load %arg18[%c0_37, %c0_38, %c0_39] : memref<1x2x128xf32, #tpu.memory_space<vmem>>, vector<1x2x128xf32>
    %52 = vector.shape_cast %51 : vector<1x2x128xf32> to vector<2x128xf32>
    %53 = vector.shape_cast %50 : vector<2x128xf32> to vector<1x2x128xf32>
    tpu.vector_store %arg18[%c0_37, %c0_38, %c0_39], %53 {strides = array<i32>} : memref<1x2x128xf32, #tpu.memory_space<vmem>>, vector<1x2x128xf32>,
    %c0_i32 = arith.constant 0 : i32
    %54 = arith.cmpi eq, %arg0, %c0_i32 : i32
    %55 = arith.extui %54 : i1 to i32
    %c0_i32_40 = arith.constant 0 : i32
    %56 = arith.cmpi ne, %55, %c0_i32_40 : i32
    scf.if %56 {
      %57 = tpu.iota {dimensions = array<i32: 0>} : vector<8x128xi32>
      %c8_i32 = arith.constant 8 : i32
      %58 = arith.muli %arg0, %c8_i32 : i32
      %59 = vector.broadcast %58 : i32 to vector<8x128xi32>
      %60 = arith.addi %59, %57 : vector<8x128xi32>
      %c4_i32 = arith.constant 4 : i32
      %61 = vector.broadcast %c4_i32 : i32 to vector<8x128xi32>
      %62 = arith.muli %60, %61 : vector<8x128xi32>
      %c0_41 = arith.constant 0 : index
      %c0_42 = arith.constant 0 : index
      %63 = vector.load %arg17[%c0_41, %c0_42] : memref<1x128xi32, #tpu.memory_space<vmem>>, vector<1x128xi32>
      %64 = vector.broadcast %63 : vector<1x128xi32> to vector<8x128xi32>
      %65 = arith.addi %62, %64 : vector<8x128xi32>
      %c0_43 = arith.constant 0 : index
      %66 = memref.load %arg1[%c0_43] : memref<1xi32, #tpu.memory_space<smem>>
      %67 = vector.broadcast %66 : i32 to vector<8x128xi32>
      %68 = arith.cmpi slt, %65, %67 : vector<8x128xi32>
      %cst_44 = arith.constant 0.000000e+00 : f32
      %69 = vector.broadcast %cst_44 : f32 to vector<8x128xf32>
      %70 = arith.select %68, %44, %69 : vector<8x128xi1>, vector<8x128xf32>
      %cst_45 = arith.constant dense<0.000000e+00> : vector<128xf32>
      %71 = vector.multi_reduction <add>, %70, %cst_45 [0] : vector<8x128xf32> to vector<128xf32>
      %72 = vector.shape_cast %71 : vector<128xf32> to vector<1x128xf32>
      %73 = arith.mulf %70, %70 : vector<8x128xf32>
      %cst_46 = arith.constant dense<0.000000e+00> : vector<128xf32>
      %74 = vector.multi_reduction <add>, %73, %cst_46 [0] : vector<8x128xf32> to vector<128xf32>
      %75 = vector.shape_cast %74 : vector<128xf32> to vector<1x128xf32>
      %76 = tpu.concatenate %72, %75 in 0 : vector<1x128xf32>, vector<1x128xf32> -> vector<2x128xf32>
      %c0_47 = arith.constant 0 : index
      %c0_48 = arith.constant 0 : index
      %c0_49 = arith.constant 0 : index
      %77 = vector.load %arg18[%c0_47, %c0_48, %c0_49] : memref<1x2x128xf32, #tpu.memory_space<vmem>>, vector<1x2x128xf32>
      %78 = vector.shape_cast %77 : vector<1x2x128xf32> to vector<2x128xf32>
      %79 = vector.shape_cast %76 : vector<2x128xf32> to vector<1x2x128xf32>
      tpu.vector_store %arg18[%c0_47, %c0_48, %c0_49], %79 {strides = array<i32>} : memref<1x2x128xf32, #tpu.memory_space<vmem>>, vector<1x2x128xf32>,
    } else {
    }
    return
  }
  func.func @transform_0(%arg0: i32) -> i32 {
    %c0_i32 = arith.constant 0 : i32
    %c0_i32_0 = arith.constant 0 : i32
    return %c0_i32 : i32
  }
  func.func @transform_1(%arg0: i32) -> (i32, i32) {
    %c0_i32 = arith.constant 0 : i32
    %c0_i32_0 = arith.constant 0 : i32
    return %arg0, %c0_i32 : i32, i32
  }
  func.func @transform_2(%arg0: i32) -> (i32, i32) {
    %c0_i32 = arith.constant 0 : i32
    %c0_i32_0 = arith.constant 0 : i32
    %c0_i32_1 = arith.constant 0 : i32
    return %c0_i32, %c0_i32_0 : i32, i32
  }
  func.func @transform_3(%arg0: i32) -> (i32, i32) {
    %c0_i32 = arith.constant 0 : i32
    %c0_i32_0 = arith.constant 0 : i32
    %c0_i32_1 = arith.constant 0 : i32
    return %c0_i32, %c0_i32_0 : i32, i32
  }
  func.func @transform_4(%arg0: i32) -> (i32, i32) {
    %c0_i32 = arith.constant 0 : i32
    %c0_i32_0 = arith.constant 0 : i32
    %c0_i32_1 = arith.constant 0 : i32
    return %c0_i32, %c0_i32_0 : i32, i32
  }
  func.func @transform_5(%arg0: i32) -> (i32, i32) {
    %c0_i32 = arith.constant 0 : i32
    %c0_i32_0 = arith.constant 0 : i32
    %c0_i32_1 = arith.constant 0 : i32
    return %c0_i32, %c0_i32_0 : i32, i32
  }
  func.func @transform_6(%arg0: i32) -> (i32, i32) {
    %c0_i32 = arith.constant 0 : i32
    %c0_i32_0 = arith.constant 0 : i32
    %c0_i32_1 = arith.constant 0 : i32
    return %c0_i32, %c0_i32_0 : i32, i32
  }
  func.func @transform_7(%arg0: i32) -> (i32, i32) {
    %c0_i32 = arith.constant 0 : i32
    %c0_i32_0 = arith.constant 0 : i32
    %c0_i32_1 = arith.constant 0 : i32
    return %c0_i32, %c0_i32_0 : i32, i32
  }
  func.func @transform_8(%arg0: i32) -> (i32, i32) {
    %c0_i32 = arith.constant 0 : i32
    %c0_i32_0 = arith.constant 0 : i32
    %c0_i32_1 = arith.constant 0 : i32
    return %c0_i32, %c0_i32_0 : i32, i32
  }
  func.func @transform_9(%arg0: i32) -> (i32, i32) {
    %c0_i32 = arith.constant 0 : i32
    %c0_i32_0 = arith.constant 0 : i32
    %c0_i32_1 = arith.constant 0 : i32
    return %c0_i32, %c0_i32_0 : i32, i32
  }
  func.func @transform_10(%arg0: i32) -> (i32, i32) {
    %c0_i32 = arith.constant 0 : i32
    %c0_i32_0 = arith.constant 0 : i32
    %c0_i32_1 = arith.constant 0 : i32
    return %c0_i32, %c0_i32_0 : i32, i32
  }
  func.func @transform_11(%arg0: i32) -> (i32, i32) {
    %c0_i32 = arith.constant 0 : i32
    %c0_i32_0 = arith.constant 0 : i32
    %c0_i32_1 = arith.constant 0 : i32
    return %c0_i32, %c0_i32_0 : i32, i32
  }
  func.func @transform_12(%arg0: i32) -> (i32, i32) {
    %c0_i32 = arith.constant 0 : i32
    %c0_i32_0 = arith.constant 0 : i32
    %c0_i32_1 = arith.constant 0 : i32
    return %c0_i32, %c0_i32_0 : i32, i32
  }
  func.func @transform_13(%arg0: i32) -> (i32, i32) {
    %c0_i32 = arith.constant 0 : i32
    %c0_i32_0 = arith.constant 0 : i32
    %c0_i32_1 = arith.constant 0 : i32
    return %c0_i32, %c0_i32_0 : i32, i32
  }
  func.func @transform_14(%arg0: i32) -> (i32, i32) {
    %c0_i32 = arith.constant 0 : i32
    %c0_i32_0 = arith.constant 0 : i32
    %c0_i32_1 = arith.constant 0 : i32
    return %c0_i32, %c0_i32_0 : i32, i32
  }
  func.func @transform_15(%arg0: i32) -> (i32, i32) {
    %c0_i32 = arith.constant 0 : i32
    %c0_i32_0 = arith.constant 0 : i32
    %c0_i32_1 = arith.constant 0 : i32
    return %c0_i32, %c0_i32_0 : i32, i32
  }
  func.func @transform_16(%arg0: i32) -> (i32, i32) {
    %c0_i32 = arith.constant 0 : i32
    %c0_i32_0 = arith.constant 0 : i32
    %c0_i32_1 = arith.constant 0 : i32
    return %c0_i32, %c0_i32_0 : i32, i32
  }
  func.func @transform_17(%arg0: i32) -> (i32, i32, i32) {
    %c0_i32 = arith.constant 0 : i32
    %c0_i32_0 = arith.constant 0 : i32
    %c0_i32_1 = arith.constant 0 : i32
    return %arg0, %c0_i32, %c0_i32_0 : i32, i32, i32
  }
}

module attributes {stable_mosaic.version = 11 : i64} {
  func.func @_trunk_pass_kernel(%arg0: i32, %arg1: memref<1xi32, #tpu.memory_space<smem>>, %arg2: memref<8x12xf32, #tpu.memory_space<vmem>>, %arg3: memref<12x128xf32, #tpu.memory_space<vmem>>, %arg4: memref<1x128xf32, #tpu.memory_space<vmem>>, %arg5: memref<1x128xf32, #tpu.memory_space<vmem>>, %arg6: memref<1x128xf32, #tpu.memory_space<vmem>>, %arg7: memref<128x128xf32, #tpu.memory_space<vmem>>, %arg8: memref<1x128xf32, #tpu.memory_space<vmem>>, %arg9: memref<1x128xf32, #tpu.memory_space<vmem>>, %arg10: memref<1x128xf32, #tpu.memory_space<vmem>>, %arg11: memref<128x128xf32, #tpu.memory_space<vmem>>, %arg12: memref<1x128xf32, #tpu.memory_space<vmem>>, %arg13: memref<1x128xf32, #tpu.memory_space<vmem>>, %arg14: memref<1x128xf32, #tpu.memory_space<vmem>>, %arg15: memref<128x128xf32, #tpu.memory_space<vmem>>, %arg16: memref<1x128xf32, #tpu.memory_space<vmem>>, %arg17: memref<1x128xf32, #tpu.memory_space<vmem>>, %arg18: memref<1x128xf32, #tpu.memory_space<vmem>>, %arg19: memref<128x128xf32, #tpu.memory_space<vmem>>, %arg20: memref<1x128xf32, #tpu.memory_space<vmem>>, %arg21: memref<1x128xf32, #tpu.memory_space<vmem>>, %arg22: memref<1x128xf32, #tpu.memory_space<vmem>>, %arg23: memref<128x128xf32, #tpu.memory_space<vmem>>, %arg24: memref<1x128xf32, #tpu.memory_space<vmem>>, %arg25: memref<1x128xi32, #tpu.memory_space<vmem>>, %arg26: memref<1x2x128xf32, #tpu.memory_space<vmem>>) attributes {dimension_semantics = [#tpu.dimension_semantics<parallel>], iteration_bounds = array<i64: 1>, scalar_prefetch = 0 : i64, scratch_operands = 0 : i64, tpu.core_type = #tpu.core_type<tc>, window_params = [{transform_indices = @transform_0, window_bounds = array<i64: 1>}, {transform_indices = @transform_1, window_bounds = array<i64: 8, 12>}, {pipeline_mode = #tpu.pipeline_mode<synchronous>, transform_indices = @transform_2, window_bounds = array<i64: 12, 128>}, {pipeline_mode = #tpu.pipeline_mode<synchronous>, transform_indices = @transform_3, window_bounds = array<i64: 1, 128>}, {pipeline_mode = #tpu.pipeline_mode<synchronous>, transform_indices = @transform_4, window_bounds = array<i64: 1, 128>}, {pipeline_mode = #tpu.pipeline_mode<synchronous>, transform_indices = @transform_5, window_bounds = array<i64: 1, 128>}, {pipeline_mode = #tpu.pipeline_mode<synchronous>, transform_indices = @transform_6, window_bounds = array<i64: 128, 128>}, {pipeline_mode = #tpu.pipeline_mode<synchronous>, transform_indices = @transform_7, window_bounds = array<i64: 1, 128>}, {pipeline_mode = #tpu.pipeline_mode<synchronous>, transform_indices = @transform_8, window_bounds = array<i64: 1, 128>}, {pipeline_mode = #tpu.pipeline_mode<synchronous>, transform_indices = @transform_9, window_bounds = array<i64: 1, 128>}, {pipeline_mode = #tpu.pipeline_mode<synchronous>, transform_indices = @transform_10, window_bounds = array<i64: 128, 128>}, {pipeline_mode = #tpu.pipeline_mode<synchronous>, transform_indices = @transform_11, window_bounds = array<i64: 1, 128>}, {pipeline_mode = #tpu.pipeline_mode<synchronous>, transform_indices = @transform_12, window_bounds = array<i64: 1, 128>}, {pipeline_mode = #tpu.pipeline_mode<synchronous>, transform_indices = @transform_13, window_bounds = array<i64: 1, 128>}, {pipeline_mode = #tpu.pipeline_mode<synchronous>, transform_indices = @transform_14, window_bounds = array<i64: 128, 128>}, {pipeline_mode = #tpu.pipeline_mode<synchronous>, transform_indices = @transform_15, window_bounds = array<i64: 1, 128>}, {pipeline_mode = #tpu.pipeline_mode<synchronous>, transform_indices = @transform_16, window_bounds = array<i64: 1, 128>}, {pipeline_mode = #tpu.pipeline_mode<synchronous>, transform_indices = @transform_17, window_bounds = array<i64: 1, 128>}, {pipeline_mode = #tpu.pipeline_mode<synchronous>, transform_indices = @transform_18, window_bounds = array<i64: 128, 128>}, {pipeline_mode = #tpu.pipeline_mode<synchronous>, transform_indices = @transform_19, window_bounds = array<i64: 1, 128>}, {pipeline_mode = #tpu.pipeline_mode<synchronous>, transform_indices = @transform_20, window_bounds = array<i64: 1, 128>}, {pipeline_mode = #tpu.pipeline_mode<synchronous>, transform_indices = @transform_21, window_bounds = array<i64: 1, 128>}, {pipeline_mode = #tpu.pipeline_mode<synchronous>, transform_indices = @transform_22, window_bounds = array<i64: 128, 128>}, {pipeline_mode = #tpu.pipeline_mode<synchronous>, transform_indices = @transform_23, window_bounds = array<i64: 1, 128>}, {pipeline_mode = #tpu.pipeline_mode<synchronous>, transform_indices = @transform_24, window_bounds = array<i64: 1, 128>}, {transform_indices = @transform_25, window_bounds = array<i64: 1, 2, 128>}]} {
    %c0 = arith.constant 0 : index
    %c0_0 = arith.constant 0 : index
    %0 = vector.load %arg2[%c0, %c0_0] : memref<8x12xf32, #tpu.memory_space<vmem>>, vector<8x12xf32>
    %c0_1 = arith.constant 0 : index
    %c0_2 = arith.constant 0 : index
    %1 = vector.load %arg3[%c0_1, %c0_2] : memref<12x128xf32, #tpu.memory_space<vmem>>, vector<12x128xf32>
    %cst = arith.constant dense<0.000000e+00> : vector<8x128xf32>
    %2 = tpu.matmul %0, %1, %cst {dimension_numbers = #tpu.dot_dimension_numbers<[1], [0], [0], [1], [0, 0, 1, 1], [], []>} : vector<8x12xf32>, vector<12x128xf32>, vector<8x128xf32> -> vector<8x128xf32>
    %c0_3 = arith.constant 0 : index
    %c0_4 = arith.constant 0 : index
    %3 = vector.load %arg4[%c0_3, %c0_4] : memref<1x128xf32, #tpu.memory_space<vmem>>, vector<1x128xf32>
    %4 = vector.broadcast %3 : vector<1x128xf32> to vector<8x128xf32>
    %5 = arith.addf %2, %4 : vector<8x128xf32>
    %c0_5 = arith.constant 0 : index
    %c0_6 = arith.constant 0 : index
    %6 = vector.load %arg5[%c0_5, %c0_6] : memref<1x128xf32, #tpu.memory_space<vmem>>, vector<1x128xf32>
    %7 = vector.broadcast %6 : vector<1x128xf32> to vector<8x128xf32>
    %8 = arith.mulf %5, %7 : vector<8x128xf32>
    %c0_7 = arith.constant 0 : index
    %c0_8 = arith.constant 0 : index
    %9 = vector.load %arg6[%c0_7, %c0_8] : memref<1x128xf32, #tpu.memory_space<vmem>>, vector<1x128xf32>
    %10 = vector.broadcast %9 : vector<1x128xf32> to vector<8x128xf32>
    %11 = arith.addf %8, %10 : vector<8x128xf32>
    %cst_9 = arith.constant 0.000000e+00 : f32
    %12 = vector.broadcast %cst_9 : f32 to vector<8x128xf32>
    %13 = arith.maximumf %11, %12 : vector<8x128xf32>
    %c0_10 = arith.constant 0 : index
    %c0_11 = arith.constant 0 : index
    %14 = vector.load %arg7[%c0_10, %c0_11] : memref<128x128xf32, #tpu.memory_space<vmem>>, vector<128x128xf32>
    %cst_12 = arith.constant dense<0.000000e+00> : vector<8x128xf32>
    %15 = tpu.matmul %13, %14, %cst_12 {dimension_numbers = #tpu.dot_dimension_numbers<[1], [0], [0], [1], [0, 0, 1, 1], [], []>} : vector<8x128xf32>, vector<128x128xf32>, vector<8x128xf32> -> vector<8x128xf32>
    %c0_13 = arith.constant 0 : index
    %c0_14 = arith.constant 0 : index
    %16 = vector.load %arg8[%c0_13, %c0_14] : memref<1x128xf32, #tpu.memory_space<vmem>>, vector<1x128xf32>
    %17 = vector.broadcast %16 : vector<1x128xf32> to vector<8x128xf32>
    %18 = arith.addf %15, %17 : vector<8x128xf32>
    %c0_15 = arith.constant 0 : index
    %c0_16 = arith.constant 0 : index
    %19 = vector.load %arg9[%c0_15, %c0_16] : memref<1x128xf32, #tpu.memory_space<vmem>>, vector<1x128xf32>
    %20 = vector.broadcast %19 : vector<1x128xf32> to vector<8x128xf32>
    %21 = arith.mulf %18, %20 : vector<8x128xf32>
    %c0_17 = arith.constant 0 : index
    %c0_18 = arith.constant 0 : index
    %22 = vector.load %arg10[%c0_17, %c0_18] : memref<1x128xf32, #tpu.memory_space<vmem>>, vector<1x128xf32>
    %23 = vector.broadcast %22 : vector<1x128xf32> to vector<8x128xf32>
    %24 = arith.addf %21, %23 : vector<8x128xf32>
    %cst_19 = arith.constant 0.000000e+00 : f32
    %25 = vector.broadcast %cst_19 : f32 to vector<8x128xf32>
    %26 = arith.maximumf %24, %25 : vector<8x128xf32>
    %c0_20 = arith.constant 0 : index
    %c0_21 = arith.constant 0 : index
    %27 = vector.load %arg11[%c0_20, %c0_21] : memref<128x128xf32, #tpu.memory_space<vmem>>, vector<128x128xf32>
    %cst_22 = arith.constant dense<0.000000e+00> : vector<8x128xf32>
    %28 = tpu.matmul %26, %27, %cst_22 {dimension_numbers = #tpu.dot_dimension_numbers<[1], [0], [0], [1], [0, 0, 1, 1], [], []>} : vector<8x128xf32>, vector<128x128xf32>, vector<8x128xf32> -> vector<8x128xf32>
    %c0_23 = arith.constant 0 : index
    %c0_24 = arith.constant 0 : index
    %29 = vector.load %arg12[%c0_23, %c0_24] : memref<1x128xf32, #tpu.memory_space<vmem>>, vector<1x128xf32>
    %30 = vector.broadcast %29 : vector<1x128xf32> to vector<8x128xf32>
    %31 = arith.addf %28, %30 : vector<8x128xf32>
    %c0_25 = arith.constant 0 : index
    %c0_26 = arith.constant 0 : index
    %32 = vector.load %arg13[%c0_25, %c0_26] : memref<1x128xf32, #tpu.memory_space<vmem>>, vector<1x128xf32>
    %33 = vector.broadcast %32 : vector<1x128xf32> to vector<8x128xf32>
    %34 = arith.mulf %31, %33 : vector<8x128xf32>
    %c0_27 = arith.constant 0 : index
    %c0_28 = arith.constant 0 : index
    %35 = vector.load %arg14[%c0_27, %c0_28] : memref<1x128xf32, #tpu.memory_space<vmem>>, vector<1x128xf32>
    %36 = vector.broadcast %35 : vector<1x128xf32> to vector<8x128xf32>
    %37 = arith.addf %34, %36 : vector<8x128xf32>
    %cst_29 = arith.constant 0.000000e+00 : f32
    %38 = vector.broadcast %cst_29 : f32 to vector<8x128xf32>
    %39 = arith.maximumf %37, %38 : vector<8x128xf32>
    %c0_30 = arith.constant 0 : index
    %c0_31 = arith.constant 0 : index
    %40 = vector.load %arg15[%c0_30, %c0_31] : memref<128x128xf32, #tpu.memory_space<vmem>>, vector<128x128xf32>
    %cst_32 = arith.constant dense<0.000000e+00> : vector<8x128xf32>
    %41 = tpu.matmul %39, %40, %cst_32 {dimension_numbers = #tpu.dot_dimension_numbers<[1], [0], [0], [1], [0, 0, 1, 1], [], []>} : vector<8x128xf32>, vector<128x128xf32>, vector<8x128xf32> -> vector<8x128xf32>
    %c0_33 = arith.constant 0 : index
    %c0_34 = arith.constant 0 : index
    %42 = vector.load %arg16[%c0_33, %c0_34] : memref<1x128xf32, #tpu.memory_space<vmem>>, vector<1x128xf32>
    %43 = vector.broadcast %42 : vector<1x128xf32> to vector<8x128xf32>
    %44 = arith.addf %41, %43 : vector<8x128xf32>
    %c0_35 = arith.constant 0 : index
    %c0_36 = arith.constant 0 : index
    %45 = vector.load %arg17[%c0_35, %c0_36] : memref<1x128xf32, #tpu.memory_space<vmem>>, vector<1x128xf32>
    %46 = vector.broadcast %45 : vector<1x128xf32> to vector<8x128xf32>
    %47 = arith.mulf %44, %46 : vector<8x128xf32>
    %c0_37 = arith.constant 0 : index
    %c0_38 = arith.constant 0 : index
    %48 = vector.load %arg18[%c0_37, %c0_38] : memref<1x128xf32, #tpu.memory_space<vmem>>, vector<1x128xf32>
    %49 = vector.broadcast %48 : vector<1x128xf32> to vector<8x128xf32>
    %50 = arith.addf %47, %49 : vector<8x128xf32>
    %cst_39 = arith.constant 0.000000e+00 : f32
    %51 = vector.broadcast %cst_39 : f32 to vector<8x128xf32>
    %52 = arith.maximumf %50, %51 : vector<8x128xf32>
    %c0_40 = arith.constant 0 : index
    %c0_41 = arith.constant 0 : index
    %53 = vector.load %arg19[%c0_40, %c0_41] : memref<128x128xf32, #tpu.memory_space<vmem>>, vector<128x128xf32>
    %cst_42 = arith.constant dense<0.000000e+00> : vector<8x128xf32>
    %54 = tpu.matmul %52, %53, %cst_42 {dimension_numbers = #tpu.dot_dimension_numbers<[1], [0], [0], [1], [0, 0, 1, 1], [], []>} : vector<8x128xf32>, vector<128x128xf32>, vector<8x128xf32> -> vector<8x128xf32>
    %c0_43 = arith.constant 0 : index
    %c0_44 = arith.constant 0 : index
    %55 = vector.load %arg20[%c0_43, %c0_44] : memref<1x128xf32, #tpu.memory_space<vmem>>, vector<1x128xf32>
    %56 = vector.broadcast %55 : vector<1x128xf32> to vector<8x128xf32>
    %57 = arith.addf %54, %56 : vector<8x128xf32>
    %c0_45 = arith.constant 0 : index
    %c0_46 = arith.constant 0 : index
    %58 = vector.load %arg21[%c0_45, %c0_46] : memref<1x128xf32, #tpu.memory_space<vmem>>, vector<1x128xf32>
    %59 = vector.broadcast %58 : vector<1x128xf32> to vector<8x128xf32>
    %60 = arith.mulf %57, %59 : vector<8x128xf32>
    %c0_47 = arith.constant 0 : index
    %c0_48 = arith.constant 0 : index
    %61 = vector.load %arg22[%c0_47, %c0_48] : memref<1x128xf32, #tpu.memory_space<vmem>>, vector<1x128xf32>
    %62 = vector.broadcast %61 : vector<1x128xf32> to vector<8x128xf32>
    %63 = arith.addf %60, %62 : vector<8x128xf32>
    %cst_49 = arith.constant 0.000000e+00 : f32
    %64 = vector.broadcast %cst_49 : f32 to vector<8x128xf32>
    %65 = arith.maximumf %63, %64 : vector<8x128xf32>
    %c0_50 = arith.constant 0 : index
    %c0_51 = arith.constant 0 : index
    %66 = vector.load %arg23[%c0_50, %c0_51] : memref<128x128xf32, #tpu.memory_space<vmem>>, vector<128x128xf32>
    %cst_52 = arith.constant dense<0.000000e+00> : vector<8x128xf32>
    %67 = tpu.matmul %65, %66, %cst_52 {dimension_numbers = #tpu.dot_dimension_numbers<[1], [0], [0], [1], [0, 0, 1, 1], [], []>} : vector<8x128xf32>, vector<128x128xf32>, vector<8x128xf32> -> vector<8x128xf32>
    %c0_53 = arith.constant 0 : index
    %c0_54 = arith.constant 0 : index
    %68 = vector.load %arg24[%c0_53, %c0_54] : memref<1x128xf32, #tpu.memory_space<vmem>>, vector<1x128xf32>
    %69 = vector.broadcast %68 : vector<1x128xf32> to vector<8x128xf32>
    %70 = arith.addf %67, %69 : vector<8x128xf32>
    %cst_55 = arith.constant dense<0.000000e+00> : vector<128xf32>
    %71 = vector.multi_reduction <add>, %70, %cst_55 [0] : vector<8x128xf32> to vector<128xf32>
    %72 = vector.shape_cast %71 : vector<128xf32> to vector<1x128xf32>
    %73 = arith.mulf %70, %70 : vector<8x128xf32>
    %cst_56 = arith.constant dense<0.000000e+00> : vector<128xf32>
    %74 = vector.multi_reduction <add>, %73, %cst_56 [0] : vector<8x128xf32> to vector<128xf32>
    %75 = vector.shape_cast %74 : vector<128xf32> to vector<1x128xf32>
    %76 = tpu.concatenate %72, %75 in 0 : vector<1x128xf32>, vector<1x128xf32> -> vector<2x128xf32>
    %c0_57 = arith.constant 0 : index
    %c0_58 = arith.constant 0 : index
    %c0_59 = arith.constant 0 : index
    %77 = vector.load %arg26[%c0_57, %c0_58, %c0_59] : memref<1x2x128xf32, #tpu.memory_space<vmem>>, vector<1x2x128xf32>
    %78 = vector.shape_cast %77 : vector<1x2x128xf32> to vector<2x128xf32>
    %79 = vector.shape_cast %76 : vector<2x128xf32> to vector<1x2x128xf32>
    tpu.vector_store %arg26[%c0_57, %c0_58, %c0_59], %79 {strides = array<i32>} : memref<1x2x128xf32, #tpu.memory_space<vmem>>, vector<1x2x128xf32>,
    %c0_i32 = arith.constant 0 : i32
    %80 = arith.cmpi eq, %arg0, %c0_i32 : i32
    %81 = arith.extui %80 : i1 to i32
    %c0_i32_60 = arith.constant 0 : i32
    %82 = arith.cmpi ne, %81, %c0_i32_60 : i32
    scf.if %82 {
      %83 = tpu.iota {dimensions = array<i32: 0>} : vector<8x128xi32>
      %c8_i32 = arith.constant 8 : i32
      %84 = arith.muli %arg0, %c8_i32 : i32
      %85 = vector.broadcast %84 : i32 to vector<8x128xi32>
      %86 = arith.addi %85, %83 : vector<8x128xi32>
      %c4_i32 = arith.constant 4 : i32
      %87 = vector.broadcast %c4_i32 : i32 to vector<8x128xi32>
      %88 = arith.muli %86, %87 : vector<8x128xi32>
      %c0_61 = arith.constant 0 : index
      %c0_62 = arith.constant 0 : index
      %89 = vector.load %arg25[%c0_61, %c0_62] : memref<1x128xi32, #tpu.memory_space<vmem>>, vector<1x128xi32>
      %90 = vector.broadcast %89 : vector<1x128xi32> to vector<8x128xi32>
      %91 = arith.addi %88, %90 : vector<8x128xi32>
      %c0_63 = arith.constant 0 : index
      %92 = memref.load %arg1[%c0_63] : memref<1xi32, #tpu.memory_space<smem>>
      %93 = vector.broadcast %92 : i32 to vector<8x128xi32>
      %94 = arith.cmpi slt, %91, %93 : vector<8x128xi32>
      %cst_64 = arith.constant 0.000000e+00 : f32
      %95 = vector.broadcast %cst_64 : f32 to vector<8x128xf32>
      %96 = arith.select %94, %70, %95 : vector<8x128xi1>, vector<8x128xf32>
      %cst_65 = arith.constant dense<0.000000e+00> : vector<128xf32>
      %97 = vector.multi_reduction <add>, %96, %cst_65 [0] : vector<8x128xf32> to vector<128xf32>
      %98 = vector.shape_cast %97 : vector<128xf32> to vector<1x128xf32>
      %99 = arith.mulf %96, %96 : vector<8x128xf32>
      %cst_66 = arith.constant dense<0.000000e+00> : vector<128xf32>
      %100 = vector.multi_reduction <add>, %99, %cst_66 [0] : vector<8x128xf32> to vector<128xf32>
      %101 = vector.shape_cast %100 : vector<128xf32> to vector<1x128xf32>
      %102 = tpu.concatenate %98, %101 in 0 : vector<1x128xf32>, vector<1x128xf32> -> vector<2x128xf32>
      %c0_67 = arith.constant 0 : index
      %c0_68 = arith.constant 0 : index
      %c0_69 = arith.constant 0 : index
      %103 = vector.load %arg26[%c0_67, %c0_68, %c0_69] : memref<1x2x128xf32, #tpu.memory_space<vmem>>, vector<1x2x128xf32>
      %104 = vector.shape_cast %103 : vector<1x2x128xf32> to vector<2x128xf32>
      %105 = vector.shape_cast %102 : vector<2x128xf32> to vector<1x2x128xf32>
      tpu.vector_store %arg26[%c0_67, %c0_68, %c0_69], %105 {strides = array<i32>} : memref<1x2x128xf32, #tpu.memory_space<vmem>>, vector<1x2x128xf32>,
    } else {
    }
    return
  }
  func.func @transform_0(%arg0: i32) -> i32 {
    %c0_i32 = arith.constant 0 : i32
    %c0_i32_0 = arith.constant 0 : i32
    return %c0_i32 : i32
  }
  func.func @transform_1(%arg0: i32) -> (i32, i32) {
    %c0_i32 = arith.constant 0 : i32
    %c0_i32_0 = arith.constant 0 : i32
    return %arg0, %c0_i32 : i32, i32
  }
  func.func @transform_2(%arg0: i32) -> (i32, i32) {
    %c0_i32 = arith.constant 0 : i32
    %c0_i32_0 = arith.constant 0 : i32
    %c0_i32_1 = arith.constant 0 : i32
    return %c0_i32, %c0_i32_0 : i32, i32
  }
  func.func @transform_3(%arg0: i32) -> (i32, i32) {
    %c0_i32 = arith.constant 0 : i32
    %c0_i32_0 = arith.constant 0 : i32
    %c0_i32_1 = arith.constant 0 : i32
    return %c0_i32, %c0_i32_0 : i32, i32
  }
  func.func @transform_4(%arg0: i32) -> (i32, i32) {
    %c0_i32 = arith.constant 0 : i32
    %c0_i32_0 = arith.constant 0 : i32
    %c0_i32_1 = arith.constant 0 : i32
    return %c0_i32, %c0_i32_0 : i32, i32
  }
  func.func @transform_5(%arg0: i32) -> (i32, i32) {
    %c0_i32 = arith.constant 0 : i32
    %c0_i32_0 = arith.constant 0 : i32
    %c0_i32_1 = arith.constant 0 : i32
    return %c0_i32, %c0_i32_0 : i32, i32
  }
  func.func @transform_6(%arg0: i32) -> (i32, i32) {
    %c0_i32 = arith.constant 0 : i32
    %c0_i32_0 = arith.constant 0 : i32
    %c0_i32_1 = arith.constant 0 : i32
    return %c0_i32, %c0_i32_0 : i32, i32
  }
  func.func @transform_7(%arg0: i32) -> (i32, i32) {
    %c0_i32 = arith.constant 0 : i32
    %c0_i32_0 = arith.constant 0 : i32
    %c0_i32_1 = arith.constant 0 : i32
    return %c0_i32, %c0_i32_0 : i32, i32
  }
  func.func @transform_8(%arg0: i32) -> (i32, i32) {
    %c0_i32 = arith.constant 0 : i32
    %c0_i32_0 = arith.constant 0 : i32
    %c0_i32_1 = arith.constant 0 : i32
    return %c0_i32, %c0_i32_0 : i32, i32
  }
  func.func @transform_9(%arg0: i32) -> (i32, i32) {
    %c0_i32 = arith.constant 0 : i32
    %c0_i32_0 = arith.constant 0 : i32
    %c0_i32_1 = arith.constant 0 : i32
    return %c0_i32, %c0_i32_0 : i32, i32
  }
  func.func @transform_10(%arg0: i32) -> (i32, i32) {
    %c0_i32 = arith.constant 0 : i32
    %c0_i32_0 = arith.constant 0 : i32
    %c0_i32_1 = arith.constant 0 : i32
    return %c0_i32, %c0_i32_0 : i32, i32
  }
  func.func @transform_11(%arg0: i32) -> (i32, i32) {
    %c0_i32 = arith.constant 0 : i32
    %c0_i32_0 = arith.constant 0 : i32
    %c0_i32_1 = arith.constant 0 : i32
    return %c0_i32, %c0_i32_0 : i32, i32
  }
  func.func @transform_12(%arg0: i32) -> (i32, i32) {
    %c0_i32 = arith.constant 0 : i32
    %c0_i32_0 = arith.constant 0 : i32
    %c0_i32_1 = arith.constant 0 : i32
    return %c0_i32, %c0_i32_0 : i32, i32
  }
  func.func @transform_13(%arg0: i32) -> (i32, i32) {
    %c0_i32 = arith.constant 0 : i32
    %c0_i32_0 = arith.constant 0 : i32
    %c0_i32_1 = arith.constant 0 : i32
    return %c0_i32, %c0_i32_0 : i32, i32
  }
  func.func @transform_14(%arg0: i32) -> (i32, i32) {
    %c0_i32 = arith.constant 0 : i32
    %c0_i32_0 = arith.constant 0 : i32
    %c0_i32_1 = arith.constant 0 : i32
    return %c0_i32, %c0_i32_0 : i32, i32
  }
  func.func @transform_15(%arg0: i32) -> (i32, i32) {
    %c0_i32 = arith.constant 0 : i32
    %c0_i32_0 = arith.constant 0 : i32
    %c0_i32_1 = arith.constant 0 : i32
    return %c0_i32, %c0_i32_0 : i32, i32
  }
  func.func @transform_16(%arg0: i32) -> (i32, i32) {
    %c0_i32 = arith.constant 0 : i32
    %c0_i32_0 = arith.constant 0 : i32
    %c0_i32_1 = arith.constant 0 : i32
    return %c0_i32, %c0_i32_0 : i32, i32
  }
  func.func @transform_17(%arg0: i32) -> (i32, i32) {
    %c0_i32 = arith.constant 0 : i32
    %c0_i32_0 = arith.constant 0 : i32
    %c0_i32_1 = arith.constant 0 : i32
    return %c0_i32, %c0_i32_0 : i32, i32
  }
  func.func @transform_18(%arg0: i32) -> (i32, i32) {
    %c0_i32 = arith.constant 0 : i32
    %c0_i32_0 = arith.constant 0 : i32
    %c0_i32_1 = arith.constant 0 : i32
    return %c0_i32, %c0_i32_0 : i32, i32
  }
  func.func @transform_19(%arg0: i32) -> (i32, i32) {
    %c0_i32 = arith.constant 0 : i32
    %c0_i32_0 = arith.constant 0 : i32
    %c0_i32_1 = arith.constant 0 : i32
    return %c0_i32, %c0_i32_0 : i32, i32
  }
  func.func @transform_20(%arg0: i32) -> (i32, i32) {
    %c0_i32 = arith.constant 0 : i32
    %c0_i32_0 = arith.constant 0 : i32
    %c0_i32_1 = arith.constant 0 : i32
    return %c0_i32, %c0_i32_0 : i32, i32
  }
  func.func @transform_21(%arg0: i32) -> (i32, i32) {
    %c0_i32 = arith.constant 0 : i32
    %c0_i32_0 = arith.constant 0 : i32
    %c0_i32_1 = arith.constant 0 : i32
    return %c0_i32, %c0_i32_0 : i32, i32
  }
  func.func @transform_22(%arg0: i32) -> (i32, i32) {
    %c0_i32 = arith.constant 0 : i32
    %c0_i32_0 = arith.constant 0 : i32
    %c0_i32_1 = arith.constant 0 : i32
    return %c0_i32, %c0_i32_0 : i32, i32
  }
  func.func @transform_23(%arg0: i32) -> (i32, i32) {
    %c0_i32 = arith.constant 0 : i32
    %c0_i32_0 = arith.constant 0 : i32
    %c0_i32_1 = arith.constant 0 : i32
    return %c0_i32, %c0_i32_0 : i32, i32
  }
  func.func @transform_24(%arg0: i32) -> (i32, i32) {
    %c0_i32 = arith.constant 0 : i32
    %c0_i32_0 = arith.constant 0 : i32
    %c0_i32_1 = arith.constant 0 : i32
    return %c0_i32, %c0_i32_0 : i32, i32
  }
  func.func @transform_25(%arg0: i32) -> (i32, i32, i32) {
    %c0_i32 = arith.constant 0 : i32
    %c0_i32_0 = arith.constant 0 : i32
    %c0_i32_1 = arith.constant 0 : i32
    return %arg0, %c0_i32, %c0_i32_0 : i32, i32, i32
  }
}

module attributes {stable_mosaic.version = 11 : i64} {
  func.func @_head_pass_kernel(%arg0: i32, %arg1: memref<8x12xf32, #tpu.memory_space<vmem>>, %arg2: memref<12x128xf32, #tpu.memory_space<vmem>>, %arg3: memref<1x128xf32, #tpu.memory_space<vmem>>, %arg4: memref<1x128xf32, #tpu.memory_space<vmem>>, %arg5: memref<1x128xf32, #tpu.memory_space<vmem>>, %arg6: memref<128x128xf32, #tpu.memory_space<vmem>>, %arg7: memref<1x128xf32, #tpu.memory_space<vmem>>, %arg8: memref<1x128xf32, #tpu.memory_space<vmem>>, %arg9: memref<1x128xf32, #tpu.memory_space<vmem>>, %arg10: memref<128x128xf32, #tpu.memory_space<vmem>>, %arg11: memref<1x128xf32, #tpu.memory_space<vmem>>, %arg12: memref<1x128xf32, #tpu.memory_space<vmem>>, %arg13: memref<1x128xf32, #tpu.memory_space<vmem>>, %arg14: memref<128x128xf32, #tpu.memory_space<vmem>>, %arg15: memref<1x128xf32, #tpu.memory_space<vmem>>, %arg16: memref<1x128xf32, #tpu.memory_space<vmem>>, %arg17: memref<1x128xf32, #tpu.memory_space<vmem>>, %arg18: memref<128x128xf32, #tpu.memory_space<vmem>>, %arg19: memref<1x128xf32, #tpu.memory_space<vmem>>, %arg20: memref<1x128xf32, #tpu.memory_space<vmem>>, %arg21: memref<1x128xf32, #tpu.memory_space<vmem>>, %arg22: memref<128x128xf32, #tpu.memory_space<vmem>>, %arg23: memref<1x128xf32, #tpu.memory_space<vmem>>, %arg24: memref<1x128xf32, #tpu.memory_space<vmem>>, %arg25: memref<1x128xf32, #tpu.memory_space<vmem>>, %arg26: memref<128x256xf32, #tpu.memory_space<vmem>>, %arg27: memref<1x256xf32, #tpu.memory_space<vmem>>, %arg28: memref<256x256xf32, #tpu.memory_space<vmem>>, %arg29: memref<1x256xf32, #tpu.memory_space<vmem>>, %arg30: memref<8x256xf32, #tpu.memory_space<vmem>>) attributes {dimension_semantics = [#tpu.dimension_semantics<parallel>], iteration_bounds = array<i64: 1>, scalar_prefetch = 0 : i64, scratch_operands = 0 : i64, tpu.core_type = #tpu.core_type<tc>, window_params = [{transform_indices = @transform_0, window_bounds = array<i64: 8, 12>}, {pipeline_mode = #tpu.pipeline_mode<synchronous>, transform_indices = @transform_1, window_bounds = array<i64: 12, 128>}, {pipeline_mode = #tpu.pipeline_mode<synchronous>, transform_indices = @transform_2, window_bounds = array<i64: 1, 128>}, {pipeline_mode = #tpu.pipeline_mode<synchronous>, transform_indices = @transform_3, window_bounds = array<i64: 1, 128>}, {pipeline_mode = #tpu.pipeline_mode<synchronous>, transform_indices = @transform_4, window_bounds = array<i64: 1, 128>}, {pipeline_mode = #tpu.pipeline_mode<synchronous>, transform_indices = @transform_5, window_bounds = array<i64: 128, 128>}, {pipeline_mode = #tpu.pipeline_mode<synchronous>, transform_indices = @transform_6, window_bounds = array<i64: 1, 128>}, {pipeline_mode = #tpu.pipeline_mode<synchronous>, transform_indices = @transform_7, window_bounds = array<i64: 1, 128>}, {pipeline_mode = #tpu.pipeline_mode<synchronous>, transform_indices = @transform_8, window_bounds = array<i64: 1, 128>}, {pipeline_mode = #tpu.pipeline_mode<synchronous>, transform_indices = @transform_9, window_bounds = array<i64: 128, 128>}, {pipeline_mode = #tpu.pipeline_mode<synchronous>, transform_indices = @transform_10, window_bounds = array<i64: 1, 128>}, {pipeline_mode = #tpu.pipeline_mode<synchronous>, transform_indices = @transform_11, window_bounds = array<i64: 1, 128>}, {pipeline_mode = #tpu.pipeline_mode<synchronous>, transform_indices = @transform_12, window_bounds = array<i64: 1, 128>}, {pipeline_mode = #tpu.pipeline_mode<synchronous>, transform_indices = @transform_13, window_bounds = array<i64: 128, 128>}, {pipeline_mode = #tpu.pipeline_mode<synchronous>, transform_indices = @transform_14, window_bounds = array<i64: 1, 128>}, {pipeline_mode = #tpu.pipeline_mode<synchronous>, transform_indices = @transform_15, window_bounds = array<i64: 1, 128>}, {pipeline_mode = #tpu.pipeline_mode<synchronous>, transform_indices = @transform_16, window_bounds = array<i64: 1, 128>}, {pipeline_mode = #tpu.pipeline_mode<synchronous>, transform_indices = @transform_17, window_bounds = array<i64: 128, 128>}, {pipeline_mode = #tpu.pipeline_mode<synchronous>, transform_indices = @transform_18, window_bounds = array<i64: 1, 128>}, {pipeline_mode = #tpu.pipeline_mode<synchronous>, transform_indices = @transform_19, window_bounds = array<i64: 1, 128>}, {pipeline_mode = #tpu.pipeline_mode<synchronous>, transform_indices = @transform_20, window_bounds = array<i64: 1, 128>}, {pipeline_mode = #tpu.pipeline_mode<synchronous>, transform_indices = @transform_21, window_bounds = array<i64: 128, 128>}, {pipeline_mode = #tpu.pipeline_mode<synchronous>, transform_indices = @transform_22, window_bounds = array<i64: 1, 128>}, {pipeline_mode = #tpu.pipeline_mode<synchronous>, transform_indices = @transform_23, window_bounds = array<i64: 1, 128>}, {pipeline_mode = #tpu.pipeline_mode<synchronous>, transform_indices = @transform_24, window_bounds = array<i64: 1, 128>}, {pipeline_mode = #tpu.pipeline_mode<synchronous>, transform_indices = @transform_25, window_bounds = array<i64: 128, 256>}, {pipeline_mode = #tpu.pipeline_mode<synchronous>, transform_indices = @transform_26, window_bounds = array<i64: 1, 256>}, {pipeline_mode = #tpu.pipeline_mode<synchronous>, transform_indices = @transform_27, window_bounds = array<i64: 256, 256>}, {pipeline_mode = #tpu.pipeline_mode<synchronous>, transform_indices = @transform_28, window_bounds = array<i64: 1, 256>}, {transform_indices = @transform_29, window_bounds = array<i64: 8, 256>}]} {
    %c0 = arith.constant 0 : index
    %c0_0 = arith.constant 0 : index
    %0 = vector.load %arg1[%c0, %c0_0] : memref<8x12xf32, #tpu.memory_space<vmem>>, vector<8x12xf32>
    %c0_1 = arith.constant 0 : index
    %c0_2 = arith.constant 0 : index
    %1 = vector.load %arg2[%c0_1, %c0_2] : memref<12x128xf32, #tpu.memory_space<vmem>>, vector<12x128xf32>
    %cst = arith.constant dense<0.000000e+00> : vector<8x128xf32>
    %2 = tpu.matmul %0, %1, %cst {dimension_numbers = #tpu.dot_dimension_numbers<[1], [0], [0], [1], [0, 0, 1, 1], [], []>} : vector<8x12xf32>, vector<12x128xf32>, vector<8x128xf32> -> vector<8x128xf32>
    %c0_3 = arith.constant 0 : index
    %c0_4 = arith.constant 0 : index
    %3 = vector.load %arg3[%c0_3, %c0_4] : memref<1x128xf32, #tpu.memory_space<vmem>>, vector<1x128xf32>
    %4 = vector.broadcast %3 : vector<1x128xf32> to vector<8x128xf32>
    %5 = arith.addf %2, %4 : vector<8x128xf32>
    %c0_5 = arith.constant 0 : index
    %c0_6 = arith.constant 0 : index
    %6 = vector.load %arg4[%c0_5, %c0_6] : memref<1x128xf32, #tpu.memory_space<vmem>>, vector<1x128xf32>
    %7 = vector.broadcast %6 : vector<1x128xf32> to vector<8x128xf32>
    %8 = arith.mulf %5, %7 : vector<8x128xf32>
    %c0_7 = arith.constant 0 : index
    %c0_8 = arith.constant 0 : index
    %9 = vector.load %arg5[%c0_7, %c0_8] : memref<1x128xf32, #tpu.memory_space<vmem>>, vector<1x128xf32>
    %10 = vector.broadcast %9 : vector<1x128xf32> to vector<8x128xf32>
    %11 = arith.addf %8, %10 : vector<8x128xf32>
    %cst_9 = arith.constant 0.000000e+00 : f32
    %12 = vector.broadcast %cst_9 : f32 to vector<8x128xf32>
    %13 = arith.maximumf %11, %12 : vector<8x128xf32>
    %c0_10 = arith.constant 0 : index
    %c0_11 = arith.constant 0 : index
    %14 = vector.load %arg6[%c0_10, %c0_11] : memref<128x128xf32, #tpu.memory_space<vmem>>, vector<128x128xf32>
    %cst_12 = arith.constant dense<0.000000e+00> : vector<8x128xf32>
    %15 = tpu.matmul %13, %14, %cst_12 {dimension_numbers = #tpu.dot_dimension_numbers<[1], [0], [0], [1], [0, 0, 1, 1], [], []>} : vector<8x128xf32>, vector<128x128xf32>, vector<8x128xf32> -> vector<8x128xf32>
    %c0_13 = arith.constant 0 : index
    %c0_14 = arith.constant 0 : index
    %16 = vector.load %arg7[%c0_13, %c0_14] : memref<1x128xf32, #tpu.memory_space<vmem>>, vector<1x128xf32>
    %17 = vector.broadcast %16 : vector<1x128xf32> to vector<8x128xf32>
    %18 = arith.addf %15, %17 : vector<8x128xf32>
    %c0_15 = arith.constant 0 : index
    %c0_16 = arith.constant 0 : index
    %19 = vector.load %arg8[%c0_15, %c0_16] : memref<1x128xf32, #tpu.memory_space<vmem>>, vector<1x128xf32>
    %20 = vector.broadcast %19 : vector<1x128xf32> to vector<8x128xf32>
    %21 = arith.mulf %18, %20 : vector<8x128xf32>
    %c0_17 = arith.constant 0 : index
    %c0_18 = arith.constant 0 : index
    %22 = vector.load %arg9[%c0_17, %c0_18] : memref<1x128xf32, #tpu.memory_space<vmem>>, vector<1x128xf32>
    %23 = vector.broadcast %22 : vector<1x128xf32> to vector<8x128xf32>
    %24 = arith.addf %21, %23 : vector<8x128xf32>
    %cst_19 = arith.constant 0.000000e+00 : f32
    %25 = vector.broadcast %cst_19 : f32 to vector<8x128xf32>
    %26 = arith.maximumf %24, %25 : vector<8x128xf32>
    %c0_20 = arith.constant 0 : index
    %c0_21 = arith.constant 0 : index
    %27 = vector.load %arg10[%c0_20, %c0_21] : memref<128x128xf32, #tpu.memory_space<vmem>>, vector<128x128xf32>
    %cst_22 = arith.constant dense<0.000000e+00> : vector<8x128xf32>
    %28 = tpu.matmul %26, %27, %cst_22 {dimension_numbers = #tpu.dot_dimension_numbers<[1], [0], [0], [1], [0, 0, 1, 1], [], []>} : vector<8x128xf32>, vector<128x128xf32>, vector<8x128xf32> -> vector<8x128xf32>
    %c0_23 = arith.constant 0 : index
    %c0_24 = arith.constant 0 : index
    %29 = vector.load %arg11[%c0_23, %c0_24] : memref<1x128xf32, #tpu.memory_space<vmem>>, vector<1x128xf32>
    %30 = vector.broadcast %29 : vector<1x128xf32> to vector<8x128xf32>
    %31 = arith.addf %28, %30 : vector<8x128xf32>
    %c0_25 = arith.constant 0 : index
    %c0_26 = arith.constant 0 : index
    %32 = vector.load %arg12[%c0_25, %c0_26] : memref<1x128xf32, #tpu.memory_space<vmem>>, vector<1x128xf32>
    %33 = vector.broadcast %32 : vector<1x128xf32> to vector<8x128xf32>
    %34 = arith.mulf %31, %33 : vector<8x128xf32>
    %c0_27 = arith.constant 0 : index
    %c0_28 = arith.constant 0 : index
    %35 = vector.load %arg13[%c0_27, %c0_28] : memref<1x128xf32, #tpu.memory_space<vmem>>, vector<1x128xf32>
    %36 = vector.broadcast %35 : vector<1x128xf32> to vector<8x128xf32>
    %37 = arith.addf %34, %36 : vector<8x128xf32>
    %cst_29 = arith.constant 0.000000e+00 : f32
    %38 = vector.broadcast %cst_29 : f32 to vector<8x128xf32>
    %39 = arith.maximumf %37, %38 : vector<8x128xf32>
    %c0_30 = arith.constant 0 : index
    %c0_31 = arith.constant 0 : index
    %40 = vector.load %arg14[%c0_30, %c0_31] : memref<128x128xf32, #tpu.memory_space<vmem>>, vector<128x128xf32>
    %cst_32 = arith.constant dense<0.000000e+00> : vector<8x128xf32>
    %41 = tpu.matmul %39, %40, %cst_32 {dimension_numbers = #tpu.dot_dimension_numbers<[1], [0], [0], [1], [0, 0, 1, 1], [], []>} : vector<8x128xf32>, vector<128x128xf32>, vector<8x128xf32> -> vector<8x128xf32>
    %c0_33 = arith.constant 0 : index
    %c0_34 = arith.constant 0 : index
    %42 = vector.load %arg15[%c0_33, %c0_34] : memref<1x128xf32, #tpu.memory_space<vmem>>, vector<1x128xf32>
    %43 = vector.broadcast %42 : vector<1x128xf32> to vector<8x128xf32>
    %44 = arith.addf %41, %43 : vector<8x128xf32>
    %c0_35 = arith.constant 0 : index
    %c0_36 = arith.constant 0 : index
    %45 = vector.load %arg16[%c0_35, %c0_36] : memref<1x128xf32, #tpu.memory_space<vmem>>, vector<1x128xf32>
    %46 = vector.broadcast %45 : vector<1x128xf32> to vector<8x128xf32>
    %47 = arith.mulf %44, %46 : vector<8x128xf32>
    %c0_37 = arith.constant 0 : index
    %c0_38 = arith.constant 0 : index
    %48 = vector.load %arg17[%c0_37, %c0_38] : memref<1x128xf32, #tpu.memory_space<vmem>>, vector<1x128xf32>
    %49 = vector.broadcast %48 : vector<1x128xf32> to vector<8x128xf32>
    %50 = arith.addf %47, %49 : vector<8x128xf32>
    %cst_39 = arith.constant 0.000000e+00 : f32
    %51 = vector.broadcast %cst_39 : f32 to vector<8x128xf32>
    %52 = arith.maximumf %50, %51 : vector<8x128xf32>
    %c0_40 = arith.constant 0 : index
    %c0_41 = arith.constant 0 : index
    %53 = vector.load %arg18[%c0_40, %c0_41] : memref<128x128xf32, #tpu.memory_space<vmem>>, vector<128x128xf32>
    %cst_42 = arith.constant dense<0.000000e+00> : vector<8x128xf32>
    %54 = tpu.matmul %52, %53, %cst_42 {dimension_numbers = #tpu.dot_dimension_numbers<[1], [0], [0], [1], [0, 0, 1, 1], [], []>} : vector<8x128xf32>, vector<128x128xf32>, vector<8x128xf32> -> vector<8x128xf32>
    %c0_43 = arith.constant 0 : index
    %c0_44 = arith.constant 0 : index
    %55 = vector.load %arg19[%c0_43, %c0_44] : memref<1x128xf32, #tpu.memory_space<vmem>>, vector<1x128xf32>
    %56 = vector.broadcast %55 : vector<1x128xf32> to vector<8x128xf32>
    %57 = arith.addf %54, %56 : vector<8x128xf32>
    %c0_45 = arith.constant 0 : index
    %c0_46 = arith.constant 0 : index
    %58 = vector.load %arg20[%c0_45, %c0_46] : memref<1x128xf32, #tpu.memory_space<vmem>>, vector<1x128xf32>
    %59 = vector.broadcast %58 : vector<1x128xf32> to vector<8x128xf32>
    %60 = arith.mulf %57, %59 : vector<8x128xf32>
    %c0_47 = arith.constant 0 : index
    %c0_48 = arith.constant 0 : index
    %61 = vector.load %arg21[%c0_47, %c0_48] : memref<1x128xf32, #tpu.memory_space<vmem>>, vector<1x128xf32>
    %62 = vector.broadcast %61 : vector<1x128xf32> to vector<8x128xf32>
    %63 = arith.addf %60, %62 : vector<8x128xf32>
    %cst_49 = arith.constant 0.000000e+00 : f32
    %64 = vector.broadcast %cst_49 : f32 to vector<8x128xf32>
    %65 = arith.maximumf %63, %64 : vector<8x128xf32>
    %c0_50 = arith.constant 0 : index
    %c0_51 = arith.constant 0 : index
    %66 = vector.load %arg22[%c0_50, %c0_51] : memref<128x128xf32, #tpu.memory_space<vmem>>, vector<128x128xf32>
    %cst_52 = arith.constant dense<0.000000e+00> : vector<8x128xf32>
    %67 = tpu.matmul %65, %66, %cst_52 {dimension_numbers = #tpu.dot_dimension_numbers<[1], [0], [0], [1], [0, 0, 1, 1], [], []>} : vector<8x128xf32>, vector<128x128xf32>, vector<8x128xf32> -> vector<8x128xf32>
    %c0_53 = arith.constant 0 : index
    %c0_54 = arith.constant 0 : index
    %68 = vector.load %arg23[%c0_53, %c0_54] : memref<1x128xf32, #tpu.memory_space<vmem>>, vector<1x128xf32>
    %69 = vector.broadcast %68 : vector<1x128xf32> to vector<8x128xf32>
    %70 = arith.addf %67, %69 : vector<8x128xf32>
    %c0_55 = arith.constant 0 : index
    %c0_56 = arith.constant 0 : index
    %71 = vector.load %arg24[%c0_55, %c0_56] : memref<1x128xf32, #tpu.memory_space<vmem>>, vector<1x128xf32>
    %72 = vector.broadcast %71 : vector<1x128xf32> to vector<8x128xf32>
    %73 = arith.mulf %70, %72 : vector<8x128xf32>
    %c0_57 = arith.constant 0 : index
    %c0_58 = arith.constant 0 : index
    %74 = vector.load %arg25[%c0_57, %c0_58] : memref<1x128xf32, #tpu.memory_space<vmem>>, vector<1x128xf32>
    %75 = vector.broadcast %74 : vector<1x128xf32> to vector<8x128xf32>
    %76 = arith.addf %73, %75 : vector<8x128xf32>
    %cst_59 = arith.constant 0.000000e+00 : f32
    %77 = vector.broadcast %cst_59 : f32 to vector<8x128xf32>
    %78 = arith.maximumf %76, %77 : vector<8x128xf32>
    %c0_60 = arith.constant 0 : index
    %c0_61 = arith.constant 0 : index
    %79 = vector.load %arg26[%c0_60, %c0_61] : memref<128x256xf32, #tpu.memory_space<vmem>>, vector<128x256xf32>
    %cst_62 = arith.constant dense<0.000000e+00> : vector<8x256xf32>
    %80 = tpu.matmul %78, %79, %cst_62 {dimension_numbers = #tpu.dot_dimension_numbers<[1], [0], [0], [1], [0, 0, 1, 1], [], []>} : vector<8x128xf32>, vector<128x256xf32>, vector<8x256xf32> -> vector<8x256xf32>
    %c0_63 = arith.constant 0 : index
    %c0_64 = arith.constant 0 : index
    %81 = vector.load %arg27[%c0_63, %c0_64] : memref<1x256xf32, #tpu.memory_space<vmem>>, vector<1x256xf32>
    %82 = vector.broadcast %81 : vector<1x256xf32> to vector<8x256xf32>
    %83 = arith.addf %80, %82 : vector<8x256xf32>
    %84 = arith.mulf %83, %83 : vector<8x256xf32>
    %c0_65 = arith.constant 0 : index
    %c0_66 = arith.constant 0 : index
    %85 = vector.load %arg28[%c0_65, %c0_66] : memref<256x256xf32, #tpu.memory_space<vmem>>, vector<256x256xf32>
    %cst_67 = arith.constant dense<0.000000e+00> : vector<8x256xf32>
    %86 = tpu.matmul %84, %85, %cst_67 {dimension_numbers = #tpu.dot_dimension_numbers<[1], [0], [0], [1], [0, 0, 1, 1], [], []>} : vector<8x256xf32>, vector<256x256xf32>, vector<8x256xf32> -> vector<8x256xf32>
    %cst_68 = arith.constant 1.000000e-24 : f32
    %87 = vector.broadcast %cst_68 : f32 to vector<8x256xf32>
    %88 = arith.maximumf %86, %87 : vector<8x256xf32>
    %89 = math.rsqrt %88 : vector<8x256xf32>
    %c0_69 = arith.constant 0 : index
    %c0_70 = arith.constant 0 : index
    %90 = vector.load %arg29[%c0_69, %c0_70] : memref<1x256xf32, #tpu.memory_space<vmem>>, vector<1x256xf32>
    %cst_71 = arith.constant 1.000000e+00 : f32
    %91 = vector.broadcast %cst_71 : f32 to vector<1x256xf32>
    %92 = arith.cmpf oeq, %90, %91 : vector<1x256xf32>
    %cst_72 = arith.constant 2.000000e+00 : f32
    %93 = vector.broadcast %cst_72 : f32 to vector<1x256xf32>
    %94 = arith.cmpf oeq, %90, %93 : vector<1x256xf32>
    %95 = arith.mulf %83, %89 : vector<8x256xf32>
    %96 = arith.negf %83 : vector<8x256xf32>
    %97 = math.exp %96 : vector<8x256xf32>
    %cst_73 = arith.constant 1.000000e+00 : f32
    %98 = vector.broadcast %cst_73 : f32 to vector<8x256xf32>
    %99 = arith.addf %98, %97 : vector<8x256xf32>
    %100 = arith.divf %98, %99 : vector<8x256xf32>
    %101 = vector.shape_cast %94 : vector<1x256xi1> to vector<1x256xi1>
    %102 = vector.broadcast %101 : vector<1x256xi1> to vector<8x256xi1>
    %103 = arith.select %102, %100, %83 : vector<8x256xi1>, vector<8x256xf32>
    %104 = vector.shape_cast %92 : vector<1x256xi1> to vector<1x256xi1>
    %105 = vector.broadcast %104 : vector<1x256xi1> to vector<8x256xi1>
    %106 = arith.select %105, %95, %103 : vector<8x256xi1>, vector<8x256xf32>
    %c0_74 = arith.constant 0 : index
    %c0_75 = arith.constant 0 : index
    %107 = vector.load %arg30[%c0_74, %c0_75] : memref<8x256xf32, #tpu.memory_space<vmem>>, vector<8x256xf32>
    tpu.vector_store %arg30[%c0_74, %c0_75], %106 {strides = array<i32>} : memref<8x256xf32, #tpu.memory_space<vmem>>, vector<8x256xf32>,
    return
  }
  func.func @transform_0(%arg0: i32) -> (i32, i32) {
    %c0_i32 = arith.constant 0 : i32
    %c0_i32_0 = arith.constant 0 : i32
    return %arg0, %c0_i32 : i32, i32
  }
  func.func @transform_1(%arg0: i32) -> (i32, i32) {
    %c0_i32 = arith.constant 0 : i32
    %c0_i32_0 = arith.constant 0 : i32
    %c0_i32_1 = arith.constant 0 : i32
    return %c0_i32, %c0_i32_0 : i32, i32
  }
  func.func @transform_2(%arg0: i32) -> (i32, i32) {
    %c0_i32 = arith.constant 0 : i32
    %c0_i32_0 = arith.constant 0 : i32
    %c0_i32_1 = arith.constant 0 : i32
    return %c0_i32, %c0_i32_0 : i32, i32
  }
  func.func @transform_3(%arg0: i32) -> (i32, i32) {
    %c0_i32 = arith.constant 0 : i32
    %c0_i32_0 = arith.constant 0 : i32
    %c0_i32_1 = arith.constant 0 : i32
    return %c0_i32, %c0_i32_0 : i32, i32
  }
  func.func @transform_4(%arg0: i32) -> (i32, i32) {
    %c0_i32 = arith.constant 0 : i32
    %c0_i32_0 = arith.constant 0 : i32
    %c0_i32_1 = arith.constant 0 : i32
    return %c0_i32, %c0_i32_0 : i32, i32
  }
  func.func @transform_5(%arg0: i32) -> (i32, i32) {
    %c0_i32 = arith.constant 0 : i32
    %c0_i32_0 = arith.constant 0 : i32
    %c0_i32_1 = arith.constant 0 : i32
    return %c0_i32, %c0_i32_0 : i32, i32
  }
  func.func @transform_6(%arg0: i32) -> (i32, i32) {
    %c0_i32 = arith.constant 0 : i32
    %c0_i32_0 = arith.constant 0 : i32
    %c0_i32_1 = arith.constant 0 : i32
    return %c0_i32, %c0_i32_0 : i32, i32
  }
  func.func @transform_7(%arg0: i32) -> (i32, i32) {
    %c0_i32 = arith.constant 0 : i32
    %c0_i32_0 = arith.constant 0 : i32
    %c0_i32_1 = arith.constant 0 : i32
    return %c0_i32, %c0_i32_0 : i32, i32
  }
  func.func @transform_8(%arg0: i32) -> (i32, i32) {
    %c0_i32 = arith.constant 0 : i32
    %c0_i32_0 = arith.constant 0 : i32
    %c0_i32_1 = arith.constant 0 : i32
    return %c0_i32, %c0_i32_0 : i32, i32
  }
  func.func @transform_9(%arg0: i32) -> (i32, i32) {
    %c0_i32 = arith.constant 0 : i32
    %c0_i32_0 = arith.constant 0 : i32
    %c0_i32_1 = arith.constant 0 : i32
    return %c0_i32, %c0_i32_0 : i32, i32
  }
  func.func @transform_10(%arg0: i32) -> (i32, i32) {
    %c0_i32 = arith.constant 0 : i32
    %c0_i32_0 = arith.constant 0 : i32
    %c0_i32_1 = arith.constant 0 : i32
    return %c0_i32, %c0_i32_0 : i32, i32
  }
  func.func @transform_11(%arg0: i32) -> (i32, i32) {
    %c0_i32 = arith.constant 0 : i32
    %c0_i32_0 = arith.constant 0 : i32
    %c0_i32_1 = arith.constant 0 : i32
    return %c0_i32, %c0_i32_0 : i32, i32
  }
  func.func @transform_12(%arg0: i32) -> (i32, i32) {
    %c0_i32 = arith.constant 0 : i32
    %c0_i32_0 = arith.constant 0 : i32
    %c0_i32_1 = arith.constant 0 : i32
    return %c0_i32, %c0_i32_0 : i32, i32
  }
  func.func @transform_13(%arg0: i32) -> (i32, i32) {
    %c0_i32 = arith.constant 0 : i32
    %c0_i32_0 = arith.constant 0 : i32
    %c0_i32_1 = arith.constant 0 : i32
    return %c0_i32, %c0_i32_0 : i32, i32
  }
  func.func @transform_14(%arg0: i32) -> (i32, i32) {
    %c0_i32 = arith.constant 0 : i32
    %c0_i32_0 = arith.constant 0 : i32
    %c0_i32_1 = arith.constant 0 : i32
    return %c0_i32, %c0_i32_0 : i32, i32
  }
  func.func @transform_15(%arg0: i32) -> (i32, i32) {
    %c0_i32 = arith.constant 0 : i32
    %c0_i32_0 = arith.constant 0 : i32
    %c0_i32_1 = arith.constant 0 : i32
    return %c0_i32, %c0_i32_0 : i32, i32
  }
  func.func @transform_16(%arg0: i32) -> (i32, i32) {
    %c0_i32 = arith.constant 0 : i32
    %c0_i32_0 = arith.constant 0 : i32
    %c0_i32_1 = arith.constant 0 : i32
    return %c0_i32, %c0_i32_0 : i32, i32
  }
  func.func @transform_17(%arg0: i32) -> (i32, i32) {
    %c0_i32 = arith.constant 0 : i32
    %c0_i32_0 = arith.constant 0 : i32
    %c0_i32_1 = arith.constant 0 : i32
    return %c0_i32, %c0_i32_0 : i32, i32
  }
  func.func @transform_18(%arg0: i32) -> (i32, i32) {
    %c0_i32 = arith.constant 0 : i32
    %c0_i32_0 = arith.constant 0 : i32
    %c0_i32_1 = arith.constant 0 : i32
    return %c0_i32, %c0_i32_0 : i32, i32
  }
  func.func @transform_19(%arg0: i32) -> (i32, i32) {
    %c0_i32 = arith.constant 0 : i32
    %c0_i32_0 = arith.constant 0 : i32
    %c0_i32_1 = arith.constant 0 : i32
    return %c0_i32, %c0_i32_0 : i32, i32
  }
  func.func @transform_20(%arg0: i32) -> (i32, i32) {
    %c0_i32 = arith.constant 0 : i32
    %c0_i32_0 = arith.constant 0 : i32
    %c0_i32_1 = arith.constant 0 : i32
    return %c0_i32, %c0_i32_0 : i32, i32
  }
  func.func @transform_21(%arg0: i32) -> (i32, i32) {
    %c0_i32 = arith.constant 0 : i32
    %c0_i32_0 = arith.constant 0 : i32
    %c0_i32_1 = arith.constant 0 : i32
    return %c0_i32, %c0_i32_0 : i32, i32
  }
  func.func @transform_22(%arg0: i32) -> (i32, i32) {
    %c0_i32 = arith.constant 0 : i32
    %c0_i32_0 = arith.constant 0 : i32
    %c0_i32_1 = arith.constant 0 : i32
    return %c0_i32, %c0_i32_0 : i32, i32
  }
  func.func @transform_23(%arg0: i32) -> (i32, i32) {
    %c0_i32 = arith.constant 0 : i32
    %c0_i32_0 = arith.constant 0 : i32
    %c0_i32_1 = arith.constant 0 : i32
    return %c0_i32, %c0_i32_0 : i32, i32
  }
  func.func @transform_24(%arg0: i32) -> (i32, i32) {
    %c0_i32 = arith.constant 0 : i32
    %c0_i32_0 = arith.constant 0 : i32
    %c0_i32_1 = arith.constant 0 : i32
    return %c0_i32, %c0_i32_0 : i32, i32
  }
  func.func @transform_25(%arg0: i32) -> (i32, i32) {
    %c0_i32 = arith.constant 0 : i32
    %c0_i32_0 = arith.constant 0 : i32
    %c0_i32_1 = arith.constant 0 : i32
    return %c0_i32, %c0_i32_0 : i32, i32
  }
  func.func @transform_26(%arg0: i32) -> (i32, i32) {
    %c0_i32 = arith.constant 0 : i32
    %c0_i32_0 = arith.constant 0 : i32
    %c0_i32_1 = arith.constant 0 : i32
    return %c0_i32, %c0_i32_0 : i32, i32
  }
  func.func @transform_27(%arg0: i32) -> (i32, i32) {
    %c0_i32 = arith.constant 0 : i32
    %c0_i32_0 = arith.constant 0 : i32
    %c0_i32_1 = arith.constant 0 : i32
    return %c0_i32, %c0_i32_0 : i32, i32
  }
  func.func @transform_28(%arg0: i32) -> (i32, i32) {
    %c0_i32 = arith.constant 0 : i32
    %c0_i32_0 = arith.constant 0 : i32
    %c0_i32_1 = arith.constant 0 : i32
    return %c0_i32, %c0_i32_0 : i32, i32
  }
  func.func @transform_29(%arg0: i32) -> (i32, i32) {
    %c0_i32 = arith.constant 0 : i32
    %c0_i32_0 = arith.constant 0 : i32
    return %arg0, %c0_i32 : i32, i32
  }
}

</mosaic_0001>

<llo_original>
// kernel: specialized_mlp_sh.8
$region0: #{specialized_mlp_sh.8}
  #allocation0 [shape = 'u32[]', space=smem, size = 0x4, offset = 0x4, fixed_abs, tag = 'smem constant byte address 0x4 - core index']
  #allocation1 [shape = 'u32[144,128]{1,0:T(1,128)}', space=vmem, size = 0x12000, scoped, tag = 'internal scratch']
  #allocation2 [shape = 's32[1]{0:T(128)S(6)}', space=smem, size = 0x200, scoped, tag = 'scoped memory for specialized_mlp_sh.8']
  %s0 = inlined_call_operand.<no memory space> [shape: s32[1], index: 0, kind: input, shape index: {}]
  %s1 = inlined_call_operand.vmem [shape: f32[8,12], index: 1, kind: input, shape index: {}]
  %s2 = inlined_call_operand.vmem [shape: f32[12,128], index: 2, kind: input, shape index: {}]
  %s3 = inlined_call_operand.vmem [shape: f32[1,128], index: 3, kind: input, shape index: {}]
  %s4 = inlined_call_operand.vmem [shape: f32[1,128], index: 4, kind: input, shape index: {}]
  %s5 = inlined_call_operand.vmem [shape: f32[1,128], index: 5, kind: input, shape index: {}]
  %s6 = inlined_call_operand.vmem [shape: f32[128,128], index: 6, kind: input, shape index: {}]
  %s7 = inlined_call_operand.vmem [shape: f32[1,128], index: 7, kind: input, shape index: {}]
  %s8 = inlined_call_operand.vmem [shape: s32[1,128], index: 8, kind: input, shape index: {}]
  %s9 = inlined_call_operand.vmem [shape: f32[1,2,128], index: 9, kind: output, shape index: {}]
  %s10 = sld [smem:[#allocation0]]
  $region50: #{specialized_mlp_sh.8} parent=0
    _
  %s12 = ssub.s32 1, %s10
  %s13 = scalar_select 0, %s12, %s10
  %14 = sst [smem:[#allocation2]] %s0
  // Predicated region
  $region2: #{specialized_mlp_sh.8} parent=0 // pred_check
    _
  $region3: #{specialized_mlp_sh.8} parent=0 // pred_check_branch
    %16 = sbr.rel (0) target = $region5
  $region4: #{specialized_mlp_sh.8} parent=0 // pred_region
    _
  $region5: #{specialized_mlp_sh.8} parent=0 // pred_fallthru
    _
  // Predicated region
  $region6: #{specialized_mlp_sh.8} parent=0 // pred_check
    _
  $region7: #{specialized_mlp_sh.8} parent=0 // pred_check_branch
    %18 = sbr.rel (0) target = $region9
  $region8: #{specialized_mlp_sh.8} parent=0 // pred_region
    _
  $region9: #{specialized_mlp_sh.8} parent=0 // pred_fallthru
    _
  // Predicated region
  $region10: #{specialized_mlp_sh.8} parent=0 // pred_check
    _
  $region11: #{specialized_mlp_sh.8} parent=0 // pred_check_branch
    %20 = sbr.rel (0) target = $region13
  $region12: #{specialized_mlp_sh.8} parent=0 // pred_region
    _
  $region13: #{specialized_mlp_sh.8} parent=0 // pred_fallthru
    _
  // Predicated region
  $region14: #{specialized_mlp_sh.8} parent=0 // pred_check
    _
  $region15: #{specialized_mlp_sh.8} parent=0 // pred_check_branch
    %22 = sbr.rel (0) target = $region17
  $region16: #{specialized_mlp_sh.8} parent=0 // pred_region
    _
  $region17: #{specialized_mlp_sh.8} parent=0 // pred_fallthru
    _
  // Predicated region
  $region18: #{specialized_mlp_sh.8} parent=0 // pred_check
    _
  $region19: #{specialized_mlp_sh.8} parent=0 // pred_check_branch
    %24 = sbr.rel (0) target = $region21
  $region20: #{specialized_mlp_sh.8} parent=0 // pred_region
    _
  $region21: #{specialized_mlp_sh.8} parent=0 // pred_fallthru
    _
  // Predicated region
  $region22: #{specialized_mlp_sh.8} parent=0 // pred_check
    _
  $region23: #{specialized_mlp_sh.8} parent=0 // pred_check_branch
    %26 = sbr.rel (0) target = $region25
  $region24: #{specialized_mlp_sh.8} parent=0 // pred_region
    _
  $region25: #{specialized_mlp_sh.8} parent=0 // pred_fallthru
    _
  // Predicated region
  $region26: #{specialized_mlp_sh.8} parent=0 // pred_check
    _
  $region27: #{specialized_mlp_sh.8} parent=0 // pred_check_branch
    %28 = sbr.rel (0) target = $region29
  $region28: #{specialized_mlp_sh.8} parent=0 // pred_region
    _
  $region29: #{specialized_mlp_sh.8} parent=0 // pred_fallthru
    _
  // Predicated region
  $region30: #{specialized_mlp_sh.8} parent=0 // pred_check
    _
  $region31: #{specialized_mlp_sh.8} parent=0 // pred_check_branch
    %30 = sbr.rel (0) target = $region33
  $region32: #{specialized_mlp_sh.8} parent=0 // pred_region
    _
  $region33: #{specialized_mlp_sh.8} parent=0 // pred_fallthru
    _
  // Predicated region
  $region34: #{specialized_mlp_sh.8} parent=0 // pred_check
    _
  $region35: #{specialized_mlp_sh.8} parent=0 // pred_check_branch
    %32 = sbr.rel (0) target = $region37
  $region36: #{specialized_mlp_sh.8} parent=0 // pred_region
    _
  $region37: #{specialized_mlp_sh.8} parent=0 // pred_fallthru
    _
  %v33 = vld [vmem:[%s1] sm:$0xff]
  %v34 = vld [vmem:[%s2] sm:$0xff]
  %v35 = vld [vmem:[%s2 + $0x8] sm:$0xf]
  %v36 = vld [vmem:[%s3] sm:$0x1]
  %v38 = vlaneseq
  %v39 = vshrl.u32 %v38, 7
  %v40 = vsub.s32 0, %v39
  %v41 = vrot.slane %v36, %v40
  %vm43 = vcmask 97280
  %v45 = vsel %vm43, %v33, 0
  %vm47 = vcmask 1043456
  %v49 = vsel %vm47, %v35, 0
  %51 = vmatprep.subr.mxu0 0.0
  %52 = vmatpush1.msra.mxu0 %v34
  %53 = vmatprep.subr.mxu0 0.0
  %54 = vmatpush1.msra.mxu0 %v49
  %55 = vmatprep.subr.mxu0 0.0
  %56 = vmatpush1.msra.mxu0 0.0
  %57 = vmatprep.subr.mxu0 0.0
  %58 = vmatpush1.msra.mxu0 0.0
  %59 = vmatprep.subr.mxu0 0.0
  %60 = vmatpush1.msra.mxu0 0.0
  %61 = vmatprep.subr.mxu0 0.0
  %62 = vmatpush1.msra.mxu0 0.0
  %63 = vmatprep.subr.mxu0 0.0
  %64 = vmatpush1.msra.mxu0 0.0
  %65 = vmatprep.subr.mxu0 0.0
  %66 = vmatpush1.msra.mxu0 0.0
  %67 = vmatprep.subr.mxu0 0.0
  %68 = vmatpush1.msra.mxu0 0.0
  %69 = vmatprep.subr.mxu0 0.0
  %70 = vmatpush1.msra.mxu0 0.0
  %71 = vmatprep.subr.mxu0 0.0
  %72 = vmatpush1.msra.mxu0 0.0
  %73 = vmatprep.subr.mxu0 0.0
  %74 = vmatpush1.msra.mxu0 0.0
  %75 = vmatprep.subr.mxu0 0.0
  %76 = vmatpush1.msra.mxu0 0.0
  %77 = vmatprep.subr.mxu0 0.0
  %78 = vmatpush1.msra.mxu0 0.0
  %79 = vmatprep.subr.mxu0 0.0
  %80 = vmatpush1.msra.mxu0 0.0
  %81 = vmatprep.subr.mxu0 0.0
  %82 = vmatpush1.msra.mxu0 0.0
  %83 = vmatprep.subr.mxu0 0.0
  %84 = vmatpush1.msra.mxu0 0.0
  %85 = vmatprep.subr.mxu0 0.0
  %86 = vmatpush1.msra.mxu0 0.0
  %87 = vmatprep.subr.mxu0 0.0
  %88 = vmatpush1.msra.mxu0 0.0
  %89 = vmatprep.subr.mxu0 0.0
  %90 = vmatpush1.msra.mxu0 0.0
  %91 = vmatprep.subr.mxu0 0.0
  %92 = vmatpush1.msra.mxu0 0.0
  %93 = vmatprep.subr.mxu0 0.0
  %94 = vmatpush1.msra.mxu0 0.0
  %95 = vmatprep.subr.mxu0 0.0
  %96 = vmatpush1.msra.mxu0 0.0
  %97 = vmatprep.subr.mxu0 0.0
  %98 = vmatpush1.msra.mxu0 0.0
  %99 = vmatprep.subr.mxu0 0.0
  %100 = vmatpush1.msra.mxu0 0.0
  %101 = vmatprep.subr.mxu0 0.0
  %102 = vmatpush1.msra.mxu0 0.0
  %103 = vmatprep.subr.mxu0 0.0
  %104 = vmatpush1.msra.mxu0 0.0
  %105 = vmatprep.subr.mxu0 0.0
  %106 = vmatpush1.msra.mxu0 0.0
  %107 = vmatprep.subr.mxu0 0.0
  %108 = vmatpush1.msra.mxu0 0.0
  %109 = vmatprep.subr.mxu0 0.0
  %110 = vmatpush1.msra.mxu0 0.0
  %111 = vmatprep.subr.mxu0 0.0
  %112 = vmatpush1.msra.mxu0 0.0
  %113 = vmatprep.subr.mxu0 0.0
  %114 = vmatpush1.msra.mxu0 0.0
  %115 = vmatprep.mubr.f32.mxu0 0.0
  %116 = vmatmul.mubr.f32.gmra.mrb[0].mxu0 %v45
  %v117 = vpop.f32.mrb[0].mxu0
  %v118 = vadd.f32 %v41, %v117
  %v119 = vpop.f32.mrb[0].mxu0
  %120 = vdwg.mxu0
  %v121 = vld [vmem:[%s4] sm:$0x1]
  %v123 = vlaneseq
  %v124 = vshrl.u32 %v123, 7
  %v125 = vsub.s32 0, %v124
  %v126 = vrot.slane %v121, %v125
  %v128 = vmul.f32 %v118, %v126
  %v129 = vld [vmem:[%s5] sm:$0x1]
  %v131 = vlaneseq
  %v132 = vshrl.u32 %v131, 7
  %v133 = vsub.s32 0, %v132
  %v134 = vrot.slane %v129, %v133
  %v136 = vadd.f32 %v128, %v134
  %v137 = vmax.f32 %v136, 0.0
  %v138 = vld [vmem:[%s6] sm:$0xff]
  %v139 = vld [vmem:[%s6 + $0x8] sm:$0xff]
  %v140 = vld [vmem:[%s6 + $0x10] sm:$0xff]
  %v141 = vld [vmem:[%s6 + $0x18] sm:$0xff]
  %v142 = vld [vmem:[%s6 + $0x20] sm:$0xff]
  %v143 = vld [vmem:[%s6 + $0x28] sm:$0xff]
  %v144 = vld [vmem:[%s6 + $0x30] sm:$0xff]
  %v145 = vld [vmem:[%s6 + $0x38] sm:$0xff]
  %v146 = vld [vmem:[%s6 + $0x40] sm:$0xff]
  %v147 = vld [vmem:[%s6 + $0x48] sm:$0xff]
  %v148 = vld [vmem:[%s6 + $0x50] sm:$0xff]
  %v149 = vld [vmem:[%s6 + $0x58] sm:$0xff]
  %v150 = vld [vmem:[%s6 + $0x60] sm:$0xff]
  %v151 = vld [vmem:[%s6 + $0x68] sm:$0xff]
  %v152 = vld [vmem:[%s6 + $0x70] sm:$0xff]
  %v153 = vld [vmem:[%s6 + $0x78] sm:$0xff]
  %v154 = vld [vmem:[%s7] sm:$0x1]
  %v156 = vlaneseq
  %v157 = vshrl.u32 %v156, 7
  %v158 = vsub.s32 0, %v157
  %v159 = vrot.slane %v154, %v158
  %161 = vmatprep.subr.mxu0 0.0
  %162 = vmatpush1.msra.mxu0 %v138
  %163 = vmatprep.subr.mxu0 0.0
  %164 = vmatpush1.msra.mxu0 %v139
  %165 = vmatprep.subr.mxu0 0.0
  %166 = vmatpush1.msra.mxu0 %v140
  %167 = vmatprep.subr.mxu0 0.0
  %168 = vmatpush1.msra.mxu0 %v141
  %169 = vmatprep.subr.mxu0 0.0
  %170 = vmatpush1.msra.mxu0 %v142
  %171 = vmatprep.subr.mxu0 0.0
  %172 = vmatpush1.msra.mxu0 %v143
  %173 = vmatprep.subr.mxu0 0.0
  %174 = vmatpush1.msra.mxu0 %v144
  %175 = vmatprep.subr.mxu0 0.0
  %176 = vmatpush1.msra.mxu0 %v145
  %177 = vmatprep.subr.mxu0 0.0
  %178 = vmatpush1.msra.mxu0 %v146
  %179 = vmatprep.subr.mxu0 0.0
  %180 = vmatpush1.msra.mxu0 %v147
  %181 = vmatprep.subr.mxu0 0.0
  %182 = vmatpush1.msra.mxu0 %v148
  %183 = vmatprep.subr.mxu0 0.0
  %184 = vmatpush1.msra.mxu0 %v149
  %185 = vmatprep.subr.mxu0 0.0
  %186 = vmatpush1.msra.mxu0 %v150
  %187 = vmatprep.subr.mxu0 0.0
  %188 = vmatpush1.msra.mxu0 %v151
  %189 = vmatprep.subr.mxu0 0.0
  %190 = vmatpush1.msra.mxu0 %v152
  %191 = vmatprep.subr.mxu0 0.0
  %192 = vmatpush1.msra.mxu0 %v153
  %193 = vmatprep.subr.mxu0 0.0
  %194 = vmatpush1.msra.mxu0 0.0
  %195 = vmatprep.subr.mxu0 0.0
  %196 = vmatpush1.msra.mxu0 0.0
  %197 = vmatprep.subr.mxu0 0.0
  %198 = vmatpush1.msra.mxu0 0.0
  %199 = vmatprep.subr.mxu0 0.0
  %200 = vmatpush1.msra.mxu0 0.0
  %201 = vmatprep.subr.mxu0 0.0
  %202 = vmatpush1.msra.mxu0 0.0
  %203 = vmatprep.subr.mxu0 0.0
  %204 = vmatpush1.msra.mxu0 0.0
  %205 = vmatprep.subr.mxu0 0.0
  %206 = vmatpush1.msra.mxu0 0.0
  %207 = vmatprep.subr.mxu0 0.0
  %208 = vmatpush1.msra.mxu0 0.0
  %209 = vmatprep.subr.mxu0 0.0
  %210 = vmatpush1.msra.mxu0 0.0
  %211 = vmatprep.subr.mxu0 0.0
  %212 = vmatpush1.msra.mxu0 0.0
  %213 = vmatprep.subr.mxu0 0.0
  %214 = vmatpush1.msra.mxu0 0.0
  %215 = vmatprep.subr.mxu0 0.0
  %216 = vmatpush1.msra.mxu0 0.0
  %217 = vmatprep.subr.mxu0 0.0
  %218 = vmatpush1.msra.mxu0 0.0
  %219 = vmatprep.subr.mxu0 0.0
  %220 = vmatpush1.msra.mxu0 0.0
  %221 = vmatprep.subr.mxu0 0.0
  %222 = vmatpush1.msra.mxu0 0.0
  %223 = vmatprep.subr.mxu0 0.0
  %224 = vmatpush1.msra.mxu0 0.0
  %225 = vmatprep.mubr.f32.mxu0 0.0
  %226 = vmatmul.mubr.f32.gmra.mrb[0].mxu0 %v137
  %v227 = vpop.f32.mrb[0].mxu0
  %v228 = vadd.f32 %v159, %v227
  %v229 = vpop.f32.mrb[0].mxu0
  %230 = vdwg.mxu0
  %v231 = vrot.slane %v228, 4
  %v232 = vadd.f32 %v228, %v231
  %v233 = vrot.slane %v232, 2
  %v234 = vadd.f32 %v232, %v233
  %v235 = vrot.slane %v234, 1
  %v236 = vadd.f32 %v234, %v235
  %v237 = vmul.f32 %v228, %v228
  %v238 = vrot.slane %v237, 4
  %v239 = vadd.f32 %v237, %v238
  %v240 = vrot.slane %v239, 2
  %v241 = vadd.f32 %v239, %v240
  %v242 = vrot.slane %v241, 1
  %v243 = vadd.f32 %v241, %v242
  %vm244 = vcmask 1040384
  %v245 = vsel %vm244, %v236, %v243
  %246 = vst [vmem:[%s9] sm:$0x3] %v245
  %p247 = scmp.eq.s32.totalorder 0, 0
  // Predicated region
  $region38: #{specialized_mlp_sh.8} parent=0 // pred_check
    %p248 = pneg %p247
  $region39: #{specialized_mlp_sh.8} parent=0 // pred_check_branch
    %250 = sbr.rel (%p248) target = $region41
  $region40: #{specialized_mlp_sh.8} parent=0 // pred_region
    %v251 = vlaneseq
    %v252 = vshrl.u32 %v251, 7
    %s253 = smul.u32 0, 8
    %v254 = vstv %s253
    %v255 = vadd.s32 %v254, %v252
    %v256 = vmul.u32 %v255, 4
    %v257 = vld [vmem:[%s8] sm:$0x1]
    %v258 = vlaneseq
    %v259 = vshrl.u32 %v258, 7
    %v260 = vsub.s32 0, %v259
    %v261 = vrot.slane %v257, %v260
    %v262 = vadd.s32 %v256, %v261
    %s263 = sld [smem:[#allocation2]]
    %v264 = vstv %s263
    %vm265 = vcmp.lt.s32.totalorder %v262, %v264
    %v266 = vsel %vm265, %v228, 0.0
    %v267 = vrot.slane %v266, 4
    %v268 = vadd.f32 %v266, %v267
    %v269 = vrot.slane %v268, 2
    %v270 = vadd.f32 %v268, %v269
    %v271 = vrot.slane %v270, 1
    %v272 = vadd.f32 %v270, %v271
    %v273 = vmul.f32 %v266, %v266
    %v274 = vrot.slane %v273, 4
    %v275 = vadd.f32 %v273, %v274
    %v276 = vrot.slane %v275, 2
    %v277 = vadd.f32 %v275, %v276
    %v278 = vrot.slane %v277, 1
    %v279 = vadd.f32 %v277, %v278
    %v280 = vsel %vm244, %v272, %v279
    %281 = vst [vmem:[%s9] sm:$0x3] %v280
  $region41: #{specialized_mlp_sh.8} parent=0 // pred_fallthru
    _
  // Predicated region
  $region42: #{specialized_mlp_sh.8} parent=0 // pred_check
    _
  $region43: #{specialized_mlp_sh.8} parent=0 // pred_check_branch
    %283 = sbr.rel (0) target = $region45
  $region44: #{specialized_mlp_sh.8} parent=0 // pred_region
    _
  $region45: #{specialized_mlp_sh.8} parent=0 // pred_fallthru
    _
  // Predicated region
  $region46: #{specialized_mlp_sh.8} parent=0 // pred_check
    _
  $region47: #{specialized_mlp_sh.8} parent=0 // pred_check_branch
    %285 = sbr.rel (0) target = $region49
  $region48: #{specialized_mlp_sh.8} parent=0 // pred_region
    _
  $region49: #{specialized_mlp_sh.8} parent=0 // pred_fallthru
    _

// kernel: specialized_mlp_sh.7
$region0: #{specialized_mlp_sh.7}
  #allocation0 [shape = 'u32[]', space=smem, size = 0x4, offset = 0x4, fixed_abs, tag = 'smem constant byte address 0x4 - core index']
  #allocation1 [shape = 'u32[144,128]{1,0:T(1,128)}', space=vmem, size = 0x12000, scoped, tag = 'internal scratch']
  #allocation2 [shape = 's32[1]{0:T(128)S(6)}', space=smem, size = 0x200, scoped, tag = 'scoped memory for specialized_mlp_sh.7']
  %s0 = inlined_call_operand.<no memory space> [shape: s32[1], index: 0, kind: input, shape index: {}]
  %s1 = inlined_call_operand.vmem [shape: f32[8,12], index: 1, kind: input, shape index: {}]
  %s2 = inlined_call_operand.vmem [shape: f32[12,128], index: 2, kind: input, shape index: {}]
  %s3 = inlined_call_operand.vmem [shape: f32[1,128], index: 3, kind: input, shape index: {}]
  %s4 = inlined_call_operand.vmem [shape: s32[1,128], index: 4, kind: input, shape index: {}]
  %s5 = inlined_call_operand.vmem [shape: f32[1,2,128], index: 5, kind: output, shape index: {}]
  %s6 = sld [smem:[#allocation0]]
  $region34: #{specialized_mlp_sh.7} parent=0
    _
  %s8 = ssub.s32 1, %s6
  %s9 = scalar_select 0, %s8, %s6
  %10 = sst [smem:[#allocation2]] %s0
  // Predicated region
  $region2: #{specialized_mlp_sh.7} parent=0 // pred_check
    _
  $region3: #{specialized_mlp_sh.7} parent=0 // pred_check_branch
    %12 = sbr.rel (0) target = $region5
  $region4: #{specialized_mlp_sh.7} parent=0 // pred_region
    _
  $region5: #{specialized_mlp_sh.7} parent=0 // pred_fallthru
    _
  // Predicated region
  $region6: #{specialized_mlp_sh.7} parent=0 // pred_check
    _
  $region7: #{specialized_mlp_sh.7} parent=0 // pred_check_branch
    %14 = sbr.rel (0) target = $region9
  $region8: #{specialized_mlp_sh.7} parent=0 // pred_region
    _
  $region9: #{specialized_mlp_sh.7} parent=0 // pred_fallthru
    _
  // Predicated region
  $region10: #{specialized_mlp_sh.7} parent=0 // pred_check
    _
  $region11: #{specialized_mlp_sh.7} parent=0 // pred_check_branch
    %16 = sbr.rel (0) target = $region13
  $region12: #{specialized_mlp_sh.7} parent=0 // pred_region
    _
  $region13: #{specialized_mlp_sh.7} parent=0 // pred_fallthru
    _
  // Predicated region
  $region14: #{specialized_mlp_sh.7} parent=0 // pred_check
    _
  $region15: #{specialized_mlp_sh.7} parent=0 // pred_check_branch
    %18 = sbr.rel (0) target = $region17
  $region16: #{specialized_mlp_sh.7} parent=0 // pred_region
    _
  $region17: #{specialized_mlp_sh.7} parent=0 // pred_fallthru
    _
  // Predicated region
  $region18: #{specialized_mlp_sh.7} parent=0 // pred_check
    _
  $region19: #{specialized_mlp_sh.7} parent=0 // pred_check_branch
    %20 = sbr.rel (0) target = $region21
  $region20: #{specialized_mlp_sh.7} parent=0 // pred_region
    _
  $region21: #{specialized_mlp_sh.7} parent=0 // pred_fallthru
    _
  %v21 = vld [vmem:[%s1] sm:$0xff]
  %v22 = vld [vmem:[%s2] sm:$0xff]
  %v23 = vld [vmem:[%s2 + $0x8] sm:$0xf]
  %v24 = vld [vmem:[%s3] sm:$0x1]
  %v26 = vlaneseq
  %v27 = vshrl.u32 %v26, 7
  %v28 = vsub.s32 0, %v27
  %v29 = vrot.slane %v24, %v28
  %vm31 = vcmask 97280
  %v33 = vsel %vm31, %v21, 0
  %vm35 = vcmask 1043456
  %v37 = vsel %vm35, %v23, 0
  %39 = vmatprep.subr.mxu0 0.0
  %40 = vmatpush1.msra.mxu0 %v22
  %41 = vmatprep.subr.mxu0 0.0
  %42 = vmatpush1.msra.mxu0 %v37
  %43 = vmatprep.subr.mxu0 0.0
  %44 = vmatpush1.msra.mxu0 0.0
  %45 = vmatprep.subr.mxu0 0.0
  %46 = vmatpush1.msra.mxu0 0.0
  %47 = vmatprep.subr.mxu0 0.0
  %48 = vmatpush1.msra.mxu0 0.0
  %49 = vmatprep.subr.mxu0 0.0
  %50 = vmatpush1.msra.mxu0 0.0
  %51 = vmatprep.subr.mxu0 0.0
  %52 = vmatpush1.msra.mxu0 0.0
  %53 = vmatprep.subr.mxu0 0.0
  %54 = vmatpush1.msra.mxu0 0.0
  %55 = vmatprep.subr.mxu0 0.0
  %56 = vmatpush1.msra.mxu0 0.0
  %57 = vmatprep.subr.mxu0 0.0
  %58 = vmatpush1.msra.mxu0 0.0
  %59 = vmatprep.subr.mxu0 0.0
  %60 = vmatpush1.msra.mxu0 0.0
  %61 = vmatprep.subr.mxu0 0.0
  %62 = vmatpush1.msra.mxu0 0.0
  %63 = vmatprep.subr.mxu0 0.0
  %64 = vmatpush1.msra.mxu0 0.0
  %65 = vmatprep.subr.mxu0 0.0
  %66 = vmatpush1.msra.mxu0 0.0
  %67 = vmatprep.subr.mxu0 0.0
  %68 = vmatpush1.msra.mxu0 0.0
  %69 = vmatprep.subr.mxu0 0.0
  %70 = vmatpush1.msra.mxu0 0.0
  %71 = vmatprep.subr.mxu0 0.0
  %72 = vmatpush1.msra.mxu0 0.0
  %73 = vmatprep.subr.mxu0 0.0
  %74 = vmatpush1.msra.mxu0 0.0
  %75 = vmatprep.subr.mxu0 0.0
  %76 = vmatpush1.msra.mxu0 0.0
  %77 = vmatprep.subr.mxu0 0.0
  %78 = vmatpush1.msra.mxu0 0.0
  %79 = vmatprep.subr.mxu0 0.0
  %80 = vmatpush1.msra.mxu0 0.0
  %81 = vmatprep.subr.mxu0 0.0
  %82 = vmatpush1.msra.mxu0 0.0
  %83 = vmatprep.subr.mxu0 0.0
  %84 = vmatpush1.msra.mxu0 0.0
  %85 = vmatprep.subr.mxu0 0.0
  %86 = vmatpush1.msra.mxu0 0.0
  %87 = vmatprep.subr.mxu0 0.0
  %88 = vmatpush1.msra.mxu0 0.0
  %89 = vmatprep.subr.mxu0 0.0
  %90 = vmatpush1.msra.mxu0 0.0
  %91 = vmatprep.subr.mxu0 0.0
  %92 = vmatpush1.msra.mxu0 0.0
  %93 = vmatprep.subr.mxu0 0.0
  %94 = vmatpush1.msra.mxu0 0.0
  %95 = vmatprep.subr.mxu0 0.0
  %96 = vmatpush1.msra.mxu0 0.0
  %97 = vmatprep.subr.mxu0 0.0
  %98 = vmatpush1.msra.mxu0 0.0
  %99 = vmatprep.subr.mxu0 0.0
  %100 = vmatpush1.msra.mxu0 0.0
  %101 = vmatprep.subr.mxu0 0.0
  %102 = vmatpush1.msra.mxu0 0.0
  %103 = vmatprep.mubr.f32.mxu0 0.0
  %104 = vmatmul.mubr.f32.gmra.mrb[0].mxu0 %v33
  %v105 = vpop.f32.mrb[0].mxu0
  %v106 = vadd.f32 %v29, %v105
  %v107 = vpop.f32.mrb[0].mxu0
  %108 = vdwg.mxu0
  %v109 = vrot.slane %v106, 4
  %v110 = vadd.f32 %v106, %v109
  %v111 = vrot.slane %v110, 2
  %v112 = vadd.f32 %v110, %v111
  %v113 = vrot.slane %v112, 1
  %v114 = vadd.f32 %v112, %v113
  %v115 = vmul.f32 %v106, %v106
  %v116 = vrot.slane %v115, 4
  %v117 = vadd.f32 %v115, %v116
  %v118 = vrot.slane %v117, 2
  %v119 = vadd.f32 %v117, %v118
  %v120 = vrot.slane %v119, 1
  %v121 = vadd.f32 %v119, %v120
  %vm122 = vcmask 1040384
  %v123 = vsel %vm122, %v114, %v121
  %124 = vst [vmem:[%s5] sm:$0x3] %v123
  %p125 = scmp.eq.s32.totalorder 0, 0
  // Predicated region
  $region22: #{specialized_mlp_sh.7} parent=0 // pred_check
    %p126 = pneg %p125
  $region23: #{specialized_mlp_sh.7} parent=0 // pred_check_branch
    %128 = sbr.rel (%p126) target = $region25
  $region24: #{specialized_mlp_sh.7} parent=0 // pred_region
    %v129 = vlaneseq
    %v130 = vshrl.u32 %v129, 7
    %s131 = smul.u32 0, 8
    %v132 = vstv %s131
    %v133 = vadd.s32 %v132, %v130
    %v134 = vmul.u32 %v133, 4
    %v135 = vld [vmem:[%s4] sm:$0x1]
    %v136 = vlaneseq
    %v137 = vshrl.u32 %v136, 7
    %v138 = vsub.s32 0, %v137
    %v139 = vrot.slane %v135, %v138
    %v140 = vadd.s32 %v134, %v139
    %s141 = sld [smem:[#allocation2]]
    %v142 = vstv %s141
    %vm143 = vcmp.lt.s32.totalorder %v140, %v142
    %v144 = vsel %vm143, %v106, 0.0
    %v145 = vrot.slane %v144, 4
    %v146 = vadd.f32 %v144, %v145
    %v147 = vrot.slane %v146, 2
    %v148 = vadd.f32 %v146, %v147
    %v149 = vrot.slane %v148, 1
    %v150 = vadd.f32 %v148, %v149
    %v151 = vmul.f32 %v144, %v144
    %v152 = vrot.slane %v151, 4
    %v153 = vadd.f32 %v151, %v152
    %v154 = vrot.slane %v153, 2
    %v155 = vadd.f32 %v153, %v154
    %v156 = vrot.slane %v155, 1
    %v157 = vadd.f32 %v155, %v156
    %v158 = vsel %vm122, %v150, %v157
    %159 = vst [vmem:[%s5] sm:$0x3] %v158
  $region25: #{specialized_mlp_sh.7} parent=0 // pred_fallthru
    _
  // Predicated region
  $region26: #{specialized_mlp_sh.7} parent=0 // pred_check
    _
  $region27: #{specialized_mlp_sh.7} parent=0 // pred_check_branch
    %161 = sbr.rel (0) target = $region29
  $region28: #{specialized_mlp_sh.7} parent=0 // pred_region
    _
  $region29: #{specialized_mlp_sh.7} parent=0 // pred_fallthru
    _
  // Predicated region
  $region30: #{specialized_mlp_sh.7} parent=0 // pred_check
    _
  $region31: #{specialized_mlp_sh.7} parent=0 // pred_check_branch
    %163 = sbr.rel (0) target = $region33
  $region32: #{specialized_mlp_sh.7} parent=0 // pred_region
    _
  $region33: #{specialized_mlp_sh.7} parent=0 // pred_fallthru
    _

// kernel: specialized_mlp_sh.9
$region0: #{specialized_mlp_sh.9}
  #allocation0 [shape = 'u32[]', space=smem, size = 0x4, offset = 0x4, fixed_abs, tag = 'smem constant byte address 0x4 - core index']
  #allocation1 [shape = 'u32[144,128]{1,0:T(1,128)}', space=vmem, size = 0x12000, scoped, tag = 'internal scratch']
  #allocation2 [shape = 's32[1]{0:T(128)S(6)}', space=smem, size = 0x200, scoped, tag = 'scoped memory for specialized_mlp_sh.9']
  %s0 = inlined_call_operand.<no memory space> [shape: s32[1], index: 0, kind: input, shape index: {}]
  %s1 = inlined_call_operand.vmem [shape: f32[8,12], index: 1, kind: input, shape index: {}]
  %s2 = inlined_call_operand.vmem [shape: f32[12,128], index: 2, kind: input, shape index: {}]
  %s3 = inlined_call_operand.vmem [shape: f32[1,128], index: 3, kind: input, shape index: {}]
  %s4 = inlined_call_operand.vmem [shape: f32[1,128], index: 4, kind: input, shape index: {}]
  %s5 = inlined_call_operand.vmem [shape: f32[1,128], index: 5, kind: input, shape index: {}]
  %s6 = inlined_call_operand.vmem [shape: f32[128,128], index: 6, kind: input, shape index: {}]
  %s7 = inlined_call_operand.vmem [shape: f32[1,128], index: 7, kind: input, shape index: {}]
  %s8 = inlined_call_operand.vmem [shape: f32[1,128], index: 8, kind: input, shape index: {}]
  %s9 = inlined_call_operand.vmem [shape: f32[1,128], index: 9, kind: input, shape index: {}]
  %s10 = inlined_call_operand.vmem [shape: f32[128,128], index: 10, kind: input, shape index: {}]
  %s11 = inlined_call_operand.vmem [shape: f32[1,128], index: 11, kind: input, shape index: {}]
  %s12 = inlined_call_operand.vmem [shape: s32[1,128], index: 12, kind: input, shape index: {}]
  %s13 = inlined_call_operand.vmem [shape: f32[1,2,128], index: 13, kind: output, shape index: {}]
  %s14 = sld [smem:[#allocation0]]
  $region66: #{specialized_mlp_sh.9} parent=0
    _
  %s16 = ssub.s32 1, %s14
  %s17 = scalar_select 0, %s16, %s14
  %18 = sst [smem:[#allocation2]] %s0
  // Predicated region
  $region2: #{specialized_mlp_sh.9} parent=0 // pred_check
    _
  $region3: #{specialized_mlp_sh.9} parent=0 // pred_check_branch
    %20 = sbr.rel (0) target = $region5
  $region4: #{specialized_mlp_sh.9} parent=0 // pred_region
    _
  $region5: #{specialized_mlp_sh.9} parent=0 // pred_fallthru
    _
  // Predicated region
  $region6: #{specialized_mlp_sh.9} parent=0 // pred_check
    _
  $region7: #{specialized_mlp_sh.9} parent=0 // pred_check_branch
    %22 = sbr.rel (0) target = $region9
  $region8: #{specialized_mlp_sh.9} parent=0 // pred_region
    _
  $region9: #{specialized_mlp_sh.9} parent=0 // pred_fallthru
    _
  // Predicated region
  $region10: #{specialized_mlp_sh.9} parent=0 // pred_check
    _
  $region11: #{specialized_mlp_sh.9} parent=0 // pred_check_branch
    %24 = sbr.rel (0) target = $region13
  $region12: #{specialized_mlp_sh.9} parent=0 // pred_region
    _
  $region13: #{specialized_mlp_sh.9} parent=0 // pred_fallthru
    _
  // Predicated region
  $region14: #{specialized_mlp_sh.9} parent=0 // pred_check
    _
  $region15: #{specialized_mlp_sh.9} parent=0 // pred_check_branch
    %26 = sbr.rel (0) target = $region17
  $region16: #{specialized_mlp_sh.9} parent=0 // pred_region
    _
  $region17: #{specialized_mlp_sh.9} parent=0 // pred_fallthru
    _
  // Predicated region
  $region18: #{specialized_mlp_sh.9} parent=0 // pred_check
    _
  $region19: #{specialized_mlp_sh.9} parent=0 // pred_check_branch
    %28 = sbr.rel (0) target = $region21
  $region20: #{specialized_mlp_sh.9} parent=0 // pred_region
    _
  $region21: #{specialized_mlp_sh.9} parent=0 // pred_fallthru
    _
  // Predicated region
  $region22: #{specialized_mlp_sh.9} parent=0 // pred_check
    _
  $region23: #{specialized_mlp_sh.9} parent=0 // pred_check_branch
    %30 = sbr.rel (0) target = $region25
  $region24: #{specialized_mlp_sh.9} parent=0 // pred_region
    _
  $region25: #{specialized_mlp_sh.9} parent=0 // pred_fallthru
    _
  // Predicated region
  $region26: #{specialized_mlp_sh.9} parent=0 // pred_check
    _
  $region27: #{specialized_mlp_sh.9} parent=0 // pred_check_branch
    %32 = sbr.rel (0) target = $region29
  $region28: #{specialized_mlp_sh.9} parent=0 // pred_region
    _
  $region29: #{specialized_mlp_sh.9} parent=0 // pred_fallthru
    _
  // Predicated region
  $region30: #{specialized_mlp_sh.9} parent=0 // pred_check
    _
  $region31: #{specialized_mlp_sh.9} parent=0 // pred_check_branch
    %34 = sbr.rel (0) target = $region33
  $region32: #{specialized_mlp_sh.9} parent=0 // pred_region
    _
  $region33: #{specialized_mlp_sh.9} parent=0 // pred_fallthru
    _
  // Predicated region
  $region34: #{specialized_mlp_sh.9} parent=0 // pred_check
    _
  $region35: #{specialized_mlp_sh.9} parent=0 // pred_check_branch
    %36 = sbr.rel (0) target = $region37
  $region36: #{specialized_mlp_sh.9} parent=0 // pred_region
    _
  $region37: #{specialized_mlp_sh.9} parent=0 // pred_fallthru
    _
  // Predicated region
  $region38: #{specialized_mlp_sh.9} parent=0 // pred_check
    _
  $region39: #{specialized_mlp_sh.9} parent=0 // pred_check_branch
    %38 = sbr.rel (0) target = $region41
  $region40: #{specialized_mlp_sh.9} parent=0 // pred_region
    _
  $region41: #{specialized_mlp_sh.9} parent=0 // pred_fallthru
    _
  // Predicated region
  $region42: #{specialized_mlp_sh.9} parent=0 // pred_check
    _
  $region43: #{specialized_mlp_sh.9} parent=0 // pred_check_branch
    %40 = sbr.rel (0) target = $region45
  $region44: #{specialized_mlp_sh.9} parent=0 // pred_region
    _
  $region45: #{specialized_mlp_sh.9} parent=0 // pred_fallthru
    _
  // Predicated region
  $region46: #{specialized_mlp_sh.9} parent=0 // pred_check
    _
  $region47: #{specialized_mlp_sh.9} parent=0 // pred_check_branch
    %42 = sbr.rel (0) target = $region49
  $region48: #{specialized_mlp_sh.9} parent=0 // pred_region
    _
  $region49: #{specialized_mlp_sh.9} parent=0 // pred_fallthru
    _
  // Predicated region
  $region50: #{specialized_mlp_sh.9} parent=0 // pred_check
    _
  $region51: #{specialized_mlp_sh.9} parent=0 // pred_check_branch
    %44 = sbr.rel (0) target = $region53
  $region52: #{specialized_mlp_sh.9} parent=0 // pred_region
    _
  $region53: #{specialized_mlp_sh.9} parent=0 // pred_fallthru
    _
  %v45 = vld [vmem:[%s1] sm:$0xff]
  %v46 = vld [vmem:[%s2] sm:$0xff]
  %v47 = vld [vmem:[%s2 + $0x8] sm:$0xf]
  %v48 = vld [vmem:[%s3] sm:$0x1]
  %v50 = vlaneseq
  %v51 = vshrl.u32 %v50, 7
  %v52 = vsub.s32 0, %v51
  %v53 = vrot.slane %v48, %v52
  %vm55 = vcmask 97280
  %v57 = vsel %vm55, %v45, 0
  %vm59 = vcmask 1043456
  %v61 = vsel %vm59, %v47, 0
  %63 = vmatprep.subr.mxu0 0.0
  %64 = vmatpush1.msra.mxu0 %v46
  %65 = vmatprep.subr.mxu0 0.0
  %66 = vmatpush1.msra.mxu0 %v61
  %67 = vmatprep.subr.mxu0 0.0
  %68 = vmatpush1.msra.mxu0 0.0
  %69 = vmatprep.subr.mxu0 0.0
  %70 = vmatpush1.msra.mxu0 0.0
  %71 = vmatprep.subr.mxu0 0.0
  %72 = vmatpush1.msra.mxu0 0.0
  %73 = vmatprep.subr.mxu0 0.0
  %74 = vmatpush1.msra.mxu0 0.0
  %75 = vmatprep.subr.mxu0 0.0
  %76 = vmatpush1.msra.mxu0 0.0
  %77 = vmatprep.subr.mxu0 0.0
  %78 = vmatpush1.msra.mxu0 0.0
  %79 = vmatprep.subr.mxu0 0.0
  %80 = vmatpush1.msra.mxu0 0.0
  %81 = vmatprep.subr.mxu0 0.0
  %82 = vmatpush1.msra.mxu0 0.0
  %83 = vmatprep.subr.mxu0 0.0
  %84 = vmatpush1.msra.mxu0 0.0
  %85 = vmatprep.subr.mxu0 0.0
  %86 = vmatpush1.msra.mxu0 0.0
  %87 = vmatprep.subr.mxu0 0.0
  %88 = vmatpush1.msra.mxu0 0.0
  %89 = vmatprep.subr.mxu0 0.0
  %90 = vmatpush1.msra.mxu0 0.0
  %91 = vmatprep.subr.mxu0 0.0
  %92 = vmatpush1.msra.mxu0 0.0
  %93 = vmatprep.subr.mxu0 0.0
  %94 = vmatpush1.msra.mxu0 0.0
  %95 = vmatprep.subr.mxu0 0.0
  %96 = vmatpush1.msra.mxu0 0.0
  %97 = vmatprep.subr.mxu0 0.0
  %98 = vmatpush1.msra.mxu0 0.0
  %99 = vmatprep.subr.mxu0 0.0
  %100 = vmatpush1.msra.mxu0 0.0
  %101 = vmatprep.subr.mxu0 0.0
  %102 = vmatpush1.msra.mxu0 0.0
  %103 = vmatprep.subr.mxu0 0.0
  %104 = vmatpush1.msra.mxu0 0.0
  %105 = vmatprep.subr.mxu0 0.0
  %106 = vmatpush1.msra.mxu0 0.0
  %107 = vmatprep.subr.mxu0 0.0
  %108 = vmatpush1.msra.mxu0 0.0
  %109 = vmatprep.subr.mxu0 0.0
  %110 = vmatpush1.msra.mxu0 0.0
  %111 = vmatprep.subr.mxu0 0.0
  %112 = vmatpush1.msra.mxu0 0.0
  %113 = vmatprep.subr.mxu0 0.0
  %114 = vmatpush1.msra.mxu0 0.0
  %115 = vmatprep.subr.mxu0 0.0
  %116 = vmatpush1.msra.mxu0 0.0
  %117 = vmatprep.subr.mxu0 0.0
  %118 = vmatpush1.msra.mxu0 0.0
  %119 = vmatprep.subr.mxu0 0.0
  %120 = vmatpush1.msra.mxu0 0.0
  %121 = vmatprep.subr.mxu0 0.0
  %122 = vmatpush1.msra.mxu0 0.0
  %123 = vmatprep.subr.mxu0 0.0
  %124 = vmatpush1.msra.mxu0 0.0
  %125 = vmatprep.subr.mxu0 0.0
  %126 = vmatpush1.msra.mxu0 0.0
  %127 = vmatprep.mubr.f32.mxu0 0.0
  %128 = vmatmul.mubr.f32.gmra.mrb[0].mxu0 %v57
  %v129 = vpop.f32.mrb[0].mxu0
  %v130 = vadd.f32 %v53, %v129
  %v131 = vpop.f32.mrb[0].mxu0
  %132 = vdwg.mxu0
  %v133 = vld [vmem:[%s4] sm:$0x1]
  %v135 = vlaneseq
  %v136 = vshrl.u32 %v135, 7
  %v137 = vsub.s32 0, %v136
  %v138 = vrot.slane %v133, %v137
  %v140 = vmul.f32 %v130, %v138
  %v141 = vld [vmem:[%s5] sm:$0x1]
  %v143 = vlaneseq
  %v144 = vshrl.u32 %v143, 7
  %v145 = vsub.s32 0, %v144
  %v146 = vrot.slane %v141, %v145
  %v148 = vadd.f32 %v140, %v146
  %v149 = vmax.f32 %v148, 0.0
  %v150 = vld [vmem:[%s6] sm:$0xff]
  %v151 = vld [vmem:[%s6 + $0x8] sm:$0xff]
  %v152 = vld [vmem:[%s6 + $0x10] sm:$0xff]
  %v153 = vld [vmem:[%s6 + $0x18] sm:$0xff]
  %v154 = vld [vmem:[%s6 + $0x20] sm:$0xff]
  %v155 = vld [vmem:[%s6 + $0x28] sm:$0xff]
  %v156 = vld [vmem:[%s6 + $0x30] sm:$0xff]
  %v157 = vld [vmem:[%s6 + $0x38] sm:$0xff]
  %v158 = vld [vmem:[%s6 + $0x40] sm:$0xff]
  %v159 = vld [vmem:[%s6 + $0x48] sm:$0xff]
  %v160 = vld [vmem:[%s6 + $0x50] sm:$0xff]
  %v161 = vld [vmem:[%s6 + $0x58] sm:$0xff]
  %v162 = vld [vmem:[%s6 + $0x60] sm:$0xff]
  %v163 = vld [vmem:[%s6 + $0x68] sm:$0xff]
  %v164 = vld [vmem:[%s6 + $0x70] sm:$0xff]
  %v165 = vld [vmem:[%s6 + $0x78] sm:$0xff]
  %v166 = vld [vmem:[%s7] sm:$0x1]
  %v168 = vlaneseq
  %v169 = vshrl.u32 %v168, 7
  %v170 = vsub.s32 0, %v169
  %v171 = vrot.slane %v166, %v170
  %173 = vmatprep.subr.mxu0 0.0
  %174 = vmatpush1.msra.mxu0 %v150
  %175 = vmatprep.subr.mxu0 0.0
  %176 = vmatpush1.msra.mxu0 %v151
  %177 = vmatprep.subr.mxu0 0.0
  %178 = vmatpush1.msra.mxu0 %v152
  %179 = vmatprep.subr.mxu0 0.0
  %180 = vmatpush1.msra.mxu0 %v153
  %181 = vmatprep.subr.mxu0 0.0
  %182 = vmatpush1.msra.mxu0 %v154
  %183 = vmatprep.subr.mxu0 0.0
  %184 = vmatpush1.msra.mxu0 %v155
  %185 = vmatprep.subr.mxu0 0.0
  %186 = vmatpush1.msra.mxu0 %v156
  %187 = vmatprep.subr.mxu0 0.0
  %188 = vmatpush1.msra.mxu0 %v157
  %189 = vmatprep.subr.mxu0 0.0
  %190 = vmatpush1.msra.mxu0 %v158
  %191 = vmatprep.subr.mxu0 0.0
  %192 = vmatpush1.msra.mxu0 %v159
  %193 = vmatprep.subr.mxu0 0.0
  %194 = vmatpush1.msra.mxu0 %v160
  %195 = vmatprep.subr.mxu0 0.0
  %196 = vmatpush1.msra.mxu0 %v161
  %197 = vmatprep.subr.mxu0 0.0
  %198 = vmatpush1.msra.mxu0 %v162
  %199 = vmatprep.subr.mxu0 0.0
  %200 = vmatpush1.msra.mxu0 %v163
  %201 = vmatprep.subr.mxu0 0.0
  %202 = vmatpush1.msra.mxu0 %v164
  %203 = vmatprep.subr.mxu0 0.0
  %204 = vmatpush1.msra.mxu0 %v165
  %205 = vmatprep.subr.mxu0 0.0
  %206 = vmatpush1.msra.mxu0 0.0
  %207 = vmatprep.subr.mxu0 0.0
  %208 = vmatpush1.msra.mxu0 0.0
  %209 = vmatprep.subr.mxu0 0.0
  %210 = vmatpush1.msra.mxu0 0.0
  %211 = vmatprep.subr.mxu0 0.0
  %212 = vmatpush1.msra.mxu0 0.0
  %213 = vmatprep.subr.mxu0 0.0
  %214 = vmatpush1.msra.mxu0 0.0
  %215 = vmatprep.subr.mxu0 0.0
  %216 = vmatpush1.msra.mxu0 0.0
  %217 = vmatprep.subr.mxu0 0.0
  %218 = vmatpush1.msra.mxu0 0.0
  %219 = vmatprep.subr.mxu0 0.0
  %220 = vmatpush1.msra.mxu0 0.0
  %221 = vmatprep.subr.mxu0 0.0
  %222 = vmatpush1.msra.mxu0 0.0
  %223 = vmatprep.subr.mxu0 0.0
  %224 = vmatpush1.msra.mxu0 0.0
  %225 = vmatprep.subr.mxu0 0.0
  %226 = vmatpush1.msra.mxu0 0.0
  %227 = vmatprep.subr.mxu0 0.0
  %228 = vmatpush1.msra.mxu0 0.0
  %229 = vmatprep.subr.mxu0 0.0
  %230 = vmatpush1.msra.mxu0 0.0
  %231 = vmatprep.subr.mxu0 0.0
  %232 = vmatpush1.msra.mxu0 0.0
  %233 = vmatprep.subr.mxu0 0.0
  %234 = vmatpush1.msra.mxu0 0.0
  %235 = vmatprep.subr.mxu0 0.0
  %236 = vmatpush1.msra.mxu0 0.0
  %237 = vmatprep.mubr.f32.mxu0 0.0
  %238 = vmatmul.mubr.f32.gmra.mrb[0].mxu0 %v149
  %v239 = vpop.f32.mrb[0].mxu0
  %v240 = vadd.f32 %v171, %v239
  %v241 = vpop.f32.mrb[0].mxu0
  %242 = vdwg.mxu0
  %v243 = vld [vmem:[%s8] sm:$0x1]
  %v245 = vlaneseq
  %v246 = vshrl.u32 %v245, 7
  %v247 = vsub.s32 0, %v246
  %v248 = vrot.slane %v243, %v247
  %v250 = vmul.f32 %v240, %v248
  %v251 = vld [vmem:[%s9] sm:$0x1]
  %v253 = vlaneseq
  %v254 = vshrl.u32 %v253, 7
  %v255 = vsub.s32 0, %v254
  %v256 = vrot.slane %v251, %v255
  %v258 = vadd.f32 %v250, %v256
  %v259 = vmax.f32 %v258, 0.0
  %v260 = vld [vmem:[%s10] sm:$0xff]
  %v261 = vld [vmem:[%s10 + $0x8] sm:$0xff]
  %v262 = vld [vmem:[%s10 + $0x10] sm:$0xff]
  %v263 = vld [vmem:[%s10 + $0x18] sm:$0xff]
  %v264 = vld [vmem:[%s10 + $0x20] sm:$0xff]
  %v265 = vld [vmem:[%s10 + $0x28] sm:$0xff]
  %v266 = vld [vmem:[%s10 + $0x30] sm:$0xff]
  %v267 = vld [vmem:[%s10 + $0x38] sm:$0xff]
  %v268 = vld [vmem:[%s10 + $0x40] sm:$0xff]
  %v269 = vld [vmem:[%s10 + $0x48] sm:$0xff]
  %v270 = vld [vmem:[%s10 + $0x50] sm:$0xff]
  %v271 = vld [vmem:[%s10 + $0x58] sm:$0xff]
  %v272 = vld [vmem:[%s10 + $0x60] sm:$0xff]
  %v273 = vld [vmem:[%s10 + $0x68] sm:$0xff]
  %v274 = vld [vmem:[%s10 + $0x70] sm:$0xff]
  %v275 = vld [vmem:[%s10 + $0x78] sm:$0xff]
  %v276 = vld [vmem:[%s11] sm:$0x1]
  %v278 = vlaneseq
  %v279 = vshrl.u32 %v278, 7
  %v280 = vsub.s32 0, %v279
  %v281 = vrot.slane %v276, %v280
  %283 = vmatprep.subr.mxu0 0.0
  %284 = vmatpush1.msra.mxu0 %v260
  %285 = vmatprep.subr.mxu0 0.0
  %286 = vmatpush1.msra.mxu0 %v261
  %287 = vmatprep.subr.mxu0 0.0
  %288 = vmatpush1.msra.mxu0 %v262
  %289 = vmatprep.subr.mxu0 0.0
  %290 = vmatpush1.msra.mxu0 %v263
  %291 = vmatprep.subr.mxu0 0.0
  %292 = vmatpush1.msra.mxu0 %v264
  %293 = vmatprep.subr.mxu0 0.0
  %294 = vmatpush1.msra.mxu0 %v265
  %295 = vmatprep.subr.mxu0 0.0
  %296 = vmatpush1.msra.mxu0 %v266
  %297 = vmatprep.subr.mxu0 0.0
  %298 = vmatpush1.msra.mxu0 %v267
  %299 = vmatprep.subr.mxu0 0.0
  %300 = vmatpush1.msra.mxu0 %v268
  %301 = vmatprep.subr.mxu0 0.0
  %302 = vmatpush1.msra.mxu0 %v269
  %303 = vmatprep.subr.mxu0 0.0
  %304 = vmatpush1.msra.mxu0 %v270
  %305 = vmatprep.subr.mxu0 0.0
  %306 = vmatpush1.msra.mxu0 %v271
  %307 = vmatprep.subr.mxu0 0.0
  %308 = vmatpush1.msra.mxu0 %v272
  %309 = vmatprep.subr.mxu0 0.0
  %310 = vmatpush1.msra.mxu0 %v273
  %311 = vmatprep.subr.mxu0 0.0
  %312 = vmatpush1.msra.mxu0 %v274
  %313 = vmatprep.subr.mxu0 0.0
  %314 = vmatpush1.msra.mxu0 %v275
  %315 = vmatprep.subr.mxu0 0.0
  %316 = vmatpush1.msra.mxu0 0.0
  %317 = vmatprep.subr.mxu0 0.0
  %318 = vmatpush1.msra.mxu0 0.0
  %319 = vmatprep.subr.mxu0 0.0
  %320 = vmatpush1.msra.mxu0 0.0
  %321 = vmatprep.subr.mxu0 0.0
  %322 = vmatpush1.msra.mxu0 0.0
  %323 = vmatprep.subr.mxu0 0.0
  %324 = vmatpush1.msra.mxu0 0.0
  %325 = vmatprep.subr.mxu0 0.0
  %326 = vmatpush1.msra.mxu0 0.0
  %327 = vmatprep.subr.mxu0 0.0
  %328 = vmatpush1.msra.mxu0 0.0
  %329 = vmatprep.subr.mxu0 0.0
  %330 = vmatpush1.msra.mxu0 0.0
  %331 = vmatprep.subr.mxu0 0.0
  %332 = vmatpush1.msra.mxu0 0.0
  %333 = vmatprep.subr.mxu0 0.0
  %334 = vmatpush1.msra.mxu0 0.0
  %335 = vmatprep.subr.mxu0 0.0
  %336 = vmatpush1.msra.mxu0 0.0
  %337 = vmatprep.subr.mxu0 0.0
  %338 = vmatpush1.msra.mxu0 0.0
  %339 = vmatprep.subr.mxu0 0.0
  %340 = vmatpush1.msra.mxu0 0.0
  %341 = vmatprep.subr.mxu0 0.0
  %342 = vmatpush1.msra.mxu0 0.0
  %343 = vmatprep.subr.mxu0 0.0
  %344 = vmatpush1.msra.mxu0 0.0
  %345 = vmatprep.subr.mxu0 0.0
  %346 = vmatpush1.msra.mxu0 0.0
  %347 = vmatprep.mubr.f32.mxu0 0.0
  %348 = vmatmul.mubr.f32.gmra.mrb[0].mxu0 %v259
  %v349 = vpop.f32.mrb[0].mxu0
  %v350 = vadd.f32 %v281, %v349
  %v351 = vpop.f32.mrb[0].mxu0
  %352 = vdwg.mxu0
  %v353 = vrot.slane %v350, 4
  %v354 = vadd.f32 %v350, %v353
  %v355 = vrot.slane %v354, 2
  %v356 = vadd.f32 %v354, %v355
  %v357 = vrot.slane %v356, 1
  %v358 = vadd.f32 %v356, %v357
  %v359 = vmul.f32 %v350, %v350
  %v360 = vrot.slane %v359, 4
  %v361 = vadd.f32 %v359, %v360
  %v362 = vrot.slane %v361, 2
  %v363 = vadd.f32 %v361, %v362
  %v364 = vrot.slane %v363, 1
  %v365 = vadd.f32 %v363, %v364
  %vm366 = vcmask 1040384
  %v367 = vsel %vm366, %v358, %v365
  %368 = vst [vmem:[%s13] sm:$0x3] %v367
  %p369 = scmp.eq.s32.totalorder 0, 0
  // Predicated region
  $region54: #{specialized_mlp_sh.9} parent=0 // pred_check
    %p370 = pneg %p369
  $region55: #{specialized_mlp_sh.9} parent=0 // pred_check_branch
    %372 = sbr.rel (%p370) target = $region57
  $region56: #{specialized_mlp_sh.9} parent=0 // pred_region
    %v373 = vlaneseq
    %v374 = vshrl.u32 %v373, 7
    %s375 = smul.u32 0, 8
    %v376 = vstv %s375
    %v377 = vadd.s32 %v376, %v374
    %v378 = vmul.u32 %v377, 4
    %v379 = vld [vmem:[%s12] sm:$0x1]
    %v380 = vlaneseq
    %v381 = vshrl.u32 %v380, 7
    %v382 = vsub.s32 0, %v381
    %v383 = vrot.slane %v379, %v382
    %v384 = vadd.s32 %v378, %v383
    %s385 = sld [smem:[#allocation2]]
    %v386 = vstv %s385
    %vm387 = vcmp.lt.s32.totalorder %v384, %v386
    %v388 = vsel %vm387, %v350, 0.0
    %v389 = vrot.slane %v388, 4
    %v390 = vadd.f32 %v388, %v389
    %v391 = vrot.slane %v390, 2
    %v392 = vadd.f32 %v390, %v391
    %v393 = vrot.slane %v392, 1
    %v394 = vadd.f32 %v392, %v393
    %v395 = vmul.f32 %v388, %v388
    %v396 = vrot.slane %v395, 4
    %v397 = vadd.f32 %v395, %v396
    %v398 = vrot.slane %v397, 2
    %v399 = vadd.f32 %v397, %v398
    %v400 = vrot.slane %v399, 1
    %v401 = vadd.f32 %v399, %v400
    %v402 = vsel %vm366, %v394, %v401
    %403 = vst [vmem:[%s13] sm:$0x3] %v402
  $region57: #{specialized_mlp_sh.9} parent=0 // pred_fallthru
    _
  // Predicated region
  $region58: #{specialized_mlp_sh.9} parent=0 // pred_check
    _
  $region59: #{specialized_mlp_sh.9} parent=0 // pred_check_branch
    %405 = sbr.rel (0) target = $region61
  $region60: #{specialized_mlp_sh.9} parent=0 // pred_region
    _
  $region61: #{specialized_mlp_sh.9} parent=0 // pred_fallthru
    _
  // Predicated region
  $region62: #{specialized_mlp_sh.9} parent=0 // pred_check
    _
  $region63: #{specialized_mlp_sh.9} parent=0 // pred_check_branch
    %407 = sbr.rel (0) target = $region65
  $region64: #{specialized_mlp_sh.9} parent=0 // pred_region
    _
  $region65: #{specialized_mlp_sh.9} parent=0 // pred_fallthru
    _

// kernel: specialized_mlp_sh.11
$region0: #{specialized_mlp_sh.11}
  #allocation0 [shape = 'u32[]', space=smem, size = 0x4, offset = 0x4, fixed_abs, tag = 'smem constant byte address 0x4 - core index']
  #allocation1 [shape = 'u32[144,128]{1,0:T(1,128)}', space=vmem, size = 0x12000, scoped, tag = 'internal scratch']
  #allocation2 [shape = 's32[1]{0:T(128)S(6)}', space=smem, size = 0x200, scoped, tag = 'scoped memory for specialized_mlp_sh.11']
  %s0 = inlined_call_operand.<no memory space> [shape: s32[1], index: 0, kind: input, shape index: {}]
  %s1 = inlined_call_operand.vmem [shape: f32[8,12], index: 1, kind: input, shape index: {}]
  %s2 = inlined_call_operand.vmem [shape: f32[12,128], index: 2, kind: input, shape index: {}]
  %s3 = inlined_call_operand.vmem [shape: f32[1,128], index: 3, kind: input, shape index: {}]
  %s4 = inlined_call_operand.vmem [shape: f32[1,128], index: 4, kind: input, shape index: {}]
  %s5 = inlined_call_operand.vmem [shape: f32[1,128], index: 5, kind: input, shape index: {}]
  %s6 = inlined_call_operand.vmem [shape: f32[128,128], index: 6, kind: input, shape index: {}]
  %s7 = inlined_call_operand.vmem [shape: f32[1,128], index: 7, kind: input, shape index: {}]
  %s8 = inlined_call_operand.vmem [shape: f32[1,128], index: 8, kind: input, shape index: {}]
  %s9 = inlined_call_operand.vmem [shape: f32[1,128], index: 9, kind: input, shape index: {}]
  %s10 = inlined_call_operand.vmem [shape: f32[128,128], index: 10, kind: input, shape index: {}]
  %s11 = inlined_call_operand.vmem [shape: f32[1,128], index: 11, kind: input, shape index: {}]
  %s12 = inlined_call_operand.vmem [shape: f32[1,128], index: 12, kind: input, shape index: {}]
  %s13 = inlined_call_operand.vmem [shape: f32[1,128], index: 13, kind: input, shape index: {}]
  %s14 = inlined_call_operand.vmem [shape: f32[128,128], index: 14, kind: input, shape index: {}]
  %s15 = inlined_call_operand.vmem [shape: f32[1,128], index: 15, kind: input, shape index: {}]
  %s16 = inlined_call_operand.vmem [shape: f32[1,128], index: 16, kind: input, shape index: {}]
  %s17 = inlined_call_operand.vmem [shape: f32[1,128], index: 17, kind: input, shape index: {}]
  %s18 = inlined_call_operand.vmem [shape: f32[128,128], index: 18, kind: input, shape index: {}]
  %s19 = inlined_call_operand.vmem [shape: f32[1,128], index: 19, kind: input, shape index: {}]
  %s20 = inlined_call_operand.vmem [shape: s32[1,128], index: 20, kind: input, shape index: {}]
  %s21 = inlined_call_operand.vmem [shape: f32[1,2,128], index: 21, kind: output, shape index: {}]
  %s22 = sld [smem:[#allocation0]]
  $region98: #{specialized_mlp_sh.11} parent=0
    _
  %s24 = ssub.s32 1, %s22
  %s25 = scalar_select 0, %s24, %s22
  %26 = sst [smem:[#allocation2]] %s0
  // Predicated region
  $region2: #{specialized_mlp_sh.11} parent=0 // pred_check
    _
  $region3: #{specialized_mlp_sh.11} parent=0 // pred_check_branch
    %28 = sbr.rel (0) target = $region5
  $region4: #{specialized_mlp_sh.11} parent=0 // pred_region
    _
  $region5: #{specialized_mlp_sh.11} parent=0 // pred_fallthru
    _
  // Predicated region
  $region6: #{specialized_mlp_sh.11} parent=0 // pred_check
    _
  $region7: #{specialized_mlp_sh.11} parent=0 // pred_check_branch
    %30 = sbr.rel (0) target = $region9
  $region8: #{specialized_mlp_sh.11} parent=0 // pred_region
    _
  $region9: #{specialized_mlp_sh.11} parent=0 // pred_fallthru
    _
  // Predicated region
  $region10: #{specialized_mlp_sh.11} parent=0 // pred_check
    _
  $region11: #{specialized_mlp_sh.11} parent=0 // pred_check_branch
    %32 = sbr.rel (0) target = $region13
  $region12: #{specialized_mlp_sh.11} parent=0 // pred_region
    _
  $region13: #{specialized_mlp_sh.11} parent=0 // pred_fallthru
    _
  // Predicated region
  $region14: #{specialized_mlp_sh.11} parent=0 // pred_check
    _
  $region15: #{specialized_mlp_sh.11} parent=0 // pred_check_branch
    %34 = sbr.rel (0) target = $region17
  $region16: #{specialized_mlp_sh.11} parent=0 // pred_region
    _
  $region17: #{specialized_mlp_sh.11} parent=0 // pred_fallthru
    _
  // Predicated region
  $region18: #{specialized_mlp_sh.11} parent=0 // pred_check
    _
  $region19: #{specialized_mlp_sh.11} parent=0 // pred_check_branch
    %36 = sbr.rel (0) target = $region21
  $region20: #{specialized_mlp_sh.11} parent=0 // pred_region
    _
  $region21: #{specialized_mlp_sh.11} parent=0 // pred_fallthru
    _
  // Predicated region
  $region22: #{specialized_mlp_sh.11} parent=0 // pred_check
    _
  $region23: #{specialized_mlp_sh.11} parent=0 // pred_check_branch
    %38 = sbr.rel (0) target = $region25
  $region24: #{specialized_mlp_sh.11} parent=0 // pred_region
    _
  $region25: #{specialized_mlp_sh.11} parent=0 // pred_fallthru
    _
  // Predicated region
  $region26: #{specialized_mlp_sh.11} parent=0 // pred_check
    _
  $region27: #{specialized_mlp_sh.11} parent=0 // pred_check_branch
    %40 = sbr.rel (0) target = $region29
  $region28: #{specialized_mlp_sh.11} parent=0 // pred_region
    _
  $region29: #{specialized_mlp_sh.11} parent=0 // pred_fallthru
    _
  // Predicated region
  $region30: #{specialized_mlp_sh.11} parent=0 // pred_check
    _
  $region31: #{specialized_mlp_sh.11} parent=0 // pred_check_branch
    %42 = sbr.rel (0) target = $region33
  $region32: #{specialized_mlp_sh.11} parent=0 // pred_region
    _
  $region33: #{specialized_mlp_sh.11} parent=0 // pred_fallthru
    _
  // Predicated region
  $region34: #{specialized_mlp_sh.11} parent=0 // pred_check
    _
  $region35: #{specialized_mlp_sh.11} parent=0 // pred_check_branch
    %44 = sbr.rel (0) target = $region37
  $region36: #{specialized_mlp_sh.11} parent=0 // pred_region
    _
  $region37: #{specialized_mlp_sh.11} parent=0 // pred_fallthru
    _
  // Predicated region
  $region38: #{specialized_mlp_sh.11} parent=0 // pred_check
    _
  $region39: #{specialized_mlp_sh.11} parent=0 // pred_check_branch
    %46 = sbr.rel (0) target = $region41
  $region40: #{specialized_mlp_sh.11} parent=0 // pred_region
    _
  $region41: #{specialized_mlp_sh.11} parent=0 // pred_fallthru
    _
  // Predicated region
  $region42: #{specialized_mlp_sh.11} parent=0 // pred_check
    _
  $region43: #{specialized_mlp_sh.11} parent=0 // pred_check_branch
    %48 = sbr.rel (0) target = $region45
  $region44: #{specialized_mlp_sh.11} parent=0 // pred_region
    _
  $region45: #{specialized_mlp_sh.11} parent=0 // pred_fallthru
    _
  // Predicated region
  $region46: #{specialized_mlp_sh.11} parent=0 // pred_check
    _
  $region47: #{specialized_mlp_sh.11} parent=0 // pred_check_branch
    %50 = sbr.rel (0) target = $region49
  $region48: #{specialized_mlp_sh.11} parent=0 // pred_region
    _
  $region49: #{specialized_mlp_sh.11} parent=0 // pred_fallthru
    _
  // Predicated region
  $region50: #{specialized_mlp_sh.11} parent=0 // pred_check
    _
  $region51: #{specialized_mlp_sh.11} parent=0 // pred_check_branch
    %52 = sbr.rel (0) target = $region53
  $region52: #{specialized_mlp_sh.11} parent=0 // pred_region
    _
  $region53: #{specialized_mlp_sh.11} parent=0 // pred_fallthru
    _
  // Predicated region
  $region54: #{specialized_mlp_sh.11} parent=0 // pred_check
    _
  $region55: #{specialized_mlp_sh.11} parent=0 // pred_check_branch
    %54 = sbr.rel (0) target = $region57
  $region56: #{specialized_mlp_sh.11} parent=0 // pred_region
    _
  $region57: #{specialized_mlp_sh.11} parent=0 // pred_fallthru
    _
  // Predicated region
  $region58: #{specialized_mlp_sh.11} parent=0 // pred_check
    _
  $region59: #{specialized_mlp_sh.11} parent=0 // pred_check_branch
    %56 = sbr.rel (0) target = $region61
  $region60: #{specialized_mlp_sh.11} parent=0 // pred_region
    _
  $region61: #{specialized_mlp_sh.11} parent=0 // pred_fallthru
    _
  // Predicated region
  $region62: #{specialized_mlp_sh.11} parent=0 // pred_check
    _
  $region63: #{specialized_mlp_sh.11} parent=0 // pred_check_branch
    %58 = sbr.rel (0) target = $region65
  $region64: #{specialized_mlp_sh.11} parent=0 // pred_region
    _
  $region65: #{specialized_mlp_sh.11} parent=0 // pred_fallthru
    _
  // Predicated region
  $region66: #{specialized_mlp_sh.11} parent=0 // pred_check
    _
  $region67: #{specialized_mlp_sh.11} parent=0 // pred_check_branch
    %60 = sbr.rel (0) target = $region69
  $region68: #{specialized_mlp_sh.11} parent=0 // pred_region
    _
  $region69: #{specialized_mlp_sh.11} parent=0 // pred_fallthru
    _
  // Predicated region
  $region70: #{specialized_mlp_sh.11} parent=0 // pred_check
    _
  $region71: #{specialized_mlp_sh.11} parent=0 // pred_check_branch
    %62 = sbr.rel (0) target = $region73
  $region72: #{specialized_mlp_sh.11} parent=0 // pred_region
    _
  $region73: #{specialized_mlp_sh.11} parent=0 // pred_fallthru
    _
  // Predicated region
  $region74: #{specialized_mlp_sh.11} parent=0 // pred_check
    _
  $region75: #{specialized_mlp_sh.11} parent=0 // pred_check_branch
    %64 = sbr.rel (0) target = $region77
  $region76: #{specialized_mlp_sh.11} parent=0 // pred_region
    _
  $region77: #{specialized_mlp_sh.11} parent=0 // pred_fallthru
    _
  // Predicated region
  $region78: #{specialized_mlp_sh.11} parent=0 // pred_check
    _
  $region79: #{specialized_mlp_sh.11} parent=0 // pred_check_branch
    %66 = sbr.rel (0) target = $region81
  $region80: #{specialized_mlp_sh.11} parent=0 // pred_region
    _
  $region81: #{specialized_mlp_sh.11} parent=0 // pred_fallthru
    _
  // Predicated region
  $region82: #{specialized_mlp_sh.11} parent=0 // pred_check
    _
  $region83: #{specialized_mlp_sh.11} parent=0 // pred_check_branch
    %68 = sbr.rel (0) target = $region85
  $region84: #{specialized_mlp_sh.11} parent=0 // pred_region
    _
  $region85: #{specialized_mlp_sh.11} parent=0 // pred_fallthru
    _
  %v69 = vld [vmem:[%s1] sm:$0xff]
  %v70 = vld [vmem:[%s2] sm:$0xff]
  %v71 = vld [vmem:[%s2 + $0x8] sm:$0xf]
  %v72 = vld [vmem:[%s3] sm:$0x1]
  %v74 = vlaneseq
  %v75 = vshrl.u32 %v74, 7
  %v76 = vsub.s32 0, %v75
  %v77 = vrot.slane %v72, %v76
  %vm79 = vcmask 97280
  %v81 = vsel %vm79, %v69, 0
  %vm83 = vcmask 1043456
  %v85 = vsel %vm83, %v71, 0
  %87 = vmatprep.subr.mxu0 0.0
  %88 = vmatpush1.msra.mxu0 %v70
  %89 = vmatprep.subr.mxu0 0.0
  %90 = vmatpush1.msra.mxu0 %v85
  %91 = vmatprep.subr.mxu0 0.0
  %92 = vmatpush1.msra.mxu0 0.0
  %93 = vmatprep.subr.mxu0 0.0
  %94 = vmatpush1.msra.mxu0 0.0
  %95 = vmatprep.subr.mxu0 0.0
  %96 = vmatpush1.msra.mxu0 0.0
  %97 = vmatprep.subr.mxu0 0.0
  %98 = vmatpush1.msra.mxu0 0.0
  %99 = vmatprep.subr.mxu0 0.0
  %100 = vmatpush1.msra.mxu0 0.0
  %101 = vmatprep.subr.mxu0 0.0
  %102 = vmatpush1.msra.mxu0 0.0
  %103 = vmatprep.subr.mxu0 0.0
  %104 = vmatpush1.msra.mxu0 0.0
  %105 = vmatprep.subr.mxu0 0.0
  %106 = vmatpush1.msra.mxu0 0.0
  %107 = vmatprep.subr.mxu0 0.0
  %108 = vmatpush1.msra.mxu0 0.0
  %109 = vmatprep.subr.mxu0 0.0
  %110 = vmatpush1.msra.mxu0 0.0
  %111 = vmatprep.subr.mxu0 0.0
  %112 = vmatpush1.msra.mxu0 0.0
  %113 = vmatprep.subr.mxu0 0.0
  %114 = vmatpush1.msra.mxu0 0.0
  %115 = vmatprep.subr.mxu0 0.0
  %116 = vmatpush1.msra.mxu0 0.0
  %117 = vmatprep.subr.mxu0 0.0
  %118 = vmatpush1.msra.mxu0 0.0
  %119 = vmatprep.subr.mxu0 0.0
  %120 = vmatpush1.msra.mxu0 0.0
  %121 = vmatprep.subr.mxu0 0.0
  %122 = vmatpush1.msra.mxu0 0.0
  %123 = vmatprep.subr.mxu0 0.0
  %124 = vmatpush1.msra.mxu0 0.0
  %125 = vmatprep.subr.mxu0 0.0
  %126 = vmatpush1.msra.mxu0 0.0
  %127 = vmatprep.subr.mxu0 0.0
  %128 = vmatpush1.msra.mxu0 0.0
  %129 = vmatprep.subr.mxu0 0.0
  %130 = vmatpush1.msra.mxu0 0.0
  %131 = vmatprep.subr.mxu0 0.0
  %132 = vmatpush1.msra.mxu0 0.0
  %133 = vmatprep.subr.mxu0 0.0
  %134 = vmatpush1.msra.mxu0 0.0
  %135 = vmatprep.subr.mxu0 0.0
  %136 = vmatpush1.msra.mxu0 0.0
  %137 = vmatprep.subr.mxu0 0.0
  %138 = vmatpush1.msra.mxu0 0.0
  %139 = vmatprep.subr.mxu0 0.0
  %140 = vmatpush1.msra.mxu0 0.0
  %141 = vmatprep.subr.mxu0 0.0
  %142 = vmatpush1.msra.mxu0 0.0
  %143 = vmatprep.subr.mxu0 0.0
  %144 = vmatpush1.msra.mxu0 0.0
  %145 = vmatprep.subr.mxu0 0.0
  %146 = vmatpush1.msra.mxu0 0.0
  %147 = vmatprep.subr.mxu0 0.0
  %148 = vmatpush1.msra.mxu0 0.0
  %149 = vmatprep.subr.mxu0 0.0
  %150 = vmatpush1.msra.mxu0 0.0
  %151 = vmatprep.mubr.f32.mxu0 0.0
  %152 = vmatmul.mubr.f32.gmra.mrb[0].mxu0 %v81
  %v153 = vpop.f32.mrb[0].mxu0
  %v154 = vadd.f32 %v77, %v153
  %v155 = vpop.f32.mrb[0].mxu0
  %156 = vdwg.mxu0
  %v157 = vld [vmem:[%s4] sm:$0x1]
  %v159 = vlaneseq
  %v160 = vshrl.u32 %v159, 7
  %v161 = vsub.s32 0, %v160
  %v162 = vrot.slane %v157, %v161
  %v164 = vmul.f32 %v154, %v162
  %v165 = vld [vmem:[%s5] sm:$0x1]
  %v167 = vlaneseq
  %v168 = vshrl.u32 %v167, 7
  %v169 = vsub.s32 0, %v168
  %v170 = vrot.slane %v165, %v169
  %v172 = vadd.f32 %v164, %v170
  %v173 = vmax.f32 %v172, 0.0
  %v174 = vld [vmem:[%s6] sm:$0xff]
  %v175 = vld [vmem:[%s6 + $0x8] sm:$0xff]
  %v176 = vld [vmem:[%s6 + $0x10] sm:$0xff]
  %v177 = vld [vmem:[%s6 + $0x18] sm:$0xff]
  %v178 = vld [vmem:[%s6 + $0x20] sm:$0xff]
  %v179 = vld [vmem:[%s6 + $0x28] sm:$0xff]
  %v180 = vld [vmem:[%s6 + $0x30] sm:$0xff]
  %v181 = vld [vmem:[%s6 + $0x38] sm:$0xff]
  %v182 = vld [vmem:[%s6 + $0x40] sm:$0xff]
  %v183 = vld [vmem:[%s6 + $0x48] sm:$0xff]
  %v184 = vld [vmem:[%s6 + $0x50] sm:$0xff]
  %v185 = vld [vmem:[%s6 + $0x58] sm:$0xff]
  %v186 = vld [vmem:[%s6 + $0x60] sm:$0xff]
  %v187 = vld [vmem:[%s6 + $0x68] sm:$0xff]
  %v188 = vld [vmem:[%s6 + $0x70] sm:$0xff]
  %v189 = vld [vmem:[%s6 + $0x78] sm:$0xff]
  %v190 = vld [vmem:[%s7] sm:$0x1]
  %v192 = vlaneseq
  %v193 = vshrl.u32 %v192, 7
  %v194 = vsub.s32 0, %v193
  %v195 = vrot.slane %v190, %v194
  %197 = vmatprep.subr.mxu0 0.0
  %198 = vmatpush1.msra.mxu0 %v174
  %199 = vmatprep.subr.mxu0 0.0
  %200 = vmatpush1.msra.mxu0 %v175
  %201 = vmatprep.subr.mxu0 0.0
  %202 = vmatpush1.msra.mxu0 %v176
  %203 = vmatprep.subr.mxu0 0.0
  %204 = vmatpush1.msra.mxu0 %v177
  %205 = vmatprep.subr.mxu0 0.0
  %206 = vmatpush1.msra.mxu0 %v178
  %207 = vmatprep.subr.mxu0 0.0
  %208 = vmatpush1.msra.mxu0 %v179
  %209 = vmatprep.subr.mxu0 0.0
  %210 = vmatpush1.msra.mxu0 %v180
  %211 = vmatprep.subr.mxu0 0.0
  %212 = vmatpush1.msra.mxu0 %v181
  %213 = vmatprep.subr.mxu0 0.0
  %214 = vmatpush1.msra.mxu0 %v182
  %215 = vmatprep.subr.mxu0 0.0
  %216 = vmatpush1.msra.mxu0 %v183
  %217 = vmatprep.subr.mxu0 0.0
  %218 = vmatpush1.msra.mxu0 %v184
  %219 = vmatprep.subr.mxu0 0.0
  %220 = vmatpush1.msra.mxu0 %v185
  %221 = vmatprep.subr.mxu0 0.0
  %222 = vmatpush1.msra.mxu0 %v186
  %223 = vmatprep.subr.mxu0 0.0
  %224 = vmatpush1.msra.mxu0 %v187
  %225 = vmatprep.subr.mxu0 0.0
  %226 = vmatpush1.msra.mxu0 %v188
  %227 = vmatprep.subr.mxu0 0.0
  %228 = vmatpush1.msra.mxu0 %v189
  %229 = vmatprep.subr.mxu0 0.0
  %230 = vmatpush1.msra.mxu0 0.0
  %231 = vmatprep.subr.mxu0 0.0
  %232 = vmatpush1.msra.mxu0 0.0
  %233 = vmatprep.subr.mxu0 0.0
  %234 = vmatpush1.msra.mxu0 0.0
  %235 = vmatprep.subr.mxu0 0.0
  %236 = vmatpush1.msra.mxu0 0.0
  %237 = vmatprep.subr.mxu0 0.0
  %238 = vmatpush1.msra.mxu0 0.0
  %239 = vmatprep.subr.mxu0 0.0
  %240 = vmatpush1.msra.mxu0 0.0
  %241 = vmatprep.subr.mxu0 0.0
  %242 = vmatpush1.msra.mxu0 0.0
  %243 = vmatprep.subr.mxu0 0.0
  %244 = vmatpush1.msra.mxu0 0.0
  %245 = vmatprep.subr.mxu0 0.0
  %246 = vmatpush1.msra.mxu0 0.0
  %247 = vmatprep.subr.mxu0 0.0
  %248 = vmatpush1.msra.mxu0 0.0
  %249 = vmatprep.subr.mxu0 0.0
  %250 = vmatpush1.msra.mxu0 0.0
  %251 = vmatprep.subr.mxu0 0.0
  %252 = vmatpush1.msra.mxu0 0.0
  %253 = vmatprep.subr.mxu0 0.0
  %254 = vmatpush1.msra.mxu0 0.0
  %255 = vmatprep.subr.mxu0 0.0
  %256 = vmatpush1.msra.mxu0 0.0
  %257 = vmatprep.subr.mxu0 0.0
  %258 = vmatpush1.msra.mxu0 0.0
  %259 = vmatprep.subr.mxu0 0.0
  %260 = vmatpush1.msra.mxu0 0.0
  %261 = vmatprep.mubr.f32.mxu0 0.0
  %262 = vmatmul.mubr.f32.gmra.mrb[0].mxu0 %v173
  %v263 = vpop.f32.mrb[0].mxu0
  %v264 = vadd.f32 %v195, %v263
  %v265 = vpop.f32.mrb[0].mxu0
  %266 = vdwg.mxu0
  %v267 = vld [vmem:[%s8] sm:$0x1]
  %v269 = vlaneseq
  %v270 = vshrl.u32 %v269, 7
  %v271 = vsub.s32 0, %v270
  %v272 = vrot.slane %v267, %v271
  %v274 = vmul.f32 %v264, %v272
  %v275 = vld [vmem:[%s9] sm:$0x1]
  %v277 = vlaneseq
  %v278 = vshrl.u32 %v277, 7
  %v279 = vsub.s32 0, %v278
  %v280 = vrot.slane %v275, %v279
  %v282 = vadd.f32 %v274, %v280
  %v283 = vmax.f32 %v282, 0.0
  %v284 = vld [vmem:[%s10] sm:$0xff]
  %v285 = vld [vmem:[%s10 + $0x8] sm:$0xff]
  %v286 = vld [vmem:[%s10 + $0x10] sm:$0xff]
  %v287 = vld [vmem:[%s10 + $0x18] sm:$0xff]
  %v288 = vld [vmem:[%s10 + $0x20] sm:$0xff]
  %v289 = vld [vmem:[%s10 + $0x28] sm:$0xff]
  %v290 = vld [vmem:[%s10 + $0x30] sm:$0xff]
  %v291 = vld [vmem:[%s10 + $0x38] sm:$0xff]
  %v292 = vld [vmem:[%s10 + $0x40] sm:$0xff]
  %v293 = vld [vmem:[%s10 + $0x48] sm:$0xff]
  %v294 = vld [vmem:[%s10 + $0x50] sm:$0xff]
  %v295 = vld [vmem:[%s10 + $0x58] sm:$0xff]
  %v296 = vld [vmem:[%s10 + $0x60] sm:$0xff]
  %v297 = vld [vmem:[%s10 + $0x68] sm:$0xff]
  %v298 = vld [vmem:[%s10 + $0x70] sm:$0xff]
  %v299 = vld [vmem:[%s10 + $0x78] sm:$0xff]
  %v300 = vld [vmem:[%s11] sm:$0x1]
  %v302 = vlaneseq
  %v303 = vshrl.u32 %v302, 7
  %v304 = vsub.s32 0, %v303
  %v305 = vrot.slane %v300, %v304
  %307 = vmatprep.subr.mxu0 0.0
  %308 = vmatpush1.msra.mxu0 %v284
  %309 = vmatprep.subr.mxu0 0.0
  %310 = vmatpush1.msra.mxu0 %v285
  %311 = vmatprep.subr.mxu0 0.0
  %312 = vmatpush1.msra.mxu0 %v286
  %313 = vmatprep.subr.mxu0 0.0
  %314 = vmatpush1.msra.mxu0 %v287
  %315 = vmatprep.subr.mxu0 0.0
  %316 = vmatpush1.msra.mxu0 %v288
  %317 = vmatprep.subr.mxu0 0.0
  %318 = vmatpush1.msra.mxu0 %v289
  %319 = vmatprep.subr.mxu0 0.0
  %320 = vmatpush1.msra.mxu0 %v290
  %321 = vmatprep.subr.mxu0 0.0
  %322 = vmatpush1.msra.mxu0 %v291
  %323 = vmatprep.subr.mxu0 0.0
  %324 = vmatpush1.msra.mxu0 %v292
  %325 = vmatprep.subr.mxu0 0.0
  %326 = vmatpush1.msra.mxu0 %v293
  %327 = vmatprep.subr.mxu0 0.0
  %328 = vmatpush1.msra.mxu0 %v294
  %329 = vmatprep.subr.mxu0 0.0
  %330 = vmatpush1.msra.mxu0 %v295
  %331 = vmatprep.subr.mxu0 0.0
  %332 = vmatpush1.msra.mxu0 %v296
  %333 = vmatprep.subr.mxu0 0.0
  %334 = vmatpush1.msra.mxu0 %v297
  %335 = vmatprep.subr.mxu0 0.0
  %336 = vmatpush1.msra.mxu0 %v298
  %337 = vmatprep.subr.mxu0 0.0
  %338 = vmatpush1.msra.mxu0 %v299
  %339 = vmatprep.subr.mxu0 0.0
  %340 = vmatpush1.msra.mxu0 0.0
  %341 = vmatprep.subr.mxu0 0.0
  %342 = vmatpush1.msra.mxu0 0.0
  %343 = vmatprep.subr.mxu0 0.0
  %344 = vmatpush1.msra.mxu0 0.0
  %345 = vmatprep.subr.mxu0 0.0
  %346 = vmatpush1.msra.mxu0 0.0
  %347 = vmatprep.subr.mxu0 0.0
  %348 = vmatpush1.msra.mxu0 0.0
  %349 = vmatprep.subr.mxu0 0.0
  %350 = vmatpush1.msra.mxu0 0.0
  %351 = vmatprep.subr.mxu0 0.0
  %352 = vmatpush1.msra.mxu0 0.0
  %353 = vmatprep.subr.mxu0 0.0
  %354 = vmatpush1.msra.mxu0 0.0
  %355 = vmatprep.subr.mxu0 0.0
  %356 = vmatpush1.msra.mxu0 0.0
  %357 = vmatprep.subr.mxu0 0.0
  %358 = vmatpush1.msra.mxu0 0.0
  %359 = vmatprep.subr.mxu0 0.0
  %360 = vmatpush1.msra.mxu0 0.0
  %361 = vmatprep.subr.mxu0 0.0
  %362 = vmatpush1.msra.mxu0 0.0
  %363 = vmatprep.subr.mxu0 0.0
  %364 = vmatpush1.msra.mxu0 0.0
  %365 = vmatprep.subr.mxu0 0.0
  %366 = vmatpush1.msra.mxu0 0.0
  %367 = vmatprep.subr.mxu0 0.0
  %368 = vmatpush1.msra.mxu0 0.0
  %369 = vmatprep.subr.mxu0 0.0
  %370 = vmatpush1.msra.mxu0 0.0
  %371 = vmatprep.mubr.f32.mxu0 0.0
  %372 = vmatmul.mubr.f32.gmra.mrb[0].mxu0 %v283
  %v373 = vpop.f32.mrb[0].mxu0
  %v374 = vadd.f32 %v305, %v373
  %v375 = vpop.f32.mrb[0].mxu0
  %376 = vdwg.mxu0
  %v377 = vld [vmem:[%s12] sm:$0x1]
  %v379 = vlaneseq
  %v380 = vshrl.u32 %v379, 7
  %v381 = vsub.s32 0, %v380
  %v382 = vrot.slane %v377, %v381
  %v384 = vmul.f32 %v374, %v382
  %v385 = vld [vmem:[%s13] sm:$0x1]
  %v387 = vlaneseq
  %v388 = vshrl.u32 %v387, 7
  %v389 = vsub.s32 0, %v388
  %v390 = vrot.slane %v385, %v389
  %v392 = vadd.f32 %v384, %v390
  %v393 = vmax.f32 %v392, 0.0
  %v394 = vld [vmem:[%s14] sm:$0xff]
  %v395 = vld [vmem:[%s14 + $0x8] sm:$0xff]
  %v396 = vld [vmem:[%s14 + $0x10] sm:$0xff]
  %v397 = vld [vmem:[%s14 + $0x18] sm:$0xff]
  %v398 = vld [vmem:[%s14 + $0x20] sm:$0xff]
  %v399 = vld [vmem:[%s14 + $0x28] sm:$0xff]
  %v400 = vld [vmem:[%s14 + $0x30] sm:$0xff]
  %v401 = vld [vmem:[%s14 + $0x38] sm:$0xff]
  %v402 = vld [vmem:[%s14 + $0x40] sm:$0xff]
  %v403 = vld [vmem:[%s14 + $0x48] sm:$0xff]
  %v404 = vld [vmem:[%s14 + $0x50] sm:$0xff]
  %v405 = vld [vmem:[%s14 + $0x58] sm:$0xff]
  %v406 = vld [vmem:[%s14 + $0x60] sm:$0xff]
  %v407 = vld [vmem:[%s14 + $0x68] sm:$0xff]
  %v408 = vld [vmem:[%s14 + $0x70] sm:$0xff]
  %v409 = vld [vmem:[%s14 + $0x78] sm:$0xff]
  %v410 = vld [vmem:[%s15] sm:$0x1]
  %v412 = vlaneseq
  %v413 = vshrl.u32 %v412, 7
  %v414 = vsub.s32 0, %v413
  %v415 = vrot.slane %v410, %v414
  %417 = vmatprep.subr.mxu0 0.0
  %418 = vmatpush1.msra.mxu0 %v394
  %419 = vmatprep.subr.mxu0 0.0
  %420 = vmatpush1.msra.mxu0 %v395
  %421 = vmatprep.subr.mxu0 0.0
  %422 = vmatpush1.msra.mxu0 %v396
  %423 = vmatprep.subr.mxu0 0.0
  %424 = vmatpush1.msra.mxu0 %v397
  %425 = vmatprep.subr.mxu0 0.0
  %426 = vmatpush1.msra.mxu0 %v398
  %427 = vmatprep.subr.mxu0 0.0
  %428 = vmatpush1.msra.mxu0 %v399
  %429 = vmatprep.subr.mxu0 0.0
  %430 = vmatpush1.msra.mxu0 %v400
  %431 = vmatprep.subr.mxu0 0.0
  %432 = vmatpush1.msra.mxu0 %v401
  %433 = vmatprep.subr.mxu0 0.0
  %434 = vmatpush1.msra.mxu0 %v402
  %435 = vmatprep.subr.mxu0 0.0
  %436 = vmatpush1.msra.mxu0 %v403
  %437 = vmatprep.subr.mxu0 0.0
  %438 = vmatpush1.msra.mxu0 %v404
  %439 = vmatprep.subr.mxu0 0.0
  %440 = vmatpush1.msra.mxu0 %v405
  %441 = vmatprep.subr.mxu0 0.0
  %442 = vmatpush1.msra.mxu0 %v406
  %443 = vmatprep.subr.mxu0 0.0
  %444 = vmatpush1.msra.mxu0 %v407
  %445 = vmatprep.subr.mxu0 0.0
  %446 = vmatpush1.msra.mxu0 %v408
  %447 = vmatprep.subr.mxu0 0.0
  %448 = vmatpush1.msra.mxu0 %v409
  %449 = vmatprep.subr.mxu0 0.0
  %450 = vmatpush1.msra.mxu0 0.0
  %451 = vmatprep.subr.mxu0 0.0
  %452 = vmatpush1.msra.mxu0 0.0
  %453 = vmatprep.subr.mxu0 0.0
  %454 = vmatpush1.msra.mxu0 0.0
  %455 = vmatprep.subr.mxu0 0.0
  %456 = vmatpush1.msra.mxu0 0.0
  %457 = vmatprep.subr.mxu0 0.0
  %458 = vmatpush1.msra.mxu0 0.0
  %459 = vmatprep.subr.mxu0 0.0
  %460 = vmatpush1.msra.mxu0 0.0
  %461 = vmatprep.subr.mxu0 0.0
  %462 = vmatpush1.msra.mxu0 0.0
  %463 = vmatprep.subr.mxu0 0.0
  %464 = vmatpush1.msra.mxu0 0.0
  %465 = vmatprep.subr.mxu0 0.0
  %466 = vmatpush1.msra.mxu0 0.0
  %467 = vmatprep.subr.mxu0 0.0
  %468 = vmatpush1.msra.mxu0 0.0
  %469 = vmatprep.subr.mxu0 0.0
  %470 = vmatpush1.msra.mxu0 0.0
  %471 = vmatprep.subr.mxu0 0.0
  %472 = vmatpush1.msra.mxu0 0.0
  %473 = vmatprep.subr.mxu0 0.0
  %474 = vmatpush1.msra.mxu0 0.0
  %475 = vmatprep.subr.mxu0 0.0
  %476 = vmatpush1.msra.mxu0 0.0
  %477 = vmatprep.subr.mxu0 0.0
  %478 = vmatpush1.msra.mxu0 0.0
  %479 = vmatprep.subr.mxu0 0.0
  %480 = vmatpush1.msra.mxu0 0.0
  %481 = vmatprep.mubr.f32.mxu0 0.0
  %482 = vmatmul.mubr.f32.gmra.mrb[0].mxu0 %v393
  %v483 = vpop.f32.mrb[0].mxu0
  %v484 = vadd.f32 %v415, %v483
  %v485 = vpop.f32.mrb[0].mxu0
  %486 = vdwg.mxu0
  %v487 = vld [vmem:[%s16] sm:$0x1]
  %v489 = vlaneseq
  %v490 = vshrl.u32 %v489, 7
  %v491 = vsub.s32 0, %v490
  %v492 = vrot.slane %v487, %v491
  %v494 = vmul.f32 %v484, %v492
  %v495 = vld [vmem:[%s17] sm:$0x1]
  %v497 = vlaneseq
  %v498 = vshrl.u32 %v497, 7
  %v499 = vsub.s32 0, %v498
  %v500 = vrot.slane %v495, %v499
  %v502 = vadd.f32 %v494, %v500
  %v503 = vmax.f32 %v502, 0.0
  %v504 = vld [vmem:[%s18] sm:$0xff]
  %v505 = vld [vmem:[%s18 + $0x8] sm:$0xff]
  %v506 = vld [vmem:[%s18 + $0x10] sm:$0xff]
  %v507 = vld [vmem:[%s18 + $0x18] sm:$0xff]
  %v508 = vld [vmem:[%s18 + $0x20] sm:$0xff]
  %v509 = vld [vmem:[%s18 + $0x28] sm:$0xff]
  %v510 = vld [vmem:[%s18 + $0x30] sm:$0xff]
  %v511 = vld [vmem:[%s18 + $0x38] sm:$0xff]
  %v512 = vld [vmem:[%s18 + $0x40] sm:$0xff]
  %v513 = vld [vmem:[%s18 + $0x48] sm:$0xff]
  %v514 = vld [vmem:[%s18 + $0x50] sm:$0xff]
  %v515 = vld [vmem:[%s18 + $0x58] sm:$0xff]
  %v516 = vld [vmem:[%s18 + $0x60] sm:$0xff]
  %v517 = vld [vmem:[%s18 + $0x68] sm:$0xff]
  %v518 = vld [vmem:[%s18 + $0x70] sm:$0xff]
  %v519 = vld [vmem:[%s18 + $0x78] sm:$0xff]
  %v520 = vld [vmem:[%s19] sm:$0x1]
  %v522 = vlaneseq
  %v523 = vshrl.u32 %v522, 7
  %v524 = vsub.s32 0, %v523
  %v525 = vrot.slane %v520, %v524
  %527 = vmatprep.subr.mxu0 0.0
  %528 = vmatpush1.msra.mxu0 %v504
  %529 = vmatprep.subr.mxu0 0.0
  %530 = vmatpush1.msra.mxu0 %v505
  %531 = vmatprep.subr.mxu0 0.0
  %532 = vmatpush1.msra.mxu0 %v506
  %533 = vmatprep.subr.mxu0 0.0
  %534 = vmatpush1.msra.mxu0 %v507
  %535 = vmatprep.subr.mxu0 0.0
  %536 = vmatpush1.msra.mxu0 %v508
  %537 = vmatprep.subr.mxu0 0.0
  %538 = vmatpush1.msra.mxu0 %v509
  %539 = vmatprep.subr.mxu0 0.0
  %540 = vmatpush1.msra.mxu0 %v510
  %541 = vmatprep.subr.mxu0 0.0
  %542 = vmatpush1.msra.mxu0 %v511
  %543 = vmatprep.subr.mxu0 0.0
  %544 = vmatpush1.msra.mxu0 %v512
  %545 = vmatprep.subr.mxu0 0.0
  %546 = vmatpush1.msra.mxu0 %v513
  %547 = vmatprep.subr.mxu0 0.0
  %548 = vmatpush1.msra.mxu0 %v514
  %549 = vmatprep.subr.mxu0 0.0
  %550 = vmatpush1.msra.mxu0 %v515
  %551 = vmatprep.subr.mxu0 0.0
  %552 = vmatpush1.msra.mxu0 %v516
  %553 = vmatprep.subr.mxu0 0.0
  %554 = vmatpush1.msra.mxu0 %v517
  %555 = vmatprep.subr.mxu0 0.0
  %556 = vmatpush1.msra.mxu0 %v518
  %557 = vmatprep.subr.mxu0 0.0
  %558 = vmatpush1.msra.mxu0 %v519
  %559 = vmatprep.subr.mxu0 0.0
  %560 = vmatpush1.msra.mxu0 0.0
  %561 = vmatprep.subr.mxu0 0.0
  %562 = vmatpush1.msra.mxu0 0.0
  %563 = vmatprep.subr.mxu0 0.0
  %564 = vmatpush1.msra.mxu0 0.0
  %565 = vmatprep.subr.mxu0 0.0
  %566 = vmatpush1.msra.mxu0 0.0
  %567 = vmatprep.subr.mxu0 0.0
  %568 = vmatpush1.msra.mxu0 0.0
  %569 = vmatprep.subr.mxu0 0.0
  %570 = vmatpush1.msra.mxu0 0.0
  %571 = vmatprep.subr.mxu0 0.0
  %572 = vmatpush1.msra.mxu0 0.0
  %573 = vmatprep.subr.mxu0 0.0
  %574 = vmatpush1.msra.mxu0 0.0
  %575 = vmatprep.subr.mxu0 0.0
  %576 = vmatpush1.msra.mxu0 0.0
  %577 = vmatprep.subr.mxu0 0.0
  %578 = vmatpush1.msra.mxu0 0.0
  %579 = vmatprep.subr.mxu0 0.0
  %580 = vmatpush1.msra.mxu0 0.0
  %581 = vmatprep.subr.mxu0 0.0
  %582 = vmatpush1.msra.mxu0 0.0
  %583 = vmatprep.subr.mxu0 0.0
  %584 = vmatpush1.msra.mxu0 0.0
  %585 = vmatprep.subr.mxu0 0.0
  %586 = vmatpush1.msra.mxu0 0.0
  %587 = vmatprep.subr.mxu0 0.0
  %588 = vmatpush1.msra.mxu0 0.0
  %589 = vmatprep.subr.mxu0 0.0
  %590 = vmatpush1.msra.mxu0 0.0
  %591 = vmatprep.mubr.f32.mxu0 0.0
  %592 = vmatmul.mubr.f32.gmra.mrb[0].mxu0 %v503
  %v593 = vpop.f32.mrb[0].mxu0
  %v594 = vadd.f32 %v525, %v593
  %v595 = vpop.f32.mrb[0].mxu0
  %596 = vdwg.mxu0
  %v597 = vrot.slane %v594, 4
  %v598 = vadd.f32 %v594, %v597
  %v599 = vrot.slane %v598, 2
  %v600 = vadd.f32 %v598, %v599
  %v601 = vrot.slane %v600, 1
  %v602 = vadd.f32 %v600, %v601
  %v603 = vmul.f32 %v594, %v594
  %v604 = vrot.slane %v603, 4
  %v605 = vadd.f32 %v603, %v604
  %v606 = vrot.slane %v605, 2
  %v607 = vadd.f32 %v605, %v606
  %v608 = vrot.slane %v607, 1
  %v609 = vadd.f32 %v607, %v608
  %vm610 = vcmask 1040384
  %v611 = vsel %vm610, %v602, %v609
  %612 = vst [vmem:[%s21] sm:$0x3] %v611
  %p613 = scmp.eq.s32.totalorder 0, 0
  // Predicated region
  $region86: #{specialized_mlp_sh.11} parent=0 // pred_check
    %p614 = pneg %p613
  $region87: #{specialized_mlp_sh.11} parent=0 // pred_check_branch
    %616 = sbr.rel (%p614) target = $region89
  $region88: #{specialized_mlp_sh.11} parent=0 // pred_region
    %v617 = vlaneseq
    %v618 = vshrl.u32 %v617, 7
    %s619 = smul.u32 0, 8
    %v620 = vstv %s619
    %v621 = vadd.s32 %v620, %v618
    %v622 = vmul.u32 %v621, 4
    %v623 = vld [vmem:[%s20] sm:$0x1]
    %v624 = vlaneseq
    %v625 = vshrl.u32 %v624, 7
    %v626 = vsub.s32 0, %v625
    %v627 = vrot.slane %v623, %v626
    %v628 = vadd.s32 %v622, %v627
    %s629 = sld [smem:[#allocation2]]
    %v630 = vstv %s629
    %vm631 = vcmp.lt.s32.totalorder %v628, %v630
    %v632 = vsel %vm631, %v594, 0.0
    %v633 = vrot.slane %v632, 4
    %v634 = vadd.f32 %v632, %v633
    %v635 = vrot.slane %v634, 2
    %v636 = vadd.f32 %v634, %v635
    %v637 = vrot.slane %v636, 1
    %v638 = vadd.f32 %v636, %v637
    %v639 = vmul.f32 %v632, %v632
    %v640 = vrot.slane %v639, 4
    %v641 = vadd.f32 %v639, %v640
    %v642 = vrot.slane %v641, 2
    %v643 = vadd.f32 %v641, %v642
    %v644 = vrot.slane %v643, 1
    %v645 = vadd.f32 %v643, %v644
    %v646 = vsel %vm610, %v638, %v645
    %647 = vst [vmem:[%s21] sm:$0x3] %v646
  $region89: #{specialized_mlp_sh.11} parent=0 // pred_fallthru
    _
  // Predicated region
  $region90: #{specialized_mlp_sh.11} parent=0 // pred_check
    _
  $region91: #{specialized_mlp_sh.11} parent=0 // pred_check_branch
    %649 = sbr.rel (0) target = $region93
  $region92: #{specialized_mlp_sh.11} parent=0 // pred_region
    _
  $region93: #{specialized_mlp_sh.11} parent=0 // pred_fallthru
    _
  // Predicated region
  $region94: #{specialized_mlp_sh.11} parent=0 // pred_check
    _
  $region95: #{specialized_mlp_sh.11} parent=0 // pred_check_branch
    %651 = sbr.rel (0) target = $region97
  $region96: #{specialized_mlp_sh.11} parent=0 // pred_region
    _
  $region97: #{specialized_mlp_sh.11} parent=0 // pred_fallthru
    _

// kernel: specialized_mlp_sh.10
$region0: #{specialized_mlp_sh.10}
  #allocation0 [shape = 'u32[]', space=smem, size = 0x4, offset = 0x4, fixed_abs, tag = 'smem constant byte address 0x4 - core index']
  #allocation1 [shape = 'u32[144,128]{1,0:T(1,128)}', space=vmem, size = 0x12000, scoped, tag = 'internal scratch']
  #allocation2 [shape = 's32[1]{0:T(128)S(6)}', space=smem, size = 0x200, scoped, tag = 'scoped memory for specialized_mlp_sh.10']
  %s0 = inlined_call_operand.<no memory space> [shape: s32[1], index: 0, kind: input, shape index: {}]
  %s1 = inlined_call_operand.vmem [shape: f32[8,12], index: 1, kind: input, shape index: {}]
  %s2 = inlined_call_operand.vmem [shape: f32[12,128], index: 2, kind: input, shape index: {}]
  %s3 = inlined_call_operand.vmem [shape: f32[1,128], index: 3, kind: input, shape index: {}]
  %s4 = inlined_call_operand.vmem [shape: f32[1,128], index: 4, kind: input, shape index: {}]
  %s5 = inlined_call_operand.vmem [shape: f32[1,128], index: 5, kind: input, shape index: {}]
  %s6 = inlined_call_operand.vmem [shape: f32[128,128], index: 6, kind: input, shape index: {}]
  %s7 = inlined_call_operand.vmem [shape: f32[1,128], index: 7, kind: input, shape index: {}]
  %s8 = inlined_call_operand.vmem [shape: f32[1,128], index: 8, kind: input, shape index: {}]
  %s9 = inlined_call_operand.vmem [shape: f32[1,128], index: 9, kind: input, shape index: {}]
  %s10 = inlined_call_operand.vmem [shape: f32[128,128], index: 10, kind: input, shape index: {}]
  %s11 = inlined_call_operand.vmem [shape: f32[1,128], index: 11, kind: input, shape index: {}]
  %s12 = inlined_call_operand.vmem [shape: f32[1,128], index: 12, kind: input, shape index: {}]
  %s13 = inlined_call_operand.vmem [shape: f32[1,128], index: 13, kind: input, shape index: {}]
  %s14 = inlined_call_operand.vmem [shape: f32[128,128], index: 14, kind: input, shape index: {}]
  %s15 = inlined_call_operand.vmem [shape: f32[1,128], index: 15, kind: input, shape index: {}]
  %s16 = inlined_call_operand.vmem [shape: s32[1,128], index: 16, kind: input, shape index: {}]
  %s17 = inlined_call_operand.vmem [shape: f32[1,2,128], index: 17, kind: output, shape index: {}]
  %s18 = sld [smem:[#allocation0]]
  $region82: #{specialized_mlp_sh.10} parent=0
    _
  %s20 = ssub.s32 1, %s18
  %s21 = scalar_select 0, %s20, %s18
  %22 = sst [smem:[#allocation2]] %s0
  // Predicated region
  $region2: #{specialized_mlp_sh.10} parent=0 // pred_check
    _
  $region3: #{specialized_mlp_sh.10} parent=0 // pred_check_branch
    %24 = sbr.rel (0) target = $region5
  $region4: #{specialized_mlp_sh.10} parent=0 // pred_region
    _
  $region5: #{specialized_mlp_sh.10} parent=0 // pred_fallthru
    _
  // Predicated region
  $region6: #{specialized_mlp_sh.10} parent=0 // pred_check
    _
  $region7: #{specialized_mlp_sh.10} parent=0 // pred_check_branch
    %26 = sbr.rel (0) target = $region9
  $region8: #{specialized_mlp_sh.10} parent=0 // pred_region
    _
  $region9: #{specialized_mlp_sh.10} parent=0 // pred_fallthru
    _
  // Predicated region
  $region10: #{specialized_mlp_sh.10} parent=0 // pred_check
    _
  $region11: #{specialized_mlp_sh.10} parent=0 // pred_check_branch
    %28 = sbr.rel (0) target = $region13
  $region12: #{specialized_mlp_sh.10} parent=0 // pred_region
    _
  $region13: #{specialized_mlp_sh.10} parent=0 // pred_fallthru
    _
  // Predicated region
  $region14: #{specialized_mlp_sh.10} parent=0 // pred_check
    _
  $region15: #{specialized_mlp_sh.10} parent=0 // pred_check_branch
    %30 = sbr.rel (0) target = $region17
  $region16: #{specialized_mlp_sh.10} parent=0 // pred_region
    _
  $region17: #{specialized_mlp_sh.10} parent=0 // pred_fallthru
    _
  // Predicated region
  $region18: #{specialized_mlp_sh.10} parent=0 // pred_check
    _
  $region19: #{specialized_mlp_sh.10} parent=0 // pred_check_branch
    %32 = sbr.rel (0) target = $region21
  $region20: #{specialized_mlp_sh.10} parent=0 // pred_region
    _
  $region21: #{specialized_mlp_sh.10} parent=0 // pred_fallthru
    _
  // Predicated region
  $region22: #{specialized_mlp_sh.10} parent=0 // pred_check
    _
  $region23: #{specialized_mlp_sh.10} parent=0 // pred_check_branch
    %34 = sbr.rel (0) target = $region25
  $region24: #{specialized_mlp_sh.10} parent=0 // pred_region
    _
  $region25: #{specialized_mlp_sh.10} parent=0 // pred_fallthru
    _
  // Predicated region
  $region26: #{specialized_mlp_sh.10} parent=0 // pred_check
    _
  $region27: #{specialized_mlp_sh.10} parent=0 // pred_check_branch
    %36 = sbr.rel (0) target = $region29
  $region28: #{specialized_mlp_sh.10} parent=0 // pred_region
    _
  $region29: #{specialized_mlp_sh.10} parent=0 // pred_fallthru
    _
  // Predicated region
  $region30: #{specialized_mlp_sh.10} parent=0 // pred_check
    _
  $region31: #{specialized_mlp_sh.10} parent=0 // pred_check_branch
    %38 = sbr.rel (0) target = $region33
  $region32: #{specialized_mlp_sh.10} parent=0 // pred_region
    _
  $region33: #{specialized_mlp_sh.10} parent=0 // pred_fallthru
    _
  // Predicated region
  $region34: #{specialized_mlp_sh.10} parent=0 // pred_check
    _
  $region35: #{specialized_mlp_sh.10} parent=0 // pred_check_branch
    %40 = sbr.rel (0) target = $region37
  $region36: #{specialized_mlp_sh.10} parent=0 // pred_region
    _
  $region37: #{specialized_mlp_sh.10} parent=0 // pred_fallthru
    _
  // Predicated region
  $region38: #{specialized_mlp_sh.10} parent=0 // pred_check
    _
  $region39: #{specialized_mlp_sh.10} parent=0 // pred_check_branch
    %42 = sbr.rel (0) target = $region41
  $region40: #{specialized_mlp_sh.10} parent=0 // pred_region
    _
  $region41: #{specialized_mlp_sh.10} parent=0 // pred_fallthru
    _
  // Predicated region
  $region42: #{specialized_mlp_sh.10} parent=0 // pred_check
    _
  $region43: #{specialized_mlp_sh.10} parent=0 // pred_check_branch
    %44 = sbr.rel (0) target = $region45
  $region44: #{specialized_mlp_sh.10} parent=0 // pred_region
    _
  $region45: #{specialized_mlp_sh.10} parent=0 // pred_fallthru
    _
  // Predicated region
  $region46: #{specialized_mlp_sh.10} parent=0 // pred_check
    _
  $region47: #{specialized_mlp_sh.10} parent=0 // pred_check_branch
    %46 = sbr.rel (0) target = $region49
  $region48: #{specialized_mlp_sh.10} parent=0 // pred_region
    _
  $region49: #{specialized_mlp_sh.10} parent=0 // pred_fallthru
    _
  // Predicated region
  $region50: #{specialized_mlp_sh.10} parent=0 // pred_check
    _
  $region51: #{specialized_mlp_sh.10} parent=0 // pred_check_branch
    %48 = sbr.rel (0) target = $region53
  $region52: #{specialized_mlp_sh.10} parent=0 // pred_region
    _
  $region53: #{specialized_mlp_sh.10} parent=0 // pred_fallthru
    _
  // Predicated region
  $region54: #{specialized_mlp_sh.10} parent=0 // pred_check
    _
  $region55: #{specialized_mlp_sh.10} parent=0 // pred_check_branch
    %50 = sbr.rel (0) target = $region57
  $region56: #{specialized_mlp_sh.10} parent=0 // pred_region
    _
  $region57: #{specialized_mlp_sh.10} parent=0 // pred_fallthru
    _
  // Predicated region
  $region58: #{specialized_mlp_sh.10} parent=0 // pred_check
    _
  $region59: #{specialized_mlp_sh.10} parent=0 // pred_check_branch
    %52 = sbr.rel (0) target = $region61
  $region60: #{specialized_mlp_sh.10} parent=0 // pred_region
    _
  $region61: #{specialized_mlp_sh.10} parent=0 // pred_fallthru
    _
  // Predicated region
  $region62: #{specialized_mlp_sh.10} parent=0 // pred_check
    _
  $region63: #{specialized_mlp_sh.10} parent=0 // pred_check_branch
    %54 = sbr.rel (0) target = $region65
  $region64: #{specialized_mlp_sh.10} parent=0 // pred_region
    _
  $region65: #{specialized_mlp_sh.10} parent=0 // pred_fallthru
    _
  // Predicated region
  $region66: #{specialized_mlp_sh.10} parent=0 // pred_check
    _
  $region67: #{specialized_mlp_sh.10} parent=0 // pred_check_branch
    %56 = sbr.rel (0) target = $region69
  $region68: #{specialized_mlp_sh.10} parent=0 // pred_region
    _
  $region69: #{specialized_mlp_sh.10} parent=0 // pred_fallthru
    _
  %v57 = vld [vmem:[%s1] sm:$0xff]
  %v58 = vld [vmem:[%s2] sm:$0xff]
  %v59 = vld [vmem:[%s2 + $0x8] sm:$0xf]
  %v60 = vld [vmem:[%s3] sm:$0x1]
  %v62 = vlaneseq
  %v63 = vshrl.u32 %v62, 7
  %v64 = vsub.s32 0, %v63
  %v65 = vrot.slane %v60, %v64
  %vm67 = vcmask 97280
  %v69 = vsel %vm67, %v57, 0
  %vm71 = vcmask 1043456
  %v73 = vsel %vm71, %v59, 0
  %75 = vmatprep.subr.mxu0 0.0
  %76 = vmatpush1.msra.mxu0 %v58
  %77 = vmatprep.subr.mxu0 0.0
  %78 = vmatpush1.msra.mxu0 %v73
  %79 = vmatprep.subr.mxu0 0.0
  %80 = vmatpush1.msra.mxu0 0.0
  %81 = vmatprep.subr.mxu0 0.0
  %82 = vmatpush1.msra.mxu0 0.0
  %83 = vmatprep.subr.mxu0 0.0
  %84 = vmatpush1.msra.mxu0 0.0
  %85 = vmatprep.subr.mxu0 0.0
  %86 = vmatpush1.msra.mxu0 0.0
  %87 = vmatprep.subr.mxu0 0.0
  %88 = vmatpush1.msra.mxu0 0.0
  %89 = vmatprep.subr.mxu0 0.0
  %90 = vmatpush1.msra.mxu0 0.0
  %91 = vmatprep.subr.mxu0 0.0
  %92 = vmatpush1.msra.mxu0 0.0
  %93 = vmatprep.subr.mxu0 0.0
  %94 = vmatpush1.msra.mxu0 0.0
  %95 = vmatprep.subr.mxu0 0.0
  %96 = vmatpush1.msra.mxu0 0.0
  %97 = vmatprep.subr.mxu0 0.0
  %98 = vmatpush1.msra.mxu0 0.0
  %99 = vmatprep.subr.mxu0 0.0
  %100 = vmatpush1.msra.mxu0 0.0
  %101 = vmatprep.subr.mxu0 0.0
  %102 = vmatpush1.msra.mxu0 0.0
  %103 = vmatprep.subr.mxu0 0.0
  %104 = vmatpush1.msra.mxu0 0.0
  %105 = vmatprep.subr.mxu0 0.0
  %106 = vmatpush1.msra.mxu0 0.0
  %107 = vmatprep.subr.mxu0 0.0
  %108 = vmatpush1.msra.mxu0 0.0
  %109 = vmatprep.subr.mxu0 0.0
  %110 = vmatpush1.msra.mxu0 0.0
  %111 = vmatprep.subr.mxu0 0.0
  %112 = vmatpush1.msra.mxu0 0.0
  %113 = vmatprep.subr.mxu0 0.0
  %114 = vmatpush1.msra.mxu0 0.0
  %115 = vmatprep.subr.mxu0 0.0
  %116 = vmatpush1.msra.mxu0 0.0
  %117 = vmatprep.subr.mxu0 0.0
  %118 = vmatpush1.msra.mxu0 0.0
  %119 = vmatprep.subr.mxu0 0.0
  %120 = vmatpush1.msra.mxu0 0.0
  %121 = vmatprep.subr.mxu0 0.0
  %122 = vmatpush1.msra.mxu0 0.0
  %123 = vmatprep.subr.mxu0 0.0
  %124 = vmatpush1.msra.mxu0 0.0
  %125 = vmatprep.subr.mxu0 0.0
  %126 = vmatpush1.msra.mxu0 0.0
  %127 = vmatprep.subr.mxu0 0.0
  %128 = vmatpush1.msra.mxu0 0.0
  %129 = vmatprep.subr.mxu0 0.0
  %130 = vmatpush1.msra.mxu0 0.0
  %131 = vmatprep.subr.mxu0 0.0
  %132 = vmatpush1.msra.mxu0 0.0
  %133 = vmatprep.subr.mxu0 0.0
  %134 = vmatpush1.msra.mxu0 0.0
  %135 = vmatprep.subr.mxu0 0.0
  %136 = vmatpush1.msra.mxu0 0.0
  %137 = vmatprep.subr.mxu0 0.0
  %138 = vmatpush1.msra.mxu0 0.0
  %139 = vmatprep.mubr.f32.mxu0 0.0
  %140 = vmatmul.mubr.f32.gmra.mrb[0].mxu0 %v69
  %v141 = vpop.f32.mrb[0].mxu0
  %v142 = vadd.f32 %v65, %v141
  %v143 = vpop.f32.mrb[0].mxu0
  %144 = vdwg.mxu0
  %v145 = vld [vmem:[%s4] sm:$0x1]
  %v147 = vlaneseq
  %v148 = vshrl.u32 %v147, 7
  %v149 = vsub.s32 0, %v148
  %v150 = vrot.slane %v145, %v149
  %v152 = vmul.f32 %v142, %v150
  %v153 = vld [vmem:[%s5] sm:$0x1]
  %v155 = vlaneseq
  %v156 = vshrl.u32 %v155, 7
  %v157 = vsub.s32 0, %v156
  %v158 = vrot.slane %v153, %v157
  %v160 = vadd.f32 %v152, %v158
  %v161 = vmax.f32 %v160, 0.0
  %v162 = vld [vmem:[%s6] sm:$0xff]
  %v163 = vld [vmem:[%s6 + $0x8] sm:$0xff]
  %v164 = vld [vmem:[%s6 + $0x10] sm:$0xff]
  %v165 = vld [vmem:[%s6 + $0x18] sm:$0xff]
  %v166 = vld [vmem:[%s6 + $0x20] sm:$0xff]
  %v167 = vld [vmem:[%s6 + $0x28] sm:$0xff]
  %v168 = vld [vmem:[%s6 + $0x30] sm:$0xff]
  %v169 = vld [vmem:[%s6 + $0x38] sm:$0xff]
  %v170 = vld [vmem:[%s6 + $0x40] sm:$0xff]
  %v171 = vld [vmem:[%s6 + $0x48] sm:$0xff]
  %v172 = vld [vmem:[%s6 + $0x50] sm:$0xff]
  %v173 = vld [vmem:[%s6 + $0x58] sm:$0xff]
  %v174 = vld [vmem:[%s6 + $0x60] sm:$0xff]
  %v175 = vld [vmem:[%s6 + $0x68] sm:$0xff]
  %v176 = vld [vmem:[%s6 + $0x70] sm:$0xff]
  %v177 = vld [vmem:[%s6 + $0x78] sm:$0xff]
  %v178 = vld [vmem:[%s7] sm:$0x1]
  %v180 = vlaneseq
  %v181 = vshrl.u32 %v180, 7
  %v182 = vsub.s32 0, %v181
  %v183 = vrot.slane %v178, %v182
  %185 = vmatprep.subr.mxu0 0.0
  %186 = vmatpush1.msra.mxu0 %v162
  %187 = vmatprep.subr.mxu0 0.0
  %188 = vmatpush1.msra.mxu0 %v163
  %189 = vmatprep.subr.mxu0 0.0
  %190 = vmatpush1.msra.mxu0 %v164
  %191 = vmatprep.subr.mxu0 0.0
  %192 = vmatpush1.msra.mxu0 %v165
  %193 = vmatprep.subr.mxu0 0.0
  %194 = vmatpush1.msra.mxu0 %v166
  %195 = vmatprep.subr.mxu0 0.0
  %196 = vmatpush1.msra.mxu0 %v167
  %197 = vmatprep.subr.mxu0 0.0
  %198 = vmatpush1.msra.mxu0 %v168
  %199 = vmatprep.subr.mxu0 0.0
  %200 = vmatpush1.msra.mxu0 %v169
  %201 = vmatprep.subr.mxu0 0.0
  %202 = vmatpush1.msra.mxu0 %v170
  %203 = vmatprep.subr.mxu0 0.0
  %204 = vmatpush1.msra.mxu0 %v171
  %205 = vmatprep.subr.mxu0 0.0
  %206 = vmatpush1.msra.mxu0 %v172
  %207 = vmatprep.subr.mxu0 0.0
  %208 = vmatpush1.msra.mxu0 %v173
  %209 = vmatprep.subr.mxu0 0.0
  %210 = vmatpush1.msra.mxu0 %v174
  %211 = vmatprep.subr.mxu0 0.0
  %212 = vmatpush1.msra.mxu0 %v175
  %213 = vmatprep.subr.mxu0 0.0
  %214 = vmatpush1.msra.mxu0 %v176
  %215 = vmatprep.subr.mxu0 0.0
  %216 = vmatpush1.msra.mxu0 %v177
  %217 = vmatprep.subr.mxu0 0.0
  %218 = vmatpush1.msra.mxu0 0.0
  %219 = vmatprep.subr.mxu0 0.0
  %220 = vmatpush1.msra.mxu0 0.0
  %221 = vmatprep.subr.mxu0 0.0
  %222 = vmatpush1.msra.mxu0 0.0
  %223 = vmatprep.subr.mxu0 0.0
  %224 = vmatpush1.msra.mxu0 0.0
  %225 = vmatprep.subr.mxu0 0.0
  %226 = vmatpush1.msra.mxu0 0.0
  %227 = vmatprep.subr.mxu0 0.0
  %228 = vmatpush1.msra.mxu0 0.0
  %229 = vmatprep.subr.mxu0 0.0
  %230 = vmatpush1.msra.mxu0 0.0
  %231 = vmatprep.subr.mxu0 0.0
  %232 = vmatpush1.msra.mxu0 0.0
  %233 = vmatprep.subr.mxu0 0.0
  %234 = vmatpush1.msra.mxu0 0.0
  %235 = vmatprep.subr.mxu0 0.0
  %236 = vmatpush1.msra.mxu0 0.0
  %237 = vmatprep.subr.mxu0 0.0
  %238 = vmatpush1.msra.mxu0 0.0
  %239 = vmatprep.subr.mxu0 0.0
  %240 = vmatpush1.msra.mxu0 0.0
  %241 = vmatprep.subr.mxu0 0.0
  %242 = vmatpush1.msra.mxu0 0.0
  %243 = vmatprep.subr.mxu0 0.0
  %244 = vmatpush1.msra.mxu0 0.0
  %245 = vmatprep.subr.mxu0 0.0
  %246 = vmatpush1.msra.mxu0 0.0
  %247 = vmatprep.subr.mxu0 0.0
  %248 = vmatpush1.msra.mxu0 0.0
  %249 = vmatprep.mubr.f32.mxu0 0.0
  %250 = vmatmul.mubr.f32.gmra.mrb[0].mxu0 %v161
  %v251 = vpop.f32.mrb[0].mxu0
  %v252 = vadd.f32 %v183, %v251
  %v253 = vpop.f32.mrb[0].mxu0
  %254 = vdwg.mxu0
  %v255 = vld [vmem:[%s8] sm:$0x1]
  %v257 = vlaneseq
  %v258 = vshrl.u32 %v257, 7
  %v259 = vsub.s32 0, %v258
  %v260 = vrot.slane %v255, %v259
  %v262 = vmul.f32 %v252, %v260
  %v263 = vld [vmem:[%s9] sm:$0x1]
  %v265 = vlaneseq
  %v266 = vshrl.u32 %v265, 7
  %v267 = vsub.s32 0, %v266
  %v268 = vrot.slane %v263, %v267
  %v270 = vadd.f32 %v262, %v268
  %v271 = vmax.f32 %v270, 0.0
  %v272 = vld [vmem:[%s10] sm:$0xff]
  %v273 = vld [vmem:[%s10 + $0x8] sm:$0xff]
  %v274 = vld [vmem:[%s10 + $0x10] sm:$0xff]
  %v275 = vld [vmem:[%s10 + $0x18] sm:$0xff]
  %v276 = vld [vmem:[%s10 + $0x20] sm:$0xff]
  %v277 = vld [vmem:[%s10 + $0x28] sm:$0xff]
  %v278 = vld [vmem:[%s10 + $0x30] sm:$0xff]
  %v279 = vld [vmem:[%s10 + $0x38] sm:$0xff]
  %v280 = vld [vmem:[%s10 + $0x40] sm:$0xff]
  %v281 = vld [vmem:[%s10 + $0x48] sm:$0xff]
  %v282 = vld [vmem:[%s10 + $0x50] sm:$0xff]
  %v283 = vld [vmem:[%s10 + $0x58] sm:$0xff]
  %v284 = vld [vmem:[%s10 + $0x60] sm:$0xff]
  %v285 = vld [vmem:[%s10 + $0x68] sm:$0xff]
  %v286 = vld [vmem:[%s10 + $0x70] sm:$0xff]
  %v287 = vld [vmem:[%s10 + $0x78] sm:$0xff]
  %v288 = vld [vmem:[%s11] sm:$0x1]
  %v290 = vlaneseq
  %v291 = vshrl.u32 %v290, 7
  %v292 = vsub.s32 0, %v291
  %v293 = vrot.slane %v288, %v292
  %295 = vmatprep.subr.mxu0 0.0
  %296 = vmatpush1.msra.mxu0 %v272
  %297 = vmatprep.subr.mxu0 0.0
  %298 = vmatpush1.msra.mxu0 %v273
  %299 = vmatprep.subr.mxu0 0.0
  %300 = vmatpush1.msra.mxu0 %v274
  %301 = vmatprep.subr.mxu0 0.0
  %302 = vmatpush1.msra.mxu0 %v275
  %303 = vmatprep.subr.mxu0 0.0
  %304 = vmatpush1.msra.mxu0 %v276
  %305 = vmatprep.subr.mxu0 0.0
  %306 = vmatpush1.msra.mxu0 %v277
  %307 = vmatprep.subr.mxu0 0.0
  %308 = vmatpush1.msra.mxu0 %v278
  %309 = vmatprep.subr.mxu0 0.0
  %310 = vmatpush1.msra.mxu0 %v279
  %311 = vmatprep.subr.mxu0 0.0
  %312 = vmatpush1.msra.mxu0 %v280
  %313 = vmatprep.subr.mxu0 0.0
  %314 = vmatpush1.msra.mxu0 %v281
  %315 = vmatprep.subr.mxu0 0.0
  %316 = vmatpush1.msra.mxu0 %v282
  %317 = vmatprep.subr.mxu0 0.0
  %318 = vmatpush1.msra.mxu0 %v283
  %319 = vmatprep.subr.mxu0 0.0
  %320 = vmatpush1.msra.mxu0 %v284
  %321 = vmatprep.subr.mxu0 0.0
  %322 = vmatpush1.msra.mxu0 %v285
  %323 = vmatprep.subr.mxu0 0.0
  %324 = vmatpush1.msra.mxu0 %v286
  %325 = vmatprep.subr.mxu0 0.0
  %326 = vmatpush1.msra.mxu0 %v287
  %327 = vmatprep.subr.mxu0 0.0
  %328 = vmatpush1.msra.mxu0 0.0
  %329 = vmatprep.subr.mxu0 0.0
  %330 = vmatpush1.msra.mxu0 0.0
  %331 = vmatprep.subr.mxu0 0.0
  %332 = vmatpush1.msra.mxu0 0.0
  %333 = vmatprep.subr.mxu0 0.0
  %334 = vmatpush1.msra.mxu0 0.0
  %335 = vmatprep.subr.mxu0 0.0
  %336 = vmatpush1.msra.mxu0 0.0
  %337 = vmatprep.subr.mxu0 0.0
  %338 = vmatpush1.msra.mxu0 0.0
  %339 = vmatprep.subr.mxu0 0.0
  %340 = vmatpush1.msra.mxu0 0.0
  %341 = vmatprep.subr.mxu0 0.0
  %342 = vmatpush1.msra.mxu0 0.0
  %343 = vmatprep.subr.mxu0 0.0
  %344 = vmatpush1.msra.mxu0 0.0
  %345 = vmatprep.subr.mxu0 0.0
  %346 = vmatpush1.msra.mxu0 0.0
  %347 = vmatprep.subr.mxu0 0.0
  %348 = vmatpush1.msra.mxu0 0.0
  %349 = vmatprep.subr.mxu0 0.0
  %350 = vmatpush1.msra.mxu0 0.0
  %351 = vmatprep.subr.mxu0 0.0
  %352 = vmatpush1.msra.mxu0 0.0
  %353 = vmatprep.subr.mxu0 0.0
  %354 = vmatpush1.msra.mxu0 0.0
  %355 = vmatprep.subr.mxu0 0.0
  %356 = vmatpush1.msra.mxu0 0.0
  %357 = vmatprep.subr.mxu0 0.0
  %358 = vmatpush1.msra.mxu0 0.0
  %359 = vmatprep.mubr.f32.mxu0 0.0
  %360 = vmatmul.mubr.f32.gmra.mrb[0].mxu0 %v271
  %v361 = vpop.f32.mrb[0].mxu0
  %v362 = vadd.f32 %v293, %v361
  %v363 = vpop.f32.mrb[0].mxu0
  %364 = vdwg.mxu0
  %v365 = vld [vmem:[%s12] sm:$0x1]
  %v367 = vlaneseq
  %v368 = vshrl.u32 %v367, 7
  %v369 = vsub.s32 0, %v368
  %v370 = vrot.slane %v365, %v369
  %v372 = vmul.f32 %v362, %v370
  %v373 = vld [vmem:[%s13] sm:$0x1]
  %v375 = vlaneseq
  %v376 = vshrl.u32 %v375, 7
  %v377 = vsub.s32 0, %v376
  %v378 = vrot.slane %v373, %v377
  %v380 = vadd.f32 %v372, %v378
  %v381 = vmax.f32 %v380, 0.0
  %v382 = vld [vmem:[%s14] sm:$0xff]
  %v383 = vld [vmem:[%s14 + $0x8] sm:$0xff]
  %v384 = vld [vmem:[%s14 + $0x10] sm:$0xff]
  %v385 = vld [vmem:[%s14 + $0x18] sm:$0xff]
  %v386 = vld [vmem:[%s14 + $0x20] sm:$0xff]
  %v387 = vld [vmem:[%s14 + $0x28] sm:$0xff]
  %v388 = vld [vmem:[%s14 + $0x30] sm:$0xff]
  %v389 = vld [vmem:[%s14 + $0x38] sm:$0xff]
  %v390 = vld [vmem:[%s14 + $0x40] sm:$0xff]
  %v391 = vld [vmem:[%s14 + $0x48] sm:$0xff]
  %v392 = vld [vmem:[%s14 + $0x50] sm:$0xff]
  %v393 = vld [vmem:[%s14 + $0x58] sm:$0xff]
  %v394 = vld [vmem:[%s14 + $0x60] sm:$0xff]
  %v395 = vld [vmem:[%s14 + $0x68] sm:$0xff]
  %v396 = vld [vmem:[%s14 + $0x70] sm:$0xff]
  %v397 = vld [vmem:[%s14 + $0x78] sm:$0xff]
  %v398 = vld [vmem:[%s15] sm:$0x1]
  %v400 = vlaneseq
  %v401 = vshrl.u32 %v400, 7
  %v402 = vsub.s32 0, %v401
  %v403 = vrot.slane %v398, %v402
  %405 = vmatprep.subr.mxu0 0.0
  %406 = vmatpush1.msra.mxu0 %v382
  %407 = vmatprep.subr.mxu0 0.0
  %408 = vmatpush1.msra.mxu0 %v383
  %409 = vmatprep.subr.mxu0 0.0
  %410 = vmatpush1.msra.mxu0 %v384
  %411 = vmatprep.subr.mxu0 0.0
  %412 = vmatpush1.msra.mxu0 %v385
  %413 = vmatprep.subr.mxu0 0.0
  %414 = vmatpush1.msra.mxu0 %v386
  %415 = vmatprep.subr.mxu0 0.0
  %416 = vmatpush1.msra.mxu0 %v387
  %417 = vmatprep.subr.mxu0 0.0
  %418 = vmatpush1.msra.mxu0 %v388
  %419 = vmatprep.subr.mxu0 0.0
  %420 = vmatpush1.msra.mxu0 %v389
  %421 = vmatprep.subr.mxu0 0.0
  %422 = vmatpush1.msra.mxu0 %v390
  %423 = vmatprep.subr.mxu0 0.0
  %424 = vmatpush1.msra.mxu0 %v391
  %425 = vmatprep.subr.mxu0 0.0
  %426 = vmatpush1.msra.mxu0 %v392
  %427 = vmatprep.subr.mxu0 0.0
  %428 = vmatpush1.msra.mxu0 %v393
  %429 = vmatprep.subr.mxu0 0.0
  %430 = vmatpush1.msra.mxu0 %v394
  %431 = vmatprep.subr.mxu0 0.0
  %432 = vmatpush1.msra.mxu0 %v395
  %433 = vmatprep.subr.mxu0 0.0
  %434 = vmatpush1.msra.mxu0 %v396
  %435 = vmatprep.subr.mxu0 0.0
  %436 = vmatpush1.msra.mxu0 %v397
  %437 = vmatprep.subr.mxu0 0.0
  %438 = vmatpush1.msra.mxu0 0.0
  %439 = vmatprep.subr.mxu0 0.0
  %440 = vmatpush1.msra.mxu0 0.0
  %441 = vmatprep.subr.mxu0 0.0
  %442 = vmatpush1.msra.mxu0 0.0
  %443 = vmatprep.subr.mxu0 0.0
  %444 = vmatpush1.msra.mxu0 0.0
  %445 = vmatprep.subr.mxu0 0.0
  %446 = vmatpush1.msra.mxu0 0.0
  %447 = vmatprep.subr.mxu0 0.0
  %448 = vmatpush1.msra.mxu0 0.0
  %449 = vmatprep.subr.mxu0 0.0
  %450 = vmatpush1.msra.mxu0 0.0
  %451 = vmatprep.subr.mxu0 0.0
  %452 = vmatpush1.msra.mxu0 0.0
  %453 = vmatprep.subr.mxu0 0.0
  %454 = vmatpush1.msra.mxu0 0.0
  %455 = vmatprep.subr.mxu0 0.0
  %456 = vmatpush1.msra.mxu0 0.0
  %457 = vmatprep.subr.mxu0 0.0
  %458 = vmatpush1.msra.mxu0 0.0
  %459 = vmatprep.subr.mxu0 0.0
  %460 = vmatpush1.msra.mxu0 0.0
  %461 = vmatprep.subr.mxu0 0.0
  %462 = vmatpush1.msra.mxu0 0.0
  %463 = vmatprep.subr.mxu0 0.0
  %464 = vmatpush1.msra.mxu0 0.0
  %465 = vmatprep.subr.mxu0 0.0
  %466 = vmatpush1.msra.mxu0 0.0
  %467 = vmatprep.subr.mxu0 0.0
  %468 = vmatpush1.msra.mxu0 0.0
  %469 = vmatprep.mubr.f32.mxu0 0.0
  %470 = vmatmul.mubr.f32.gmra.mrb[0].mxu0 %v381
  %v471 = vpop.f32.mrb[0].mxu0
  %v472 = vadd.f32 %v403, %v471
  %v473 = vpop.f32.mrb[0].mxu0
  %474 = vdwg.mxu0
  %v475 = vrot.slane %v472, 4
  %v476 = vadd.f32 %v472, %v475
  %v477 = vrot.slane %v476, 2
  %v478 = vadd.f32 %v476, %v477
  %v479 = vrot.slane %v478, 1
  %v480 = vadd.f32 %v478, %v479
  %v481 = vmul.f32 %v472, %v472
  %v482 = vrot.slane %v481, 4
  %v483 = vadd.f32 %v481, %v482
  %v484 = vrot.slane %v483, 2
  %v485 = vadd.f32 %v483, %v484
  %v486 = vrot.slane %v485, 1
  %v487 = vadd.f32 %v485, %v486
  %vm488 = vcmask 1040384
  %v489 = vsel %vm488, %v480, %v487
  %490 = vst [vmem:[%s17] sm:$0x3] %v489
  %p491 = scmp.eq.s32.totalorder 0, 0
  // Predicated region
  $region70: #{specialized_mlp_sh.10} parent=0 // pred_check
    %p492 = pneg %p491
  $region71: #{specialized_mlp_sh.10} parent=0 // pred_check_branch
    %494 = sbr.rel (%p492) target = $region73
  $region72: #{specialized_mlp_sh.10} parent=0 // pred_region
    %v495 = vlaneseq
    %v496 = vshrl.u32 %v495, 7
    %s497 = smul.u32 0, 8
    %v498 = vstv %s497
    %v499 = vadd.s32 %v498, %v496
    %v500 = vmul.u32 %v499, 4
    %v501 = vld [vmem:[%s16] sm:$0x1]
    %v502 = vlaneseq
    %v503 = vshrl.u32 %v502, 7
    %v504 = vsub.s32 0, %v503
    %v505 = vrot.slane %v501, %v504
    %v506 = vadd.s32 %v500, %v505
    %s507 = sld [smem:[#allocation2]]
    %v508 = vstv %s507
    %vm509 = vcmp.lt.s32.totalorder %v506, %v508
    %v510 = vsel %vm509, %v472, 0.0
    %v511 = vrot.slane %v510, 4
    %v512 = vadd.f32 %v510, %v511
    %v513 = vrot.slane %v512, 2
    %v514 = vadd.f32 %v512, %v513
    %v515 = vrot.slane %v514, 1
    %v516 = vadd.f32 %v514, %v515
    %v517 = vmul.f32 %v510, %v510
    %v518 = vrot.slane %v517, 4
    %v519 = vadd.f32 %v517, %v518
    %v520 = vrot.slane %v519, 2
    %v521 = vadd.f32 %v519, %v520
    %v522 = vrot.slane %v521, 1
    %v523 = vadd.f32 %v521, %v522
    %v524 = vsel %vm488, %v516, %v523
    %525 = vst [vmem:[%s17] sm:$0x3] %v524
  $region73: #{specialized_mlp_sh.10} parent=0 // pred_fallthru
    _
  // Predicated region
  $region74: #{specialized_mlp_sh.10} parent=0 // pred_check
    _
  $region75: #{specialized_mlp_sh.10} parent=0 // pred_check_branch
    %527 = sbr.rel (0) target = $region77
  $region76: #{specialized_mlp_sh.10} parent=0 // pred_region
    _
  $region77: #{specialized_mlp_sh.10} parent=0 // pred_fallthru
    _
  // Predicated region
  $region78: #{specialized_mlp_sh.10} parent=0 // pred_check
    _
  $region79: #{specialized_mlp_sh.10} parent=0 // pred_check_branch
    %529 = sbr.rel (0) target = $region81
  $region80: #{specialized_mlp_sh.10} parent=0 // pred_region
    _
  $region81: #{specialized_mlp_sh.10} parent=0 // pred_fallthru
    _

// kernel: specialized_mlp_sh.12
$region0: #{specialized_mlp_sh.12}
  #allocation0 [shape = 'u32[]', space=smem, size = 0x4, offset = 0x4, fixed_abs, tag = 'smem constant byte address 0x4 - core index']
  #allocation1 [shape = 'u32[144,128]{1,0:T(1,128)}', space=vmem, size = 0x12000, scoped, tag = 'internal scratch']
  #allocation2 [shape = 's32[1]{0:T(128)S(6)}', space=smem, size = 0x200, scoped, tag = 'scoped memory for specialized_mlp_sh.12']
  %s0 = inlined_call_operand.<no memory space> [shape: s32[1], index: 0, kind: input, shape index: {}]
  %s1 = inlined_call_operand.vmem [shape: f32[8,12], index: 1, kind: input, shape index: {}]
  %s2 = inlined_call_operand.vmem [shape: f32[12,128], index: 2, kind: input, shape index: {}]
  %s3 = inlined_call_operand.vmem [shape: f32[1,128], index: 3, kind: input, shape index: {}]
  %s4 = inlined_call_operand.vmem [shape: f32[1,128], index: 4, kind: input, shape index: {}]
  %s5 = inlined_call_operand.vmem [shape: f32[1,128], index: 5, kind: input, shape index: {}]
  %s6 = inlined_call_operand.vmem [shape: f32[128,128], index: 6, kind: input, shape index: {}]
  %s7 = inlined_call_operand.vmem [shape: f32[1,128], index: 7, kind: input, shape index: {}]
  %s8 = inlined_call_operand.vmem [shape: f32[1,128], index: 8, kind: input, shape index: {}]
  %s9 = inlined_call_operand.vmem [shape: f32[1,128], index: 9, kind: input, shape index: {}]
  %s10 = inlined_call_operand.vmem [shape: f32[128,128], index: 10, kind: input, shape index: {}]
  %s11 = inlined_call_operand.vmem [shape: f32[1,128], index: 11, kind: input, shape index: {}]
  %s12 = inlined_call_operand.vmem [shape: f32[1,128], index: 12, kind: input, shape index: {}]
  %s13 = inlined_call_operand.vmem [shape: f32[1,128], index: 13, kind: input, shape index: {}]
  %s14 = inlined_call_operand.vmem [shape: f32[128,128], index: 14, kind: input, shape index: {}]
  %s15 = inlined_call_operand.vmem [shape: f32[1,128], index: 15, kind: input, shape index: {}]
  %s16 = inlined_call_operand.vmem [shape: f32[1,128], index: 16, kind: input, shape index: {}]
  %s17 = inlined_call_operand.vmem [shape: f32[1,128], index: 17, kind: input, shape index: {}]
  %s18 = inlined_call_operand.vmem [shape: f32[128,128], index: 18, kind: input, shape index: {}]
  %s19 = inlined_call_operand.vmem [shape: f32[1,128], index: 19, kind: input, shape index: {}]
  %s20 = inlined_call_operand.vmem [shape: f32[1,128], index: 20, kind: input, shape index: {}]
  %s21 = inlined_call_operand.vmem [shape: f32[1,128], index: 21, kind: input, shape index: {}]
  %s22 = inlined_call_operand.vmem [shape: f32[128,128], index: 22, kind: input, shape index: {}]
  %s23 = inlined_call_operand.vmem [shape: f32[1,128], index: 23, kind: input, shape index: {}]
  %s24 = inlined_call_operand.vmem [shape: s32[1,128], index: 24, kind: input, shape index: {}]
  %s25 = inlined_call_operand.vmem [shape: f32[1,2,128], index: 25, kind: output, shape index: {}]
  %s26 = sld [smem:[#allocation0]]
  $region114: #{specialized_mlp_sh.12} parent=0
    _
  %s28 = ssub.s32 1, %s26
  %s29 = scalar_select 0, %s28, %s26
  %30 = sst [smem:[#allocation2]] %s0
  // Predicated region
  $region2: #{specialized_mlp_sh.12} parent=0 // pred_check
    _
  $region3: #{specialized_mlp_sh.12} parent=0 // pred_check_branch
    %32 = sbr.rel (0) target = $region5
  $region4: #{specialized_mlp_sh.12} parent=0 // pred_region
    _
  $region5: #{specialized_mlp_sh.12} parent=0 // pred_fallthru
    _
  // Predicated region
  $region6: #{specialized_mlp_sh.12} parent=0 // pred_check
    _
  $region7: #{specialized_mlp_sh.12} parent=0 // pred_check_branch
    %34 = sbr.rel (0) target = $region9
  $region8: #{specialized_mlp_sh.12} parent=0 // pred_region
    _
  $region9: #{specialized_mlp_sh.12} parent=0 // pred_fallthru
    _
  // Predicated region
  $region10: #{specialized_mlp_sh.12} parent=0 // pred_check
    _
  $region11: #{specialized_mlp_sh.12} parent=0 // pred_check_branch
    %36 = sbr.rel (0) target = $region13
  $region12: #{specialized_mlp_sh.12} parent=0 // pred_region
    _
  $region13: #{specialized_mlp_sh.12} parent=0 // pred_fallthru
    _
  // Predicated region
  $region14: #{specialized_mlp_sh.12} parent=0 // pred_check
    _
  $region15: #{specialized_mlp_sh.12} parent=0 // pred_check_branch
    %38 = sbr.rel (0) target = $region17
  $region16: #{specialized_mlp_sh.12} parent=0 // pred_region
    _
  $region17: #{specialized_mlp_sh.12} parent=0 // pred_fallthru
    _
  // Predicated region
  $region18: #{specialized_mlp_sh.12} parent=0 // pred_check
    _
  $region19: #{specialized_mlp_sh.12} parent=0 // pred_check_branch
    %40 = sbr.rel (0) target = $region21
  $region20: #{specialized_mlp_sh.12} parent=0 // pred_region
    _
  $region21: #{specialized_mlp_sh.12} parent=0 // pred_fallthru
    _
  // Predicated region
  $region22: #{specialized_mlp_sh.12} parent=0 // pred_check
    _
  $region23: #{specialized_mlp_sh.12} parent=0 // pred_check_branch
    %42 = sbr.rel (0) target = $region25
  $region24: #{specialized_mlp_sh.12} parent=0 // pred_region
    _
  $region25: #{specialized_mlp_sh.12} parent=0 // pred_fallthru
    _
  // Predicated region
  $region26: #{specialized_mlp_sh.12} parent=0 // pred_check
    _
  $region27: #{specialized_mlp_sh.12} parent=0 // pred_check_branch
    %44 = sbr.rel (0) target = $region29
  $region28: #{specialized_mlp_sh.12} parent=0 // pred_region
    _
  $region29: #{specialized_mlp_sh.12} parent=0 // pred_fallthru
    _
  // Predicated region
  $region30: #{specialized_mlp_sh.12} parent=0 // pred_check
    _
  $region31: #{specialized_mlp_sh.12} parent=0 // pred_check_branch
    %46 = sbr.rel (0) target = $region33
  $region32: #{specialized_mlp_sh.12} parent=0 // pred_region
    _
  $region33: #{specialized_mlp_sh.12} parent=0 // pred_fallthru
    _
  // Predicated region
  $region34: #{specialized_mlp_sh.12} parent=0 // pred_check
    _
  $region35: #{specialized_mlp_sh.12} parent=0 // pred_check_branch
    %48 = sbr.rel (0) target = $region37
  $region36: #{specialized_mlp_sh.12} parent=0 // pred_region
    _
  $region37: #{specialized_mlp_sh.12} parent=0 // pred_fallthru
    _
  // Predicated region
  $region38: #{specialized_mlp_sh.12} parent=0 // pred_check
    _
  $region39: #{specialized_mlp_sh.12} parent=0 // pred_check_branch
    %50 = sbr.rel (0) target = $region41
  $region40: #{specialized_mlp_sh.12} parent=0 // pred_region
    _
  $region41: #{specialized_mlp_sh.12} parent=0 // pred_fallthru
    _
  // Predicated region
  $region42: #{specialized_mlp_sh.12} parent=0 // pred_check
    _
  $region43: #{specialized_mlp_sh.12} parent=0 // pred_check_branch
    %52 = sbr.rel (0) target = $region45
  $region44: #{specialized_mlp_sh.12} parent=0 // pred_region
    _
  $region45: #{specialized_mlp_sh.12} parent=0 // pred_fallthru
    _
  // Predicated region
  $region46: #{specialized_mlp_sh.12} parent=0 // pred_check
    _
  $region47: #{specialized_mlp_sh.12} parent=0 // pred_check_branch
    %54 = sbr.rel (0) target = $region49
  $region48: #{specialized_mlp_sh.12} parent=0 // pred_region
    _
  $region49: #{specialized_mlp_sh.12} parent=0 // pred_fallthru
    _
  // Predicated region
  $region50: #{specialized_mlp_sh.12} parent=0 // pred_check
    _
  $region51: #{specialized_mlp_sh.12} parent=0 // pred_check_branch
    %56 = sbr.rel (0) target = $region53
  $region52: #{specialized_mlp_sh.12} parent=0 // pred_region
    _
  $region53: #{specialized_mlp_sh.12} parent=0 // pred_fallthru
    _
  // Predicated region
  $region54: #{specialized_mlp_sh.12} parent=0 // pred_check
    _
  $region55: #{specialized_mlp_sh.12} parent=0 // pred_check_branch
    %58 = sbr.rel (0) target = $region57
  $region56: #{specialized_mlp_sh.12} parent=0 // pred_region
    _
  $region57: #{specialized_mlp_sh.12} parent=0 // pred_fallthru
    _
  // Predicated region
  $region58: #{specialized_mlp_sh.12} parent=0 // pred_check
    _
  $region59: #{specialized_mlp_sh.12} parent=0 // pred_check_branch
    %60 = sbr.rel (0) target = $region61
  $region60: #{specialized_mlp_sh.12} parent=0 // pred_region
    _
  $region61: #{specialized_mlp_sh.12} parent=0 // pred_fallthru
    _
  // Predicated region
  $region62: #{specialized_mlp_sh.12} parent=0 // pred_check
    _
  $region63: #{specialized_mlp_sh.12} parent=0 // pred_check_branch
    %62 = sbr.rel (0) target = $region65
  $region64: #{specialized_mlp_sh.12} parent=0 // pred_region
    _
  $region65: #{specialized_mlp_sh.12} parent=0 // pred_fallthru
    _
  // Predicated region
  $region66: #{specialized_mlp_sh.12} parent=0 // pred_check
    _
  $region67: #{specialized_mlp_sh.12} parent=0 // pred_check_branch
    %64 = sbr.rel (0) target = $region69
  $region68: #{specialized_mlp_sh.12} parent=0 // pred_region
    _
  $region69: #{specialized_mlp_sh.12} parent=0 // pred_fallthru
    _
  // Predicated region
  $region70: #{specialized_mlp_sh.12} parent=0 // pred_check
    _
  $region71: #{specialized_mlp_sh.12} parent=0 // pred_check_branch
    %66 = sbr.rel (0) target = $region73
  $region72: #{specialized_mlp_sh.12} parent=0 // pred_region
    _
  $region73: #{specialized_mlp_sh.12} parent=0 // pred_fallthru
    _
  // Predicated region
  $region74: #{specialized_mlp_sh.12} parent=0 // pred_check
    _
  $region75: #{specialized_mlp_sh.12} parent=0 // pred_check_branch
    %68 = sbr.rel (0) target = $region77
  $region76: #{specialized_mlp_sh.12} parent=0 // pred_region
    _
  $region77: #{specialized_mlp_sh.12} parent=0 // pred_fallthru
    _
  // Predicated region
  $region78: #{specialized_mlp_sh.12} parent=0 // pred_check
    _
  $region79: #{specialized_mlp_sh.12} parent=0 // pred_check_branch
    %70 = sbr.rel (0) target = $region81
  $region80: #{specialized_mlp_sh.12} parent=0 // pred_region
    _
  $region81: #{specialized_mlp_sh.12} parent=0 // pred_fallthru
    _
  // Predicated region
  $region82: #{specialized_mlp_sh.12} parent=0 // pred_check
    _
  $region83: #{specialized_mlp_sh.12} parent=0 // pred_check_branch
    %72 = sbr.rel (0) target = $region85
  $region84: #{specialized_mlp_sh.12} parent=0 // pred_region
    _
  $region85: #{specialized_mlp_sh.12} parent=0 // pred_fallthru
    _
  // Predicated region
  $region86: #{specialized_mlp_sh.12} parent=0 // pred_check
    _
  $region87: #{specialized_mlp_sh.12} parent=0 // pred_check_branch
    %74 = sbr.rel (0) target = $region89
  $region88: #{specialized_mlp_sh.12} parent=0 // pred_region
    _
  $region89: #{specialized_mlp_sh.12} parent=0 // pred_fallthru
    _
  // Predicated region
  $region90: #{specialized_mlp_sh.12} parent=0 // pred_check
    _
  $region91: #{specialized_mlp_sh.12} parent=0 // pred_check_branch
    %76 = sbr.rel (0) target = $region93
  $region92: #{specialized_mlp_sh.12} parent=0 // pred_region
    _
  $region93: #{specialized_mlp_sh.12} parent=0 // pred_fallthru
    _
  // Predicated region
  $region94: #{specialized_mlp_sh.12} parent=0 // pred_check
    _
  $region95: #{specialized_mlp_sh.12} parent=0 // pred_check_branch
    %78 = sbr.rel (0) target = $region97
  $region96: #{specialized_mlp_sh.12} parent=0 // pred_region
    _
  $region97: #{specialized_mlp_sh.12} parent=0 // pred_fallthru
    _
  // Predicated region
  $region98: #{specialized_mlp_sh.12} parent=0 // pred_check
    _
  $region99: #{specialized_mlp_sh.12} parent=0 // pred_check_branch
    %80 = sbr.rel (0) target = $region101
  $region100: #{specialized_mlp_sh.12} parent=0 // pred_region
    _
  $region101: #{specialized_mlp_sh.12} parent=0 // pred_fallthru
    _
  %v81 = vld [vmem:[%s1] sm:$0xff]
  %v82 = vld [vmem:[%s2] sm:$0xff]
  %v83 = vld [vmem:[%s2 + $0x8] sm:$0xf]
  %v84 = vld [vmem:[%s3] sm:$0x1]
  %v86 = vlaneseq
  %v87 = vshrl.u32 %v86, 7
  %v88 = vsub.s32 0, %v87
  %v89 = vrot.slane %v84, %v88
  %vm91 = vcmask 97280
  %v93 = vsel %vm91, %v81, 0
  %vm95 = vcmask 1043456
  %v97 = vsel %vm95, %v83, 0
  %99 = vmatprep.subr.mxu0 0.0
  %100 = vmatpush1.msra.mxu0 %v82
  %101 = vmatprep.subr.mxu0 0.0
  %102 = vmatpush1.msra.mxu0 %v97
  %103 = vmatprep.subr.mxu0 0.0
  %104 = vmatpush1.msra.mxu0 0.0
  %105 = vmatprep.subr.mxu0 0.0
  %106 = vmatpush1.msra.mxu0 0.0
  %107 = vmatprep.subr.mxu0 0.0
  %108 = vmatpush1.msra.mxu0 0.0
  %109 = vmatprep.subr.mxu0 0.0
  %110 = vmatpush1.msra.mxu0 0.0
  %111 = vmatprep.subr.mxu0 0.0
  %112 = vmatpush1.msra.mxu0 0.0
  %113 = vmatprep.subr.mxu0 0.0
  %114 = vmatpush1.msra.mxu0 0.0
  %115 = vmatprep.subr.mxu0 0.0
  %116 = vmatpush1.msra.mxu0 0.0
  %117 = vmatprep.subr.mxu0 0.0
  %118 = vmatpush1.msra.mxu0 0.0
  %119 = vmatprep.subr.mxu0 0.0
  %120 = vmatpush1.msra.mxu0 0.0
  %121 = vmatprep.subr.mxu0 0.0
  %122 = vmatpush1.msra.mxu0 0.0
  %123 = vmatprep.subr.mxu0 0.0
  %124 = vmatpush1.msra.mxu0 0.0
  %125 = vmatprep.subr.mxu0 0.0
  %126 = vmatpush1.msra.mxu0 0.0
  %127 = vmatprep.subr.mxu0 0.0
  %128 = vmatpush1.msra.mxu0 0.0
  %129 = vmatprep.subr.mxu0 0.0
  %130 = vmatpush1.msra.mxu0 0.0
  %131 = vmatprep.subr.mxu0 0.0
  %132 = vmatpush1.msra.mxu0 0.0
  %133 = vmatprep.subr.mxu0 0.0
  %134 = vmatpush1.msra.mxu0 0.0
  %135 = vmatprep.subr.mxu0 0.0
  %136 = vmatpush1.msra.mxu0 0.0
  %137 = vmatprep.subr.mxu0 0.0
  %138 = vmatpush1.msra.mxu0 0.0
  %139 = vmatprep.subr.mxu0 0.0
  %140 = vmatpush1.msra.mxu0 0.0
  %141 = vmatprep.subr.mxu0 0.0
  %142 = vmatpush1.msra.mxu0 0.0
  %143 = vmatprep.subr.mxu0 0.0
  %144 = vmatpush1.msra.mxu0 0.0
  %145 = vmatprep.subr.mxu0 0.0
  %146 = vmatpush1.msra.mxu0 0.0
  %147 = vmatprep.subr.mxu0 0.0
  %148 = vmatpush1.msra.mxu0 0.0
  %149 = vmatprep.subr.mxu0 0.0
  %150 = vmatpush1.msra.mxu0 0.0
  %151 = vmatprep.subr.mxu0 0.0
  %152 = vmatpush1.msra.mxu0 0.0
  %153 = vmatprep.subr.mxu0 0.0
  %154 = vmatpush1.msra.mxu0 0.0
  %155 = vmatprep.subr.mxu0 0.0
  %156 = vmatpush1.msra.mxu0 0.0
  %157 = vmatprep.subr.mxu0 0.0
  %158 = vmatpush1.msra.mxu0 0.0
  %159 = vmatprep.subr.mxu0 0.0
  %160 = vmatpush1.msra.mxu0 0.0
  %161 = vmatprep.subr.mxu0 0.0
  %162 = vmatpush1.msra.mxu0 0.0
  %163 = vmatprep.mubr.f32.mxu0 0.0
  %164 = vmatmul.mubr.f32.gmra.mrb[0].mxu0 %v93
  %v165 = vpop.f32.mrb[0].mxu0
  %v166 = vadd.f32 %v89, %v165
  %v167 = vpop.f32.mrb[0].mxu0
  %168 = vdwg.mxu0
  %v169 = vld [vmem:[%s4] sm:$0x1]
  %v171 = vlaneseq
  %v172 = vshrl.u32 %v171, 7
  %v173 = vsub.s32 0, %v172
  %v174 = vrot.slane %v169, %v173
  %v176 = vmul.f32 %v166, %v174
  %v177 = vld [vmem:[%s5] sm:$0x1]
  %v179 = vlaneseq
  %v180 = vshrl.u32 %v179, 7
  %v181 = vsub.s32 0, %v180
  %v182 = vrot.slane %v177, %v181
  %v184 = vadd.f32 %v176, %v182
  %v185 = vmax.f32 %v184, 0.0
  %v186 = vld [vmem:[%s6] sm:$0xff]
  %v187 = vld [vmem:[%s6 + $0x8] sm:$0xff]
  %v188 = vld [vmem:[%s6 + $0x10] sm:$0xff]
  %v189 = vld [vmem:[%s6 + $0x18] sm:$0xff]
  %v190 = vld [vmem:[%s6 + $0x20] sm:$0xff]
  %v191 = vld [vmem:[%s6 + $0x28] sm:$0xff]
  %v192 = vld [vmem:[%s6 + $0x30] sm:$0xff]
  %v193 = vld [vmem:[%s6 + $0x38] sm:$0xff]
  %v194 = vld [vmem:[%s6 + $0x40] sm:$0xff]
  %v195 = vld [vmem:[%s6 + $0x48] sm:$0xff]
  %v196 = vld [vmem:[%s6 + $0x50] sm:$0xff]
  %v197 = vld [vmem:[%s6 + $0x58] sm:$0xff]
  %v198 = vld [vmem:[%s6 + $0x60] sm:$0xff]
  %v199 = vld [vmem:[%s6 + $0x68] sm:$0xff]
  %v200 = vld [vmem:[%s6 + $0x70] sm:$0xff]
  %v201 = vld [vmem:[%s6 + $0x78] sm:$0xff]
  %v202 = vld [vmem:[%s7] sm:$0x1]
  %v204 = vlaneseq
  %v205 = vshrl.u32 %v204, 7
  %v206 = vsub.s32 0, %v205
  %v207 = vrot.slane %v202, %v206
  %209 = vmatprep.subr.mxu0 0.0
  %210 = vmatpush1.msra.mxu0 %v186
  %211 = vmatprep.subr.mxu0 0.0
  %212 = vmatpush1.msra.mxu0 %v187
  %213 = vmatprep.subr.mxu0 0.0
  %214 = vmatpush1.msra.mxu0 %v188
  %215 = vmatprep.subr.mxu0 0.0
  %216 = vmatpush1.msra.mxu0 %v189
  %217 = vmatprep.subr.mxu0 0.0
  %218 = vmatpush1.msra.mxu0 %v190
  %219 = vmatprep.subr.mxu0 0.0
  %220 = vmatpush1.msra.mxu0 %v191
  %221 = vmatprep.subr.mxu0 0.0
  %222 = vmatpush1.msra.mxu0 %v192
  %223 = vmatprep.subr.mxu0 0.0
  %224 = vmatpush1.msra.mxu0 %v193
  %225 = vmatprep.subr.mxu0 0.0
  %226 = vmatpush1.msra.mxu0 %v194
  %227 = vmatprep.subr.mxu0 0.0
  %228 = vmatpush1.msra.mxu0 %v195
  %229 = vmatprep.subr.mxu0 0.0
  %230 = vmatpush1.msra.mxu0 %v196
  %231 = vmatprep.subr.mxu0 0.0
  %232 = vmatpush1.msra.mxu0 %v197
  %233 = vmatprep.subr.mxu0 0.0
  %234 = vmatpush1.msra.mxu0 %v198
  %235 = vmatprep.subr.mxu0 0.0
  %236 = vmatpush1.msra.mxu0 %v199
  %237 = vmatprep.subr.mxu0 0.0
  %238 = vmatpush1.msra.mxu0 %v200
  %239 = vmatprep.subr.mxu0 0.0
  %240 = vmatpush1.msra.mxu0 %v201
  %241 = vmatprep.subr.mxu0 0.0
  %242 = vmatpush1.msra.mxu0 0.0
  %243 = vmatprep.subr.mxu0 0.0
  %244 = vmatpush1.msra.mxu0 0.0
  %245 = vmatprep.subr.mxu0 0.0
  %246 = vmatpush1.msra.mxu0 0.0
  %247 = vmatprep.subr.mxu0 0.0
  %248 = vmatpush1.msra.mxu0 0.0
  %249 = vmatprep.subr.mxu0 0.0
  %250 = vmatpush1.msra.mxu0 0.0
  %251 = vmatprep.subr.mxu0 0.0
  %252 = vmatpush1.msra.mxu0 0.0
  %253 = vmatprep.subr.mxu0 0.0
  %254 = vmatpush1.msra.mxu0 0.0
  %255 = vmatprep.subr.mxu0 0.0
  %256 = vmatpush1.msra.mxu0 0.0
  %257 = vmatprep.subr.mxu0 0.0
  %258 = vmatpush1.msra.mxu0 0.0
  %259 = vmatprep.subr.mxu0 0.0
  %260 = vmatpush1.msra.mxu0 0.0
  %261 = vmatprep.subr.mxu0 0.0
  %262 = vmatpush1.msra.mxu0 0.0
  %263 = vmatprep.subr.mxu0 0.0
  %264 = vmatpush1.msra.mxu0 0.0
  %265 = vmatprep.subr.mxu0 0.0
  %266 = vmatpush1.msra.mxu0 0.0
  %267 = vmatprep.subr.mxu0 0.0
  %268 = vmatpush1.msra.mxu0 0.0
  %269 = vmatprep.subr.mxu0 0.0
  %270 = vmatpush1.msra.mxu0 0.0
  %271 = vmatprep.subr.mxu0 0.0
  %272 = vmatpush1.msra.mxu0 0.0
  %273 = vmatprep.mubr.f32.mxu0 0.0
  %274 = vmatmul.mubr.f32.gmra.mrb[0].mxu0 %v185
  %v275 = vpop.f32.mrb[0].mxu0
  %v276 = vadd.f32 %v207, %v275
  %v277 = vpop.f32.mrb[0].mxu0
  %278 = vdwg.mxu0
  %v279 = vld [vmem:[%s8] sm:$0x1]
  %v281 = vlaneseq
  %v282 = vshrl.u32 %v281, 7
  %v283 = vsub.s32 0, %v282
  %v284 = vrot.slane %v279, %v283
  %v286 = vmul.f32 %v276, %v284
  %v287 = vld [vmem:[%s9] sm:$0x1]
  %v289 = vlaneseq
  %v290 = vshrl.u32 %v289, 7
  %v291 = vsub.s32 0, %v290
  %v292 = vrot.slane %v287, %v291
  %v294 = vadd.f32 %v286, %v292
  %v295 = vmax.f32 %v294, 0.0
  %v296 = vld [vmem:[%s10] sm:$0xff]
  %v297 = vld [vmem:[%s10 + $0x8] sm:$0xff]
  %v298 = vld [vmem:[%s10 + $0x10] sm:$0xff]
  %v299 = vld [vmem:[%s10 + $0x18] sm:$0xff]
  %v300 = vld [vmem:[%s10 + $0x20] sm:$0xff]
  %v301 = vld [vmem:[%s10 + $0x28] sm:$0xff]
  %v302 = vld [vmem:[%s10 + $0x30] sm:$0xff]
  %v303 = vld [vmem:[%s10 + $0x38] sm:$0xff]
  %v304 = vld [vmem:[%s10 + $0x40] sm:$0xff]
  %v305 = vld [vmem:[%s10 + $0x48] sm:$0xff]
  %v306 = vld [vmem:[%s10 + $0x50] sm:$0xff]
  %v307 = vld [vmem:[%s10 + $0x58] sm:$0xff]
  %v308 = vld [vmem:[%s10 + $0x60] sm:$0xff]
  %v309 = vld [vmem:[%s10 + $0x68] sm:$0xff]
  %v310 = vld [vmem:[%s10 + $0x70] sm:$0xff]
  %v311 = vld [vmem:[%s10 + $0x78] sm:$0xff]
  %v312 = vld [vmem:[%s11] sm:$0x1]
  %v314 = vlaneseq
  %v315 = vshrl.u32 %v314, 7
  %v316 = vsub.s32 0, %v315
  %v317 = vrot.slane %v312, %v316
  %319 = vmatprep.subr.mxu0 0.0
  %320 = vmatpush1.msra.mxu0 %v296
  %321 = vmatprep.subr.mxu0 0.0
  %322 = vmatpush1.msra.mxu0 %v297
  %323 = vmatprep.subr.mxu0 0.0
  %324 = vmatpush1.msra.mxu0 %v298
  %325 = vmatprep.subr.mxu0 0.0
  %326 = vmatpush1.msra.mxu0 %v299
  %327 = vmatprep.subr.mxu0 0.0
  %328 = vmatpush1.msra.mxu0 %v300
  %329 = vmatprep.subr.mxu0 0.0
  %330 = vmatpush1.msra.mxu0 %v301
  %331 = vmatprep.subr.mxu0 0.0
  %332 = vmatpush1.msra.mxu0 %v302
  %333 = vmatprep.subr.mxu0 0.0
  %334 = vmatpush1.msra.mxu0 %v303
  %335 = vmatprep.subr.mxu0 0.0
  %336 = vmatpush1.msra.mxu0 %v304
  %337 = vmatprep.subr.mxu0 0.0
  %338 = vmatpush1.msra.mxu0 %v305
  %339 = vmatprep.subr.mxu0 0.0
  %340 = vmatpush1.msra.mxu0 %v306
  %341 = vmatprep.subr.mxu0 0.0
  %342 = vmatpush1.msra.mxu0 %v307
  %343 = vmatprep.subr.mxu0 0.0
  %344 = vmatpush1.msra.mxu0 %v308
  %345 = vmatprep.subr.mxu0 0.0
  %346 = vmatpush1.msra.mxu0 %v309
  %347 = vmatprep.subr.mxu0 0.0
  %348 = vmatpush1.msra.mxu0 %v310
  %349 = vmatprep.subr.mxu0 0.0
  %350 = vmatpush1.msra.mxu0 %v311
  %351 = vmatprep.subr.mxu0 0.0
  %352 = vmatpush1.msra.mxu0 0.0
  %353 = vmatprep.subr.mxu0 0.0
  %354 = vmatpush1.msra.mxu0 0.0
  %355 = vmatprep.subr.mxu0 0.0
  %356 = vmatpush1.msra.mxu0 0.0
  %357 = vmatprep.subr.mxu0 0.0
  %358 = vmatpush1.msra.mxu0 0.0
  %359 = vmatprep.subr.mxu0 0.0
  %360 = vmatpush1.msra.mxu0 0.0
  %361 = vmatprep.subr.mxu0 0.0
  %362 = vmatpush1.msra.mxu0 0.0
  %363 = vmatprep.subr.mxu0 0.0
  %364 = vmatpush1.msra.mxu0 0.0
  %365 = vmatprep.subr.mxu0 0.0
  %366 = vmatpush1.msra.mxu0 0.0
  %367 = vmatprep.subr.mxu0 0.0
  %368 = vmatpush1.msra.mxu0 0.0
  %369 = vmatprep.subr.mxu0 0.0
  %370 = vmatpush1.msra.mxu0 0.0
  %371 = vmatprep.subr.mxu0 0.0
  %372 = vmatpush1.msra.mxu0 0.0
  %373 = vmatprep.subr.mxu0 0.0
  %374 = vmatpush1.msra.mxu0 0.0
  %375 = vmatprep.subr.mxu0 0.0
  %376 = vmatpush1.msra.mxu0 0.0
  %377 = vmatprep.subr.mxu0 0.0
  %378 = vmatpush1.msra.mxu0 0.0
  %379 = vmatprep.subr.mxu0 0.0
  %380 = vmatpush1.msra.mxu0 0.0
  %381 = vmatprep.subr.mxu0 0.0
  %382 = vmatpush1.msra.mxu0 0.0
  %383 = vmatprep.mubr.f32.mxu0 0.0
  %384 = vmatmul.mubr.f32.gmra.mrb[0].mxu0 %v295
  %v385 = vpop.f32.mrb[0].mxu0
  %v386 = vadd.f32 %v317, %v385
  %v387 = vpop.f32.mrb[0].mxu0
  %388 = vdwg.mxu0
  %v389 = vld [vmem:[%s12] sm:$0x1]
  %v391 = vlaneseq
  %v392 = vshrl.u32 %v391, 7
  %v393 = vsub.s32 0, %v392
  %v394 = vrot.slane %v389, %v393
  %v396 = vmul.f32 %v386, %v394
  %v397 = vld [vmem:[%s13] sm:$0x1]
  %v399 = vlaneseq
  %v400 = vshrl.u32 %v399, 7
  %v401 = vsub.s32 0, %v400
  %v402 = vrot.slane %v397, %v401
  %v404 = vadd.f32 %v396, %v402
  %v405 = vmax.f32 %v404, 0.0
  %v406 = vld [vmem:[%s14] sm:$0xff]
  %v407 = vld [vmem:[%s14 + $0x8] sm:$0xff]
  %v408 = vld [vmem:[%s14 + $0x10] sm:$0xff]
  %v409 = vld [vmem:[%s14 + $0x18] sm:$0xff]
  %v410 = vld [vmem:[%s14 + $0x20] sm:$0xff]
  %v411 = vld [vmem:[%s14 + $0x28] sm:$0xff]
  %v412 = vld [vmem:[%s14 + $0x30] sm:$0xff]
  %v413 = vld [vmem:[%s14 + $0x38] sm:$0xff]
  %v414 = vld [vmem:[%s14 + $0x40] sm:$0xff]
  %v415 = vld [vmem:[%s14 + $0x48] sm:$0xff]
  %v416 = vld [vmem:[%s14 + $0x50] sm:$0xff]
  %v417 = vld [vmem:[%s14 + $0x58] sm:$0xff]
  %v418 = vld [vmem:[%s14 + $0x60] sm:$0xff]
  %v419 = vld [vmem:[%s14 + $0x68] sm:$0xff]
  %v420 = vld [vmem:[%s14 + $0x70] sm:$0xff]
  %v421 = vld [vmem:[%s14 + $0x78] sm:$0xff]
  %v422 = vld [vmem:[%s15] sm:$0x1]
  %v424 = vlaneseq
  %v425 = vshrl.u32 %v424, 7
  %v426 = vsub.s32 0, %v425
  %v427 = vrot.slane %v422, %v426
  %429 = vmatprep.subr.mxu0 0.0
  %430 = vmatpush1.msra.mxu0 %v406
  %431 = vmatprep.subr.mxu0 0.0
  %432 = vmatpush1.msra.mxu0 %v407
  %433 = vmatprep.subr.mxu0 0.0
  %434 = vmatpush1.msra.mxu0 %v408
  %435 = vmatprep.subr.mxu0 0.0
  %436 = vmatpush1.msra.mxu0 %v409
  %437 = vmatprep.subr.mxu0 0.0
  %438 = vmatpush1.msra.mxu0 %v410
  %439 = vmatprep.subr.mxu0 0.0
  %440 = vmatpush1.msra.mxu0 %v411
  %441 = vmatprep.subr.mxu0 0.0
  %442 = vmatpush1.msra.mxu0 %v412
  %443 = vmatprep.subr.mxu0 0.0
  %444 = vmatpush1.msra.mxu0 %v413
  %445 = vmatprep.subr.mxu0 0.0
  %446 = vmatpush1.msra.mxu0 %v414
  %447 = vmatprep.subr.mxu0 0.0
  %448 = vmatpush1.msra.mxu0 %v415
  %449 = vmatprep.subr.mxu0 0.0
  %450 = vmatpush1.msra.mxu0 %v416
  %451 = vmatprep.subr.mxu0 0.0
  %452 = vmatpush1.msra.mxu0 %v417
  %453 = vmatprep.subr.mxu0 0.0
  %454 = vmatpush1.msra.mxu0 %v418
  %455 = vmatprep.subr.mxu0 0.0
  %456 = vmatpush1.msra.mxu0 %v419
  %457 = vmatprep.subr.mxu0 0.0
  %458 = vmatpush1.msra.mxu0 %v420
  %459 = vmatprep.subr.mxu0 0.0
  %460 = vmatpush1.msra.mxu0 %v421
  %461 = vmatprep.subr.mxu0 0.0
  %462 = vmatpush1.msra.mxu0 0.0
  %463 = vmatprep.subr.mxu0 0.0
  %464 = vmatpush1.msra.mxu0 0.0
  %465 = vmatprep.subr.mxu0 0.0
  %466 = vmatpush1.msra.mxu0 0.0
  %467 = vmatprep.subr.mxu0 0.0
  %468 = vmatpush1.msra.mxu0 0.0
  %469 = vmatprep.subr.mxu0 0.0
  %470 = vmatpush1.msra.mxu0 0.0
  %471 = vmatprep.subr.mxu0 0.0
  %472 = vmatpush1.msra.mxu0 0.0
  %473 = vmatprep.subr.mxu0 0.0
  %474 = vmatpush1.msra.mxu0 0.0
  %475 = vmatprep.subr.mxu0 0.0
  %476 = vmatpush1.msra.mxu0 0.0
  %477 = vmatprep.subr.mxu0 0.0
  %478 = vmatpush1.msra.mxu0 0.0
  %479 = vmatprep.subr.mxu0 0.0
  %480 = vmatpush1.msra.mxu0 0.0
  %481 = vmatprep.subr.mxu0 0.0
  %482 = vmatpush1.msra.mxu0 0.0
  %483 = vmatprep.subr.mxu0 0.0
  %484 = vmatpush1.msra.mxu0 0.0
  %485 = vmatprep.subr.mxu0 0.0
  %486 = vmatpush1.msra.mxu0 0.0
  %487 = vmatprep.subr.mxu0 0.0
  %488 = vmatpush1.msra.mxu0 0.0
  %489 = vmatprep.subr.mxu0 0.0
  %490 = vmatpush1.msra.mxu0 0.0
  %491 = vmatprep.subr.mxu0 0.0
  %492 = vmatpush1.msra.mxu0 0.0
  %493 = vmatprep.mubr.f32.mxu0 0.0
  %494 = vmatmul.mubr.f32.gmra.mrb[0].mxu0 %v405
  %v495 = vpop.f32.mrb[0].mxu0
  %v496 = vadd.f32 %v427, %v495
  %v497 = vpop.f32.mrb[0].mxu0
  %498 = vdwg.mxu0
  %v499 = vld [vmem:[%s16] sm:$0x1]
  %v501 = vlaneseq
  %v502 = vshrl.u32 %v501, 7
  %v503 = vsub.s32 0, %v502
  %v504 = vrot.slane %v499, %v503
  %v506 = vmul.f32 %v496, %v504
  %v507 = vld [vmem:[%s17] sm:$0x1]
  %v509 = vlaneseq
  %v510 = vshrl.u32 %v509, 7
  %v511 = vsub.s32 0, %v510
  %v512 = vrot.slane %v507, %v511
  %v514 = vadd.f32 %v506, %v512
  %v515 = vmax.f32 %v514, 0.0
  %v516 = vld [vmem:[%s18] sm:$0xff]
  %v517 = vld [vmem:[%s18 + $0x8] sm:$0xff]
  %v518 = vld [vmem:[%s18 + $0x10] sm:$0xff]
  %v519 = vld [vmem:[%s18 + $0x18] sm:$0xff]
  %v520 = vld [vmem:[%s18 + $0x20] sm:$0xff]
  %v521 = vld [vmem:[%s18 + $0x28] sm:$0xff]
  %v522 = vld [vmem:[%s18 + $0x30] sm:$0xff]
  %v523 = vld [vmem:[%s18 + $0x38] sm:$0xff]
  %v524 = vld [vmem:[%s18 + $0x40] sm:$0xff]
  %v525 = vld [vmem:[%s18 + $0x48] sm:$0xff]
  %v526 = vld [vmem:[%s18 + $0x50] sm:$0xff]
  %v527 = vld [vmem:[%s18 + $0x58] sm:$0xff]
  %v528 = vld [vmem:[%s18 + $0x60] sm:$0xff]
  %v529 = vld [vmem:[%s18 + $0x68] sm:$0xff]
  %v530 = vld [vmem:[%s18 + $0x70] sm:$0xff]
  %v531 = vld [vmem:[%s18 + $0x78] sm:$0xff]
  %v532 = vld [vmem:[%s19] sm:$0x1]
  %v534 = vlaneseq
  %v535 = vshrl.u32 %v534, 7
  %v536 = vsub.s32 0, %v535
  %v537 = vrot.slane %v532, %v536
  %539 = vmatprep.subr.mxu0 0.0
  %540 = vmatpush1.msra.mxu0 %v516
  %541 = vmatprep.subr.mxu0 0.0
  %542 = vmatpush1.msra.mxu0 %v517
  %543 = vmatprep.subr.mxu0 0.0
  %544 = vmatpush1.msra.mxu0 %v518
  %545 = vmatprep.subr.mxu0 0.0
  %546 = vmatpush1.msra.mxu0 %v519
  %547 = vmatprep.subr.mxu0 0.0
  %548 = vmatpush1.msra.mxu0 %v520
  %549 = vmatprep.subr.mxu0 0.0
  %550 = vmatpush1.msra.mxu0 %v521
  %551 = vmatprep.subr.mxu0 0.0
  %552 = vmatpush1.msra.mxu0 %v522
  %553 = vmatprep.subr.mxu0 0.0
  %554 = vmatpush1.msra.mxu0 %v523
  %555 = vmatprep.subr.mxu0 0.0
  %556 = vmatpush1.msra.mxu0 %v524
  %557 = vmatprep.subr.mxu0 0.0
  %558 = vmatpush1.msra.mxu0 %v525
  %559 = vmatprep.subr.mxu0 0.0
  %560 = vmatpush1.msra.mxu0 %v526
  %561 = vmatprep.subr.mxu0 0.0
  %562 = vmatpush1.msra.mxu0 %v527
  %563 = vmatprep.subr.mxu0 0.0
  %564 = vmatpush1.msra.mxu0 %v528
  %565 = vmatprep.subr.mxu0 0.0
  %566 = vmatpush1.msra.mxu0 %v529
  %567 = vmatprep.subr.mxu0 0.0
  %568 = vmatpush1.msra.mxu0 %v530
  %569 = vmatprep.subr.mxu0 0.0
  %570 = vmatpush1.msra.mxu0 %v531
  %571 = vmatprep.subr.mxu0 0.0
  %572 = vmatpush1.msra.mxu0 0.0
  %573 = vmatprep.subr.mxu0 0.0
  %574 = vmatpush1.msra.mxu0 0.0
  %575 = vmatprep.subr.mxu0 0.0
  %576 = vmatpush1.msra.mxu0 0.0
  %577 = vmatprep.subr.mxu0 0.0
  %578 = vmatpush1.msra.mxu0 0.0
  %579 = vmatprep.subr.mxu0 0.0
  %580 = vmatpush1.msra.mxu0 0.0
  %581 = vmatprep.subr.mxu0 0.0
  %582 = vmatpush1.msra.mxu0 0.0
  %583 = vmatprep.subr.mxu0 0.0
  %584 = vmatpush1.msra.mxu0 0.0
  %585 = vmatprep.subr.mxu0 0.0
  %586 = vmatpush1.msra.mxu0 0.0
  %587 = vmatprep.subr.mxu0 0.0
  %588 = vmatpush1.msra.mxu0 0.0
  %589 = vmatprep.subr.mxu0 0.0
  %590 = vmatpush1.msra.mxu0 0.0
  %591 = vmatprep.subr.mxu0 0.0
  %592 = vmatpush1.msra.mxu0 0.0
  %593 = vmatprep.subr.mxu0 0.0
  %594 = vmatpush1.msra.mxu0 0.0
  %595 = vmatprep.subr.mxu0 0.0
  %596 = vmatpush1.msra.mxu0 0.0
  %597 = vmatprep.subr.mxu0 0.0
  %598 = vmatpush1.msra.mxu0 0.0
  %599 = vmatprep.subr.mxu0 0.0
  %600 = vmatpush1.msra.mxu0 0.0
  %601 = vmatprep.subr.mxu0 0.0
  %602 = vmatpush1.msra.mxu0 0.0
  %603 = vmatprep.mubr.f32.mxu0 0.0
  %604 = vmatmul.mubr.f32.gmra.mrb[0].mxu0 %v515
  %v605 = vpop.f32.mrb[0].mxu0
  %v606 = vadd.f32 %v537, %v605
  %v607 = vpop.f32.mrb[0].mxu0
  %608 = vdwg.mxu0
  %v609 = vld [vmem:[%s20] sm:$0x1]
  %v611 = vlaneseq
  %v612 = vshrl.u32 %v611, 7
  %v613 = vsub.s32 0, %v612
  %v614 = vrot.slane %v609, %v613
  %v616 = vmul.f32 %v606, %v614
  %v617 = vld [vmem:[%s21] sm:$0x1]
  %v619 = vlaneseq
  %v620 = vshrl.u32 %v619, 7
  %v621 = vsub.s32 0, %v620
  %v622 = vrot.slane %v617, %v621
  %v624 = vadd.f32 %v616, %v622
  %v625 = vmax.f32 %v624, 0.0
  %v626 = vld [vmem:[%s22] sm:$0xff]
  %v627 = vld [vmem:[%s22 + $0x8] sm:$0xff]
  %v628 = vld [vmem:[%s22 + $0x10] sm:$0xff]
  %v629 = vld [vmem:[%s22 + $0x18] sm:$0xff]
  %v630 = vld [vmem:[%s22 + $0x20] sm:$0xff]
  %v631 = vld [vmem:[%s22 + $0x28] sm:$0xff]
  %v632 = vld [vmem:[%s22 + $0x30] sm:$0xff]
  %v633 = vld [vmem:[%s22 + $0x38] sm:$0xff]
  %v634 = vld [vmem:[%s22 + $0x40] sm:$0xff]
  %v635 = vld [vmem:[%s22 + $0x48] sm:$0xff]
  %v636 = vld [vmem:[%s22 + $0x50] sm:$0xff]
  %v637 = vld [vmem:[%s22 + $0x58] sm:$0xff]
  %v638 = vld [vmem:[%s22 + $0x60] sm:$0xff]
  %v639 = vld [vmem:[%s22 + $0x68] sm:$0xff]
  %v640 = vld [vmem:[%s22 + $0x70] sm:$0xff]
  %v641 = vld [vmem:[%s22 + $0x78] sm:$0xff]
  %v642 = vld [vmem:[%s23] sm:$0x1]
  %v644 = vlaneseq
  %v645 = vshrl.u32 %v644, 7
  %v646 = vsub.s32 0, %v645
  %v647 = vrot.slane %v642, %v646
  %649 = vmatprep.subr.mxu0 0.0
  %650 = vmatpush1.msra.mxu0 %v626
  %651 = vmatprep.subr.mxu0 0.0
  %652 = vmatpush1.msra.mxu0 %v627
  %653 = vmatprep.subr.mxu0 0.0
  %654 = vmatpush1.msra.mxu0 %v628
  %655 = vmatprep.subr.mxu0 0.0
  %656 = vmatpush1.msra.mxu0 %v629
  %657 = vmatprep.subr.mxu0 0.0
  %658 = vmatpush1.msra.mxu0 %v630
  %659 = vmatprep.subr.mxu0 0.0
  %660 = vmatpush1.msra.mxu0 %v631
  %661 = vmatprep.subr.mxu0 0.0
  %662 = vmatpush1.msra.mxu0 %v632
  %663 = vmatprep.subr.mxu0 0.0
  %664 = vmatpush1.msra.mxu0 %v633
  %665 = vmatprep.subr.mxu0 0.0
  %666 = vmatpush1.msra.mxu0 %v634
  %667 = vmatprep.subr.mxu0 0.0
  %668 = vmatpush1.msra.mxu0 %v635
  %669 = vmatprep.subr.mxu0 0.0
  %670 = vmatpush1.msra.mxu0 %v636
  %671 = vmatprep.subr.mxu0 0.0
  %672 = vmatpush1.msra.mxu0 %v637
  %673 = vmatprep.subr.mxu0 0.0
  %674 = vmatpush1.msra.mxu0 %v638
  %675 = vmatprep.subr.mxu0 0.0
  %676 = vmatpush1.msra.mxu0 %v639
  %677 = vmatprep.subr.mxu0 0.0
  %678 = vmatpush1.msra.mxu0 %v640
  %679 = vmatprep.subr.mxu0 0.0
  %680 = vmatpush1.msra.mxu0 %v641
  %681 = vmatprep.subr.mxu0 0.0
  %682 = vmatpush1.msra.mxu0 0.0
  %683 = vmatprep.subr.mxu0 0.0
  %684 = vmatpush1.msra.mxu0 0.0
  %685 = vmatprep.subr.mxu0 0.0
  %686 = vmatpush1.msra.mxu0 0.0
  %687 = vmatprep.subr.mxu0 0.0
  %688 = vmatpush1.msra.mxu0 0.0
  %689 = vmatprep.subr.mxu0 0.0
  %690 = vmatpush1.msra.mxu0 0.0
  %691 = vmatprep.subr.mxu0 0.0
  %692 = vmatpush1.msra.mxu0 0.0
  %693 = vmatprep.subr.mxu0 0.0
  %694 = vmatpush1.msra.mxu0 0.0
  %695 = vmatprep.subr.mxu0 0.0
  %696 = vmatpush1.msra.mxu0 0.0
  %697 = vmatprep.subr.mxu0 0.0
  %698 = vmatpush1.msra.mxu0 0.0
  %699 = vmatprep.subr.mxu0 0.0
  %700 = vmatpush1.msra.mxu0 0.0
  %701 = vmatprep.subr.mxu0 0.0
  %702 = vmatpush1.msra.mxu0 0.0
  %703 = vmatprep.subr.mxu0 0.0
  %704 = vmatpush1.msra.mxu0 0.0
  %705 = vmatprep.subr.mxu0 0.0
  %706 = vmatpush1.msra.mxu0 0.0
  %707 = vmatprep.subr.mxu0 0.0
  %708 = vmatpush1.msra.mxu0 0.0
  %709 = vmatprep.subr.mxu0 0.0
  %710 = vmatpush1.msra.mxu0 0.0
  %711 = vmatprep.subr.mxu0 0.0
  %712 = vmatpush1.msra.mxu0 0.0
  %713 = vmatprep.mubr.f32.mxu0 0.0
  %714 = vmatmul.mubr.f32.gmra.mrb[0].mxu0 %v625
  %v715 = vpop.f32.mrb[0].mxu0
  %v716 = vadd.f32 %v647, %v715
  %v717 = vpop.f32.mrb[0].mxu0
  %718 = vdwg.mxu0
  %v719 = vrot.slane %v716, 4
  %v720 = vadd.f32 %v716, %v719
  %v721 = vrot.slane %v720, 2
  %v722 = vadd.f32 %v720, %v721
  %v723 = vrot.slane %v722, 1
  %v724 = vadd.f32 %v722, %v723
  %v725 = vmul.f32 %v716, %v716
  %v726 = vrot.slane %v725, 4
  %v727 = vadd.f32 %v725, %v726
  %v728 = vrot.slane %v727, 2
  %v729 = vadd.f32 %v727, %v728
  %v730 = vrot.slane %v729, 1
  %v731 = vadd.f32 %v729, %v730
  %vm732 = vcmask 1040384
  %v733 = vsel %vm732, %v724, %v731
  %734 = vst [vmem:[%s25] sm:$0x3] %v733
  %p735 = scmp.eq.s32.totalorder 0, 0
  // Predicated region
  $region102: #{specialized_mlp_sh.12} parent=0 // pred_check
    %p736 = pneg %p735
  $region103: #{specialized_mlp_sh.12} parent=0 // pred_check_branch
    %738 = sbr.rel (%p736) target = $region105
  $region104: #{specialized_mlp_sh.12} parent=0 // pred_region
    %v739 = vlaneseq
    %v740 = vshrl.u32 %v739, 7
    %s741 = smul.u32 0, 8
    %v742 = vstv %s741
    %v743 = vadd.s32 %v742, %v740
    %v744 = vmul.u32 %v743, 4
    %v745 = vld [vmem:[%s24] sm:$0x1]
    %v746 = vlaneseq
    %v747 = vshrl.u32 %v746, 7
    %v748 = vsub.s32 0, %v747
    %v749 = vrot.slane %v745, %v748
    %v750 = vadd.s32 %v744, %v749
    %s751 = sld [smem:[#allocation2]]
    %v752 = vstv %s751
    %vm753 = vcmp.lt.s32.totalorder %v750, %v752
    %v754 = vsel %vm753, %v716, 0.0
    %v755 = vrot.slane %v754, 4
    %v756 = vadd.f32 %v754, %v755
    %v757 = vrot.slane %v756, 2
    %v758 = vadd.f32 %v756, %v757
    %v759 = vrot.slane %v758, 1
    %v760 = vadd.f32 %v758, %v759
    %v761 = vmul.f32 %v754, %v754
    %v762 = vrot.slane %v761, 4
    %v763 = vadd.f32 %v761, %v762
    %v764 = vrot.slane %v763, 2
    %v765 = vadd.f32 %v763, %v764
    %v766 = vrot.slane %v765, 1
    %v767 = vadd.f32 %v765, %v766
    %v768 = vsel %vm732, %v760, %v767
    %769 = vst [vmem:[%s25] sm:$0x3] %v768
  $region105: #{specialized_mlp_sh.12} parent=0 // pred_fallthru
    _
  // Predicated region
  $region106: #{specialized_mlp_sh.12} parent=0 // pred_check
    _
  $region107: #{specialized_mlp_sh.12} parent=0 // pred_check_branch
    %771 = sbr.rel (0) target = $region109
  $region108: #{specialized_mlp_sh.12} parent=0 // pred_region
    _
  $region109: #{specialized_mlp_sh.12} parent=0 // pred_fallthru
    _
  // Predicated region
  $region110: #{specialized_mlp_sh.12} parent=0 // pred_check
    _
  $region111: #{specialized_mlp_sh.12} parent=0 // pred_check_branch
    %773 = sbr.rel (0) target = $region113
  $region112: #{specialized_mlp_sh.12} parent=0 // pred_region
    _
  $region113: #{specialized_mlp_sh.12} parent=0 // pred_fallthru
    _

// kernel: specialized_mlp_sh.13
$region0: #{specialized_mlp_sh.13}
  #allocation0 [shape = 'u32[]', space=smem, size = 0x4, offset = 0x4, fixed_abs, tag = 'smem constant byte address 0x4 - core index']
  #allocation1 [shape = 'u32[144,128]{1,0:T(1,128)}', space=vmem, size = 0x12000, scoped, tag = 'internal scratch']
  %s0 = inlined_call_operand.smem [shape: u32[30], index: -1, kind: input, shape index: {}]
  %s1 = sld [smem:[%s0]]
  %s2 = scalar_lea.smem %s0, 1
  %s3 = sld [smem:[%s2]]
  %s4 = scalar_lea.smem %s0, 2
  %s5 = sld [smem:[%s4]]
  %s6 = scalar_lea.smem %s0, 3
  %s7 = sld [smem:[%s6]]
  %s8 = scalar_lea.smem %s0, 4
  %s9 = sld [smem:[%s8]]
  %s10 = scalar_lea.smem %s0, 5
  %s11 = sld [smem:[%s10]]
  %s12 = scalar_lea.smem %s0, 6
  %s13 = sld [smem:[%s12]]
  %s14 = scalar_lea.smem %s0, 7
  %s15 = sld [smem:[%s14]]
  %s16 = scalar_lea.smem %s0, 8
  %s17 = sld [smem:[%s16]]
  %s18 = scalar_lea.smem %s0, 9
  %s19 = sld [smem:[%s18]]
  %s20 = scalar_lea.smem %s0, 10
  %s21 = sld [smem:[%s20]]
  %s22 = scalar_lea.smem %s0, 11
  %s23 = sld [smem:[%s22]]
  %s24 = scalar_lea.smem %s0, 12
  %s25 = sld [smem:[%s24]]
  %s26 = scalar_lea.smem %s0, 13
  %s27 = sld [smem:[%s26]]
  %s28 = scalar_lea.smem %s0, 14
  %s29 = sld [smem:[%s28]]
  %s30 = scalar_lea.smem %s0, 15
  %s31 = sld [smem:[%s30]]
  %s32 = scalar_lea.smem %s0, 16
  %s33 = sld [smem:[%s32]]
  %s34 = scalar_lea.smem %s0, 17
  %s35 = sld [smem:[%s34]]
  %s36 = scalar_lea.smem %s0, 18
  %s37 = sld [smem:[%s36]]
  %s38 = scalar_lea.smem %s0, 19
  %s39 = sld [smem:[%s38]]
  %s40 = scalar_lea.smem %s0, 20
  %s41 = sld [smem:[%s40]]
  %s42 = scalar_lea.smem %s0, 21
  %s43 = sld [smem:[%s42]]
  %s44 = scalar_lea.smem %s0, 22
  %s45 = sld [smem:[%s44]]
  %s46 = scalar_lea.smem %s0, 23
  %s47 = sld [smem:[%s46]]
  %s48 = scalar_lea.smem %s0, 24
  %s49 = sld [smem:[%s48]]
  %s50 = scalar_lea.smem %s0, 25
  %s51 = sld [smem:[%s50]]
  %s52 = scalar_lea.smem %s0, 26
  %s53 = sld [smem:[%s52]]
  %s54 = scalar_lea.smem %s0, 27
  %s55 = sld [smem:[%s54]]
  %s56 = scalar_lea.smem %s0, 28
  %s57 = sld [smem:[%s56]]
  %s58 = scalar_lea.smem %s0, 29
  %s59 = sld [smem:[%s58]]
  %s60 = sld [smem:[#allocation0]]
  $region126: #{specialized_mlp_sh.13} parent=0
    _
  %s62 = ssub.s32 1, %s60
  %s63 = scalar_select 0, %s62, %s60
  // Predicated region
  $region2: #{specialized_mlp_sh.13} parent=0 // pred_check
    _
  $region3: #{specialized_mlp_sh.13} parent=0 // pred_check_branch
    %65 = sbr.rel (0) target = $region5
  $region4: #{specialized_mlp_sh.13} parent=0 // pred_region
    _
  $region5: #{specialized_mlp_sh.13} parent=0 // pred_fallthru
    _
  // Predicated region
  $region6: #{specialized_mlp_sh.13} parent=0 // pred_check
    _
  $region7: #{specialized_mlp_sh.13} parent=0 // pred_check_branch
    %67 = sbr.rel (0) target = $region9
  $region8: #{specialized_mlp_sh.13} parent=0 // pred_region
    _
  $region9: #{specialized_mlp_sh.13} parent=0 // pred_fallthru
    _
  // Predicated region
  $region10: #{specialized_mlp_sh.13} parent=0 // pred_check
    _
  $region11: #{specialized_mlp_sh.13} parent=0 // pred_check_branch
    %69 = sbr.rel (0) target = $region13
  $region12: #{specialized_mlp_sh.13} parent=0 // pred_region
    _
  $region13: #{specialized_mlp_sh.13} parent=0 // pred_fallthru
    _
  // Predicated region
  $region14: #{specialized_mlp_sh.13} parent=0 // pred_check
    _
  $region15: #{specialized_mlp_sh.13} parent=0 // pred_check_branch
    %71 = sbr.rel (0) target = $region17
  $region16: #{specialized_mlp_sh.13} parent=0 // pred_region
    _
  $region17: #{specialized_mlp_sh.13} parent=0 // pred_fallthru
    _
  // Predicated region
  $region18: #{specialized_mlp_sh.13} parent=0 // pred_check
    _
  $region19: #{specialized_mlp_sh.13} parent=0 // pred_check_branch
    %73 = sbr.rel (0) target = $region21
  $region20: #{specialized_mlp_sh.13} parent=0 // pred_region
    _
  $region21: #{specialized_mlp_sh.13} parent=0 // pred_fallthru
    _
  // Predicated region
  $region22: #{specialized_mlp_sh.13} parent=0 // pred_check
    _
  $region23: #{specialized_mlp_sh.13} parent=0 // pred_check_branch
    %75 = sbr.rel (0) target = $region25
  $region24: #{specialized_mlp_sh.13} parent=0 // pred_region
    _
  $region25: #{specialized_mlp_sh.13} parent=0 // pred_fallthru
    _
  // Predicated region
  $region26: #{specialized_mlp_sh.13} parent=0 // pred_check
    _
  $region27: #{specialized_mlp_sh.13} parent=0 // pred_check_branch
    %77 = sbr.rel (0) target = $region29
  $region28: #{specialized_mlp_sh.13} parent=0 // pred_region
    _
  $region29: #{specialized_mlp_sh.13} parent=0 // pred_fallthru
    _
  // Predicated region
  $region30: #{specialized_mlp_sh.13} parent=0 // pred_check
    _
  $region31: #{specialized_mlp_sh.13} parent=0 // pred_check_branch
    %79 = sbr.rel (0) target = $region33
  $region32: #{specialized_mlp_sh.13} parent=0 // pred_region
    _
  $region33: #{specialized_mlp_sh.13} parent=0 // pred_fallthru
    _
  // Predicated region
  $region34: #{specialized_mlp_sh.13} parent=0 // pred_check
    _
  $region35: #{specialized_mlp_sh.13} parent=0 // pred_check_branch
    %81 = sbr.rel (0) target = $region37
  $region36: #{specialized_mlp_sh.13} parent=0 // pred_region
    _
  $region37: #{specialized_mlp_sh.13} parent=0 // pred_fallthru
    _
  // Predicated region
  $region38: #{specialized_mlp_sh.13} parent=0 // pred_check
    _
  $region39: #{specialized_mlp_sh.13} parent=0 // pred_check_branch
    %83 = sbr.rel (0) target = $region41
  $region40: #{specialized_mlp_sh.13} parent=0 // pred_region
    _
  $region41: #{specialized_mlp_sh.13} parent=0 // pred_fallthru
    _
  // Predicated region
  $region42: #{specialized_mlp_sh.13} parent=0 // pred_check
    _
  $region43: #{specialized_mlp_sh.13} parent=0 // pred_check_branch
    %85 = sbr.rel (0) target = $region45
  $region44: #{specialized_mlp_sh.13} parent=0 // pred_region
    _
  $region45: #{specialized_mlp_sh.13} parent=0 // pred_fallthru
    _
  // Predicated region
  $region46: #{specialized_mlp_sh.13} parent=0 // pred_check
    _
  $region47: #{specialized_mlp_sh.13} parent=0 // pred_check_branch
    %87 = sbr.rel (0) target = $region49
  $region48: #{specialized_mlp_sh.13} parent=0 // pred_region
    _
  $region49: #{specialized_mlp_sh.13} parent=0 // pred_fallthru
    _
  // Predicated region
  $region50: #{specialized_mlp_sh.13} parent=0 // pred_check
    _
  $region51: #{specialized_mlp_sh.13} parent=0 // pred_check_branch
    %89 = sbr.rel (0) target = $region53
  $region52: #{specialized_mlp_sh.13} parent=0 // pred_region
    _
  $region53: #{specialized_mlp_sh.13} parent=0 // pred_fallthru
    _
  // Predicated region
  $region54: #{specialized_mlp_sh.13} parent=0 // pred_check
    _
  $region55: #{specialized_mlp_sh.13} parent=0 // pred_check_branch
    %91 = sbr.rel (0) target = $region57
  $region56: #{specialized_mlp_sh.13} parent=0 // pred_region
    _
  $region57: #{specialized_mlp_sh.13} parent=0 // pred_fallthru
    _
  // Predicated region
  $region58: #{specialized_mlp_sh.13} parent=0 // pred_check
    _
  $region59: #{specialized_mlp_sh.13} parent=0 // pred_check_branch
    %93 = sbr.rel (0) target = $region61
  $region60: #{specialized_mlp_sh.13} parent=0 // pred_region
    _
  $region61: #{specialized_mlp_sh.13} parent=0 // pred_fallthru
    _
  // Predicated region
  $region62: #{specialized_mlp_sh.13} parent=0 // pred_check
    _
  $region63: #{specialized_mlp_sh.13} parent=0 // pred_check_branch
    %95 = sbr.rel (0) target = $region65
  $region64: #{specialized_mlp_sh.13} parent=0 // pred_region
    _
  $region65: #{specialized_mlp_sh.13} parent=0 // pred_fallthru
    _
  // Predicated region
  $region66: #{specialized_mlp_sh.13} parent=0 // pred_check
    _
  $region67: #{specialized_mlp_sh.13} parent=0 // pred_check_branch
    %97 = sbr.rel (0) target = $region69
  $region68: #{specialized_mlp_sh.13} parent=0 // pred_region
    _
  $region69: #{specialized_mlp_sh.13} parent=0 // pred_fallthru
    _
  // Predicated region
  $region70: #{specialized_mlp_sh.13} parent=0 // pred_check
    _
  $region71: #{specialized_mlp_sh.13} parent=0 // pred_check_branch
    %99 = sbr.rel (0) target = $region73
  $region72: #{specialized_mlp_sh.13} parent=0 // pred_region
    _
  $region73: #{specialized_mlp_sh.13} parent=0 // pred_fallthru
    _
  // Predicated region
  $region74: #{specialized_mlp_sh.13} parent=0 // pred_check
    _
  $region75: #{specialized_mlp_sh.13} parent=0 // pred_check_branch
    %101 = sbr.rel (0) target = $region77
  $region76: #{specialized_mlp_sh.13} parent=0 // pred_region
    _
  $region77: #{specialized_mlp_sh.13} parent=0 // pred_fallthru
    _
  // Predicated region
  $region78: #{specialized_mlp_sh.13} parent=0 // pred_check
    _
  $region79: #{specialized_mlp_sh.13} parent=0 // pred_check_branch
    %103 = sbr.rel (0) target = $region81
  $region80: #{specialized_mlp_sh.13} parent=0 // pred_region
    _
  $region81: #{specialized_mlp_sh.13} parent=0 // pred_fallthru
    _
  // Predicated region
  $region82: #{specialized_mlp_sh.13} parent=0 // pred_check
    _
  $region83: #{specialized_mlp_sh.13} parent=0 // pred_check_branch
    %105 = sbr.rel (0) target = $region85
  $region84: #{specialized_mlp_sh.13} parent=0 // pred_region
    _
  $region85: #{specialized_mlp_sh.13} parent=0 // pred_fallthru
    _
  // Predicated region
  $region86: #{specialized_mlp_sh.13} parent=0 // pred_check
    _
  $region87: #{specialized_mlp_sh.13} parent=0 // pred_check_branch
    %107 = sbr.rel (0) target = $region89
  $region88: #{specialized_mlp_sh.13} parent=0 // pred_region
    _
  $region89: #{specialized_mlp_sh.13} parent=0 // pred_fallthru
    _
  // Predicated region
  $region90: #{specialized_mlp_sh.13} parent=0 // pred_check
    _
  $region91: #{specialized_mlp_sh.13} parent=0 // pred_check_branch
    %109 = sbr.rel (0) target = $region93
  $region92: #{specialized_mlp_sh.13} parent=0 // pred_region
    _
  $region93: #{specialized_mlp_sh.13} parent=0 // pred_fallthru
    _
  // Predicated region
  $region94: #{specialized_mlp_sh.13} parent=0 // pred_check
    _
  $region95: #{specialized_mlp_sh.13} parent=0 // pred_check_branch
    %111 = sbr.rel (0) target = $region97
  $region96: #{specialized_mlp_sh.13} parent=0 // pred_region
    _
  $region97: #{specialized_mlp_sh.13} parent=0 // pred_fallthru
    _
  // Predicated region
  $region98: #{specialized_mlp_sh.13} parent=0 // pred_check
    _
  $region99: #{specialized_mlp_sh.13} parent=0 // pred_check_branch
    %113 = sbr.rel (0) target = $region101
  $region100: #{specialized_mlp_sh.13} parent=0 // pred_region
    _
  $region101: #{specialized_mlp_sh.13} parent=0 // pred_fallthru
    _
  // Predicated region
  $region102: #{specialized_mlp_sh.13} parent=0 // pred_check
    _
  $region103: #{specialized_mlp_sh.13} parent=0 // pred_check_branch
    %115 = sbr.rel (0) target = $region105
  $region104: #{specialized_mlp_sh.13} parent=0 // pred_region
    _
  $region105: #{specialized_mlp_sh.13} parent=0 // pred_fallthru
    _
  // Predicated region
  $region106: #{specialized_mlp_sh.13} parent=0 // pred_check
    _
  $region107: #{specialized_mlp_sh.13} parent=0 // pred_check_branch
    %117 = sbr.rel (0) target = $region109
  $region108: #{specialized_mlp_sh.13} parent=0 // pred_region
    _
  $region109: #{specialized_mlp_sh.13} parent=0 // pred_fallthru
    _
  // Predicated region
  $region110: #{specialized_mlp_sh.13} parent=0 // pred_check
    _
  $region111: #{specialized_mlp_sh.13} parent=0 // pred_check_branch
    %119 = sbr.rel (0) target = $region113
  $region112: #{specialized_mlp_sh.13} parent=0 // pred_region
    _
  $region113: #{specialized_mlp_sh.13} parent=0 // pred_fallthru
    _
  // Predicated region
  $region114: #{specialized_mlp_sh.13} parent=0 // pred_check
    _
  $region115: #{specialized_mlp_sh.13} parent=0 // pred_check_branch
    %121 = sbr.rel (0) target = $region117
  $region116: #{specialized_mlp_sh.13} parent=0 // pred_region
    _
  $region117: #{specialized_mlp_sh.13} parent=0 // pred_fallthru
    _
  %v122 = vld [vmem:[%s1] sm:$0xff]
  %v123 = vld [vmem:[%s3] sm:$0xff]
  %v124 = vld [vmem:[%s3 + $0x8] sm:$0xf]
  %v125 = vld [vmem:[%s5] sm:$0x1]
  %v127 = vlaneseq
  %v128 = vshrl.u32 %v127, 7
  %v129 = vsub.s32 0, %v128
  %v130 = vrot.slane %v125, %v129
  %vm132 = vcmask 97280
  %v134 = vsel %vm132, %v122, 0
  %vm136 = vcmask 1043456
  %v138 = vsel %vm136, %v124, 0
  %140 = vmatprep.subr.mxu0 0.0
  %141 = vmatpush1.msra.mxu0 %v123
  %142 = vmatprep.subr.mxu0 0.0
  %143 = vmatpush1.msra.mxu0 %v138
  %144 = vmatprep.subr.mxu0 0.0
  %145 = vmatpush1.msra.mxu0 0.0
  %146 = vmatprep.subr.mxu0 0.0
  %147 = vmatpush1.msra.mxu0 0.0
  %148 = vmatprep.subr.mxu0 0.0
  %149 = vmatpush1.msra.mxu0 0.0
  %150 = vmatprep.subr.mxu0 0.0
  %151 = vmatpush1.msra.mxu0 0.0
  %152 = vmatprep.subr.mxu0 0.0
  %153 = vmatpush1.msra.mxu0 0.0
  %154 = vmatprep.subr.mxu0 0.0
  %155 = vmatpush1.msra.mxu0 0.0
  %156 = vmatprep.subr.mxu0 0.0
  %157 = vmatpush1.msra.mxu0 0.0
  %158 = vmatprep.subr.mxu0 0.0
  %159 = vmatpush1.msra.mxu0 0.0
  %160 = vmatprep.subr.mxu0 0.0
  %161 = vmatpush1.msra.mxu0 0.0
  %162 = vmatprep.subr.mxu0 0.0
  %163 = vmatpush1.msra.mxu0 0.0
  %164 = vmatprep.subr.mxu0 0.0
  %165 = vmatpush1.msra.mxu0 0.0
  %166 = vmatprep.subr.mxu0 0.0
  %167 = vmatpush1.msra.mxu0 0.0
  %168 = vmatprep.subr.mxu0 0.0
  %169 = vmatpush1.msra.mxu0 0.0
  %170 = vmatprep.subr.mxu0 0.0
  %171 = vmatpush1.msra.mxu0 0.0
  %172 = vmatprep.subr.mxu0 0.0
  %173 = vmatpush1.msra.mxu0 0.0
  %174 = vmatprep.subr.mxu0 0.0
  %175 = vmatpush1.msra.mxu0 0.0
  %176 = vmatprep.subr.mxu0 0.0
  %177 = vmatpush1.msra.mxu0 0.0
  %178 = vmatprep.subr.mxu0 0.0
  %179 = vmatpush1.msra.mxu0 0.0
  %180 = vmatprep.subr.mxu0 0.0
  %181 = vmatpush1.msra.mxu0 0.0
  %182 = vmatprep.subr.mxu0 0.0
  %183 = vmatpush1.msra.mxu0 0.0
  %184 = vmatprep.subr.mxu0 0.0
  %185 = vmatpush1.msra.mxu0 0.0
  %186 = vmatprep.subr.mxu0 0.0
  %187 = vmatpush1.msra.mxu0 0.0
  %188 = vmatprep.subr.mxu0 0.0
  %189 = vmatpush1.msra.mxu0 0.0
  %190 = vmatprep.subr.mxu0 0.0
  %191 = vmatpush1.msra.mxu0 0.0
  %192 = vmatprep.subr.mxu0 0.0
  %193 = vmatpush1.msra.mxu0 0.0
  %194 = vmatprep.subr.mxu0 0.0
  %195 = vmatpush1.msra.mxu0 0.0
  %196 = vmatprep.subr.mxu0 0.0
  %197 = vmatpush1.msra.mxu0 0.0
  %198 = vmatprep.subr.mxu0 0.0
  %199 = vmatpush1.msra.mxu0 0.0
  %200 = vmatprep.subr.mxu0 0.0
  %201 = vmatpush1.msra.mxu0 0.0
  %202 = vmatprep.subr.mxu0 0.0
  %203 = vmatpush1.msra.mxu0 0.0
  %204 = vmatprep.mubr.f32.mxu0 0.0
  %205 = vmatmul.mubr.f32.gmra.mrb[0].mxu0 %v134
  %v206 = vpop.f32.mrb[0].mxu0
  %v207 = vadd.f32 %v130, %v206
  %v208 = vpop.f32.mrb[0].mxu0
  %209 = vdwg.mxu0
  %v210 = vld [vmem:[%s7] sm:$0x1]
  %v212 = vlaneseq
  %v213 = vshrl.u32 %v212, 7
  %v214 = vsub.s32 0, %v213
  %v215 = vrot.slane %v210, %v214
  %v217 = vmul.f32 %v207, %v215
  %v218 = vld [vmem:[%s9] sm:$0x1]
  %v220 = vlaneseq
  %v221 = vshrl.u32 %v220, 7
  %v222 = vsub.s32 0, %v221
  %v223 = vrot.slane %v218, %v222
  %v225 = vadd.f32 %v217, %v223
  %v226 = vmax.f32 %v225, 0.0
  %v227 = vld [vmem:[%s11] sm:$0xff]
  %v228 = vld [vmem:[%s11 + $0x8] sm:$0xff]
  %v229 = vld [vmem:[%s11 + $0x10] sm:$0xff]
  %v230 = vld [vmem:[%s11 + $0x18] sm:$0xff]
  %v231 = vld [vmem:[%s11 + $0x20] sm:$0xff]
  %v232 = vld [vmem:[%s11 + $0x28] sm:$0xff]
  %v233 = vld [vmem:[%s11 + $0x30] sm:$0xff]
  %v234 = vld [vmem:[%s11 + $0x38] sm:$0xff]
  %v235 = vld [vmem:[%s11 + $0x40] sm:$0xff]
  %v236 = vld [vmem:[%s11 + $0x48] sm:$0xff]
  %v237 = vld [vmem:[%s11 + $0x50] sm:$0xff]
  %v238 = vld [vmem:[%s11 + $0x58] sm:$0xff]
  %v239 = vld [vmem:[%s11 + $0x60] sm:$0xff]
  %v240 = vld [vmem:[%s11 + $0x68] sm:$0xff]
  %v241 = vld [vmem:[%s11 + $0x70] sm:$0xff]
  %v242 = vld [vmem:[%s11 + $0x78] sm:$0xff]
  %v243 = vld [vmem:[%s13] sm:$0x1]
  %v245 = vlaneseq
  %v246 = vshrl.u32 %v245, 7
  %v247 = vsub.s32 0, %v246
  %v248 = vrot.slane %v243, %v247
  %250 = vmatprep.subr.mxu0 0.0
  %251 = vmatpush1.msra.mxu0 %v227
  %252 = vmatprep.subr.mxu0 0.0
  %253 = vmatpush1.msra.mxu0 %v228
  %254 = vmatprep.subr.mxu0 0.0
  %255 = vmatpush1.msra.mxu0 %v229
  %256 = vmatprep.subr.mxu0 0.0
  %257 = vmatpush1.msra.mxu0 %v230
  %258 = vmatprep.subr.mxu0 0.0
  %259 = vmatpush1.msra.mxu0 %v231
  %260 = vmatprep.subr.mxu0 0.0
  %261 = vmatpush1.msra.mxu0 %v232
  %262 = vmatprep.subr.mxu0 0.0
  %263 = vmatpush1.msra.mxu0 %v233
  %264 = vmatprep.subr.mxu0 0.0
  %265 = vmatpush1.msra.mxu0 %v234
  %266 = vmatprep.subr.mxu0 0.0
  %267 = vmatpush1.msra.mxu0 %v235
  %268 = vmatprep.subr.mxu0 0.0
  %269 = vmatpush1.msra.mxu0 %v236
  %270 = vmatprep.subr.mxu0 0.0
  %271 = vmatpush1.msra.mxu0 %v237
  %272 = vmatprep.subr.mxu0 0.0
  %273 = vmatpush1.msra.mxu0 %v238
  %274 = vmatprep.subr.mxu0 0.0
  %275 = vmatpush1.msra.mxu0 %v239
  %276 = vmatprep.subr.mxu0 0.0
  %277 = vmatpush1.msra.mxu0 %v240
  %278 = vmatprep.subr.mxu0 0.0
  %279 = vmatpush1.msra.mxu0 %v241
  %280 = vmatprep.subr.mxu0 0.0
  %281 = vmatpush1.msra.mxu0 %v242
  %282 = vmatprep.subr.mxu0 0.0
  %283 = vmatpush1.msra.mxu0 0.0
  %284 = vmatprep.subr.mxu0 0.0
  %285 = vmatpush1.msra.mxu0 0.0
  %286 = vmatprep.subr.mxu0 0.0
  %287 = vmatpush1.msra.mxu0 0.0
  %288 = vmatprep.subr.mxu0 0.0
  %289 = vmatpush1.msra.mxu0 0.0
  %290 = vmatprep.subr.mxu0 0.0
  %291 = vmatpush1.msra.mxu0 0.0
  %292 = vmatprep.subr.mxu0 0.0
  %293 = vmatpush1.msra.mxu0 0.0
  %294 = vmatprep.subr.mxu0 0.0
  %295 = vmatpush1.msra.mxu0 0.0
  %296 = vmatprep.subr.mxu0 0.0
  %297 = vmatpush1.msra.mxu0 0.0
  %298 = vmatprep.subr.mxu0 0.0
  %299 = vmatpush1.msra.mxu0 0.0
  %300 = vmatprep.subr.mxu0 0.0
  %301 = vmatpush1.msra.mxu0 0.0
  %302 = vmatprep.subr.mxu0 0.0
  %303 = vmatpush1.msra.mxu0 0.0
  %304 = vmatprep.subr.mxu0 0.0
  %305 = vmatpush1.msra.mxu0 0.0
  %306 = vmatprep.subr.mxu0 0.0
  %307 = vmatpush1.msra.mxu0 0.0
  %308 = vmatprep.subr.mxu0 0.0
  %309 = vmatpush1.msra.mxu0 0.0
  %310 = vmatprep.subr.mxu0 0.0
  %311 = vmatpush1.msra.mxu0 0.0
  %312 = vmatprep.subr.mxu0 0.0
  %313 = vmatpush1.msra.mxu0 0.0
  %314 = vmatprep.mubr.f32.mxu0 0.0
  %315 = vmatmul.mubr.f32.gmra.mrb[0].mxu0 %v226
  %v316 = vpop.f32.mrb[0].mxu0
  %v317 = vadd.f32 %v248, %v316
  %v318 = vpop.f32.mrb[0].mxu0
  %319 = vdwg.mxu0
  %v320 = vld [vmem:[%s15] sm:$0x1]
  %v322 = vlaneseq
  %v323 = vshrl.u32 %v322, 7
  %v324 = vsub.s32 0, %v323
  %v325 = vrot.slane %v320, %v324
  %v327 = vmul.f32 %v317, %v325
  %v328 = vld [vmem:[%s17] sm:$0x1]
  %v330 = vlaneseq
  %v331 = vshrl.u32 %v330, 7
  %v332 = vsub.s32 0, %v331
  %v333 = vrot.slane %v328, %v332
  %v335 = vadd.f32 %v327, %v333
  %v336 = vmax.f32 %v335, 0.0
  %v337 = vld [vmem:[%s19] sm:$0xff]
  %v338 = vld [vmem:[%s19 + $0x8] sm:$0xff]
  %v339 = vld [vmem:[%s19 + $0x10] sm:$0xff]
  %v340 = vld [vmem:[%s19 + $0x18] sm:$0xff]
  %v341 = vld [vmem:[%s19 + $0x20] sm:$0xff]
  %v342 = vld [vmem:[%s19 + $0x28] sm:$0xff]
  %v343 = vld [vmem:[%s19 + $0x30] sm:$0xff]
  %v344 = vld [vmem:[%s19 + $0x38] sm:$0xff]
  %v345 = vld [vmem:[%s19 + $0x40] sm:$0xff]
  %v346 = vld [vmem:[%s19 + $0x48] sm:$0xff]
  %v347 = vld [vmem:[%s19 + $0x50] sm:$0xff]
  %v348 = vld [vmem:[%s19 + $0x58] sm:$0xff]
  %v349 = vld [vmem:[%s19 + $0x60] sm:$0xff]
  %v350 = vld [vmem:[%s19 + $0x68] sm:$0xff]
  %v351 = vld [vmem:[%s19 + $0x70] sm:$0xff]
  %v352 = vld [vmem:[%s19 + $0x78] sm:$0xff]
  %v353 = vld [vmem:[%s21] sm:$0x1]
  %v355 = vlaneseq
  %v356 = vshrl.u32 %v355, 7
  %v357 = vsub.s32 0, %v356
  %v358 = vrot.slane %v353, %v357
  %360 = vmatprep.subr.mxu0 0.0
  %361 = vmatpush1.msra.mxu0 %v337
  %362 = vmatprep.subr.mxu0 0.0
  %363 = vmatpush1.msra.mxu0 %v338
  %364 = vmatprep.subr.mxu0 0.0
  %365 = vmatpush1.msra.mxu0 %v339
  %366 = vmatprep.subr.mxu0 0.0
  %367 = vmatpush1.msra.mxu0 %v340
  %368 = vmatprep.subr.mxu0 0.0
  %369 = vmatpush1.msra.mxu0 %v341
  %370 = vmatprep.subr.mxu0 0.0
  %371 = vmatpush1.msra.mxu0 %v342
  %372 = vmatprep.subr.mxu0 0.0
  %373 = vmatpush1.msra.mxu0 %v343
  %374 = vmatprep.subr.mxu0 0.0
  %375 = vmatpush1.msra.mxu0 %v344
  %376 = vmatprep.subr.mxu0 0.0
  %377 = vmatpush1.msra.mxu0 %v345
  %378 = vmatprep.subr.mxu0 0.0
  %379 = vmatpush1.msra.mxu0 %v346
  %380 = vmatprep.subr.mxu0 0.0
  %381 = vmatpush1.msra.mxu0 %v347
  %382 = vmatprep.subr.mxu0 0.0
  %383 = vmatpush1.msra.mxu0 %v348
  %384 = vmatprep.subr.mxu0 0.0
  %385 = vmatpush1.msra.mxu0 %v349
  %386 = vmatprep.subr.mxu0 0.0
  %387 = vmatpush1.msra.mxu0 %v350
  %388 = vmatprep.subr.mxu0 0.0
  %389 = vmatpush1.msra.mxu0 %v351
  %390 = vmatprep.subr.mxu0 0.0
  %391 = vmatpush1.msra.mxu0 %v352
  %392 = vmatprep.subr.mxu0 0.0
  %393 = vmatpush1.msra.mxu0 0.0
  %394 = vmatprep.subr.mxu0 0.0
  %395 = vmatpush1.msra.mxu0 0.0
  %396 = vmatprep.subr.mxu0 0.0
  %397 = vmatpush1.msra.mxu0 0.0
  %398 = vmatprep.subr.mxu0 0.0
  %399 = vmatpush1.msra.mxu0 0.0
  %400 = vmatprep.subr.mxu0 0.0
  %401 = vmatpush1.msra.mxu0 0.0
  %402 = vmatprep.subr.mxu0 0.0
  %403 = vmatpush1.msra.mxu0 0.0
  %404 = vmatprep.subr.mxu0 0.0
  %405 = vmatpush1.msra.mxu0 0.0
  %406 = vmatprep.subr.mxu0 0.0
  %407 = vmatpush1.msra.mxu0 0.0
  %408 = vmatprep.subr.mxu0 0.0
  %409 = vmatpush1.msra.mxu0 0.0
  %410 = vmatprep.subr.mxu0 0.0
  %411 = vmatpush1.msra.mxu0 0.0
  %412 = vmatprep.subr.mxu0 0.0
  %413 = vmatpush1.msra.mxu0 0.0
  %414 = vmatprep.subr.mxu0 0.0
  %415 = vmatpush1.msra.mxu0 0.0
  %416 = vmatprep.subr.mxu0 0.0
  %417 = vmatpush1.msra.mxu0 0.0
  %418 = vmatprep.subr.mxu0 0.0
  %419 = vmatpush1.msra.mxu0 0.0
  %420 = vmatprep.subr.mxu0 0.0
  %421 = vmatpush1.msra.mxu0 0.0
  %422 = vmatprep.subr.mxu0 0.0
  %423 = vmatpush1.msra.mxu0 0.0
  %424 = vmatprep.mubr.f32.mxu0 0.0
  %425 = vmatmul.mubr.f32.gmra.mrb[0].mxu0 %v336
  %v426 = vpop.f32.mrb[0].mxu0
  %v427 = vadd.f32 %v358, %v426
  %v428 = vpop.f32.mrb[0].mxu0
  %429 = vdwg.mxu0
  %v430 = vld [vmem:[%s23] sm:$0x1]
  %v432 = vlaneseq
  %v433 = vshrl.u32 %v432, 7
  %v434 = vsub.s32 0, %v433
  %v435 = vrot.slane %v430, %v434
  %v437 = vmul.f32 %v427, %v435
  %v438 = vld [vmem:[%s25] sm:$0x1]
  %v440 = vlaneseq
  %v441 = vshrl.u32 %v440, 7
  %v442 = vsub.s32 0, %v441
  %v443 = vrot.slane %v438, %v442
  %v445 = vadd.f32 %v437, %v443
  %v446 = vmax.f32 %v445, 0.0
  %v447 = vld [vmem:[%s27] sm:$0xff]
  %v448 = vld [vmem:[%s27 + $0x8] sm:$0xff]
  %v449 = vld [vmem:[%s27 + $0x10] sm:$0xff]
  %v450 = vld [vmem:[%s27 + $0x18] sm:$0xff]
  %v451 = vld [vmem:[%s27 + $0x20] sm:$0xff]
  %v452 = vld [vmem:[%s27 + $0x28] sm:$0xff]
  %v453 = vld [vmem:[%s27 + $0x30] sm:$0xff]
  %v454 = vld [vmem:[%s27 + $0x38] sm:$0xff]
  %v455 = vld [vmem:[%s27 + $0x40] sm:$0xff]
  %v456 = vld [vmem:[%s27 + $0x48] sm:$0xff]
  %v457 = vld [vmem:[%s27 + $0x50] sm:$0xff]
  %v458 = vld [vmem:[%s27 + $0x58] sm:$0xff]
  %v459 = vld [vmem:[%s27 + $0x60] sm:$0xff]
  %v460 = vld [vmem:[%s27 + $0x68] sm:$0xff]
  %v461 = vld [vmem:[%s27 + $0x70] sm:$0xff]
  %v462 = vld [vmem:[%s27 + $0x78] sm:$0xff]
  %v463 = vld [vmem:[%s29] sm:$0x1]
  %v465 = vlaneseq
  %v466 = vshrl.u32 %v465, 7
  %v467 = vsub.s32 0, %v466
  %v468 = vrot.slane %v463, %v467
  %470 = vmatprep.subr.mxu0 0.0
  %471 = vmatpush1.msra.mxu0 %v447
  %472 = vmatprep.subr.mxu0 0.0
  %473 = vmatpush1.msra.mxu0 %v448
  %474 = vmatprep.subr.mxu0 0.0
  %475 = vmatpush1.msra.mxu0 %v449
  %476 = vmatprep.subr.mxu0 0.0
  %477 = vmatpush1.msra.mxu0 %v450
  %478 = vmatprep.subr.mxu0 0.0
  %479 = vmatpush1.msra.mxu0 %v451
  %480 = vmatprep.subr.mxu0 0.0
  %481 = vmatpush1.msra.mxu0 %v452
  %482 = vmatprep.subr.mxu0 0.0
  %483 = vmatpush1.msra.mxu0 %v453
  %484 = vmatprep.subr.mxu0 0.0
  %485 = vmatpush1.msra.mxu0 %v454
  %486 = vmatprep.subr.mxu0 0.0
  %487 = vmatpush1.msra.mxu0 %v455
  %488 = vmatprep.subr.mxu0 0.0
  %489 = vmatpush1.msra.mxu0 %v456
  %490 = vmatprep.subr.mxu0 0.0
  %491 = vmatpush1.msra.mxu0 %v457
  %492 = vmatprep.subr.mxu0 0.0
  %493 = vmatpush1.msra.mxu0 %v458
  %494 = vmatprep.subr.mxu0 0.0
  %495 = vmatpush1.msra.mxu0 %v459
  %496 = vmatprep.subr.mxu0 0.0
  %497 = vmatpush1.msra.mxu0 %v460
  %498 = vmatprep.subr.mxu0 0.0
  %499 = vmatpush1.msra.mxu0 %v461
  %500 = vmatprep.subr.mxu0 0.0
  %501 = vmatpush1.msra.mxu0 %v462
  %502 = vmatprep.subr.mxu0 0.0
  %503 = vmatpush1.msra.mxu0 0.0
  %504 = vmatprep.subr.mxu0 0.0
  %505 = vmatpush1.msra.mxu0 0.0
  %506 = vmatprep.subr.mxu0 0.0
  %507 = vmatpush1.msra.mxu0 0.0
  %508 = vmatprep.subr.mxu0 0.0
  %509 = vmatpush1.msra.mxu0 0.0
  %510 = vmatprep.subr.mxu0 0.0
  %511 = vmatpush1.msra.mxu0 0.0
  %512 = vmatprep.subr.mxu0 0.0
  %513 = vmatpush1.msra.mxu0 0.0
  %514 = vmatprep.subr.mxu0 0.0
  %515 = vmatpush1.msra.mxu0 0.0
  %516 = vmatprep.subr.mxu0 0.0
  %517 = vmatpush1.msra.mxu0 0.0
  %518 = vmatprep.subr.mxu0 0.0
  %519 = vmatpush1.msra.mxu0 0.0
  %520 = vmatprep.subr.mxu0 0.0
  %521 = vmatpush1.msra.mxu0 0.0
  %522 = vmatprep.subr.mxu0 0.0
  %523 = vmatpush1.msra.mxu0 0.0
  %524 = vmatprep.subr.mxu0 0.0
  %525 = vmatpush1.msra.mxu0 0.0
  %526 = vmatprep.subr.mxu0 0.0
  %527 = vmatpush1.msra.mxu0 0.0
  %528 = vmatprep.subr.mxu0 0.0
  %529 = vmatpush1.msra.mxu0 0.0
  %530 = vmatprep.subr.mxu0 0.0
  %531 = vmatpush1.msra.mxu0 0.0
  %532 = vmatprep.subr.mxu0 0.0
  %533 = vmatpush1.msra.mxu0 0.0
  %534 = vmatprep.mubr.f32.mxu0 0.0
  %535 = vmatmul.mubr.f32.gmra.mrb[0].mxu0 %v446
  %v536 = vpop.f32.mrb[0].mxu0
  %v537 = vadd.f32 %v468, %v536
  %v538 = vpop.f32.mrb[0].mxu0
  %539 = vdwg.mxu0
  %v540 = vld [vmem:[%s31] sm:$0x1]
  %v542 = vlaneseq
  %v543 = vshrl.u32 %v542, 7
  %v544 = vsub.s32 0, %v543
  %v545 = vrot.slane %v540, %v544
  %v547 = vmul.f32 %v537, %v545
  %v548 = vld [vmem:[%s33] sm:$0x1]
  %v550 = vlaneseq
  %v551 = vshrl.u32 %v550, 7
  %v552 = vsub.s32 0, %v551
  %v553 = vrot.slane %v548, %v552
  %v555 = vadd.f32 %v547, %v553
  %v556 = vmax.f32 %v555, 0.0
  %v557 = vld [vmem:[%s35] sm:$0xff]
  %v558 = vld [vmem:[%s35 + $0x8] sm:$0xff]
  %v559 = vld [vmem:[%s35 + $0x10] sm:$0xff]
  %v560 = vld [vmem:[%s35 + $0x18] sm:$0xff]
  %v561 = vld [vmem:[%s35 + $0x20] sm:$0xff]
  %v562 = vld [vmem:[%s35 + $0x28] sm:$0xff]
  %v563 = vld [vmem:[%s35 + $0x30] sm:$0xff]
  %v564 = vld [vmem:[%s35 + $0x38] sm:$0xff]
  %v565 = vld [vmem:[%s35 + $0x40] sm:$0xff]
  %v566 = vld [vmem:[%s35 + $0x48] sm:$0xff]
  %v567 = vld [vmem:[%s35 + $0x50] sm:$0xff]
  %v568 = vld [vmem:[%s35 + $0x58] sm:$0xff]
  %v569 = vld [vmem:[%s35 + $0x60] sm:$0xff]
  %v570 = vld [vmem:[%s35 + $0x68] sm:$0xff]
  %v571 = vld [vmem:[%s35 + $0x70] sm:$0xff]
  %v572 = vld [vmem:[%s35 + $0x78] sm:$0xff]
  %v573 = vld [vmem:[%s37] sm:$0x1]
  %v575 = vlaneseq
  %v576 = vshrl.u32 %v575, 7
  %v577 = vsub.s32 0, %v576
  %v578 = vrot.slane %v573, %v577
  %580 = vmatprep.subr.mxu0 0.0
  %581 = vmatpush1.msra.mxu0 %v557
  %582 = vmatprep.subr.mxu0 0.0
  %583 = vmatpush1.msra.mxu0 %v558
  %584 = vmatprep.subr.mxu0 0.0
  %585 = vmatpush1.msra.mxu0 %v559
  %586 = vmatprep.subr.mxu0 0.0
  %587 = vmatpush1.msra.mxu0 %v560
  %588 = vmatprep.subr.mxu0 0.0
  %589 = vmatpush1.msra.mxu0 %v561
  %590 = vmatprep.subr.mxu0 0.0
  %591 = vmatpush1.msra.mxu0 %v562
  %592 = vmatprep.subr.mxu0 0.0
  %593 = vmatpush1.msra.mxu0 %v563
  %594 = vmatprep.subr.mxu0 0.0
  %595 = vmatpush1.msra.mxu0 %v564
  %596 = vmatprep.subr.mxu0 0.0
  %597 = vmatpush1.msra.mxu0 %v565
  %598 = vmatprep.subr.mxu0 0.0
  %599 = vmatpush1.msra.mxu0 %v566
  %600 = vmatprep.subr.mxu0 0.0
  %601 = vmatpush1.msra.mxu0 %v567
  %602 = vmatprep.subr.mxu0 0.0
  %603 = vmatpush1.msra.mxu0 %v568
  %604 = vmatprep.subr.mxu0 0.0
  %605 = vmatpush1.msra.mxu0 %v569
  %606 = vmatprep.subr.mxu0 0.0
  %607 = vmatpush1.msra.mxu0 %v570
  %608 = vmatprep.subr.mxu0 0.0
  %609 = vmatpush1.msra.mxu0 %v571
  %610 = vmatprep.subr.mxu0 0.0
  %611 = vmatpush1.msra.mxu0 %v572
  %612 = vmatprep.subr.mxu0 0.0
  %613 = vmatpush1.msra.mxu0 0.0
  %614 = vmatprep.subr.mxu0 0.0
  %615 = vmatpush1.msra.mxu0 0.0
  %616 = vmatprep.subr.mxu0 0.0
  %617 = vmatpush1.msra.mxu0 0.0
  %618 = vmatprep.subr.mxu0 0.0
  %619 = vmatpush1.msra.mxu0 0.0
  %620 = vmatprep.subr.mxu0 0.0
  %621 = vmatpush1.msra.mxu0 0.0
  %622 = vmatprep.subr.mxu0 0.0
  %623 = vmatpush1.msra.mxu0 0.0
  %624 = vmatprep.subr.mxu0 0.0
  %625 = vmatpush1.msra.mxu0 0.0
  %626 = vmatprep.subr.mxu0 0.0
  %627 = vmatpush1.msra.mxu0 0.0
  %628 = vmatprep.subr.mxu0 0.0
  %629 = vmatpush1.msra.mxu0 0.0
  %630 = vmatprep.subr.mxu0 0.0
  %631 = vmatpush1.msra.mxu0 0.0
  %632 = vmatprep.subr.mxu0 0.0
  %633 = vmatpush1.msra.mxu0 0.0
  %634 = vmatprep.subr.mxu0 0.0
  %635 = vmatpush1.msra.mxu0 0.0
  %636 = vmatprep.subr.mxu0 0.0
  %637 = vmatpush1.msra.mxu0 0.0
  %638 = vmatprep.subr.mxu0 0.0
  %639 = vmatpush1.msra.mxu0 0.0
  %640 = vmatprep.subr.mxu0 0.0
  %641 = vmatpush1.msra.mxu0 0.0
  %642 = vmatprep.subr.mxu0 0.0
  %643 = vmatpush1.msra.mxu0 0.0
  %644 = vmatprep.mubr.f32.mxu0 0.0
  %645 = vmatmul.mubr.f32.gmra.mrb[0].mxu0 %v556
  %v646 = vpop.f32.mrb[0].mxu0
  %v647 = vadd.f32 %v578, %v646
  %v648 = vpop.f32.mrb[0].mxu0
  %649 = vdwg.mxu0
  %v650 = vld [vmem:[%s39] sm:$0x1]
  %v652 = vlaneseq
  %v653 = vshrl.u32 %v652, 7
  %v654 = vsub.s32 0, %v653
  %v655 = vrot.slane %v650, %v654
  %v657 = vmul.f32 %v647, %v655
  %v658 = vld [vmem:[%s41] sm:$0x1]
  %v660 = vlaneseq
  %v661 = vshrl.u32 %v660, 7
  %v662 = vsub.s32 0, %v661
  %v663 = vrot.slane %v658, %v662
  %v665 = vadd.f32 %v657, %v663
  %v666 = vmax.f32 %v665, 0.0
  %v667 = vld [vmem:[%s43] sm:$0xff]
  %v668 = vld [vmem:[%s43 + $0x8] sm:$0xff]
  %v669 = vld [vmem:[%s43 + $0x10] sm:$0xff]
  %v670 = vld [vmem:[%s43 + $0x18] sm:$0xff]
  %v671 = vld [vmem:[%s43 + $0x20] sm:$0xff]
  %v672 = vld [vmem:[%s43 + $0x28] sm:$0xff]
  %v673 = vld [vmem:[%s43 + $0x30] sm:$0xff]
  %v674 = vld [vmem:[%s43 + $0x38] sm:$0xff]
  %v675 = vld [vmem:[%s43 + $0x40] sm:$0xff]
  %v676 = vld [vmem:[%s43 + $0x48] sm:$0xff]
  %v677 = vld [vmem:[%s43 + $0x50] sm:$0xff]
  %v678 = vld [vmem:[%s43 + $0x58] sm:$0xff]
  %v679 = vld [vmem:[%s43 + $0x60] sm:$0xff]
  %v680 = vld [vmem:[%s43 + $0x68] sm:$0xff]
  %v681 = vld [vmem:[%s43 + $0x70] sm:$0xff]
  %v682 = vld [vmem:[%s43 + $0x78] sm:$0xff]
  %v683 = vld [vmem:[%s45] sm:$0x1]
  %v685 = vlaneseq
  %v686 = vshrl.u32 %v685, 7
  %v687 = vsub.s32 0, %v686
  %v688 = vrot.slane %v683, %v687
  %690 = vmatprep.subr.mxu0 0.0
  %691 = vmatpush1.msra.mxu0 %v667
  %692 = vmatprep.subr.mxu0 0.0
  %693 = vmatpush1.msra.mxu0 %v668
  %694 = vmatprep.subr.mxu0 0.0
  %695 = vmatpush1.msra.mxu0 %v669
  %696 = vmatprep.subr.mxu0 0.0
  %697 = vmatpush1.msra.mxu0 %v670
  %698 = vmatprep.subr.mxu0 0.0
  %699 = vmatpush1.msra.mxu0 %v671
  %700 = vmatprep.subr.mxu0 0.0
  %701 = vmatpush1.msra.mxu0 %v672
  %702 = vmatprep.subr.mxu0 0.0
  %703 = vmatpush1.msra.mxu0 %v673
  %704 = vmatprep.subr.mxu0 0.0
  %705 = vmatpush1.msra.mxu0 %v674
  %706 = vmatprep.subr.mxu0 0.0
  %707 = vmatpush1.msra.mxu0 %v675
  %708 = vmatprep.subr.mxu0 0.0
  %709 = vmatpush1.msra.mxu0 %v676
  %710 = vmatprep.subr.mxu0 0.0
  %711 = vmatpush1.msra.mxu0 %v677
  %712 = vmatprep.subr.mxu0 0.0
  %713 = vmatpush1.msra.mxu0 %v678
  %714 = vmatprep.subr.mxu0 0.0
  %715 = vmatpush1.msra.mxu0 %v679
  %716 = vmatprep.subr.mxu0 0.0
  %717 = vmatpush1.msra.mxu0 %v680
  %718 = vmatprep.subr.mxu0 0.0
  %719 = vmatpush1.msra.mxu0 %v681
  %720 = vmatprep.subr.mxu0 0.0
  %721 = vmatpush1.msra.mxu0 %v682
  %722 = vmatprep.subr.mxu0 0.0
  %723 = vmatpush1.msra.mxu0 0.0
  %724 = vmatprep.subr.mxu0 0.0
  %725 = vmatpush1.msra.mxu0 0.0
  %726 = vmatprep.subr.mxu0 0.0
  %727 = vmatpush1.msra.mxu0 0.0
  %728 = vmatprep.subr.mxu0 0.0
  %729 = vmatpush1.msra.mxu0 0.0
  %730 = vmatprep.subr.mxu0 0.0
  %731 = vmatpush1.msra.mxu0 0.0
  %732 = vmatprep.subr.mxu0 0.0
  %733 = vmatpush1.msra.mxu0 0.0
  %734 = vmatprep.subr.mxu0 0.0
  %735 = vmatpush1.msra.mxu0 0.0
  %736 = vmatprep.subr.mxu0 0.0
  %737 = vmatpush1.msra.mxu0 0.0
  %738 = vmatprep.subr.mxu0 0.0
  %739 = vmatpush1.msra.mxu0 0.0
  %740 = vmatprep.subr.mxu0 0.0
  %741 = vmatpush1.msra.mxu0 0.0
  %742 = vmatprep.subr.mxu0 0.0
  %743 = vmatpush1.msra.mxu0 0.0
  %744 = vmatprep.subr.mxu0 0.0
  %745 = vmatpush1.msra.mxu0 0.0
  %746 = vmatprep.subr.mxu0 0.0
  %747 = vmatpush1.msra.mxu0 0.0
  %748 = vmatprep.subr.mxu0 0.0
  %749 = vmatpush1.msra.mxu0 0.0
  %750 = vmatprep.subr.mxu0 0.0
  %751 = vmatpush1.msra.mxu0 0.0
  %752 = vmatprep.subr.mxu0 0.0
  %753 = vmatpush1.msra.mxu0 0.0
  %754 = vmatprep.mubr.f32.mxu0 0.0
  %755 = vmatmul.mubr.f32.gmra.mrb[0].mxu0 %v666
  %v756 = vpop.f32.mrb[0].mxu0
  %v757 = vadd.f32 %v688, %v756
  %v758 = vpop.f32.mrb[0].mxu0
  %759 = vdwg.mxu0
  %v760 = vld [vmem:[%s47] sm:$0x1]
  %v762 = vlaneseq
  %v763 = vshrl.u32 %v762, 7
  %v764 = vsub.s32 0, %v763
  %v765 = vrot.slane %v760, %v764
  %v767 = vmul.f32 %v757, %v765
  %v768 = vld [vmem:[%s49] sm:$0x1]
  %v770 = vlaneseq
  %v771 = vshrl.u32 %v770, 7
  %v772 = vsub.s32 0, %v771
  %v773 = vrot.slane %v768, %v772
  %v775 = vadd.f32 %v767, %v773
  %v776 = vmax.f32 %v775, 0.0
  %v777 = vld [vmem:[%s51] sm:$0xff]
  %v778 = vld [vmem:[%s51 + $0x8] sm:$0xff]
  %v779 = vld [vmem:[%s51 + $0x10] sm:$0xff]
  %v780 = vld [vmem:[%s51 + $0x18] sm:$0xff]
  %v781 = vld [vmem:[%s51 + $0x20] sm:$0xff]
  %v782 = vld [vmem:[%s51 + $0x28] sm:$0xff]
  %v783 = vld [vmem:[%s51 + $0x30] sm:$0xff]
  %v784 = vld [vmem:[%s51 + $0x38] sm:$0xff]
  %v785 = vld [vmem:[%s51 + $0x40] sm:$0xff]
  %v786 = vld [vmem:[%s51 + $0x48] sm:$0xff]
  %v787 = vld [vmem:[%s51 + $0x50] sm:$0xff]
  %v788 = vld [vmem:[%s51 + $0x58] sm:$0xff]
  %v789 = vld [vmem:[%s51 + $0x60] sm:$0xff]
  %v790 = vld [vmem:[%s51 + $0x68] sm:$0xff]
  %v791 = vld [vmem:[%s51 + $0x70] sm:$0xff]
  %v792 = vld [vmem:[%s51 + $0x78] sm:$0xff]
  %v793 = vld [vmem:[%s51 + $0x80] sm:$0xff]
  %v794 = vld [vmem:[%s51 + $0x88] sm:$0xff]
  %v795 = vld [vmem:[%s51 + $0x90] sm:$0xff]
  %v796 = vld [vmem:[%s51 + $0x98] sm:$0xff]
  %v797 = vld [vmem:[%s51 + $0xa0] sm:$0xff]
  %v798 = vld [vmem:[%s51 + $0xa8] sm:$0xff]
  %v799 = vld [vmem:[%s51 + $0xb0] sm:$0xff]
  %v800 = vld [vmem:[%s51 + $0xb8] sm:$0xff]
  %v801 = vld [vmem:[%s51 + $0xc0] sm:$0xff]
  %v802 = vld [vmem:[%s51 + $0xc8] sm:$0xff]
  %v803 = vld [vmem:[%s51 + $0xd0] sm:$0xff]
  %v804 = vld [vmem:[%s51 + $0xd8] sm:$0xff]
  %v805 = vld [vmem:[%s51 + $0xe0] sm:$0xff]
  %v806 = vld [vmem:[%s51 + $0xe8] sm:$0xff]
  %v807 = vld [vmem:[%s51 + $0xf0] sm:$0xff]
  %v808 = vld [vmem:[%s51 + $0xf8] sm:$0xff]
  %v809 = vld [vmem:[%s53] sm:$0x3]
  %v811 = vlaneseq
  %v812 = vshrl.u32 %v811, 7
  %v813 = vsub.s32 0, %v812
  %v814 = vrot.slane %v809, %v813
  %v815 = vlaneseq
  %v816 = vshrl.u32 %v815, 7
  %v817 = vsub.s32 1, %v816
  %v818 = vrot.slane %v809, %v817
  %821 = vmatprep.subr.mxu0 %v778
  %822 = vmatpush1.msra.mxu0 %v777
  %823 = vmatprep.subr.mxu0 %v780
  %824 = vmatpush1.msra.mxu0 %v779
  %825 = vmatprep.subr.mxu0 %v782
  %826 = vmatpush1.msra.mxu0 %v781
  %827 = vmatprep.subr.mxu0 %v784
  %828 = vmatpush1.msra.mxu0 %v783
  %829 = vmatprep.subr.mxu0 %v786
  %830 = vmatpush1.msra.mxu0 %v785
  %831 = vmatprep.subr.mxu0 %v788
  %832 = vmatpush1.msra.mxu0 %v787
  %833 = vmatprep.subr.mxu0 %v790
  %834 = vmatpush1.msra.mxu0 %v789
  %835 = vmatprep.subr.mxu0 %v792
  %836 = vmatpush1.msra.mxu0 %v791
  %837 = vmatprep.subr.mxu0 %v794
  %838 = vmatpush1.msra.mxu0 %v793
  %839 = vmatprep.subr.mxu0 %v796
  %840 = vmatpush1.msra.mxu0 %v795
  %841 = vmatprep.subr.mxu0 %v798
  %842 = vmatpush1.msra.mxu0 %v797
  %843 = vmatprep.subr.mxu0 %v800
  %844 = vmatpush1.msra.mxu0 %v799
  %845 = vmatprep.subr.mxu0 %v802
  %846 = vmatpush1.msra.mxu0 %v801
  %847 = vmatprep.subr.mxu0 %v804
  %848 = vmatpush1.msra.mxu0 %v803
  %849 = vmatprep.subr.mxu0 %v806
  %850 = vmatpush1.msra.mxu0 %v805
  %851 = vmatprep.subr.mxu0 %v808
  %852 = vmatpush1.msra.mxu0 %v807
  %853 = vmatprep.subr.mxu0 0.0
  %854 = vmatpush1.msra.mxu0 0.0
  %855 = vmatprep.subr.mxu0 0.0
  %856 = vmatpush1.msra.mxu0 0.0
  %857 = vmatprep.subr.mxu0 0.0
  %858 = vmatpush1.msra.mxu0 0.0
  %859 = vmatprep.subr.mxu0 0.0
  %860 = vmatpush1.msra.mxu0 0.0
  %861 = vmatprep.subr.mxu0 0.0
  %862 = vmatpush1.msra.mxu0 0.0
  %863 = vmatprep.subr.mxu0 0.0
  %864 = vmatpush1.msra.mxu0 0.0
  %865 = vmatprep.subr.mxu0 0.0
  %866 = vmatpush1.msra.mxu0 0.0
  %867 = vmatprep.subr.mxu0 0.0
  %868 = vmatpush1.msra.mxu0 0.0
  %869 = vmatprep.subr.mxu0 0.0
  %870 = vmatpush1.msra.mxu0 0.0
  %871 = vmatprep.subr.mxu0 0.0
  %872 = vmatpush1.msra.mxu0 0.0
  %873 = vmatprep.subr.mxu0 0.0
  %874 = vmatpush1.msra.mxu0 0.0
  %875 = vmatprep.subr.mxu0 0.0
  %876 = vmatpush1.msra.mxu0 0.0
  %877 = vmatprep.subr.mxu0 0.0
  %878 = vmatpush1.msra.mxu0 0.0
  %879 = vmatprep.subr.mxu0 0.0
  %880 = vmatpush1.msra.mxu0 0.0
  %881 = vmatprep.subr.mxu0 0.0
  %882 = vmatpush1.msra.mxu0 0.0
  %883 = vmatprep.subr.mxu0 0.0
  %884 = vmatpush1.msra.mxu0 0.0
  %885 = vmatprep.mubr.f32.mxu0 0.0
  %886 = vmatmul.mubr.f32.gmra.mrb[0].mxu0 %v776
  %v887 = vpop.f32.mrb[0].mxu0
  %v888 = vadd.f32 %v814, %v887
  %v889 = vpop.f32.mrb[0].mxu0
  %v890 = vadd.f32 %v818, %v889
  %891 = vdwg.mxu0
  %v892 = vmul.f32 %v888, %v888
  %v893 = vmul.f32 %v890, %v890
  %v894 = vld [vmem:[%s55] sm:$0xff]
  %v895 = vld [vmem:[%s55 + $0x8] sm:$0xff]
  %v896 = vld [vmem:[%s55 + $0x10] sm:$0xff]
  %v897 = vld [vmem:[%s55 + $0x18] sm:$0xff]
  %v898 = vld [vmem:[%s55 + $0x20] sm:$0xff]
  %v899 = vld [vmem:[%s55 + $0x28] sm:$0xff]
  %v900 = vld [vmem:[%s55 + $0x30] sm:$0xff]
  %v901 = vld [vmem:[%s55 + $0x38] sm:$0xff]
  %v902 = vld [vmem:[%s55 + $0x40] sm:$0xff]
  %v903 = vld [vmem:[%s55 + $0x48] sm:$0xff]
  %v904 = vld [vmem:[%s55 + $0x50] sm:$0xff]
  %v905 = vld [vmem:[%s55 + $0x58] sm:$0xff]
  %v906 = vld [vmem:[%s55 + $0x60] sm:$0xff]
  %v907 = vld [vmem:[%s55 + $0x68] sm:$0xff]
  %v908 = vld [vmem:[%s55 + $0x70] sm:$0xff]
  %v909 = vld [vmem:[%s55 + $0x78] sm:$0xff]
  %v910 = vld [vmem:[%s55 + $0x80] sm:$0xff]
  %v911 = vld [vmem:[%s55 + $0x88] sm:$0xff]
  %v912 = vld [vmem:[%s55 + $0x90] sm:$0xff]
  %v913 = vld [vmem:[%s55 + $0x98] sm:$0xff]
  %v914 = vld [vmem:[%s55 + $0xa0] sm:$0xff]
  %v915 = vld [vmem:[%s55 + $0xa8] sm:$0xff]
  %v916 = vld [vmem:[%s55 + $0xb0] sm:$0xff]
  %v917 = vld [vmem:[%s55 + $0xb8] sm:$0xff]
  %v918 = vld [vmem:[%s55 + $0xc0] sm:$0xff]
  %v919 = vld [vmem:[%s55 + $0xc8] sm:$0xff]
  %v920 = vld [vmem:[%s55 + $0xd0] sm:$0xff]
  %v921 = vld [vmem:[%s55 + $0xd8] sm:$0xff]
  %v922 = vld [vmem:[%s55 + $0xe0] sm:$0xff]
  %v923 = vld [vmem:[%s55 + $0xe8] sm:$0xff]
  %v924 = vld [vmem:[%s55 + $0xf0] sm:$0xff]
  %v925 = vld [vmem:[%s55 + $0xf8] sm:$0xff]
  %v926 = vld [vmem:[%s55 + $0x100] sm:$0xff]
  %v927 = vld [vmem:[%s55 + $0x108] sm:$0xff]
  %v928 = vld [vmem:[%s55 + $0x110] sm:$0xff]
  %v929 = vld [vmem:[%s55 + $0x118] sm:$0xff]
  %v930 = vld [vmem:[%s55 + $0x120] sm:$0xff]
  %v931 = vld [vmem:[%s55 + $0x128] sm:$0xff]
  %v932 = vld [vmem:[%s55 + $0x130] sm:$0xff]
  %v933 = vld [vmem:[%s55 + $0x138] sm:$0xff]
  %v934 = vld [vmem:[%s55 + $0x140] sm:$0xff]
  %v935 = vld [vmem:[%s55 + $0x148] sm:$0xff]
  %v936 = vld [vmem:[%s55 + $0x150] sm:$0xff]
  %v937 = vld [vmem:[%s55 + $0x158] sm:$0xff]
  %v938 = vld [vmem:[%s55 + $0x160] sm:$0xff]
  %v939 = vld [vmem:[%s55 + $0x168] sm:$0xff]
  %v940 = vld [vmem:[%s55 + $0x170] sm:$0xff]
  %v941 = vld [vmem:[%s55 + $0x178] sm:$0xff]
  %v942 = vld [vmem:[%s55 + $0x180] sm:$0xff]
  %v943 = vld [vmem:[%s55 + $0x188] sm:$0xff]
  %v944 = vld [vmem:[%s55 + $0x190] sm:$0xff]
  %v945 = vld [vmem:[%s55 + $0x198] sm:$0xff]
  %v946 = vld [vmem:[%s55 + $0x1a0] sm:$0xff]
  %v947 = vld [vmem:[%s55 + $0x1a8] sm:$0xff]
  %v948 = vld [vmem:[%s55 + $0x1b0] sm:$0xff]
  %v949 = vld [vmem:[%s55 + $0x1b8] sm:$0xff]
  %v950 = vld [vmem:[%s55 + $0x1c0] sm:$0xff]
  %v951 = vld [vmem:[%s55 + $0x1c8] sm:$0xff]
  %v952 = vld [vmem:[%s55 + $0x1d0] sm:$0xff]
  %v953 = vld [vmem:[%s55 + $0x1d8] sm:$0xff]
  %v954 = vld [vmem:[%s55 + $0x1e0] sm:$0xff]
  %v955 = vld [vmem:[%s55 + $0x1e8] sm:$0xff]
  %v956 = vld [vmem:[%s55 + $0x1f0] sm:$0xff]
  %v957 = vld [vmem:[%s55 + $0x1f8] sm:$0xff]
  %958 = vmatprep.subr.mxu0 %v895
  %959 = vmatpush1.msra.mxu0 %v894
  %960 = vmatprep.subr.mxu0 %v897
  %961 = vmatpush1.msra.mxu0 %v896
  %962 = vmatprep.subr.mxu0 %v899
  %963 = vmatpush1.msra.mxu0 %v898
  %964 = vmatprep.subr.mxu0 %v901
  %965 = vmatpush1.msra.mxu0 %v900
  %966 = vmatprep.subr.mxu0 %v903
  %967 = vmatpush1.msra.mxu0 %v902
  %968 = vmatprep.subr.mxu0 %v905
  %969 = vmatpush1.msra.mxu0 %v904
  %970 = vmatprep.subr.mxu0 %v907
  %971 = vmatpush1.msra.mxu0 %v906
  %972 = vmatprep.subr.mxu0 %v909
  %973 = vmatpush1.msra.mxu0 %v908
  %974 = vmatprep.subr.mxu0 %v911
  %975 = vmatpush1.msra.mxu0 %v910
  %976 = vmatprep.subr.mxu0 %v913
  %977 = vmatpush1.msra.mxu0 %v912
  %978 = vmatprep.subr.mxu0 %v915
  %979 = vmatpush1.msra.mxu0 %v914
  %980 = vmatprep.subr.mxu0 %v917
  %981 = vmatpush1.msra.mxu0 %v916
  %982 = vmatprep.subr.mxu0 %v919
  %983 = vmatpush1.msra.mxu0 %v918
  %984 = vmatprep.subr.mxu0 %v921
  %985 = vmatpush1.msra.mxu0 %v920
  %986 = vmatprep.subr.mxu0 %v923
  %987 = vmatpush1.msra.mxu0 %v922
  %988 = vmatprep.subr.mxu0 %v925
  %989 = vmatpush1.msra.mxu0 %v924
  %990 = vmatprep.subr.mxu0 %v927
  %991 = vmatpush1.msra.mxu0 %v926
  %992 = vmatprep.subr.mxu0 %v929
  %993 = vmatpush1.msra.mxu0 %v928
  %994 = vmatprep.subr.mxu0 %v931
  %995 = vmatpush1.msra.mxu0 %v930
  %996 = vmatprep.subr.mxu0 %v933
  %997 = vmatpush1.msra.mxu0 %v932
  %998 = vmatprep.subr.mxu0 %v935
  %999 = vmatpush1.msra.mxu0 %v934
  %1000 = vmatprep.subr.mxu0 %v937
  %1001 = vmatpush1.msra.mxu0 %v936
  %1002 = vmatprep.subr.mxu0 %v939
  %1003 = vmatpush1.msra.mxu0 %v938
  %1004 = vmatprep.subr.mxu0 %v941
  %1005 = vmatpush1.msra.mxu0 %v940
  %1006 = vmatprep.subr.mxu0 %v943
  %1007 = vmatpush1.msra.mxu0 %v942
  %1008 = vmatprep.subr.mxu0 %v945
  %1009 = vmatpush1.msra.mxu0 %v944
  %1010 = vmatprep.subr.mxu0 %v947
  %1011 = vmatpush1.msra.mxu0 %v946
  %1012 = vmatprep.subr.mxu0 %v949
  %1013 = vmatpush1.msra.mxu0 %v948
  %1014 = vmatprep.subr.mxu0 %v951
  %1015 = vmatpush1.msra.mxu0 %v950
  %1016 = vmatprep.subr.mxu0 %v953
  %1017 = vmatpush1.msra.mxu0 %v952
  %1018 = vmatprep.subr.mxu0 %v955
  %1019 = vmatpush1.msra.mxu0 %v954
  %1020 = vmatprep.subr.mxu0 %v957
  %1021 = vmatpush1.msra.mxu0 %v956
  %1022 = vmatprep.mubr.f32.mxu0 %v893
  %1023 = vmatmul.mubr.f32.gmra.mrb[0].mxu0 %v892
  %v1024 = vpop.f32.mrb[0].mxu0
  %v1025 = vadd.f32 0.0, %v1024
  %v1026 = vpop.f32.mrb[0].mxu0
  %v1027 = vadd.f32 0.0, %v1026
  %1028 = vdwg.mxu0
  %v1029 = vmax.f32 %v1025, 1e-24
  %v1030 = vmax.f32 %v1027, 1e-24
  %v1031 = vrsqrt.pop %v1029
  %v1032 = vrsqrt.pop %v1030
  %v1033 = vld [vmem:[%s57] sm:$0x3]
  %vm1034 = vcmp.eq.f32.partialorder %v1033, 1.0
  %vm1035 = vcmp.eq.f32.partialorder %v1033, 2.0
  %v1036 = vmul.f32 %v888, %v1031
  %v1037 = vmul.f32 %v890, %v1032
  %v1038 = vxor.u32 %v888, 2147483648
  %v1039 = vxor.u32 %v890, 2147483648
  %v1040 = vmul.f32 %v1038, 1.442695
  %v1041 = vpow.pop %v1040
  %v1042 = vmul.f32 %v1039, 1.442695
  %v1043 = vpow.pop %v1042
  %v1044 = vadd.f32 %v1041, 1.0
  %v1045 = vadd.f32 %v1043, 1.0
  %v1046 = vrcp.pop %v1044
  %v1047 = vmul.f32 1.0, %v1046
  %v1048 = vrcp.pop %v1045
  %v1049 = vmul.f32 1.0, %v1048
  %v1050 = vsel %vm1035, 1, 0
  %v1051 = vlaneseq
  %v1052 = vshrl.u32 %v1051, 7
  %v1053 = vsub.s32 0, %v1052
  %v1054 = vrot.slane %v1050, %v1053
  %v1055 = vlaneseq
  %v1056 = vshrl.u32 %v1055, 7
  %v1057 = vsub.s32 1, %v1056
  %v1058 = vrot.slane %v1050, %v1057
  %vm1059 = vcmp.eq.s32.totalorder %v1054, 1
  %vm1060 = vcmp.eq.s32.totalorder %v1058, 1
  %v1061 = vsel %vm1059, %v1047, %v888
  %v1062 = vsel %vm1060, %v1049, %v890
  %v1063 = vsel %vm1034, 1, 0
  %v1064 = vlaneseq
  %v1065 = vshrl.u32 %v1064, 7
  %v1066 = vsub.s32 0, %v1065
  %v1067 = vrot.slane %v1063, %v1066
  %v1068 = vlaneseq
  %v1069 = vshrl.u32 %v1068, 7
  %v1070 = vsub.s32 1, %v1069
  %v1071 = vrot.slane %v1063, %v1070
  %vm1072 = vcmp.eq.s32.totalorder %v1067, 1
  %vm1073 = vcmp.eq.s32.totalorder %v1071, 1
  %v1074 = vsel %vm1072, %v1036, %v1061
  %v1075 = vsel %vm1073, %v1037, %v1062
  %1076 = vst [vmem:[%s59] sm:$0xff] %v1074
  %1077 = vst [vmem:[%s59 + $0x8] sm:$0xff] %v1075
  // Predicated region
  $region118: #{specialized_mlp_sh.13} parent=0 // pred_check
    _
  $region119: #{specialized_mlp_sh.13} parent=0 // pred_check_branch
    %1079 = sbr.rel (0) target = $region121
  $region120: #{specialized_mlp_sh.13} parent=0 // pred_region
    _
  $region121: #{specialized_mlp_sh.13} parent=0 // pred_fallthru
    _
  // Predicated region
  $region122: #{specialized_mlp_sh.13} parent=0 // pred_check
    _
  $region123: #{specialized_mlp_sh.13} parent=0 // pred_check_branch
    %1081 = sbr.rel (0) target = $region125
  $region124: #{specialized_mlp_sh.13} parent=0 // pred_region
    _
  $region125: #{specialized_mlp_sh.13} parent=0 // pred_fallthru
    _

</llo_original>
